<compile_context>
chip_gen: v7x
topology: tpu7x:2x2x1
jax: 0.10.0
libtpu: 0.0.40
codegen_flags: <defaults>
</compile_context>

<pallas_src>
import functools

import jax
import jax.numpy as jnp
from jax.experimental import pallas as pl
from jax.experimental.pallas import tpu as pltpu


# ----------------------------------------------------------------------------
# Fused Pallas kernel: whole forward pass for one image
# ----------------------------------------------------------------------------
def _fused_forward_kernel(
        x1_ref, w1_ref, b1_ref, w2_ref, b2_ref, w3_ref, b3_ref, w4_ref, b4_ref,
        fc1w_ref, fc1b_ref, fc2w_ref, fc2b_ref, fc3w_ref, fc3b_ref,
        prob_ref, logits_ref,
        conv_buf, pad2_buf, pad3_buf, pad4_buf, feat_buf,
        *, H, W):
    """TRSimpleConvNet forward for ONE image, entirely VMEM-resident.

    x1_ref : (H*W, 27)  bf16   layer-1 input, pre-im2col'd (Cin=3 -> K=27)
    wX_ref : (9*Cin, 32) bf16  conv weights with BN scale + routing mask folded in
    bX_ref : (1, 32)     f32   conv bias + BN shift (mask folded in)
    fc*    : f32               fc1 rows pre-permuted to PyTorch NCHW-flatten order
    outputs: (1, num_class) f32 softmax prob and logits
    scratch: conv_buf (H*W,32) f32 pre-pool conv output (reused per layer)
             padK_buf padded row-flattened input of layer K (zero rows top/bottom)
             feat_buf (4,32) f32 pooled layer-4 output
    """

    def conv3x3_bn_mask_relu(pad_ref, w_ref, b_ref, h, w):
        # pad_ref: (h*w + 2*(w+1), Cin) f32 row-flattened image with zero rows top/bottom.
        m = h * w
        pad = w + 1
        col = jax.lax.broadcasted_iota(jnp.int32, (m, 1), 0) % w
        not_left = col > 0            # reading column j-1 is valid
        not_right = col < (w - 1)     # reading column j+1 is valid
        taps = []
        for t in range(9):            # statically unrolled 3x3 taps
            di, dj = t // 3 - 1, t % 3 - 1
            start = pad + di * w + dj
            v = pad_ref[start:start + m, :].astype(jnp.bfloat16)
            if dj == -1:
                v = jnp.where(not_left, v, 0.0)
            elif dj == 1:
                v = jnp.where(not_right, v, 0.0)
            taps.append(v)
        patch = jnp.concatenate(taps, axis=-1)          # (m, 9*Cin) bf16 im2col
        y = jnp.dot(patch, w_ref[...],
                    preferred_element_type=jnp.float32) + b_ref[...]
        return jnp.maximum(y, 0.0)

    def maxpool2x2_into(src_ref, h, w, dst_ref, dst_row0):
        # 2x2/2 maxpool of src_ref[0:h*w] (row-flattened); rows written from dst_row0.
        hw = w // 2
        for i2 in range(h // 2):      # statically unrolled
            base = 2 * i2 * w
            p = jnp.maximum(
                jnp.maximum(src_ref[pl.ds(base, hw, 2), :],
                            src_ref[pl.ds(base + 1, hw, 2), :]),
                jnp.maximum(src_ref[pl.ds(base + w, hw, 2), :],
                            src_ref[pl.ds(base + w + 1, hw, 2), :]))
            dst_ref[dst_row0 + i2 * hw: dst_row0 + (i2 + 1) * hw, :] = (
                p.astype(dst_ref.dtype))

    h1, w1 = H, W
    h2, w2 = h1 // 2, w1 // 2
    h3, w3 = h2 // 2, w2 // 2
    h4, w4 = h3 // 2, w3 // 2

    # ---- layer 1: input pre-im2col'd in the wrapper (one K=27 dot, no masks) ----
    y1 = jnp.dot(x1_ref[...], w1_ref[...],
                 preferred_element_type=jnp.float32) + b1_ref[...]
    conv_buf[0:h1 * w1, :] = jnp.maximum(y1, 0.0)
    pad2_buf[...] = jnp.zeros(pad2_buf.shape, pad2_buf.dtype)
    maxpool2x2_into(conv_buf, h1, w1, pad2_buf, w2 + 1)

    # ---- layer 2 ----
    conv_buf[0:h2 * w2, :] = conv3x3_bn_mask_relu(pad2_buf, w2_ref, b2_ref, h2, w2)
    pad3_buf[...] = jnp.zeros(pad3_buf.shape, pad3_buf.dtype)
    maxpool2x2_into(conv_buf, h2, w2, pad3_buf, w3 + 1)

    # ---- layer 3 ----
    conv_buf[0:h3 * w3, :] = conv3x3_bn_mask_relu(pad3_buf, w3_ref, b3_ref, h3, w3)
    pad4_buf[...] = jnp.zeros(pad4_buf.shape, pad4_buf.dtype)
    maxpool2x2_into(conv_buf, h3, w3, pad4_buf, w4 + 1)

    # ---- layer 4 ----
    conv_buf[0:h4 * w4, :] = conv3x3_bn_mask_relu(pad4_buf, w4_ref, b4_ref, h4, w4)
    maxpool2x2_into(conv_buf, h4, w4, feat_buf, 0)

    # ---- flatten (NHWC row-major; fc1 rows pre-permuted to match PyTorch NCHW view) ----
    n_rows = (h4 // 2) * (w4 // 2)                      # = 4
    feat = jnp.concatenate([feat_buf[r:r + 1, :] for r in range(n_rows)], axis=1)

    # ---- FC head in f32 (no activations between fc layers, matching the module) ----
    a1 = jnp.dot(feat, fc1w_ref[...], preferred_element_type=jnp.float32) + fc1b_ref[...]
    a2 = jnp.dot(a1, fc2w_ref[...], preferred_element_type=jnp.float32) + fc2b_ref[...]
    logits = jnp.dot(a2, fc3w_ref[...], preferred_element_type=jnp.float32) + fc3b_ref[...]
    mx = jnp.max(logits, axis=-1, keepdims=True)
    e = jnp.exp(logits - mx)
    prob_ref[...] = e / jnp.sum(e, axis=-1, keepdims=True)
    logits_ref[...] = logits


# ----------------------------------------------------------------------------
# Host-side preparation (hoisted, once per task) and wrapper
# ----------------------------------------------------------------------------
def fold_conv_params(layer, task_id, eps=1e-5):
    """Fold conv bias + inference-mode BN + binary routing mask into (weights, bias)."""
    s = layer["gamma"] * jax.lax.rsqrt(layer["var"] + eps)           # (Cout,)
    m = layer["mask"][task_id]                                       # (Cout,) 0/1
    w_eff = layer["w"] * (s * m)                                     # (3,3,Cin,Cout)
    b_eff = m * (layer["beta"] + s * (layer["b"] - layer["mean"]))
    kh, kw, cin, cout = layer["w"].shape
    return (w_eff.reshape(kh * kw * cin, cout).astype(jnp.bfloat16),
            b_eff.reshape(1, cout).astype(jnp.float32))


def prepare_task_params(params, task_id):
    """One-time, per-task parameter folding / reshaping (hoisted out of the hot path)."""
    prepared = {}
    for i in range(4):
        w_eff, b_eff = fold_conv_params(params[f"layer{i + 1}"], task_id)
        prepared[f"w{i + 1}"] = w_eff
        prepared[f"b{i + 1}"] = b_eff
    # fc1 rows: PyTorch flattens NCHW (index c*4 + h*2 + w); our feature is NHWC
    # row-major (index (h*2+w)*nf + c) -> permute fc1 rows once here.
    nf = params["layer4"]["w"].shape[-1]
    hw = params["fc1_w"].shape[0] // nf                              # = 4
    n_feat = nf * hw
    new_to_old = (jnp.arange(n_feat) % nf) * hw + (jnp.arange(n_feat) // nf)
    prepared["fc1_w"] = params["fc1_w"][new_to_old, :].astype(jnp.float32)
    prepared["fc1_b"] = params["fc1_b"].reshape(1, -1).astype(jnp.float32)
    prepared["fc2_w"] = params["fc2_w"].astype(jnp.float32)
    prepared["fc2_b"] = params["fc2_b"].reshape(1, -1).astype(jnp.float32)
    prepared["fc3_w"] = params["fc3_w"][task_id].astype(jnp.float32)
    prepared["fc3_b"] = params["fc3_b"][task_id].reshape(1, -1).astype(jnp.float32)
    return prepared


def _im2col_3x3(x_nhwc):
    n, h, w, c = x_nhwc.shape
    xp = jnp.pad(x_nhwc, ((0, 0), (1, 1), (1, 1), (0, 0)))
    taps = [xp[:, kh:kh + h, kw:kw + w, :] for kh in range(3) for kw in range(3)]
    return jnp.concatenate(taps, axis=-1).reshape(n, h * w, 9 * c)


def forward_prepared(prepared, x_nchw):
    x = jnp.transpose(x_nchw, (0, 2, 3, 1)).astype(jnp.float32)      # NCHW -> NHWC
    n, h, w, cin = x.shape
    assert h == 32 and w == 32, "fc1 (num_filter*2*2 inputs) requires a 32x32 input"

    x1 = _im2col_3x3(x).astype(jnp.bfloat16)                         # (N, 1024, 27)
    m1, k1 = h * w, 9 * cin
    nf = prepared["w2"].shape[-1]                                    # 32
    k9 = prepared["w2"].shape[0]                                     # 288
    nh = prepared["fc1_w"].shape[-1]                                 # 128
    ncls = prepared["fc3_w"].shape[-1]                               # 5

    cmap = lambda i: (0, 0)
    in_specs = [
        pl.BlockSpec((None, m1, k1), lambda i: (i, 0, 0)),
        pl.BlockSpec((k1, nf), cmap), pl.BlockSpec((1, nf), cmap),
        pl.BlockSpec((k9, nf), cmap), pl.BlockSpec((1, nf), cmap),
        pl.BlockSpec((k9, nf), cmap), pl.BlockSpec((1, nf), cmap),
        pl.BlockSpec((k9, nf), cmap), pl.BlockSpec((1, nf), cmap),
        pl.BlockSpec((4 * nf, nh), cmap), pl.BlockSpec((1, nh), cmap),
        pl.BlockSpec((nh, nh), cmap), pl.BlockSpec((1, nh), cmap),
        pl.BlockSpec((nh, ncls), cmap), pl.BlockSpec((1, ncls), cmap),
    ]
    scratch = [
        pltpu.VMEM((m1, nf), jnp.float32),                            # pre-pool conv output
        pltpu.VMEM((m1 // 4 + 2 * (w // 2 + 1), nf), jnp.float32),    # layer-2 padded input
        pltpu.VMEM((m1 // 16 + 2 * (w // 4 + 1), nf), jnp.float32),   # layer-3 padded input
        pltpu.VMEM((m1 // 64 + 2 * (w // 8 + 1), nf), jnp.float32),   # layer-4 padded input
        pltpu.VMEM((4, nf), jnp.float32),                             # pooled layer-4 feature
    ]
    flops = 2 * n * (m1 * k1 * nf
                     + (m1 // 4 + m1 // 16 + m1 // 64) * k9 * nf
                     + 4 * nf * nh + nh * nh + nh * ncls)
    bytes_accessed = int(x1.size * 2 + (k1 + 3 * k9) * nf * 2 + 4 * nf * 4
                         + (4 * nf * nh + nh * nh + nh * ncls + 2 * nh + ncls) * 4
                         + 2 * n * ncls * 4)

    prob, logits = pl.pallas_call(
        functools.partial(_fused_forward_kernel, H=h, W=w),
        grid=(n,),
        in_specs=in_specs,
        out_specs=[pl.BlockSpec((None, 1, ncls), lambda i: (i, 0, 0)),
                   pl.BlockSpec((None, 1, ncls), lambda i: (i, 0, 0))],
        out_shape=(jax.ShapeDtypeStruct((n, 1, ncls), jnp.float32),
                   jax.ShapeDtypeStruct((n, 1, ncls), jnp.float32)),
        scratch_shapes=scratch,
        compiler_params=pltpu.CompilerParams(dimension_semantics=("parallel",)),
        cost_estimate=pl.CostEstimate(flops=flops, transcendentals=n * ncls,
                                      bytes_accessed=bytes_accessed),
    )(x1,
      prepared["w1"], prepared["b1"], prepared["w2"], prepared["b2"],
      prepared["w3"], prepared["b3"], prepared["w4"], prepared["b4"],
      prepared["fc1_w"], prepared["fc1_b"],
      prepared["fc2_w"], prepared["fc2_b"],
      prepared["fc3_w"], prepared["fc3_b"])
    return prob.reshape(n, ncls), logits.reshape(n, ncls)


def trsimpleconvnet_forward(params, x_nchw, task_id):
    return forward_prepared(prepare_task_params(params, task_id), x_nchw)


# ----------------------------------------------------------------------------
# Parameter init (random, PyTorch-default-like) + pure-XLA reference
# ----------------------------------------------------------------------------
def _task_router_mask(key, num_task, unit_count, sigma):
    r = jax.random.uniform(key, (num_task, unit_count))
    rank = jnp.argsort(jnp.argsort(r, axis=1), axis=1)
    k = int(unit_count * sigma)
    return (rank >= k).astype(jnp.float32)


def _linear_init(key, din, dout):
    kw, kb = jax.random.split(key)
    bound = 1.0 / float(din) ** 0.5
    w = jax.random.uniform(kw, (din, dout), minval=-bound, maxval=bound, dtype=jnp.float32)
    b = jax.random.uniform(kb, (dout,), minval=-bound, maxval=bound, dtype=jnp.float32)
    return w, b


def init_params(key, num_class=5, num_task=20, sigma=0.5, num_filter=32, num_hidden=128):
    keys = jax.random.split(key, 7)
    params = {}
    cins = (3, num_filter, num_filter, num_filter)
    for i, cin in enumerate(cins):
        k = jax.random.split(keys[i], 7)
        bound = 1.0 / float(9 * cin) ** 0.5
        params[f"layer{i + 1}"] = {
            "w": jax.random.uniform(k[0], (3, 3, cin, num_filter),
                                    minval=-bound, maxval=bound, dtype=jnp.float32),
            "b": jax.random.uniform(k[1], (num_filter,), minval=-bound, maxval=bound,
                                    dtype=jnp.float32),
            "gamma": 1.0 + 0.1 * jax.random.normal(k[2], (num_filter,), dtype=jnp.float32),
            "beta": 0.1 * jax.random.normal(k[3], (num_filter,), dtype=jnp.float32),
            "mean": 0.1 * jax.random.normal(k[4], (num_filter,), dtype=jnp.float32),
            "var": 1.0 + 0.1 * jax.random.uniform(k[5], (num_filter,), dtype=jnp.float32),
            "mask": _task_router_mask(k[6], num_task, num_filter, sigma),
        }
    params["fc1_w"], params["fc1_b"] = _linear_init(keys[4], num_filter * 2 * 2, num_hidden)
    params["fc2_w"], params["fc2_b"] = _linear_init(keys[5], num_hidden, num_hidden)
    w3s, b3s = [], []
    for tk in jax.random.split(keys[6], num_task):
        w, b = _linear_init(tk, num_hidden, num_class)
        w3s.append(w)
        b3s.append(b)
    params["fc3_w"] = jnp.stack(w3s)
    params["fc3_b"] = jnp.stack(b3s)
    return params


def reference_forward(params, x_nchw, task_id, eps=1e-5):
    x = x_nchw
    for i in range(4):
        lp = params[f"layer{i + 1}"]
        w_oihw = jnp.transpose(lp["w"], (3, 2, 0, 1))
        x = jax.lax.conv_general_dilated(
            x, w_oihw, window_strides=(1, 1), padding=((1, 1), (1, 1)),
            dimension_numbers=("NCHW", "OIHW", "NCHW"))
        x = x + lp["b"][None, :, None, None]
        s = lp["gamma"] / jnp.sqrt(lp["var"] + eps)
        x = (s[None, :, None, None] * (x - lp["mean"][None, :, None, None])
             + lp["beta"][None, :, None, None])
        x = x * lp["mask"][task_id][None, :, None, None]
        x = jax.nn.relu(x)
        x = jax.lax.reduce_window(x, -jnp.inf, jax.lax.max,
                                  (1, 1, 2, 2), (1, 1, 2, 2), "VALID")
    feat = x.reshape(x.shape[0], -1)
    h1 = feat @ params["fc1_w"] + params["fc1_b"]
    h2 = h1 @ params["fc2_w"] + params["fc2_b"]
    logits = h2 @ params["fc3_w"][task_id] + params["fc3_b"][task_id]
    return jax.nn.softmax(logits, axis=-1), logits


if __name__ == "__main__":
    key = jax.random.PRNGKey(0)
    kx, kp = jax.random.split(key)
    # 32x32 input so that four MaxPool2d(2,2) stages leave the 2x2 spatial map that
    # fc1 (in_features = num_filter*2*2 = 128) expects.
    x = jax.random.normal(kx, (2, 3, 32, 32), dtype=jnp.float32)
    params = init_params(kp, num_class=5, num_task=20, sigma=0.5)
    task_id = 3  # equivalent of model.set_task(3)

    prepared = prepare_task_params(params, task_id)   # hoisted per-task folding
    fwd = jax.jit(forward_prepared)
    prob, logits = fwd(prepared, x)
    jax.block_until_ready((prob, logits))

    assert prob.shape == (2, 5) and logits.shape == (2, 5)
    assert bool(jnp.all(jnp.isfinite(prob))) and bool(jnp.all(jnp.isfinite(logits)))
    assert bool(jnp.all(jnp.abs(jnp.sum(prob, axis=1) - 1.0) < 1e-3))

    # correctness vs pure-XLA reference (bf16 MXU conv operands -> loose tolerance)
    ref_prob, ref_logits = reference_forward(params, x, task_id)
    assert bool(jnp.allclose(logits, ref_logits, rtol=0.1, atol=0.05)), (
        "max |dlogit| = %f" % float(jnp.max(jnp.abs(logits - ref_logits))))
    assert bool(jnp.allclose(prob, ref_prob, rtol=0.1, atol=0.02))

    print("KERNEL_OK")
</pallas_src>

<mosaic_0001>
module attributes {stable_mosaic.version = 11 : i64} {
  func.func @_fused_forward_kernel(%arg0: i32, %arg1: memref<1x1024x27xbf16, #tpu.memory_space<vmem>>, %arg2: memref<27x32xbf16, #tpu.memory_space<vmem>>, %arg3: memref<1x32xf32, #tpu.memory_space<vmem>>, %arg4: memref<288x32xbf16, #tpu.memory_space<vmem>>, %arg5: memref<1x32xf32, #tpu.memory_space<vmem>>, %arg6: memref<288x32xbf16, #tpu.memory_space<vmem>>, %arg7: memref<1x32xf32, #tpu.memory_space<vmem>>, %arg8: memref<288x32xbf16, #tpu.memory_space<vmem>>, %arg9: memref<1x32xf32, #tpu.memory_space<vmem>>, %arg10: memref<128x128xf32, #tpu.memory_space<vmem>>, %arg11: memref<1x128xf32, #tpu.memory_space<vmem>>, %arg12: memref<128x128xf32, #tpu.memory_space<vmem>>, %arg13: memref<1x128xf32, #tpu.memory_space<vmem>>, %arg14: memref<128x5xf32, #tpu.memory_space<vmem>>, %arg15: memref<1x5xf32, #tpu.memory_space<vmem>>, %arg16: memref<1x1x5xf32, #tpu.memory_space<vmem>>, %arg17: memref<1x1x5xf32, #tpu.memory_space<vmem>>, %arg18: memref<1024x32xf32, #tpu.memory_space<vmem>>, %arg19: memref<290x32xf32, #tpu.memory_space<vmem>>, %arg20: memref<82x32xf32, #tpu.memory_space<vmem>>, %arg21: memref<26x32xf32, #tpu.memory_space<vmem>>, %arg22: memref<4x32xf32, #tpu.memory_space<vmem>>) attributes {dimension_semantics = [#tpu.dimension_semantics<parallel>], iteration_bounds = array<i64: 2>, scalar_prefetch = 0 : i64, scratch_operands = 5 : i64, tpu.core_type = #tpu.core_type<tc>, window_params = [{transform_indices = @transform_0, window_bounds = array<i64: 1, 1024, 27>}, {pipeline_mode = #tpu.pipeline_mode<synchronous>, transform_indices = @transform_1, window_bounds = array<i64: 27, 32>}, {pipeline_mode = #tpu.pipeline_mode<synchronous>, transform_indices = @transform_2, window_bounds = array<i64: 1, 32>}, {pipeline_mode = #tpu.pipeline_mode<synchronous>, transform_indices = @transform_3, window_bounds = array<i64: 288, 32>}, {pipeline_mode = #tpu.pipeline_mode<synchronous>, transform_indices = @transform_4, window_bounds = array<i64: 1, 32>}, {pipeline_mode = #tpu.pipeline_mode<synchronous>, transform_indices = @transform_5, window_bounds = array<i64: 288, 32>}, {pipeline_mode = #tpu.pipeline_mode<synchronous>, transform_indices = @transform_6, window_bounds = array<i64: 1, 32>}, {pipeline_mode = #tpu.pipeline_mode<synchronous>, transform_indices = @transform_7, window_bounds = array<i64: 288, 32>}, {pipeline_mode = #tpu.pipeline_mode<synchronous>, transform_indices = @transform_8, window_bounds = array<i64: 1, 32>}, {pipeline_mode = #tpu.pipeline_mode<synchronous>, transform_indices = @transform_9, window_bounds = array<i64: 128, 128>}, {pipeline_mode = #tpu.pipeline_mode<synchronous>, transform_indices = @transform_10, window_bounds = array<i64: 1, 128>}, {pipeline_mode = #tpu.pipeline_mode<synchronous>, transform_indices = @transform_11, window_bounds = array<i64: 128, 128>}, {pipeline_mode = #tpu.pipeline_mode<synchronous>, transform_indices = @transform_12, window_bounds = array<i64: 1, 128>}, {pipeline_mode = #tpu.pipeline_mode<synchronous>, transform_indices = @transform_13, window_bounds = array<i64: 128, 5>}, {pipeline_mode = #tpu.pipeline_mode<synchronous>, transform_indices = @transform_14, window_bounds = array<i64: 1, 5>}, {transform_indices = @transform_15, window_bounds = array<i64: 1, 1, 5>}, {transform_indices = @transform_16, window_bounds = array<i64: 1, 1, 5>}]} {
    %c0 = arith.constant 0 : index
    %c0_0 = arith.constant 0 : index
    %c0_1 = arith.constant 0 : index
    %0 = vector.load %arg1[%c0, %c0_0, %c0_1] : memref<1x1024x27xbf16, #tpu.memory_space<vmem>>, vector<1x1024x27xbf16>
    %1 = vector.shape_cast %0 : vector<1x1024x27xbf16> to vector<1024x27xbf16>
    %c0_2 = arith.constant 0 : index
    %c0_3 = arith.constant 0 : index
    %2 = vector.load %arg2[%c0_2, %c0_3] : memref<27x32xbf16, #tpu.memory_space<vmem>>, vector<27x32xbf16>
    %cst = arith.constant dense<0.000000e+00> : vector<1024x32xf32>
    %3 = tpu.matmul %1, %2, %cst {dimension_numbers = #tpu.dot_dimension_numbers<[1], [0], [0], [1], [0, 0, 1, 1], [], []>} : vector<1024x27xbf16>, vector<27x32xbf16>, vector<1024x32xf32> -> vector<1024x32xf32>
    %c0_4 = arith.constant 0 : index
    %c0_5 = arith.constant 0 : index
    %4 = vector.load %arg3[%c0_4, %c0_5] : memref<1x32xf32, #tpu.memory_space<vmem>>, vector<1x32xf32>
    %5 = vector.broadcast %4 : vector<1x32xf32> to vector<1024x32xf32>
    %6 = arith.addf %3, %5 : vector<1024x32xf32>
    %cst_6 = arith.constant 0.000000e+00 : f32
    %7 = vector.broadcast %cst_6 : f32 to vector<1024x32xf32>
    %8 = arith.maximumf %6, %7 : vector<1024x32xf32>
    %c0_7 = arith.constant 0 : index
    %c0_8 = arith.constant 0 : index
    %9 = vector.load %arg18[%c0_7, %c0_8] : memref<1024x32xf32, #tpu.memory_space<vmem>>, vector<1024x32xf32>
    tpu.vector_store %arg18[%c0_7, %c0_8], %8 {strides = array<i32>} : memref<1024x32xf32, #tpu.memory_space<vmem>>, vector<1024x32xf32>,
    %cst_9 = arith.constant 0.000000e+00 : f32
    %10 = vector.broadcast %cst_9 : f32 to vector<290x32xf32>
    %c0_10 = arith.constant 0 : index
    %c0_11 = arith.constant 0 : index
    %11 = vector.load %arg19[%c0_10, %c0_11] : memref<290x32xf32, #tpu.memory_space<vmem>>, vector<290x32xf32>
    tpu.vector_store %arg19[%c0_10, %c0_11], %10 {strides = array<i32>} : memref<290x32xf32, #tpu.memory_space<vmem>>, vector<290x32xf32>,
    %c0_12 = arith.constant 0 : index
    %c0_13 = arith.constant 0 : index
    %12 = tpu.strided_load %arg18[%c0_12, %c0_13] {strides = array<i32: 2, 1>} : memref<1024x32xf32, #tpu.memory_space<vmem>>, vector<16x32xf32>
    %c1 = arith.constant 1 : index
    %c0_14 = arith.constant 0 : index
    %13 = tpu.strided_load %arg18[%c1, %c0_14] {strides = array<i32: 2, 1>} : memref<1024x32xf32, #tpu.memory_space<vmem>>, vector<16x32xf32>
    %14 = arith.maximumf %12, %13 : vector<16x32xf32>
    %c32 = arith.constant 32 : index
    %c0_15 = arith.constant 0 : index
    %15 = tpu.strided_load %arg18[%c32, %c0_15] {strides = array<i32: 2, 1>} : memref<1024x32xf32, #tpu.memory_space<vmem>>, vector<16x32xf32>
    %c33 = arith.constant 33 : index
    %c0_16 = arith.constant 0 : index
    %16 = tpu.strided_load %arg18[%c33, %c0_16] {strides = array<i32: 2, 1>} : memref<1024x32xf32, #tpu.memory_space<vmem>>, vector<16x32xf32>
    %17 = arith.maximumf %15, %16 : vector<16x32xf32>
    %18 = arith.maximumf %14, %17 : vector<16x32xf32>
    %c17 = arith.constant 17 : index
    %c0_17 = arith.constant 0 : index
    %19 = vector.load %arg19[%c17, %c0_17] : memref<290x32xf32, #tpu.memory_space<vmem>>, vector<16x32xf32>
    tpu.vector_store %arg19[%c17, %c0_17], %18 {strides = array<i32>} : memref<290x32xf32, #tpu.memory_space<vmem>>, vector<16x32xf32>,
    %c64 = arith.constant 64 : index
    %c0_18 = arith.constant 0 : index
    %20 = tpu.strided_load %arg18[%c64, %c0_18] {strides = array<i32: 2, 1>} : memref<1024x32xf32, #tpu.memory_space<vmem>>, vector<16x32xf32>
    %c65 = arith.constant 65 : index
    %c0_19 = arith.constant 0 : index
    %21 = tpu.strided_load %arg18[%c65, %c0_19] {strides = array<i32: 2, 1>} : memref<1024x32xf32, #tpu.memory_space<vmem>>, vector<16x32xf32>
    %22 = arith.maximumf %20, %21 : vector<16x32xf32>
    %c96 = arith.constant 96 : index
    %c0_20 = arith.constant 0 : index
    %23 = tpu.strided_load %arg18[%c96, %c0_20] {strides = array<i32: 2, 1>} : memref<1024x32xf32, #tpu.memory_space<vmem>>, vector<16x32xf32>
    %c97 = arith.constant 97 : index
    %c0_21 = arith.constant 0 : index
    %24 = tpu.strided_load %arg18[%c97, %c0_21] {strides = array<i32: 2, 1>} : memref<1024x32xf32, #tpu.memory_space<vmem>>, vector<16x32xf32>
    %25 = arith.maximumf %23, %24 : vector<16x32xf32>
    %26 = arith.maximumf %22, %25 : vector<16x32xf32>
    %c33_22 = arith.constant 33 : index
    %c0_23 = arith.constant 0 : index
    %27 = vector.load %arg19[%c33_22, %c0_23] : memref<290x32xf32, #tpu.memory_space<vmem>>, vector<16x32xf32>
    tpu.vector_store %arg19[%c33_22, %c0_23], %26 {strides = array<i32>} : memref<290x32xf32, #tpu.memory_space<vmem>>, vector<16x32xf32>,
    %c128 = arith.constant 128 : index
    %c0_24 = arith.constant 0 : index
    %28 = tpu.strided_load %arg18[%c128, %c0_24] {strides = array<i32: 2, 1>} : memref<1024x32xf32, #tpu.memory_space<vmem>>, vector<16x32xf32>
    %c129 = arith.constant 129 : index
    %c0_25 = arith.constant 0 : index
    %29 = tpu.strided_load %arg18[%c129, %c0_25] {strides = array<i32: 2, 1>} : memref<1024x32xf32, #tpu.memory_space<vmem>>, vector<16x32xf32>
    %30 = arith.maximumf %28, %29 : vector<16x32xf32>
    %c160 = arith.constant 160 : index
    %c0_26 = arith.constant 0 : index
    %31 = tpu.strided_load %arg18[%c160, %c0_26] {strides = array<i32: 2, 1>} : memref<1024x32xf32, #tpu.memory_space<vmem>>, vector<16x32xf32>
    %c161 = arith.constant 161 : index
    %c0_27 = arith.constant 0 : index
    %32 = tpu.strided_load %arg18[%c161, %c0_27] {strides = array<i32: 2, 1>} : memref<1024x32xf32, #tpu.memory_space<vmem>>, vector<16x32xf32>
    %33 = arith.maximumf %31, %32 : vector<16x32xf32>
    %34 = arith.maximumf %30, %33 : vector<16x32xf32>
    %c49 = arith.constant 49 : index
    %c0_28 = arith.constant 0 : index
    %35 = vector.load %arg19[%c49, %c0_28] : memref<290x32xf32, #tpu.memory_space<vmem>>, vector<16x32xf32>
    tpu.vector_store %arg19[%c49, %c0_28], %34 {strides = array<i32>} : memref<290x32xf32, #tpu.memory_space<vmem>>, vector<16x32xf32>,
    %c192 = arith.constant 192 : index
    %c0_29 = arith.constant 0 : index
    %36 = tpu.strided_load %arg18[%c192, %c0_29] {strides = array<i32: 2, 1>} : memref<1024x32xf32, #tpu.memory_space<vmem>>, vector<16x32xf32>
    %c193 = arith.constant 193 : index
    %c0_30 = arith.constant 0 : index
    %37 = tpu.strided_load %arg18[%c193, %c0_30] {strides = array<i32: 2, 1>} : memref<1024x32xf32, #tpu.memory_space<vmem>>, vector<16x32xf32>
    %38 = arith.maximumf %36, %37 : vector<16x32xf32>
    %c224 = arith.constant 224 : index
    %c0_31 = arith.constant 0 : index
    %39 = tpu.strided_load %arg18[%c224, %c0_31] {strides = array<i32: 2, 1>} : memref<1024x32xf32, #tpu.memory_space<vmem>>, vector<16x32xf32>
    %c225 = arith.constant 225 : index
    %c0_32 = arith.constant 0 : index
    %40 = tpu.strided_load %arg18[%c225, %c0_32] {strides = array<i32: 2, 1>} : memref<1024x32xf32, #tpu.memory_space<vmem>>, vector<16x32xf32>
    %41 = arith.maximumf %39, %40 : vector<16x32xf32>
    %42 = arith.maximumf %38, %41 : vector<16x32xf32>
    %c65_33 = arith.constant 65 : index
    %c0_34 = arith.constant 0 : index
    %43 = vector.load %arg19[%c65_33, %c0_34] : memref<290x32xf32, #tpu.memory_space<vmem>>, vector<16x32xf32>
    tpu.vector_store %arg19[%c65_33, %c0_34], %42 {strides = array<i32>} : memref<290x32xf32, #tpu.memory_space<vmem>>, vector<16x32xf32>,
    %c256 = arith.constant 256 : index
    %c0_35 = arith.constant 0 : index
    %44 = tpu.strided_load %arg18[%c256, %c0_35] {strides = array<i32: 2, 1>} : memref<1024x32xf32, #tpu.memory_space<vmem>>, vector<16x32xf32>
    %c257 = arith.constant 257 : index
    %c0_36 = arith.constant 0 : index
    %45 = tpu.strided_load %arg18[%c257, %c0_36] {strides = array<i32: 2, 1>} : memref<1024x32xf32, #tpu.memory_space<vmem>>, vector<16x32xf32>
    %46 = arith.maximumf %44, %45 : vector<16x32xf32>
    %c288 = arith.constant 288 : index
    %c0_37 = arith.constant 0 : index
    %47 = tpu.strided_load %arg18[%c288, %c0_37] {strides = array<i32: 2, 1>} : memref<1024x32xf32, #tpu.memory_space<vmem>>, vector<16x32xf32>
    %c289 = arith.constant 289 : index
    %c0_38 = arith.constant 0 : index
    %48 = tpu.strided_load %arg18[%c289, %c0_38] {strides = array<i32: 2, 1>} : memref<1024x32xf32, #tpu.memory_space<vmem>>, vector<16x32xf32>
    %49 = arith.maximumf %47, %48 : vector<16x32xf32>
    %50 = arith.maximumf %46, %49 : vector<16x32xf32>
    %c81 = arith.constant 81 : index
    %c0_39 = arith.constant 0 : index
    %51 = vector.load %arg19[%c81, %c0_39] : memref<290x32xf32, #tpu.memory_space<vmem>>, vector<16x32xf32>
    tpu.vector_store %arg19[%c81, %c0_39], %50 {strides = array<i32>} : memref<290x32xf32, #tpu.memory_space<vmem>>, vector<16x32xf32>,
    %c320 = arith.constant 320 : index
    %c0_40 = arith.constant 0 : index
    %52 = tpu.strided_load %arg18[%c320, %c0_40] {strides = array<i32: 2, 1>} : memref<1024x32xf32, #tpu.memory_space<vmem>>, vector<16x32xf32>
    %c321 = arith.constant 321 : index
    %c0_41 = arith.constant 0 : index
    %53 = tpu.strided_load %arg18[%c321, %c0_41] {strides = array<i32: 2, 1>} : memref<1024x32xf32, #tpu.memory_space<vmem>>, vector<16x32xf32>
    %54 = arith.maximumf %52, %53 : vector<16x32xf32>
    %c352 = arith.constant 352 : index
    %c0_42 = arith.constant 0 : index
    %55 = tpu.strided_load %arg18[%c352, %c0_42] {strides = array<i32: 2, 1>} : memref<1024x32xf32, #tpu.memory_space<vmem>>, vector<16x32xf32>
    %c353 = arith.constant 353 : index
    %c0_43 = arith.constant 0 : index
    %56 = tpu.strided_load %arg18[%c353, %c0_43] {strides = array<i32: 2, 1>} : memref<1024x32xf32, #tpu.memory_space<vmem>>, vector<16x32xf32>
    %57 = arith.maximumf %55, %56 : vector<16x32xf32>
    %58 = arith.maximumf %54, %57 : vector<16x32xf32>
    %c97_44 = arith.constant 97 : index
    %c0_45 = arith.constant 0 : index
    %59 = vector.load %arg19[%c97_44, %c0_45] : memref<290x32xf32, #tpu.memory_space<vmem>>, vector<16x32xf32>
    tpu.vector_store %arg19[%c97_44, %c0_45], %58 {strides = array<i32>} : memref<290x32xf32, #tpu.memory_space<vmem>>, vector<16x32xf32>,
    %c384 = arith.constant 384 : index
    %c0_46 = arith.constant 0 : index
    %60 = tpu.strided_load %arg18[%c384, %c0_46] {strides = array<i32: 2, 1>} : memref<1024x32xf32, #tpu.memory_space<vmem>>, vector<16x32xf32>
    %c385 = arith.constant 385 : index
    %c0_47 = arith.constant 0 : index
    %61 = tpu.strided_load %arg18[%c385, %c0_47] {strides = array<i32: 2, 1>} : memref<1024x32xf32, #tpu.memory_space<vmem>>, vector<16x32xf32>
    %62 = arith.maximumf %60, %61 : vector<16x32xf32>
    %c416 = arith.constant 416 : index
    %c0_48 = arith.constant 0 : index
    %63 = tpu.strided_load %arg18[%c416, %c0_48] {strides = array<i32: 2, 1>} : memref<1024x32xf32, #tpu.memory_space<vmem>>, vector<16x32xf32>
    %c417 = arith.constant 417 : index
    %c0_49 = arith.constant 0 : index
    %64 = tpu.strided_load %arg18[%c417, %c0_49] {strides = array<i32: 2, 1>} : memref<1024x32xf32, #tpu.memory_space<vmem>>, vector<16x32xf32>
    %65 = arith.maximumf %63, %64 : vector<16x32xf32>
    %66 = arith.maximumf %62, %65 : vector<16x32xf32>
    %c113 = arith.constant 113 : index
    %c0_50 = arith.constant 0 : index
    %67 = vector.load %arg19[%c113, %c0_50] : memref<290x32xf32, #tpu.memory_space<vmem>>, vector<16x32xf32>
    tpu.vector_store %arg19[%c113, %c0_50], %66 {strides = array<i32>} : memref<290x32xf32, #tpu.memory_space<vmem>>, vector<16x32xf32>,
    %c448 = arith.constant 448 : index
    %c0_51 = arith.constant 0 : index
    %68 = tpu.strided_load %arg18[%c448, %c0_51] {strides = array<i32: 2, 1>} : memref<1024x32xf32, #tpu.memory_space<vmem>>, vector<16x32xf32>
    %c449 = arith.constant 449 : index
    %c0_52 = arith.constant 0 : index
    %69 = tpu.strided_load %arg18[%c449, %c0_52] {strides = array<i32: 2, 1>} : memref<1024x32xf32, #tpu.memory_space<vmem>>, vector<16x32xf32>
    %70 = arith.maximumf %68, %69 : vector<16x32xf32>
    %c480 = arith.constant 480 : index
    %c0_53 = arith.constant 0 : index
    %71 = tpu.strided_load %arg18[%c480, %c0_53] {strides = array<i32: 2, 1>} : memref<1024x32xf32, #tpu.memory_space<vmem>>, vector<16x32xf32>
    %c481 = arith.constant 481 : index
    %c0_54 = arith.constant 0 : index
    %72 = tpu.strided_load %arg18[%c481, %c0_54] {strides = array<i32: 2, 1>} : memref<1024x32xf32, #tpu.memory_space<vmem>>, vector<16x32xf32>
    %73 = arith.maximumf %71, %72 : vector<16x32xf32>
    %74 = arith.maximumf %70, %73 : vector<16x32xf32>
    %c129_55 = arith.constant 129 : index
    %c0_56 = arith.constant 0 : index
    %75 = vector.load %arg19[%c129_55, %c0_56] : memref<290x32xf32, #tpu.memory_space<vmem>>, vector<16x32xf32>
    tpu.vector_store %arg19[%c129_55, %c0_56], %74 {strides = array<i32>} : memref<290x32xf32, #tpu.memory_space<vmem>>, vector<16x32xf32>,
    %c512 = arith.constant 512 : index
    %c0_57 = arith.constant 0 : index
    %76 = tpu.strided_load %arg18[%c512, %c0_57] {strides = array<i32: 2, 1>} : memref<1024x32xf32, #tpu.memory_space<vmem>>, vector<16x32xf32>
    %c513 = arith.constant 513 : index
    %c0_58 = arith.constant 0 : index
    %77 = tpu.strided_load %arg18[%c513, %c0_58] {strides = array<i32: 2, 1>} : memref<1024x32xf32, #tpu.memory_space<vmem>>, vector<16x32xf32>
    %78 = arith.maximumf %76, %77 : vector<16x32xf32>
    %c544 = arith.constant 544 : index
    %c0_59 = arith.constant 0 : index
    %79 = tpu.strided_load %arg18[%c544, %c0_59] {strides = array<i32: 2, 1>} : memref<1024x32xf32, #tpu.memory_space<vmem>>, vector<16x32xf32>
    %c545 = arith.constant 545 : index
    %c0_60 = arith.constant 0 : index
    %80 = tpu.strided_load %arg18[%c545, %c0_60] {strides = array<i32: 2, 1>} : memref<1024x32xf32, #tpu.memory_space<vmem>>, vector<16x32xf32>
    %81 = arith.maximumf %79, %80 : vector<16x32xf32>
    %82 = arith.maximumf %78, %81 : vector<16x32xf32>
    %c145 = arith.constant 145 : index
    %c0_61 = arith.constant 0 : index
    %83 = vector.load %arg19[%c145, %c0_61] : memref<290x32xf32, #tpu.memory_space<vmem>>, vector<16x32xf32>
    tpu.vector_store %arg19[%c145, %c0_61], %82 {strides = array<i32>} : memref<290x32xf32, #tpu.memory_space<vmem>>, vector<16x32xf32>,
    %c576 = arith.constant 576 : index
    %c0_62 = arith.constant 0 : index
    %84 = tpu.strided_load %arg18[%c576, %c0_62] {strides = array<i32: 2, 1>} : memref<1024x32xf32, #tpu.memory_space<vmem>>, vector<16x32xf32>
    %c577 = arith.constant 577 : index
    %c0_63 = arith.constant 0 : index
    %85 = tpu.strided_load %arg18[%c577, %c0_63] {strides = array<i32: 2, 1>} : memref<1024x32xf32, #tpu.memory_space<vmem>>, vector<16x32xf32>
    %86 = arith.maximumf %84, %85 : vector<16x32xf32>
    %c608 = arith.constant 608 : index
    %c0_64 = arith.constant 0 : index
    %87 = tpu.strided_load %arg18[%c608, %c0_64] {strides = array<i32: 2, 1>} : memref<1024x32xf32, #tpu.memory_space<vmem>>, vector<16x32xf32>
    %c609 = arith.constant 609 : index
    %c0_65 = arith.constant 0 : index
    %88 = tpu.strided_load %arg18[%c609, %c0_65] {strides = array<i32: 2, 1>} : memref<1024x32xf32, #tpu.memory_space<vmem>>, vector<16x32xf32>
    %89 = arith.maximumf %87, %88 : vector<16x32xf32>
    %90 = arith.maximumf %86, %89 : vector<16x32xf32>
    %c161_66 = arith.constant 161 : index
    %c0_67 = arith.constant 0 : index
    %91 = vector.load %arg19[%c161_66, %c0_67] : memref<290x32xf32, #tpu.memory_space<vmem>>, vector<16x32xf32>
    tpu.vector_store %arg19[%c161_66, %c0_67], %90 {strides = array<i32>} : memref<290x32xf32, #tpu.memory_space<vmem>>, vector<16x32xf32>,
    %c640 = arith.constant 640 : index
    %c0_68 = arith.constant 0 : index
    %92 = tpu.strided_load %arg18[%c640, %c0_68] {strides = array<i32: 2, 1>} : memref<1024x32xf32, #tpu.memory_space<vmem>>, vector<16x32xf32>
    %c641 = arith.constant 641 : index
    %c0_69 = arith.constant 0 : index
    %93 = tpu.strided_load %arg18[%c641, %c0_69] {strides = array<i32: 2, 1>} : memref<1024x32xf32, #tpu.memory_space<vmem>>, vector<16x32xf32>
    %94 = arith.maximumf %92, %93 : vector<16x32xf32>
    %c672 = arith.constant 672 : index
    %c0_70 = arith.constant 0 : index
    %95 = tpu.strided_load %arg18[%c672, %c0_70] {strides = array<i32: 2, 1>} : memref<1024x32xf32, #tpu.memory_space<vmem>>, vector<16x32xf32>
    %c673 = arith.constant 673 : index
    %c0_71 = arith.constant 0 : index
    %96 = tpu.strided_load %arg18[%c673, %c0_71] {strides = array<i32: 2, 1>} : memref<1024x32xf32, #tpu.memory_space<vmem>>, vector<16x32xf32>
    %97 = arith.maximumf %95, %96 : vector<16x32xf32>
    %98 = arith.maximumf %94, %97 : vector<16x32xf32>
    %c177 = arith.constant 177 : index
    %c0_72 = arith.constant 0 : index
    %99 = vector.load %arg19[%c177, %c0_72] : memref<290x32xf32, #tpu.memory_space<vmem>>, vector<16x32xf32>
    tpu.vector_store %arg19[%c177, %c0_72], %98 {strides = array<i32>} : memref<290x32xf32, #tpu.memory_space<vmem>>, vector<16x32xf32>,
    %c704 = arith.constant 704 : index
    %c0_73 = arith.constant 0 : index
    %100 = tpu.strided_load %arg18[%c704, %c0_73] {strides = array<i32: 2, 1>} : memref<1024x32xf32, #tpu.memory_space<vmem>>, vector<16x32xf32>
    %c705 = arith.constant 705 : index
    %c0_74 = arith.constant 0 : index
    %101 = tpu.strided_load %arg18[%c705, %c0_74] {strides = array<i32: 2, 1>} : memref<1024x32xf32, #tpu.memory_space<vmem>>, vector<16x32xf32>
    %102 = arith.maximumf %100, %101 : vector<16x32xf32>
    %c736 = arith.constant 736 : index
    %c0_75 = arith.constant 0 : index
    %103 = tpu.strided_load %arg18[%c736, %c0_75] {strides = array<i32: 2, 1>} : memref<1024x32xf32, #tpu.memory_space<vmem>>, vector<16x32xf32>
    %c737 = arith.constant 737 : index
    %c0_76 = arith.constant 0 : index
    %104 = tpu.strided_load %arg18[%c737, %c0_76] {strides = array<i32: 2, 1>} : memref<1024x32xf32, #tpu.memory_space<vmem>>, vector<16x32xf32>
    %105 = arith.maximumf %103, %104 : vector<16x32xf32>
    %106 = arith.maximumf %102, %105 : vector<16x32xf32>
    %c193_77 = arith.constant 193 : index
    %c0_78 = arith.constant 0 : index
    %107 = vector.load %arg19[%c193_77, %c0_78] : memref<290x32xf32, #tpu.memory_space<vmem>>, vector<16x32xf32>
    tpu.vector_store %arg19[%c193_77, %c0_78], %106 {strides = array<i32>} : memref<290x32xf32, #tpu.memory_space<vmem>>, vector<16x32xf32>,
    %c768 = arith.constant 768 : index
    %c0_79 = arith.constant 0 : index
    %108 = tpu.strided_load %arg18[%c768, %c0_79] {strides = array<i32: 2, 1>} : memref<1024x32xf32, #tpu.memory_space<vmem>>, vector<16x32xf32>
    %c769 = arith.constant 769 : index
    %c0_80 = arith.constant 0 : index
    %109 = tpu.strided_load %arg18[%c769, %c0_80] {strides = array<i32: 2, 1>} : memref<1024x32xf32, #tpu.memory_space<vmem>>, vector<16x32xf32>
    %110 = arith.maximumf %108, %109 : vector<16x32xf32>
    %c800 = arith.constant 800 : index
    %c0_81 = arith.constant 0 : index
    %111 = tpu.strided_load %arg18[%c800, %c0_81] {strides = array<i32: 2, 1>} : memref<1024x32xf32, #tpu.memory_space<vmem>>, vector<16x32xf32>
    %c801 = arith.constant 801 : index
    %c0_82 = arith.constant 0 : index
    %112 = tpu.strided_load %arg18[%c801, %c0_82] {strides = array<i32: 2, 1>} : memref<1024x32xf32, #tpu.memory_space<vmem>>, vector<16x32xf32>
    %113 = arith.maximumf %111, %112 : vector<16x32xf32>
    %114 = arith.maximumf %110, %113 : vector<16x32xf32>
    %c209 = arith.constant 209 : index
    %c0_83 = arith.constant 0 : index
    %115 = vector.load %arg19[%c209, %c0_83] : memref<290x32xf32, #tpu.memory_space<vmem>>, vector<16x32xf32>
    tpu.vector_store %arg19[%c209, %c0_83], %114 {strides = array<i32>} : memref<290x32xf32, #tpu.memory_space<vmem>>, vector<16x32xf32>,
    %c832 = arith.constant 832 : index
    %c0_84 = arith.constant 0 : index
    %116 = tpu.strided_load %arg18[%c832, %c0_84] {strides = array<i32: 2, 1>} : memref<1024x32xf32, #tpu.memory_space<vmem>>, vector<16x32xf32>
    %c833 = arith.constant 833 : index
    %c0_85 = arith.constant 0 : index
    %117 = tpu.strided_load %arg18[%c833, %c0_85] {strides = array<i32: 2, 1>} : memref<1024x32xf32, #tpu.memory_space<vmem>>, vector<16x32xf32>
    %118 = arith.maximumf %116, %117 : vector<16x32xf32>
    %c864 = arith.constant 864 : index
    %c0_86 = arith.constant 0 : index
    %119 = tpu.strided_load %arg18[%c864, %c0_86] {strides = array<i32: 2, 1>} : memref<1024x32xf32, #tpu.memory_space<vmem>>, vector<16x32xf32>
    %c865 = arith.constant 865 : index
    %c0_87 = arith.constant 0 : index
    %120 = tpu.strided_load %arg18[%c865, %c0_87] {strides = array<i32: 2, 1>} : memref<1024x32xf32, #tpu.memory_space<vmem>>, vector<16x32xf32>
    %121 = arith.maximumf %119, %120 : vector<16x32xf32>
    %122 = arith.maximumf %118, %121 : vector<16x32xf32>
    %c225_88 = arith.constant 225 : index
    %c0_89 = arith.constant 0 : index
    %123 = vector.load %arg19[%c225_88, %c0_89] : memref<290x32xf32, #tpu.memory_space<vmem>>, vector<16x32xf32>
    tpu.vector_store %arg19[%c225_88, %c0_89], %122 {strides = array<i32>} : memref<290x32xf32, #tpu.memory_space<vmem>>, vector<16x32xf32>,
    %c896 = arith.constant 896 : index
    %c0_90 = arith.constant 0 : index
    %124 = tpu.strided_load %arg18[%c896, %c0_90] {strides = array<i32: 2, 1>} : memref<1024x32xf32, #tpu.memory_space<vmem>>, vector<16x32xf32>
    %c897 = arith.constant 897 : index
    %c0_91 = arith.constant 0 : index
    %125 = tpu.strided_load %arg18[%c897, %c0_91] {strides = array<i32: 2, 1>} : memref<1024x32xf32, #tpu.memory_space<vmem>>, vector<16x32xf32>
    %126 = arith.maximumf %124, %125 : vector<16x32xf32>
    %c928 = arith.constant 928 : index
    %c0_92 = arith.constant 0 : index
    %127 = tpu.strided_load %arg18[%c928, %c0_92] {strides = array<i32: 2, 1>} : memref<1024x32xf32, #tpu.memory_space<vmem>>, vector<16x32xf32>
    %c929 = arith.constant 929 : index
    %c0_93 = arith.constant 0 : index
    %128 = tpu.strided_load %arg18[%c929, %c0_93] {strides = array<i32: 2, 1>} : memref<1024x32xf32, #tpu.memory_space<vmem>>, vector<16x32xf32>
    %129 = arith.maximumf %127, %128 : vector<16x32xf32>
    %130 = arith.maximumf %126, %129 : vector<16x32xf32>
    %c241 = arith.constant 241 : index
    %c0_94 = arith.constant 0 : index
    %131 = vector.load %arg19[%c241, %c0_94] : memref<290x32xf32, #tpu.memory_space<vmem>>, vector<16x32xf32>
    tpu.vector_store %arg19[%c241, %c0_94], %130 {strides = array<i32>} : memref<290x32xf32, #tpu.memory_space<vmem>>, vector<16x32xf32>,
    %c960 = arith.constant 960 : index
    %c0_95 = arith.constant 0 : index
    %132 = tpu.strided_load %arg18[%c960, %c0_95] {strides = array<i32: 2, 1>} : memref<1024x32xf32, #tpu.memory_space<vmem>>, vector<16x32xf32>
    %c961 = arith.constant 961 : index
    %c0_96 = arith.constant 0 : index
    %133 = tpu.strided_load %arg18[%c961, %c0_96] {strides = array<i32: 2, 1>} : memref<1024x32xf32, #tpu.memory_space<vmem>>, vector<16x32xf32>
    %134 = arith.maximumf %132, %133 : vector<16x32xf32>
    %c992 = arith.constant 992 : index
    %c0_97 = arith.constant 0 : index
    %135 = tpu.strided_load %arg18[%c992, %c0_97] {strides = array<i32: 2, 1>} : memref<1024x32xf32, #tpu.memory_space<vmem>>, vector<16x32xf32>
    %c993 = arith.constant 993 : index
    %c0_98 = arith.constant 0 : index
    %136 = tpu.strided_load %arg18[%c993, %c0_98] {strides = array<i32: 2, 1>} : memref<1024x32xf32, #tpu.memory_space<vmem>>, vector<16x32xf32>
    %137 = arith.maximumf %135, %136 : vector<16x32xf32>
    %138 = arith.maximumf %134, %137 : vector<16x32xf32>
    %c257_99 = arith.constant 257 : index
    %c0_100 = arith.constant 0 : index
    %139 = vector.load %arg19[%c257_99, %c0_100] : memref<290x32xf32, #tpu.memory_space<vmem>>, vector<16x32xf32>
    tpu.vector_store %arg19[%c257_99, %c0_100], %138 {strides = array<i32>} : memref<290x32xf32, #tpu.memory_space<vmem>>, vector<16x32xf32>,
    %140 = tpu.iota {dimensions = array<i32: 0>} : vector<256x1xi32>
    %c16_i32 = arith.constant 16 : i32
    %c0_i32 = arith.constant 0 : i32
    %141 = arith.cmpi eq, %c16_i32, %c0_i32 : i32
    %c1_i32 = arith.constant 1 : i32
    %142 = arith.select %141, %c1_i32, %c16_i32 : i32
    %143 = vector.broadcast %142 : i32 to vector<256x1xi32>
    %144 = arith.remsi %140, %143 : vector<256x1xi32>
    %c0_i32_101 = arith.constant 0 : i32
    %145 = vector.broadcast %c0_i32_101 : i32 to vector<256x1xi32>
    %146 = arith.cmpi ne, %144, %145 : vector<256x1xi32>
    %c0_i32_102 = arith.constant 0 : i32
    %147 = vector.broadcast %c0_i32_102 : i32 to vector<256x1xi32>
    %148 = arith.cmpi slt, %144, %147 : vector<256x1xi32>
    %c0_i32_103 = arith.constant 0 : i32
    %149 = arith.cmpi slt, %142, %c0_i32_103 : i32
    %150 = vector.broadcast %149 : i1 to vector<256x1xi1>
    %151 = vector.broadcast %150 : vector<256x1xi1> to vector<256x1xi1>
    %152 = arith.xori %148, %151 : vector<256x1xi1>
    %153 = arith.andi %152, %146 : vector<256x1xi1>
    %154 = vector.broadcast %142 : i32 to vector<256x1xi32>
    %155 = arith.addi %144, %154 : vector<256x1xi32>
    %156 = arith.select %153, %155, %144 : vector<256x1xi1>, vector<256x1xi32>
    %c0_i32_104 = arith.constant 0 : i32
    %157 = vector.broadcast %c0_i32_104 : i32 to vector<256x1xi32>
    %158 = arith.cmpi sgt, %156, %157 : vector<256x1xi32>
    %c15_i32 = arith.constant 15 : i32
    %159 = vector.broadcast %c15_i32 : i32 to vector<256x1xi32>
    %160 = arith.cmpi slt, %156, %159 : vector<256x1xi32>
    %c0_105 = arith.constant 0 : index
    %c0_106 = arith.constant 0 : index
    %161 = vector.load %arg19[%c0_105, %c0_106] : memref<290x32xf32, #tpu.memory_space<vmem>>, vector<256x32xf32>
    %162 = arith.truncf %161 : vector<256x32xf32> to vector<256x32xbf16>
    %cst_107 = arith.constant 0.000000e+00 : f32
    %163 = arith.truncf %cst_107 : f32 to bf16
    %164 = vector.shape_cast %158 : vector<256x1xi1> to vector<256x1xi1>
    %165 = vector.broadcast %164 : vector<256x1xi1> to vector<256x32xi1>
    %166 = vector.broadcast %163 : bf16 to vector<256x32xbf16>
    %167 = arith.select %165, %162, %166 : vector<256x32xi1>, vector<256x32xbf16>
    %c1_108 = arith.constant 1 : index
    %c0_109 = arith.constant 0 : index
    %168 = vector.load %arg19[%c1_108, %c0_109] : memref<290x32xf32, #tpu.memory_space<vmem>>, vector<256x32xf32>
    %169 = arith.truncf %168 : vector<256x32xf32> to vector<256x32xbf16>
    %c2 = arith.constant 2 : index
    %c0_110 = arith.constant 0 : index
    %170 = vector.load %arg19[%c2, %c0_110] : memref<290x32xf32, #tpu.memory_space<vmem>>, vector<256x32xf32>
    %171 = arith.truncf %170 : vector<256x32xf32> to vector<256x32xbf16>
    %cst_111 = arith.constant 0.000000e+00 : f32
    %172 = arith.truncf %cst_111 : f32 to bf16
    %173 = vector.shape_cast %160 : vector<256x1xi1> to vector<256x1xi1>
    %174 = vector.broadcast %173 : vector<256x1xi1> to vector<256x32xi1>
    %175 = vector.broadcast %172 : bf16 to vector<256x32xbf16>
    %176 = arith.select %174, %171, %175 : vector<256x32xi1>, vector<256x32xbf16>
    %c16 = arith.constant 16 : index
    %c0_112 = arith.constant 0 : index
    %177 = vector.load %arg19[%c16, %c0_112] : memref<290x32xf32, #tpu.memory_space<vmem>>, vector<256x32xf32>
    %178 = arith.truncf %177 : vector<256x32xf32> to vector<256x32xbf16>
    %cst_113 = arith.constant 0.000000e+00 : f32
    %179 = arith.truncf %cst_113 : f32 to bf16
    %180 = vector.shape_cast %158 : vector<256x1xi1> to vector<256x1xi1>
    %181 = vector.broadcast %180 : vector<256x1xi1> to vector<256x32xi1>
    %182 = vector.broadcast %179 : bf16 to vector<256x32xbf16>
    %183 = arith.select %181, %178, %182 : vector<256x32xi1>, vector<256x32xbf16>
    %c17_114 = arith.constant 17 : index
    %c0_115 = arith.constant 0 : index
    %184 = vector.load %arg19[%c17_114, %c0_115] : memref<290x32xf32, #tpu.memory_space<vmem>>, vector<256x32xf32>
    %185 = arith.truncf %184 : vector<256x32xf32> to vector<256x32xbf16>
    %c18 = arith.constant 18 : index
    %c0_116 = arith.constant 0 : index
    %186 = vector.load %arg19[%c18, %c0_116] : memref<290x32xf32, #tpu.memory_space<vmem>>, vector<256x32xf32>
    %187 = arith.truncf %186 : vector<256x32xf32> to vector<256x32xbf16>
    %cst_117 = arith.constant 0.000000e+00 : f32
    %188 = arith.truncf %cst_117 : f32 to bf16
    %189 = vector.shape_cast %160 : vector<256x1xi1> to vector<256x1xi1>
    %190 = vector.broadcast %189 : vector<256x1xi1> to vector<256x32xi1>
    %191 = vector.broadcast %188 : bf16 to vector<256x32xbf16>
    %192 = arith.select %190, %187, %191 : vector<256x32xi1>, vector<256x32xbf16>
    %c32_118 = arith.constant 32 : index
    %c0_119 = arith.constant 0 : index
    %193 = vector.load %arg19[%c32_118, %c0_119] : memref<290x32xf32, #tpu.memory_space<vmem>>, vector<256x32xf32>
    %194 = arith.truncf %193 : vector<256x32xf32> to vector<256x32xbf16>
    %cst_120 = arith.constant 0.000000e+00 : f32
    %195 = arith.truncf %cst_120 : f32 to bf16
    %196 = vector.shape_cast %158 : vector<256x1xi1> to vector<256x1xi1>
    %197 = vector.broadcast %196 : vector<256x1xi1> to vector<256x32xi1>
    %198 = vector.broadcast %195 : bf16 to vector<256x32xbf16>
    %199 = arith.select %197, %194, %198 : vector<256x32xi1>, vector<256x32xbf16>
    %c33_121 = arith.constant 33 : index
    %c0_122 = arith.constant 0 : index
    %200 = vector.load %arg19[%c33_121, %c0_122] : memref<290x32xf32, #tpu.memory_space<vmem>>, vector<256x32xf32>
    %201 = arith.truncf %200 : vector<256x32xf32> to vector<256x32xbf16>
    %c34 = arith.constant 34 : index
    %c0_123 = arith.constant 0 : index
    %202 = vector.load %arg19[%c34, %c0_123] : memref<290x32xf32, #tpu.memory_space<vmem>>, vector<256x32xf32>
    %203 = arith.truncf %202 : vector<256x32xf32> to vector<256x32xbf16>
    %cst_124 = arith.constant 0.000000e+00 : f32
    %204 = arith.truncf %cst_124 : f32 to bf16
    %205 = vector.shape_cast %160 : vector<256x1xi1> to vector<256x1xi1>
    %206 = vector.broadcast %205 : vector<256x1xi1> to vector<256x32xi1>
    %207 = vector.broadcast %204 : bf16 to vector<256x32xbf16>
    %208 = arith.select %206, %203, %207 : vector<256x32xi1>, vector<256x32xbf16>
    %209 = tpu.concatenate %167, %169, %176, %183, %185, %192, %199, %201, %208 in 1 : vector<256x32xbf16>, vector<256x32xbf16>, vector<256x32xbf16>, vector<256x32xbf16>, vector<256x32xbf16>, vector<256x32xbf16>, vector<256x32xbf16>, vector<256x32xbf16>, vector<256x32xbf16> -> vector<256x288xbf16>
    %c0_125 = arith.constant 0 : index
    %c0_126 = arith.constant 0 : index
    %210 = vector.load %arg4[%c0_125, %c0_126] : memref<288x32xbf16, #tpu.memory_space<vmem>>, vector<288x32xbf16>
    %cst_127 = arith.constant dense<0.000000e+00> : vector<256x32xf32>
    %211 = tpu.matmul %209, %210, %cst_127 {dimension_numbers = #tpu.dot_dimension_numbers<[1], [0], [0], [1], [0, 0, 1, 1], [], []>} : vector<256x288xbf16>, vector<288x32xbf16>, vector<256x32xf32> -> vector<256x32xf32>
    %c0_128 = arith.constant 0 : index
    %c0_129 = arith.constant 0 : index
    %212 = vector.load %arg5[%c0_128, %c0_129] : memref<1x32xf32, #tpu.memory_space<vmem>>, vector<1x32xf32>
    %213 = vector.broadcast %212 : vector<1x32xf32> to vector<256x32xf32>
    %214 = arith.addf %211, %213 : vector<256x32xf32>
    %cst_130 = arith.constant 0.000000e+00 : f32
    %215 = vector.broadcast %cst_130 : f32 to vector<256x32xf32>
    %216 = arith.maximumf %214, %215 : vector<256x32xf32>
    %c0_131 = arith.constant 0 : index
    %c0_132 = arith.constant 0 : index
    %217 = vector.load %arg18[%c0_131, %c0_132] : memref<1024x32xf32, #tpu.memory_space<vmem>>, vector<256x32xf32>
    tpu.vector_store %arg18[%c0_131, %c0_132], %216 {strides = array<i32>} : memref<1024x32xf32, #tpu.memory_space<vmem>>, vector<256x32xf32>,
    %cst_133 = arith.constant 0.000000e+00 : f32
    %218 = vector.broadcast %cst_133 : f32 to vector<82x32xf32>
    %c0_134 = arith.constant 0 : index
    %c0_135 = arith.constant 0 : index
    %219 = vector.load %arg20[%c0_134, %c0_135] : memref<82x32xf32, #tpu.memory_space<vmem>>, vector<82x32xf32>
    tpu.vector_store %arg20[%c0_134, %c0_135], %218 {strides = array<i32>} : memref<82x32xf32, #tpu.memory_space<vmem>>, vector<82x32xf32>,
    %c0_136 = arith.constant 0 : index
    %c0_137 = arith.constant 0 : index
    %220 = tpu.strided_load %arg18[%c0_136, %c0_137] {strides = array<i32: 2, 1>} : memref<1024x32xf32, #tpu.memory_space<vmem>>, vector<8x32xf32>
    %c1_138 = arith.constant 1 : index
    %c0_139 = arith.constant 0 : index
    %221 = tpu.strided_load %arg18[%c1_138, %c0_139] {strides = array<i32: 2, 1>} : memref<1024x32xf32, #tpu.memory_space<vmem>>, vector<8x32xf32>
    %222 = arith.maximumf %220, %221 : vector<8x32xf32>
    %c16_140 = arith.constant 16 : index
    %c0_141 = arith.constant 0 : index
    %223 = tpu.strided_load %arg18[%c16_140, %c0_141] {strides = array<i32: 2, 1>} : memref<1024x32xf32, #tpu.memory_space<vmem>>, vector<8x32xf32>
    %c17_142 = arith.constant 17 : index
    %c0_143 = arith.constant 0 : index
    %224 = tpu.strided_load %arg18[%c17_142, %c0_143] {strides = array<i32: 2, 1>} : memref<1024x32xf32, #tpu.memory_space<vmem>>, vector<8x32xf32>
    %225 = arith.maximumf %223, %224 : vector<8x32xf32>
    %226 = arith.maximumf %222, %225 : vector<8x32xf32>
    %c9 = arith.constant 9 : index
    %c0_144 = arith.constant 0 : index
    %227 = vector.load %arg20[%c9, %c0_144] : memref<82x32xf32, #tpu.memory_space<vmem>>, vector<8x32xf32>
    tpu.vector_store %arg20[%c9, %c0_144], %226 {strides = array<i32>} : memref<82x32xf32, #tpu.memory_space<vmem>>, vector<8x32xf32>,
    %c32_145 = arith.constant 32 : index
    %c0_146 = arith.constant 0 : index
    %228 = tpu.strided_load %arg18[%c32_145, %c0_146] {strides = array<i32: 2, 1>} : memref<1024x32xf32, #tpu.memory_space<vmem>>, vector<8x32xf32>
    %c33_147 = arith.constant 33 : index
    %c0_148 = arith.constant 0 : index
    %229 = tpu.strided_load %arg18[%c33_147, %c0_148] {strides = array<i32: 2, 1>} : memref<1024x32xf32, #tpu.memory_space<vmem>>, vector<8x32xf32>
    %230 = arith.maximumf %228, %229 : vector<8x32xf32>
    %c48 = arith.constant 48 : index
    %c0_149 = arith.constant 0 : index
    %231 = tpu.strided_load %arg18[%c48, %c0_149] {strides = array<i32: 2, 1>} : memref<1024x32xf32, #tpu.memory_space<vmem>>, vector<8x32xf32>
    %c49_150 = arith.constant 49 : index
    %c0_151 = arith.constant 0 : index
    %232 = tpu.strided_load %arg18[%c49_150, %c0_151] {strides = array<i32: 2, 1>} : memref<1024x32xf32, #tpu.memory_space<vmem>>, vector<8x32xf32>
    %233 = arith.maximumf %231, %232 : vector<8x32xf32>
    %234 = arith.maximumf %230, %233 : vector<8x32xf32>
    %c17_152 = arith.constant 17 : index
    %c0_153 = arith.constant 0 : index
    %235 = vector.load %arg20[%c17_152, %c0_153] : memref<82x32xf32, #tpu.memory_space<vmem>>, vector<8x32xf32>
    tpu.vector_store %arg20[%c17_152, %c0_153], %234 {strides = array<i32>} : memref<82x32xf32, #tpu.memory_space<vmem>>, vector<8x32xf32>,
    %c64_154 = arith.constant 64 : index
    %c0_155 = arith.constant 0 : index
    %236 = tpu.strided_load %arg18[%c64_154, %c0_155] {strides = array<i32: 2, 1>} : memref<1024x32xf32, #tpu.memory_space<vmem>>, vector<8x32xf32>
    %c65_156 = arith.constant 65 : index
    %c0_157 = arith.constant 0 : index
    %237 = tpu.strided_load %arg18[%c65_156, %c0_157] {strides = array<i32: 2, 1>} : memref<1024x32xf32, #tpu.memory_space<vmem>>, vector<8x32xf32>
    %238 = arith.maximumf %236, %237 : vector<8x32xf32>
    %c80 = arith.constant 80 : index
    %c0_158 = arith.constant 0 : index
    %239 = tpu.strided_load %arg18[%c80, %c0_158] {strides = array<i32: 2, 1>} : memref<1024x32xf32, #tpu.memory_space<vmem>>, vector<8x32xf32>
    %c81_159 = arith.constant 81 : index
    %c0_160 = arith.constant 0 : index
    %240 = tpu.strided_load %arg18[%c81_159, %c0_160] {strides = array<i32: 2, 1>} : memref<1024x32xf32, #tpu.memory_space<vmem>>, vector<8x32xf32>
    %241 = arith.maximumf %239, %240 : vector<8x32xf32>
    %242 = arith.maximumf %238, %241 : vector<8x32xf32>
    %c25 = arith.constant 25 : index
    %c0_161 = arith.constant 0 : index
    %243 = vector.load %arg20[%c25, %c0_161] : memref<82x32xf32, #tpu.memory_space<vmem>>, vector<8x32xf32>
    tpu.vector_store %arg20[%c25, %c0_161], %242 {strides = array<i32>} : memref<82x32xf32, #tpu.memory_space<vmem>>, vector<8x32xf32>,
    %c96_162 = arith.constant 96 : index
    %c0_163 = arith.constant 0 : index
    %244 = tpu.strided_load %arg18[%c96_162, %c0_163] {strides = array<i32: 2, 1>} : memref<1024x32xf32, #tpu.memory_space<vmem>>, vector<8x32xf32>
    %c97_164 = arith.constant 97 : index
    %c0_165 = arith.constant 0 : index
    %245 = tpu.strided_load %arg18[%c97_164, %c0_165] {strides = array<i32: 2, 1>} : memref<1024x32xf32, #tpu.memory_space<vmem>>, vector<8x32xf32>
    %246 = arith.maximumf %244, %245 : vector<8x32xf32>
    %c112 = arith.constant 112 : index
    %c0_166 = arith.constant 0 : index
    %247 = tpu.strided_load %arg18[%c112, %c0_166] {strides = array<i32: 2, 1>} : memref<1024x32xf32, #tpu.memory_space<vmem>>, vector<8x32xf32>
    %c113_167 = arith.constant 113 : index
    %c0_168 = arith.constant 0 : index
    %248 = tpu.strided_load %arg18[%c113_167, %c0_168] {strides = array<i32: 2, 1>} : memref<1024x32xf32, #tpu.memory_space<vmem>>, vector<8x32xf32>
    %249 = arith.maximumf %247, %248 : vector<8x32xf32>
    %250 = arith.maximumf %246, %249 : vector<8x32xf32>
    %c33_169 = arith.constant 33 : index
    %c0_170 = arith.constant 0 : index
    %251 = vector.load %arg20[%c33_169, %c0_170] : memref<82x32xf32, #tpu.memory_space<vmem>>, vector<8x32xf32>
    tpu.vector_store %arg20[%c33_169, %c0_170], %250 {strides = array<i32>} : memref<82x32xf32, #tpu.memory_space<vmem>>, vector<8x32xf32>,
    %c128_171 = arith.constant 128 : index
    %c0_172 = arith.constant 0 : index
    %252 = tpu.strided_load %arg18[%c128_171, %c0_172] {strides = array<i32: 2, 1>} : memref<1024x32xf32, #tpu.memory_space<vmem>>, vector<8x32xf32>
    %c129_173 = arith.constant 129 : index
    %c0_174 = arith.constant 0 : index
    %253 = tpu.strided_load %arg18[%c129_173, %c0_174] {strides = array<i32: 2, 1>} : memref<1024x32xf32, #tpu.memory_space<vmem>>, vector<8x32xf32>
    %254 = arith.maximumf %252, %253 : vector<8x32xf32>
    %c144 = arith.constant 144 : index
    %c0_175 = arith.constant 0 : index
    %255 = tpu.strided_load %arg18[%c144, %c0_175] {strides = array<i32: 2, 1>} : memref<1024x32xf32, #tpu.memory_space<vmem>>, vector<8x32xf32>
    %c145_176 = arith.constant 145 : index
    %c0_177 = arith.constant 0 : index
    %256 = tpu.strided_load %arg18[%c145_176, %c0_177] {strides = array<i32: 2, 1>} : memref<1024x32xf32, #tpu.memory_space<vmem>>, vector<8x32xf32>
    %257 = arith.maximumf %255, %256 : vector<8x32xf32>
    %258 = arith.maximumf %254, %257 : vector<8x32xf32>
    %c41 = arith.constant 41 : index
    %c0_178 = arith.constant 0 : index
    %259 = vector.load %arg20[%c41, %c0_178] : memref<82x32xf32, #tpu.memory_space<vmem>>, vector<8x32xf32>
    tpu.vector_store %arg20[%c41, %c0_178], %258 {strides = array<i32>} : memref<82x32xf32, #tpu.memory_space<vmem>>, vector<8x32xf32>,
    %c160_179 = arith.constant 160 : index
    %c0_180 = arith.constant 0 : index
    %260 = tpu.strided_load %arg18[%c160_179, %c0_180] {strides = array<i32: 2, 1>} : memref<1024x32xf32, #tpu.memory_space<vmem>>, vector<8x32xf32>
    %c161_181 = arith.constant 161 : index
    %c0_182 = arith.constant 0 : index
    %261 = tpu.strided_load %arg18[%c161_181, %c0_182] {strides = array<i32: 2, 1>} : memref<1024x32xf32, #tpu.memory_space<vmem>>, vector<8x32xf32>
    %262 = arith.maximumf %260, %261 : vector<8x32xf32>
    %c176 = arith.constant 176 : index
    %c0_183 = arith.constant 0 : index
    %263 = tpu.strided_load %arg18[%c176, %c0_183] {strides = array<i32: 2, 1>} : memref<1024x32xf32, #tpu.memory_space<vmem>>, vector<8x32xf32>
    %c177_184 = arith.constant 177 : index
    %c0_185 = arith.constant 0 : index
    %264 = tpu.strided_load %arg18[%c177_184, %c0_185] {strides = array<i32: 2, 1>} : memref<1024x32xf32, #tpu.memory_space<vmem>>, vector<8x32xf32>
    %265 = arith.maximumf %263, %264 : vector<8x32xf32>
    %266 = arith.maximumf %262, %265 : vector<8x32xf32>
    %c49_186 = arith.constant 49 : index
    %c0_187 = arith.constant 0 : index
    %267 = vector.load %arg20[%c49_186, %c0_187] : memref<82x32xf32, #tpu.memory_space<vmem>>, vector<8x32xf32>
    tpu.vector_store %arg20[%c49_186, %c0_187], %266 {strides = array<i32>} : memref<82x32xf32, #tpu.memory_space<vmem>>, vector<8x32xf32>,
    %c192_188 = arith.constant 192 : index
    %c0_189 = arith.constant 0 : index
    %268 = tpu.strided_load %arg18[%c192_188, %c0_189] {strides = array<i32: 2, 1>} : memref<1024x32xf32, #tpu.memory_space<vmem>>, vector<8x32xf32>
    %c193_190 = arith.constant 193 : index
    %c0_191 = arith.constant 0 : index
    %269 = tpu.strided_load %arg18[%c193_190, %c0_191] {strides = array<i32: 2, 1>} : memref<1024x32xf32, #tpu.memory_space<vmem>>, vector<8x32xf32>
    %270 = arith.maximumf %268, %269 : vector<8x32xf32>
    %c208 = arith.constant 208 : index
    %c0_192 = arith.constant 0 : index
    %271 = tpu.strided_load %arg18[%c208, %c0_192] {strides = array<i32: 2, 1>} : memref<1024x32xf32, #tpu.memory_space<vmem>>, vector<8x32xf32>
    %c209_193 = arith.constant 209 : index
    %c0_194 = arith.constant 0 : index
    %272 = tpu.strided_load %arg18[%c209_193, %c0_194] {strides = array<i32: 2, 1>} : memref<1024x32xf32, #tpu.memory_space<vmem>>, vector<8x32xf32>
    %273 = arith.maximumf %271, %272 : vector<8x32xf32>
    %274 = arith.maximumf %270, %273 : vector<8x32xf32>
    %c57 = arith.constant 57 : index
    %c0_195 = arith.constant 0 : index
    %275 = vector.load %arg20[%c57, %c0_195] : memref<82x32xf32, #tpu.memory_space<vmem>>, vector<8x32xf32>
    tpu.vector_store %arg20[%c57, %c0_195], %274 {strides = array<i32>} : memref<82x32xf32, #tpu.memory_space<vmem>>, vector<8x32xf32>,
    %c224_196 = arith.constant 224 : index
    %c0_197 = arith.constant 0 : index
    %276 = tpu.strided_load %arg18[%c224_196, %c0_197] {strides = array<i32: 2, 1>} : memref<1024x32xf32, #tpu.memory_space<vmem>>, vector<8x32xf32>
    %c225_198 = arith.constant 225 : index
    %c0_199 = arith.constant 0 : index
    %277 = tpu.strided_load %arg18[%c225_198, %c0_199] {strides = array<i32: 2, 1>} : memref<1024x32xf32, #tpu.memory_space<vmem>>, vector<8x32xf32>
    %278 = arith.maximumf %276, %277 : vector<8x32xf32>
    %c240 = arith.constant 240 : index
    %c0_200 = arith.constant 0 : index
    %279 = tpu.strided_load %arg18[%c240, %c0_200] {strides = array<i32: 2, 1>} : memref<1024x32xf32, #tpu.memory_space<vmem>>, vector<8x32xf32>
    %c241_201 = arith.constant 241 : index
    %c0_202 = arith.constant 0 : index
    %280 = tpu.strided_load %arg18[%c241_201, %c0_202] {strides = array<i32: 2, 1>} : memref<1024x32xf32, #tpu.memory_space<vmem>>, vector<8x32xf32>
    %281 = arith.maximumf %279, %280 : vector<8x32xf32>
    %282 = arith.maximumf %278, %281 : vector<8x32xf32>
    %c65_203 = arith.constant 65 : index
    %c0_204 = arith.constant 0 : index
    %283 = vector.load %arg20[%c65_203, %c0_204] : memref<82x32xf32, #tpu.memory_space<vmem>>, vector<8x32xf32>
    tpu.vector_store %arg20[%c65_203, %c0_204], %282 {strides = array<i32>} : memref<82x32xf32, #tpu.memory_space<vmem>>, vector<8x32xf32>,
    %284 = tpu.iota {dimensions = array<i32: 0>} : vector<64x1xi32>
    %c8_i32 = arith.constant 8 : i32
    %c0_i32_205 = arith.constant 0 : i32
    %285 = arith.cmpi eq, %c8_i32, %c0_i32_205 : i32
    %c1_i32_206 = arith.constant 1 : i32
    %286 = arith.select %285, %c1_i32_206, %c8_i32 : i32
    %287 = vector.broadcast %286 : i32 to vector<64x1xi32>
    %288 = arith.remsi %284, %287 : vector<64x1xi32>
    %c0_i32_207 = arith.constant 0 : i32
    %289 = vector.broadcast %c0_i32_207 : i32 to vector<64x1xi32>
    %290 = arith.cmpi ne, %288, %289 : vector<64x1xi32>
    %c0_i32_208 = arith.constant 0 : i32
    %291 = vector.broadcast %c0_i32_208 : i32 to vector<64x1xi32>
    %292 = arith.cmpi slt, %288, %291 : vector<64x1xi32>
    %c0_i32_209 = arith.constant 0 : i32
    %293 = arith.cmpi slt, %286, %c0_i32_209 : i32
    %294 = vector.broadcast %293 : i1 to vector<64x1xi1>
    %295 = vector.broadcast %294 : vector<64x1xi1> to vector<64x1xi1>
    %296 = arith.xori %292, %295 : vector<64x1xi1>
    %297 = arith.andi %296, %290 : vector<64x1xi1>
    %298 = vector.broadcast %286 : i32 to vector<64x1xi32>
    %299 = arith.addi %288, %298 : vector<64x1xi32>
    %300 = arith.select %297, %299, %288 : vector<64x1xi1>, vector<64x1xi32>
    %c0_i32_210 = arith.constant 0 : i32
    %301 = vector.broadcast %c0_i32_210 : i32 to vector<64x1xi32>
    %302 = arith.cmpi sgt, %300, %301 : vector<64x1xi32>
    %c7_i32 = arith.constant 7 : i32
    %303 = vector.broadcast %c7_i32 : i32 to vector<64x1xi32>
    %304 = arith.cmpi slt, %300, %303 : vector<64x1xi32>
    %c0_211 = arith.constant 0 : index
    %c0_212 = arith.constant 0 : index
    %305 = vector.load %arg20[%c0_211, %c0_212] : memref<82x32xf32, #tpu.memory_space<vmem>>, vector<64x32xf32>
    %306 = arith.truncf %305 : vector<64x32xf32> to vector<64x32xbf16>
    %cst_213 = arith.constant 0.000000e+00 : f32
    %307 = arith.truncf %cst_213 : f32 to bf16
    %308 = vector.shape_cast %302 : vector<64x1xi1> to vector<64x1xi1>
    %309 = vector.broadcast %308 : vector<64x1xi1> to vector<64x32xi1>
    %310 = vector.broadcast %307 : bf16 to vector<64x32xbf16>
    %311 = arith.select %309, %306, %310 : vector<64x32xi1>, vector<64x32xbf16>
    %c1_214 = arith.constant 1 : index
    %c0_215 = arith.constant 0 : index
    %312 = vector.load %arg20[%c1_214, %c0_215] : memref<82x32xf32, #tpu.memory_space<vmem>>, vector<64x32xf32>
    %313 = arith.truncf %312 : vector<64x32xf32> to vector<64x32xbf16>
    %c2_216 = arith.constant 2 : index
    %c0_217 = arith.constant 0 : index
    %314 = vector.load %arg20[%c2_216, %c0_217] : memref<82x32xf32, #tpu.memory_space<vmem>>, vector<64x32xf32>
    %315 = arith.truncf %314 : vector<64x32xf32> to vector<64x32xbf16>
    %cst_218 = arith.constant 0.000000e+00 : f32
    %316 = arith.truncf %cst_218 : f32 to bf16
    %317 = vector.shape_cast %304 : vector<64x1xi1> to vector<64x1xi1>
    %318 = vector.broadcast %317 : vector<64x1xi1> to vector<64x32xi1>
    %319 = vector.broadcast %316 : bf16 to vector<64x32xbf16>
    %320 = arith.select %318, %315, %319 : vector<64x32xi1>, vector<64x32xbf16>
    %c8 = arith.constant 8 : index
    %c0_219 = arith.constant 0 : index
    %321 = vector.load %arg20[%c8, %c0_219] : memref<82x32xf32, #tpu.memory_space<vmem>>, vector<64x32xf32>
    %322 = arith.truncf %321 : vector<64x32xf32> to vector<64x32xbf16>
    %cst_220 = arith.constant 0.000000e+00 : f32
    %323 = arith.truncf %cst_220 : f32 to bf16
    %324 = vector.shape_cast %302 : vector<64x1xi1> to vector<64x1xi1>
    %325 = vector.broadcast %324 : vector<64x1xi1> to vector<64x32xi1>
    %326 = vector.broadcast %323 : bf16 to vector<64x32xbf16>
    %327 = arith.select %325, %322, %326 : vector<64x32xi1>, vector<64x32xbf16>
    %c9_221 = arith.constant 9 : index
    %c0_222 = arith.constant 0 : index
    %328 = vector.load %arg20[%c9_221, %c0_222] : memref<82x32xf32, #tpu.memory_space<vmem>>, vector<64x32xf32>
    %329 = arith.truncf %328 : vector<64x32xf32> to vector<64x32xbf16>
    %c10 = arith.constant 10 : index
    %c0_223 = arith.constant 0 : index
    %330 = vector.load %arg20[%c10, %c0_223] : memref<82x32xf32, #tpu.memory_space<vmem>>, vector<64x32xf32>
    %331 = arith.truncf %330 : vector<64x32xf32> to vector<64x32xbf16>
    %cst_224 = arith.constant 0.000000e+00 : f32
    %332 = arith.truncf %cst_224 : f32 to bf16
    %333 = vector.shape_cast %304 : vector<64x1xi1> to vector<64x1xi1>
    %334 = vector.broadcast %333 : vector<64x1xi1> to vector<64x32xi1>
    %335 = vector.broadcast %332 : bf16 to vector<64x32xbf16>
    %336 = arith.select %334, %331, %335 : vector<64x32xi1>, vector<64x32xbf16>
    %c16_225 = arith.constant 16 : index
    %c0_226 = arith.constant 0 : index
    %337 = vector.load %arg20[%c16_225, %c0_226] : memref<82x32xf32, #tpu.memory_space<vmem>>, vector<64x32xf32>
    %338 = arith.truncf %337 : vector<64x32xf32> to vector<64x32xbf16>
    %cst_227 = arith.constant 0.000000e+00 : f32
    %339 = arith.truncf %cst_227 : f32 to bf16
    %340 = vector.shape_cast %302 : vector<64x1xi1> to vector<64x1xi1>
    %341 = vector.broadcast %340 : vector<64x1xi1> to vector<64x32xi1>
    %342 = vector.broadcast %339 : bf16 to vector<64x32xbf16>
    %343 = arith.select %341, %338, %342 : vector<64x32xi1>, vector<64x32xbf16>
    %c17_228 = arith.constant 17 : index
    %c0_229 = arith.constant 0 : index
    %344 = vector.load %arg20[%c17_228, %c0_229] : memref<82x32xf32, #tpu.memory_space<vmem>>, vector<64x32xf32>
    %345 = arith.truncf %344 : vector<64x32xf32> to vector<64x32xbf16>
    %c18_230 = arith.constant 18 : index
    %c0_231 = arith.constant 0 : index
    %346 = vector.load %arg20[%c18_230, %c0_231] : memref<82x32xf32, #tpu.memory_space<vmem>>, vector<64x32xf32>
    %347 = arith.truncf %346 : vector<64x32xf32> to vector<64x32xbf16>
    %cst_232 = arith.constant 0.000000e+00 : f32
    %348 = arith.truncf %cst_232 : f32 to bf16
    %349 = vector.shape_cast %304 : vector<64x1xi1> to vector<64x1xi1>
    %350 = vector.broadcast %349 : vector<64x1xi1> to vector<64x32xi1>
    %351 = vector.broadcast %348 : bf16 to vector<64x32xbf16>
    %352 = arith.select %350, %347, %351 : vector<64x32xi1>, vector<64x32xbf16>
    %353 = tpu.concatenate %311, %313, %320, %327, %329, %336, %343, %345, %352 in 1 : vector<64x32xbf16>, vector<64x32xbf16>, vector<64x32xbf16>, vector<64x32xbf16>, vector<64x32xbf16>, vector<64x32xbf16>, vector<64x32xbf16>, vector<64x32xbf16>, vector<64x32xbf16> -> vector<64x288xbf16>
    %c0_233 = arith.constant 0 : index
    %c0_234 = arith.constant 0 : index
    %354 = vector.load %arg6[%c0_233, %c0_234] : memref<288x32xbf16, #tpu.memory_space<vmem>>, vector<288x32xbf16>
    %cst_235 = arith.constant dense<0.000000e+00> : vector<64x32xf32>
    %355 = tpu.matmul %353, %354, %cst_235 {dimension_numbers = #tpu.dot_dimension_numbers<[1], [0], [0], [1], [0, 0, 1, 1], [], []>} : vector<64x288xbf16>, vector<288x32xbf16>, vector<64x32xf32> -> vector<64x32xf32>
    %c0_236 = arith.constant 0 : index
    %c0_237 = arith.constant 0 : index
    %356 = vector.load %arg7[%c0_236, %c0_237] : memref<1x32xf32, #tpu.memory_space<vmem>>, vector<1x32xf32>
    %357 = vector.broadcast %356 : vector<1x32xf32> to vector<64x32xf32>
    %358 = arith.addf %355, %357 : vector<64x32xf32>
    %cst_238 = arith.constant 0.000000e+00 : f32
    %359 = vector.broadcast %cst_238 : f32 to vector<64x32xf32>
    %360 = arith.maximumf %358, %359 : vector<64x32xf32>
    %c0_239 = arith.constant 0 : index
    %c0_240 = arith.constant 0 : index
    %361 = vector.load %arg18[%c0_239, %c0_240] : memref<1024x32xf32, #tpu.memory_space<vmem>>, vector<64x32xf32>
    tpu.vector_store %arg18[%c0_239, %c0_240], %360 {strides = array<i32>} : memref<1024x32xf32, #tpu.memory_space<vmem>>, vector<64x32xf32>,
    %cst_241 = arith.constant 0.000000e+00 : f32
    %362 = vector.broadcast %cst_241 : f32 to vector<26x32xf32>
    %c0_242 = arith.constant 0 : index
    %c0_243 = arith.constant 0 : index
    %363 = vector.load %arg21[%c0_242, %c0_243] : memref<26x32xf32, #tpu.memory_space<vmem>>, vector<26x32xf32>
    tpu.vector_store %arg21[%c0_242, %c0_243], %362 {strides = array<i32>} : memref<26x32xf32, #tpu.memory_space<vmem>>, vector<26x32xf32>,
    %c0_244 = arith.constant 0 : index
    %c0_245 = arith.constant 0 : index
    %364 = tpu.strided_load %arg18[%c0_244, %c0_245] {strides = array<i32: 2, 1>} : memref<1024x32xf32, #tpu.memory_space<vmem>>, vector<4x32xf32>
    %c1_246 = arith.constant 1 : index
    %c0_247 = arith.constant 0 : index
    %365 = tpu.strided_load %arg18[%c1_246, %c0_247] {strides = array<i32: 2, 1>} : memref<1024x32xf32, #tpu.memory_space<vmem>>, vector<4x32xf32>
    %366 = arith.maximumf %364, %365 : vector<4x32xf32>
    %c8_248 = arith.constant 8 : index
    %c0_249 = arith.constant 0 : index
    %367 = tpu.strided_load %arg18[%c8_248, %c0_249] {strides = array<i32: 2, 1>} : memref<1024x32xf32, #tpu.memory_space<vmem>>, vector<4x32xf32>
    %c9_250 = arith.constant 9 : index
    %c0_251 = arith.constant 0 : index
    %368 = tpu.strided_load %arg18[%c9_250, %c0_251] {strides = array<i32: 2, 1>} : memref<1024x32xf32, #tpu.memory_space<vmem>>, vector<4x32xf32>
    %369 = arith.maximumf %367, %368 : vector<4x32xf32>
    %370 = arith.maximumf %366, %369 : vector<4x32xf32>
    %c5 = arith.constant 5 : index
    %c0_252 = arith.constant 0 : index
    %371 = vector.load %arg21[%c5, %c0_252] : memref<26x32xf32, #tpu.memory_space<vmem>>, vector<4x32xf32>
    tpu.vector_store %arg21[%c5, %c0_252], %370 {strides = array<i32>} : memref<26x32xf32, #tpu.memory_space<vmem>>, vector<4x32xf32>,
    %c16_253 = arith.constant 16 : index
    %c0_254 = arith.constant 0 : index
    %372 = tpu.strided_load %arg18[%c16_253, %c0_254] {strides = array<i32: 2, 1>} : memref<1024x32xf32, #tpu.memory_space<vmem>>, vector<4x32xf32>
    %c17_255 = arith.constant 17 : index
    %c0_256 = arith.constant 0 : index
    %373 = tpu.strided_load %arg18[%c17_255, %c0_256] {strides = array<i32: 2, 1>} : memref<1024x32xf32, #tpu.memory_space<vmem>>, vector<4x32xf32>
    %374 = arith.maximumf %372, %373 : vector<4x32xf32>
    %c24 = arith.constant 24 : index
    %c0_257 = arith.constant 0 : index
    %375 = tpu.strided_load %arg18[%c24, %c0_257] {strides = array<i32: 2, 1>} : memref<1024x32xf32, #tpu.memory_space<vmem>>, vector<4x32xf32>
    %c25_258 = arith.constant 25 : index
    %c0_259 = arith.constant 0 : index
    %376 = tpu.strided_load %arg18[%c25_258, %c0_259] {strides = array<i32: 2, 1>} : memref<1024x32xf32, #tpu.memory_space<vmem>>, vector<4x32xf32>
    %377 = arith.maximumf %375, %376 : vector<4x32xf32>
    %378 = arith.maximumf %374, %377 : vector<4x32xf32>
    %c9_260 = arith.constant 9 : index
    %c0_261 = arith.constant 0 : index
    %379 = vector.load %arg21[%c9_260, %c0_261] : memref<26x32xf32, #tpu.memory_space<vmem>>, vector<4x32xf32>
    tpu.vector_store %arg21[%c9_260, %c0_261], %378 {strides = array<i32>} : memref<26x32xf32, #tpu.memory_space<vmem>>, vector<4x32xf32>,
    %c32_262 = arith.constant 32 : index
    %c0_263 = arith.constant 0 : index
    %380 = tpu.strided_load %arg18[%c32_262, %c0_263] {strides = array<i32: 2, 1>} : memref<1024x32xf32, #tpu.memory_space<vmem>>, vector<4x32xf32>
    %c33_264 = arith.constant 33 : index
    %c0_265 = arith.constant 0 : index
    %381 = tpu.strided_load %arg18[%c33_264, %c0_265] {strides = array<i32: 2, 1>} : memref<1024x32xf32, #tpu.memory_space<vmem>>, vector<4x32xf32>
    %382 = arith.maximumf %380, %381 : vector<4x32xf32>
    %c40 = arith.constant 40 : index
    %c0_266 = arith.constant 0 : index
    %383 = tpu.strided_load %arg18[%c40, %c0_266] {strides = array<i32: 2, 1>} : memref<1024x32xf32, #tpu.memory_space<vmem>>, vector<4x32xf32>
    %c41_267 = arith.constant 41 : index
    %c0_268 = arith.constant 0 : index
    %384 = tpu.strided_load %arg18[%c41_267, %c0_268] {strides = array<i32: 2, 1>} : memref<1024x32xf32, #tpu.memory_space<vmem>>, vector<4x32xf32>
    %385 = arith.maximumf %383, %384 : vector<4x32xf32>
    %386 = arith.maximumf %382, %385 : vector<4x32xf32>
    %c13 = arith.constant 13 : index
    %c0_269 = arith.constant 0 : index
    %387 = vector.load %arg21[%c13, %c0_269] : memref<26x32xf32, #tpu.memory_space<vmem>>, vector<4x32xf32>
    tpu.vector_store %arg21[%c13, %c0_269], %386 {strides = array<i32>} : memref<26x32xf32, #tpu.memory_space<vmem>>, vector<4x32xf32>,
    %c48_270 = arith.constant 48 : index
    %c0_271 = arith.constant 0 : index
    %388 = tpu.strided_load %arg18[%c48_270, %c0_271] {strides = array<i32: 2, 1>} : memref<1024x32xf32, #tpu.memory_space<vmem>>, vector<4x32xf32>
    %c49_272 = arith.constant 49 : index
    %c0_273 = arith.constant 0 : index
    %389 = tpu.strided_load %arg18[%c49_272, %c0_273] {strides = array<i32: 2, 1>} : memref<1024x32xf32, #tpu.memory_space<vmem>>, vector<4x32xf32>
    %390 = arith.maximumf %388, %389 : vector<4x32xf32>
    %c56 = arith.constant 56 : index
    %c0_274 = arith.constant 0 : index
    %391 = tpu.strided_load %arg18[%c56, %c0_274] {strides = array<i32: 2, 1>} : memref<1024x32xf32, #tpu.memory_space<vmem>>, vector<4x32xf32>
    %c57_275 = arith.constant 57 : index
    %c0_276 = arith.constant 0 : index
    %392 = tpu.strided_load %arg18[%c57_275, %c0_276] {strides = array<i32: 2, 1>} : memref<1024x32xf32, #tpu.memory_space<vmem>>, vector<4x32xf32>
    %393 = arith.maximumf %391, %392 : vector<4x32xf32>
    %394 = arith.maximumf %390, %393 : vector<4x32xf32>
    %c17_277 = arith.constant 17 : index
    %c0_278 = arith.constant 0 : index
    %395 = vector.load %arg21[%c17_277, %c0_278] : memref<26x32xf32, #tpu.memory_space<vmem>>, vector<4x32xf32>
    tpu.vector_store %arg21[%c17_277, %c0_278], %394 {strides = array<i32>} : memref<26x32xf32, #tpu.memory_space<vmem>>, vector<4x32xf32>,
    %396 = tpu.iota {dimensions = array<i32: 0>} : vector<16x1xi32>
    %c4_i32 = arith.constant 4 : i32
    %c0_i32_279 = arith.constant 0 : i32
    %397 = arith.cmpi eq, %c4_i32, %c0_i32_279 : i32
    %c1_i32_280 = arith.constant 1 : i32
    %398 = arith.select %397, %c1_i32_280, %c4_i32 : i32
    %399 = vector.broadcast %398 : i32 to vector<16x1xi32>
    %400 = arith.remsi %396, %399 : vector<16x1xi32>
    %c0_i32_281 = arith.constant 0 : i32
    %401 = vector.broadcast %c0_i32_281 : i32 to vector<16x1xi32>
    %402 = arith.cmpi ne, %400, %401 : vector<16x1xi32>
    %c0_i32_282 = arith.constant 0 : i32
    %403 = vector.broadcast %c0_i32_282 : i32 to vector<16x1xi32>
    %404 = arith.cmpi slt, %400, %403 : vector<16x1xi32>
    %c0_i32_283 = arith.constant 0 : i32
    %405 = arith.cmpi slt, %398, %c0_i32_283 : i32
    %406 = vector.broadcast %405 : i1 to vector<16x1xi1>
    %407 = vector.broadcast %406 : vector<16x1xi1> to vector<16x1xi1>
    %408 = arith.xori %404, %407 : vector<16x1xi1>
    %409 = arith.andi %408, %402 : vector<16x1xi1>
    %410 = vector.broadcast %398 : i32 to vector<16x1xi32>
    %411 = arith.addi %400, %410 : vector<16x1xi32>
    %412 = arith.select %409, %411, %400 : vector<16x1xi1>, vector<16x1xi32>
    %c0_i32_284 = arith.constant 0 : i32
    %413 = vector.broadcast %c0_i32_284 : i32 to vector<16x1xi32>
    %414 = arith.cmpi sgt, %412, %413 : vector<16x1xi32>
    %c3_i32 = arith.constant 3 : i32
    %415 = vector.broadcast %c3_i32 : i32 to vector<16x1xi32>
    %416 = arith.cmpi slt, %412, %415 : vector<16x1xi32>
    %c0_285 = arith.constant 0 : index
    %c0_286 = arith.constant 0 : index
    %417 = vector.load %arg21[%c0_285, %c0_286] : memref<26x32xf32, #tpu.memory_space<vmem>>, vector<16x32xf32>
    %418 = arith.truncf %417 : vector<16x32xf32> to vector<16x32xbf16>
    %cst_287 = arith.constant 0.000000e+00 : f32
    %419 = arith.truncf %cst_287 : f32 to bf16
    %420 = vector.shape_cast %414 : vector<16x1xi1> to vector<16x1xi1>
    %421 = vector.broadcast %420 : vector<16x1xi1> to vector<16x32xi1>
    %422 = vector.broadcast %419 : bf16 to vector<16x32xbf16>
    %423 = arith.select %421, %418, %422 : vector<16x32xi1>, vector<16x32xbf16>
    %c1_288 = arith.constant 1 : index
    %c0_289 = arith.constant 0 : index
    %424 = vector.load %arg21[%c1_288, %c0_289] : memref<26x32xf32, #tpu.memory_space<vmem>>, vector<16x32xf32>
    %425 = arith.truncf %424 : vector<16x32xf32> to vector<16x32xbf16>
    %c2_290 = arith.constant 2 : index
    %c0_291 = arith.constant 0 : index
    %426 = vector.load %arg21[%c2_290, %c0_291] : memref<26x32xf32, #tpu.memory_space<vmem>>, vector<16x32xf32>
    %427 = arith.truncf %426 : vector<16x32xf32> to vector<16x32xbf16>
    %cst_292 = arith.constant 0.000000e+00 : f32
    %428 = arith.truncf %cst_292 : f32 to bf16
    %429 = vector.shape_cast %416 : vector<16x1xi1> to vector<16x1xi1>
    %430 = vector.broadcast %429 : vector<16x1xi1> to vector<16x32xi1>
    %431 = vector.broadcast %428 : bf16 to vector<16x32xbf16>
    %432 = arith.select %430, %427, %431 : vector<16x32xi1>, vector<16x32xbf16>
    %c4 = arith.constant 4 : index
    %c0_293 = arith.constant 0 : index
    %433 = vector.load %arg21[%c4, %c0_293] : memref<26x32xf32, #tpu.memory_space<vmem>>, vector<16x32xf32>
    %434 = arith.truncf %433 : vector<16x32xf32> to vector<16x32xbf16>
    %cst_294 = arith.constant 0.000000e+00 : f32
    %435 = arith.truncf %cst_294 : f32 to bf16
    %436 = vector.shape_cast %414 : vector<16x1xi1> to vector<16x1xi1>
    %437 = vector.broadcast %436 : vector<16x1xi1> to vector<16x32xi1>
    %438 = vector.broadcast %435 : bf16 to vector<16x32xbf16>
    %439 = arith.select %437, %434, %438 : vector<16x32xi1>, vector<16x32xbf16>
    %c5_295 = arith.constant 5 : index
    %c0_296 = arith.constant 0 : index
    %440 = vector.load %arg21[%c5_295, %c0_296] : memref<26x32xf32, #tpu.memory_space<vmem>>, vector<16x32xf32>
    %441 = arith.truncf %440 : vector<16x32xf32> to vector<16x32xbf16>
    %c6 = arith.constant 6 : index
    %c0_297 = arith.constant 0 : index
    %442 = vector.load %arg21[%c6, %c0_297] : memref<26x32xf32, #tpu.memory_space<vmem>>, vector<16x32xf32>
    %443 = arith.truncf %442 : vector<16x32xf32> to vector<16x32xbf16>
    %cst_298 = arith.constant 0.000000e+00 : f32
    %444 = arith.truncf %cst_298 : f32 to bf16
    %445 = vector.shape_cast %416 : vector<16x1xi1> to vector<16x1xi1>
    %446 = vector.broadcast %445 : vector<16x1xi1> to vector<16x32xi1>
    %447 = vector.broadcast %444 : bf16 to vector<16x32xbf16>
    %448 = arith.select %446, %443, %447 : vector<16x32xi1>, vector<16x32xbf16>
    %c8_299 = arith.constant 8 : index
    %c0_300 = arith.constant 0 : index
    %449 = vector.load %arg21[%c8_299, %c0_300] : memref<26x32xf32, #tpu.memory_space<vmem>>, vector<16x32xf32>
    %450 = arith.truncf %449 : vector<16x32xf32> to vector<16x32xbf16>
    %cst_301 = arith.constant 0.000000e+00 : f32
    %451 = arith.truncf %cst_301 : f32 to bf16
    %452 = vector.shape_cast %414 : vector<16x1xi1> to vector<16x1xi1>
    %453 = vector.broadcast %452 : vector<16x1xi1> to vector<16x32xi1>
    %454 = vector.broadcast %451 : bf16 to vector<16x32xbf16>
    %455 = arith.select %453, %450, %454 : vector<16x32xi1>, vector<16x32xbf16>
    %c9_302 = arith.constant 9 : index
    %c0_303 = arith.constant 0 : index
    %456 = vector.load %arg21[%c9_302, %c0_303] : memref<26x32xf32, #tpu.memory_space<vmem>>, vector<16x32xf32>
    %457 = arith.truncf %456 : vector<16x32xf32> to vector<16x32xbf16>
    %c10_304 = arith.constant 10 : index
    %c0_305 = arith.constant 0 : index
    %458 = vector.load %arg21[%c10_304, %c0_305] : memref<26x32xf32, #tpu.memory_space<vmem>>, vector<16x32xf32>
    %459 = arith.truncf %458 : vector<16x32xf32> to vector<16x32xbf16>
    %cst_306 = arith.constant 0.000000e+00 : f32
    %460 = arith.truncf %cst_306 : f32 to bf16
    %461 = vector.shape_cast %416 : vector<16x1xi1> to vector<16x1xi1>
    %462 = vector.broadcast %461 : vector<16x1xi1> to vector<16x32xi1>
    %463 = vector.broadcast %460 : bf16 to vector<16x32xbf16>
    %464 = arith.select %462, %459, %463 : vector<16x32xi1>, vector<16x32xbf16>
    %465 = tpu.concatenate %423, %425, %432, %439, %441, %448, %455, %457, %464 in 1 : vector<16x32xbf16>, vector<16x32xbf16>, vector<16x32xbf16>, vector<16x32xbf16>, vector<16x32xbf16>, vector<16x32xbf16>, vector<16x32xbf16>, vector<16x32xbf16>, vector<16x32xbf16> -> vector<16x288xbf16>
    %c0_307 = arith.constant 0 : index
    %c0_308 = arith.constant 0 : index
    %466 = vector.load %arg8[%c0_307, %c0_308] : memref<288x32xbf16, #tpu.memory_space<vmem>>, vector<288x32xbf16>
    %cst_309 = arith.constant dense<0.000000e+00> : vector<16x32xf32>
    %467 = tpu.matmul %465, %466, %cst_309 {dimension_numbers = #tpu.dot_dimension_numbers<[1], [0], [0], [1], [0, 0, 1, 1], [], []>} : vector<16x288xbf16>, vector<288x32xbf16>, vector<16x32xf32> -> vector<16x32xf32>
    %c0_310 = arith.constant 0 : index
    %c0_311 = arith.constant 0 : index
    %468 = vector.load %arg9[%c0_310, %c0_311] : memref<1x32xf32, #tpu.memory_space<vmem>>, vector<1x32xf32>
    %469 = vector.broadcast %468 : vector<1x32xf32> to vector<16x32xf32>
    %470 = arith.addf %467, %469 : vector<16x32xf32>
    %cst_312 = arith.constant 0.000000e+00 : f32
    %471 = vector.broadcast %cst_312 : f32 to vector<16x32xf32>
    %472 = arith.maximumf %470, %471 : vector<16x32xf32>
    %c0_313 = arith.constant 0 : index
    %c0_314 = arith.constant 0 : index
    %473 = vector.load %arg18[%c0_313, %c0_314] : memref<1024x32xf32, #tpu.memory_space<vmem>>, vector<16x32xf32>
    tpu.vector_store %arg18[%c0_313, %c0_314], %472 {strides = array<i32>} : memref<1024x32xf32, #tpu.memory_space<vmem>>, vector<16x32xf32>,
    %c0_315 = arith.constant 0 : index
    %c0_316 = arith.constant 0 : index
    %474 = tpu.strided_load %arg18[%c0_315, %c0_316] {strides = array<i32: 2, 1>} : memref<1024x32xf32, #tpu.memory_space<vmem>>, vector<2x32xf32>
    %c1_317 = arith.constant 1 : index
    %c0_318 = arith.constant 0 : index
    %475 = tpu.strided_load %arg18[%c1_317, %c0_318] {strides = array<i32: 2, 1>} : memref<1024x32xf32, #tpu.memory_space<vmem>>, vector<2x32xf32>
    %476 = arith.maximumf %474, %475 : vector<2x32xf32>
    %c4_319 = arith.constant 4 : index
    %c0_320 = arith.constant 0 : index
    %477 = tpu.strided_load %arg18[%c4_319, %c0_320] {strides = array<i32: 2, 1>} : memref<1024x32xf32, #tpu.memory_space<vmem>>, vector<2x32xf32>
    %c5_321 = arith.constant 5 : index
    %c0_322 = arith.constant 0 : index
    %478 = tpu.strided_load %arg18[%c5_321, %c0_322] {strides = array<i32: 2, 1>} : memref<1024x32xf32, #tpu.memory_space<vmem>>, vector<2x32xf32>
    %479 = arith.maximumf %477, %478 : vector<2x32xf32>
    %480 = arith.maximumf %476, %479 : vector<2x32xf32>
    %c0_323 = arith.constant 0 : index
    %c0_324 = arith.constant 0 : index
    %481 = vector.load %arg22[%c0_323, %c0_324] : memref<4x32xf32, #tpu.memory_space<vmem>>, vector<2x32xf32>
    tpu.vector_store %arg22[%c0_323, %c0_324], %480 {strides = array<i32>} : memref<4x32xf32, #tpu.memory_space<vmem>>, vector<2x32xf32>,
    %c8_325 = arith.constant 8 : index
    %c0_326 = arith.constant 0 : index
    %482 = tpu.strided_load %arg18[%c8_325, %c0_326] {strides = array<i32: 2, 1>} : memref<1024x32xf32, #tpu.memory_space<vmem>>, vector<2x32xf32>
    %c9_327 = arith.constant 9 : index
    %c0_328 = arith.constant 0 : index
    %483 = tpu.strided_load %arg18[%c9_327, %c0_328] {strides = array<i32: 2, 1>} : memref<1024x32xf32, #tpu.memory_space<vmem>>, vector<2x32xf32>
    %484 = arith.maximumf %482, %483 : vector<2x32xf32>
    %c12 = arith.constant 12 : index
    %c0_329 = arith.constant 0 : index
    %485 = tpu.strided_load %arg18[%c12, %c0_329] {strides = array<i32: 2, 1>} : memref<1024x32xf32, #tpu.memory_space<vmem>>, vector<2x32xf32>
    %c13_330 = arith.constant 13 : index
    %c0_331 = arith.constant 0 : index
    %486 = tpu.strided_load %arg18[%c13_330, %c0_331] {strides = array<i32: 2, 1>} : memref<1024x32xf32, #tpu.memory_space<vmem>>, vector<2x32xf32>
    %487 = arith.maximumf %485, %486 : vector<2x32xf32>
    %488 = arith.maximumf %484, %487 : vector<2x32xf32>
    %c2_332 = arith.constant 2 : index
    %c0_333 = arith.constant 0 : index
    %489 = vector.load %arg22[%c2_332, %c0_333] : memref<4x32xf32, #tpu.memory_space<vmem>>, vector<2x32xf32>
    tpu.vector_store %arg22[%c2_332, %c0_333], %488 {strides = array<i32>} : memref<4x32xf32, #tpu.memory_space<vmem>>, vector<2x32xf32>,
    %c0_334 = arith.constant 0 : index
    %c0_335 = arith.constant 0 : index
    %490 = vector.load %arg22[%c0_334, %c0_335] : memref<4x32xf32, #tpu.memory_space<vmem>>, vector<1x32xf32>
    %c1_336 = arith.constant 1 : index
    %c0_337 = arith.constant 0 : index
    %491 = vector.load %arg22[%c1_336, %c0_337] : memref<4x32xf32, #tpu.memory_space<vmem>>, vector<1x32xf32>
    %c2_338 = arith.constant 2 : index
    %c0_339 = arith.constant 0 : index
    %492 = vector.load %arg22[%c2_338, %c0_339] : memref<4x32xf32, #tpu.memory_space<vmem>>, vector<1x32xf32>
    %c3 = arith.constant 3 : index
    %c0_340 = arith.constant 0 : index
    %493 = vector.load %arg22[%c3, %c0_340] : memref<4x32xf32, #tpu.memory_space<vmem>>, vector<1x32xf32>
    %494 = tpu.concatenate %490, %491, %492, %493 in 1 : vector<1x32xf32>, vector<1x32xf32>, vector<1x32xf32>, vector<1x32xf32> -> vector<1x128xf32>
    %c0_341 = arith.constant 0 : index
    %c0_342 = arith.constant 0 : index
    %495 = vector.load %arg10[%c0_341, %c0_342] : memref<128x128xf32, #tpu.memory_space<vmem>>, vector<128x128xf32>
    %cst_343 = arith.constant dense<0.000000e+00> : vector<1x128xf32>
    %496 = tpu.matmul %494, %495, %cst_343 {dimension_numbers = #tpu.dot_dimension_numbers<[1], [0], [0], [1], [0, 0, 1, 1], [], []>} : vector<1x128xf32>, vector<128x128xf32>, vector<1x128xf32> -> vector<1x128xf32>
    %c0_344 = arith.constant 0 : index
    %c0_345 = arith.constant 0 : index
    %497 = vector.load %arg11[%c0_344, %c0_345] : memref<1x128xf32, #tpu.memory_space<vmem>>, vector<1x128xf32>
    %498 = arith.addf %496, %497 : vector<1x128xf32>
    %c0_346 = arith.constant 0 : index
    %c0_347 = arith.constant 0 : index
    %499 = vector.load %arg12[%c0_346, %c0_347] : memref<128x128xf32, #tpu.memory_space<vmem>>, vector<128x128xf32>
    %cst_348 = arith.constant dense<0.000000e+00> : vector<1x128xf32>
    %500 = tpu.matmul %498, %499, %cst_348 {dimension_numbers = #tpu.dot_dimension_numbers<[1], [0], [0], [1], [0, 0, 1, 1], [], []>} : vector<1x128xf32>, vector<128x128xf32>, vector<1x128xf32> -> vector<1x128xf32>
    %c0_349 = arith.constant 0 : index
    %c0_350 = arith.constant 0 : index
    %501 = vector.load %arg13[%c0_349, %c0_350] : memref<1x128xf32, #tpu.memory_space<vmem>>, vector<1x128xf32>
    %502 = arith.addf %500, %501 : vector<1x128xf32>
    %c0_351 = arith.constant 0 : index
    %c0_352 = arith.constant 0 : index
    %503 = vector.load %arg14[%c0_351, %c0_352] : memref<128x5xf32, #tpu.memory_space<vmem>>, vector<128x5xf32>
    %cst_353 = arith.constant dense<0.000000e+00> : vector<1x5xf32>
    %504 = tpu.matmul %502, %503, %cst_353 {dimension_numbers = #tpu.dot_dimension_numbers<[1], [0], [0], [1], [0, 0, 1, 1], [], []>} : vector<1x128xf32>, vector<128x5xf32>, vector<1x5xf32> -> vector<1x5xf32>
    %c0_354 = arith.constant 0 : index
    %c0_355 = arith.constant 0 : index
    %505 = vector.load %arg15[%c0_354, %c0_355] : memref<1x5xf32, #tpu.memory_space<vmem>>, vector<1x5xf32>
    %506 = arith.addf %504, %505 : vector<1x5xf32>
    %cst_356 = arith.constant dense<0xFF800000> : vector<1xf32>
    %507 = vector.multi_reduction <maximumf>, %506, %cst_356 [1] : vector<1x5xf32> to vector<1xf32>
    %508 = vector.shape_cast %507 : vector<1xf32> to vector<1x1xf32>
    %509 = vector.broadcast %508 : vector<1x1xf32> to vector<1x5xf32>
    %510 = arith.subf %506, %509 : vector<1x5xf32>
    %511 = math.exp %510 : vector<1x5xf32>
    %cst_357 = arith.constant dense<0.000000e+00> : vector<1xf32>
    %512 = vector.multi_reduction <add>, %511, %cst_357 [1] : vector<1x5xf32> to vector<1xf32>
    %513 = vector.shape_cast %512 : vector<1xf32> to vector<1x1xf32>
    %514 = vector.broadcast %513 : vector<1x1xf32> to vector<1x5xf32>
    %515 = arith.divf %511, %514 : vector<1x5xf32>
    %c0_358 = arith.constant 0 : index
    %c0_359 = arith.constant 0 : index
    %c0_360 = arith.constant 0 : index
    %516 = vector.load %arg16[%c0_358, %c0_359, %c0_360] : memref<1x1x5xf32, #tpu.memory_space<vmem>>, vector<1x1x5xf32>
    %517 = vector.shape_cast %516 : vector<1x1x5xf32> to vector<1x5xf32>
    %518 = vector.shape_cast %515 : vector<1x5xf32> to vector<1x1x5xf32>
    tpu.vector_store %arg16[%c0_358, %c0_359, %c0_360], %518 {strides = array<i32>} : memref<1x1x5xf32, #tpu.memory_space<vmem>>, vector<1x1x5xf32>,
    %c0_361 = arith.constant 0 : index
    %c0_362 = arith.constant 0 : index
    %c0_363 = arith.constant 0 : index
    %519 = vector.load %arg17[%c0_361, %c0_362, %c0_363] : memref<1x1x5xf32, #tpu.memory_space<vmem>>, vector<1x1x5xf32>
    %520 = vector.shape_cast %519 : vector<1x1x5xf32> to vector<1x5xf32>
    %521 = vector.shape_cast %506 : vector<1x5xf32> to vector<1x1x5xf32>
    tpu.vector_store %arg17[%c0_361, %c0_362, %c0_363], %521 {strides = array<i32>} : memref<1x1x5xf32, #tpu.memory_space<vmem>>, vector<1x1x5xf32>,
    return
  }
  func.func @transform_0(%arg0: i32) -> (i32, i32, i32) {
    %c0_i32 = arith.constant 0 : i32
    %c0_i32_0 = arith.constant 0 : i32
    %c0_i32_1 = arith.constant 0 : i32
    return %arg0, %c0_i32, %c0_i32_0 : i32, i32, i32
  }
  func.func @transform_1(%arg0: i32) -> (i32, i32) {
    %c0_i32 = arith.constant 0 : i32
    %c0_i32_0 = arith.constant 0 : i32
    %c0_i32_1 = arith.constant 0 : i32
    return %c0_i32, %c0_i32_0 : i32, i32
  }
  func.func @transform_2(%arg0: i32) -> (i32, i32) {
    %c0_i32 = arith.constant 0 : i32
    %c0_i32_0 = arith.constant 0 : i32
    %c0_i32_1 = arith.constant 0 : i32
    return %c0_i32, %c0_i32_0 : i32, i32
  }
  func.func @transform_3(%arg0: i32) -> (i32, i32) {
    %c0_i32 = arith.constant 0 : i32
    %c0_i32_0 = arith.constant 0 : i32
    %c0_i32_1 = arith.constant 0 : i32
    return %c0_i32, %c0_i32_0 : i32, i32
  }
  func.func @transform_4(%arg0: i32) -> (i32, i32) {
    %c0_i32 = arith.constant 0 : i32
    %c0_i32_0 = arith.constant 0 : i32
    %c0_i32_1 = arith.constant 0 : i32
    return %c0_i32, %c0_i32_0 : i32, i32
  }
  func.func @transform_5(%arg0: i32) -> (i32, i32) {
    %c0_i32 = arith.constant 0 : i32
    %c0_i32_0 = arith.constant 0 : i32
    %c0_i32_1 = arith.constant 0 : i32
    return %c0_i32, %c0_i32_0 : i32, i32
  }
  func.func @transform_6(%arg0: i32) -> (i32, i32) {
    %c0_i32 = arith.constant 0 : i32
    %c0_i32_0 = arith.constant 0 : i32
    %c0_i32_1 = arith.constant 0 : i32
    return %c0_i32, %c0_i32_0 : i32, i32
  }
  func.func @transform_7(%arg0: i32) -> (i32, i32) {
    %c0_i32 = arith.constant 0 : i32
    %c0_i32_0 = arith.constant 0 : i32
    %c0_i32_1 = arith.constant 0 : i32
    return %c0_i32, %c0_i32_0 : i32, i32
  }
  func.func @transform_8(%arg0: i32) -> (i32, i32) {
    %c0_i32 = arith.constant 0 : i32
    %c0_i32_0 = arith.constant 0 : i32
    %c0_i32_1 = arith.constant 0 : i32
    return %c0_i32, %c0_i32_0 : i32, i32
  }
  func.func @transform_9(%arg0: i32) -> (i32, i32) {
    %c0_i32 = arith.constant 0 : i32
    %c0_i32_0 = arith.constant 0 : i32
    %c0_i32_1 = arith.constant 0 : i32
    return %c0_i32, %c0_i32_0 : i32, i32
  }
  func.func @transform_10(%arg0: i32) -> (i32, i32) {
    %c0_i32 = arith.constant 0 : i32
    %c0_i32_0 = arith.constant 0 : i32
    %c0_i32_1 = arith.constant 0 : i32
    return %c0_i32, %c0_i32_0 : i32, i32
  }
  func.func @transform_11(%arg0: i32) -> (i32, i32) {
    %c0_i32 = arith.constant 0 : i32
    %c0_i32_0 = arith.constant 0 : i32
    %c0_i32_1 = arith.constant 0 : i32
    return %c0_i32, %c0_i32_0 : i32, i32
  }
  func.func @transform_12(%arg0: i32) -> (i32, i32) {
    %c0_i32 = arith.constant 0 : i32
    %c0_i32_0 = arith.constant 0 : i32
    %c0_i32_1 = arith.constant 0 : i32
    return %c0_i32, %c0_i32_0 : i32, i32
  }
  func.func @transform_13(%arg0: i32) -> (i32, i32) {
    %c0_i32 = arith.constant 0 : i32
    %c0_i32_0 = arith.constant 0 : i32
    %c0_i32_1 = arith.constant 0 : i32
    return %c0_i32, %c0_i32_0 : i32, i32
  }
  func.func @transform_14(%arg0: i32) -> (i32, i32) {
    %c0_i32 = arith.constant 0 : i32
    %c0_i32_0 = arith.constant 0 : i32
    %c0_i32_1 = arith.constant 0 : i32
    return %c0_i32, %c0_i32_0 : i32, i32
  }
  func.func @transform_15(%arg0: i32) -> (i32, i32, i32) {
    %c0_i32 = arith.constant 0 : i32
    %c0_i32_0 = arith.constant 0 : i32
    %c0_i32_1 = arith.constant 0 : i32
    return %arg0, %c0_i32, %c0_i32_0 : i32, i32, i32
  }
  func.func @transform_16(%arg0: i32) -> (i32, i32, i32) {
    %c0_i32 = arith.constant 0 : i32
    %c0_i32_0 = arith.constant 0 : i32
    %c0_i32_1 = arith.constant 0 : i32
    return %arg0, %c0_i32, %c0_i32_0 : i32, i32, i32
  }
}

</mosaic_0001>

<llo_original>
// kernel: forward_prepared.1
$region0: #{forward_prepared.1}
  #allocation0 [shape = 'u32[]', space=smem, size = 0x4, offset = 0x4, fixed_abs, tag = 'smem constant byte address 0x4 - core index']
  #allocation1 [shape = 'u32[144,128]{1,0:T(1,128)}', space=vmem, size = 0x12000, scoped, tag = 'internal scratch']
  #allocation2 [shape = 'f32[1024,32]{1,0:T(8,128)}', space=vmem, size = 0x80000, scoped, tag = 'scratch operand']
  #allocation3 [shape = 'f32[290,32]{1,0:T(8,128)}', space=vmem, size = 0x25000, scoped, tag = 'scratch operand']
  #allocation4 [shape = 'f32[82,32]{1,0:T(8,128)}', space=vmem, size = 0xb000, scoped, tag = 'scratch operand']
  #allocation5 [shape = 'f32[26,32]{1,0:T(8,128)}', space=vmem, size = 0x4000, scoped, tag = 'scratch operand']
  #allocation6 [shape = 'f32[4,32]{1,0:T(4,128)}', space=vmem, size = 0x800, scoped, tag = 'scratch operand']
  %s0 = inlined_call_operand.vmem [shape: bf16[2,1024,27], index: 0, kind: input, shape index: {}]
  %s1 = inlined_call_operand.vmem [shape: bf16[27,32], index: 1, kind: input, shape index: {}]
  %s2 = inlined_call_operand.vmem [shape: f32[1,32], index: 2, kind: input, shape index: {}]
  %s3 = inlined_call_operand.vmem [shape: bf16[288,32], index: 3, kind: input, shape index: {}]
  %s4 = inlined_call_operand.vmem [shape: f32[1,32], index: 4, kind: input, shape index: {}]
  %s5 = inlined_call_operand.vmem [shape: bf16[288,32], index: 5, kind: input, shape index: {}]
  %s6 = inlined_call_operand.vmem [shape: f32[1,32], index: 6, kind: input, shape index: {}]
  %s7 = inlined_call_operand.vmem [shape: bf16[288,32], index: 7, kind: input, shape index: {}]
  %s8 = inlined_call_operand.vmem [shape: f32[1,32], index: 8, kind: input, shape index: {}]
  %s9 = inlined_call_operand.vmem [shape: f32[128,128], index: 9, kind: input, shape index: {}]
  %s10 = inlined_call_operand.vmem [shape: f32[1,128], index: 10, kind: input, shape index: {}]
  %s11 = inlined_call_operand.vmem [shape: f32[128,128], index: 11, kind: input, shape index: {}]
  %s12 = inlined_call_operand.vmem [shape: f32[1,128], index: 12, kind: input, shape index: {}]
  %s13 = inlined_call_operand.vmem [shape: f32[128,5], index: 13, kind: input, shape index: {}]
  %s14 = inlined_call_operand.vmem [shape: f32[1,5], index: 14, kind: input, shape index: {}]
  %s15 = inlined_call_operand.hbm [shape: f32[2,1,5], index: 15, kind: output, shape index: {0}]
  %s16 = inlined_call_operand.hbm [shape: f32[2,1,5], index: 16, kind: output, shape index: {1}]
  %17 = xla_tuple %s15, %s16
  %s18 = sld [smem:[#allocation0]]
  $region101: #{forward_prepared.1} parent=0
    _
  %s20 = ssub.s32 1, %s18
  %s21 = scalar_select 0, %s20, %s18
  $region1: #{forward_prepared.1} parent=0
    #allocation7 [shape = 'u8[1024]{0}', space=vmem, size = 0x400, scoped, tag = 'output window, operand 0']
    #allocation8 [shape = 's32[2]{0}', space=sflag, size = 0x8, scoped, tag = 'scoped memory for forward_prepared.1']
    #allocation9 [shape = 'u8[1024]{0}', space=vmem, size = 0x400, scoped, tag = 'output window, operand 1']
    #allocation10 [shape = 's32[2]{0}', space=sflag, size = 0x8, scoped, tag = 'scoped memory for forward_prepared.1']
    %22 = vsyncpa [#allocation8], 0
    %s23 = scalar_lea.sflag [#allocation8], 1
    %24 = vsyncpa %s23, 0
    %25 = vsyncpa [#allocation10], 0
    %s26 = scalar_lea.sflag [#allocation10], 1
    %27 = vsyncpa %s26, 0
    loop: start=0, step=1, limit=4
    $region2: #{forward_prepared.1} parent=1 // loop_pre_header
      _
    $region3: #{forward_prepared.1} parent=1 // loop_header
      %s29 = sphi 0, %s33
      %p30 = scmp.ge.s32.totalorder %s29, 4
      %s39 = sphi 0, %s41
      %s42 = sphi 0, %s39
      %s43 = sphi 0, %s42
      %s59 = sphi 0, %s43
      %s63 = sphi 0, %s63
      %s65 = sphi 0, %s63
      %s66 = sphi 0, %s65
      %s80 = sphi 0, %s66
      %s84 = sphi 0, %s84
      %s86 = sphi 0, %s84
      %s87 = sphi 0, %s86
      %s101 = sphi 0, %s87
      %s105 = sphi 0, %s105
      %s107 = sphi 0, %s105
      %s108 = sphi 0, %s107
      %s122 = sphi 0, %s108
      %s126 = sphi 0, %s126
      %s128 = sphi 0, %s126
      %s129 = sphi 0, %s128
      %s143 = sphi 0, %s129
      %s147 = sphi 0, %s147
      %s149 = sphi 0, %s147
      %s150 = sphi 0, %s149
      %s164 = sphi 0, %s150
      %s168 = sphi 0, %s168
      %s170 = sphi 0, %s168
      %s171 = sphi 0, %s170
      %s185 = sphi 0, %s171
      %s189 = sphi 0, %s189
      %s191 = sphi 0, %s189
      %s192 = sphi 0, %s191
      %s206 = sphi 0, %s192
      %s210 = sphi 0, %s210
      %s212 = sphi 0, %s210
      %s213 = sphi 0, %s212
      %s227 = sphi 0, %s213
      %s231 = sphi 0, %s231
      %s233 = sphi 0, %s231
      %s234 = sphi 0, %s233
      %s248 = sphi 0, %s234
      %s252 = sphi 0, %s252
      %s254 = sphi 0, %s252
      %s255 = sphi 0, %s254
      %s269 = sphi 0, %s255
      %s273 = sphi 0, %s273
      %s275 = sphi 0, %s273
      %s276 = sphi 0, %s275
      %s290 = sphi 0, %s276
      %s294 = sphi 0, %s294
      %s296 = sphi 0, %s294
      %s297 = sphi 0, %s296
      %s311 = sphi 0, %s297
      %s315 = sphi 0, %s315
      %s317 = sphi 0, %s315
      %s318 = sphi 0, %s317
      %s332 = sphi 0, %s318
      %s336 = sphi 0, %s336
      %s338 = sphi 0, %s336
      %s339 = sphi 0, %s338
      %s353 = sphi 0, %s339
      %s359 = sphi 0, %s361
      %s362 = sphi 0, %s359
      %s363 = sphi 0, %s362
      %s379 = sphi 0, %s363
      %s385 = sphi 0, %s387
      %s388 = sphi 0, %s385
      %s389 = sphi 0, %s388
      %s405 = sphi 0, %s389
    $region4: #{forward_prepared.1} parent=1 // loop_header_branch
      %32 = sbr.rel (%p30) target = $region8
    $region5: #{forward_prepared.1} parent=1 // loop_body
      %s34 = ssub.s32 %s29, 1
      %s35 = ssub.s32 %s29, 2
      %s36 = sadd.s32 %s29, 1
      %s37 = ssub.s32 %s29, %s36
      %p38 = scmp.eq.s32.totalorder %s37, 0
      %s40 = sadd.s32 %s39, 1
      %s41 = scalar_select %p38, %s39, %s40
      %p44 = pneg %p38
      %p45 = scmp.eq.s32.totalorder %s29, 1
      %p46 = por %p44, %p45
      %p47 = scmp.ne.s32.totalorder %s39, %s42
      %p48 = scmp.eq.s32.totalorder %s29, 0
      %p49 = por %p47, %p48
      %p50 = scmp.ne.s32.totalorder %s39, %s42
      %p51 = scmp.eq.s32.totalorder %s34, 1
      %p52 = por %p50, %p51
      %p53 = scmp.ne.s32.totalorder %s42, %s43
      %p54 = scmp.eq.s32.totalorder %s34, 0
      %p55 = por %p53, %p54
      %p56 = scmp.ne.s32.totalorder %s42, %s43
      %p57 = scmp.eq.s32.totalorder %s35, 1
      %p58 = por %p56, %p57
      %p60 = scmp.ne.s32.totalorder %s43, %s59
      %p61 = scmp.eq.s32.totalorder %s35, 0
      %p62 = por %p60, %p61
      %s64 = sadd.s32 %s63, 1
      %p67 = scmp.eq.s32.totalorder %s29, 1
      %p68 = scmp.ne.s32.totalorder %s63, %s65
      %p69 = scmp.eq.s32.totalorder %s29, 0
      %p70 = por %p68, %p69
      %p71 = scmp.ne.s32.totalorder %s63, %s65
      %p72 = scmp.eq.s32.totalorder %s34, 1
      %p73 = por %p71, %p72
      %p74 = scmp.ne.s32.totalorder %s65, %s66
      %p75 = scmp.eq.s32.totalorder %s34, 0
      %p76 = por %p74, %p75
      %p77 = scmp.ne.s32.totalorder %s65, %s66
      %p78 = scmp.eq.s32.totalorder %s35, 1
      %p79 = por %p77, %p78
      %p81 = scmp.ne.s32.totalorder %s66, %s80
      %p82 = scmp.eq.s32.totalorder %s35, 0
      %p83 = por %p81, %p82
      %s85 = sadd.s32 %s84, 1
      %p88 = scmp.eq.s32.totalorder %s29, 1
      %p89 = scmp.ne.s32.totalorder %s84, %s86
      %p90 = scmp.eq.s32.totalorder %s29, 0
      %p91 = por %p89, %p90
      %p92 = scmp.ne.s32.totalorder %s84, %s86
      %p93 = scmp.eq.s32.totalorder %s34, 1
      %p94 = por %p92, %p93
      %p95 = scmp.ne.s32.totalorder %s86, %s87
      %p96 = scmp.eq.s32.totalorder %s34, 0
      %p97 = por %p95, %p96
      %p98 = scmp.ne.s32.totalorder %s86, %s87
      %p99 = scmp.eq.s32.totalorder %s35, 1
      %p100 = por %p98, %p99
      %p102 = scmp.ne.s32.totalorder %s87, %s101
      %p103 = scmp.eq.s32.totalorder %s35, 0
      %p104 = por %p102, %p103
      %s106 = sadd.s32 %s105, 1
      %p109 = scmp.eq.s32.totalorder %s29, 1
      %p110 = scmp.ne.s32.totalorder %s105, %s107
      %p111 = scmp.eq.s32.totalorder %s29, 0
      %p112 = por %p110, %p111
      %p113 = scmp.ne.s32.totalorder %s105, %s107
      %p114 = scmp.eq.s32.totalorder %s34, 1
      %p115 = por %p113, %p114
      %p116 = scmp.ne.s32.totalorder %s107, %s108
      %p117 = scmp.eq.s32.totalorder %s34, 0
      %p118 = por %p116, %p117
      %p119 = scmp.ne.s32.totalorder %s107, %s108
      %p120 = scmp.eq.s32.totalorder %s35, 1
      %p121 = por %p119, %p120
      %p123 = scmp.ne.s32.totalorder %s108, %s122
      %p124 = scmp.eq.s32.totalorder %s35, 0
      %p125 = por %p123, %p124
      %s127 = sadd.s32 %s126, 1
      %p130 = scmp.eq.s32.totalorder %s29, 1
      %p131 = scmp.ne.s32.totalorder %s126, %s128
      %p132 = scmp.eq.s32.totalorder %s29, 0
      %p133 = por %p131, %p132
      %p134 = scmp.ne.s32.totalorder %s126, %s128
      %p135 = scmp.eq.s32.totalorder %s34, 1
      %p136 = por %p134, %p135
      %p137 = scmp.ne.s32.totalorder %s128, %s129
      %p138 = scmp.eq.s32.totalorder %s34, 0
      %p139 = por %p137, %p138
      %p140 = scmp.ne.s32.totalorder %s128, %s129
      %p141 = scmp.eq.s32.totalorder %s35, 1
      %p142 = por %p140, %p141
      %p144 = scmp.ne.s32.totalorder %s129, %s143
      %p145 = scmp.eq.s32.totalorder %s35, 0
      %p146 = por %p144, %p145
      %s148 = sadd.s32 %s147, 1
      %p151 = scmp.eq.s32.totalorder %s29, 1
      %p152 = scmp.ne.s32.totalorder %s147, %s149
      %p153 = scmp.eq.s32.totalorder %s29, 0
      %p154 = por %p152, %p153
      %p155 = scmp.ne.s32.totalorder %s147, %s149
      %p156 = scmp.eq.s32.totalorder %s34, 1
      %p157 = por %p155, %p156
      %p158 = scmp.ne.s32.totalorder %s149, %s150
      %p159 = scmp.eq.s32.totalorder %s34, 0
      %p160 = por %p158, %p159
      %p161 = scmp.ne.s32.totalorder %s149, %s150
      %p162 = scmp.eq.s32.totalorder %s35, 1
      %p163 = por %p161, %p162
      %p165 = scmp.ne.s32.totalorder %s150, %s164
      %p166 = scmp.eq.s32.totalorder %s35, 0
      %p167 = por %p165, %p166
      %s169 = sadd.s32 %s168, 1
      %p172 = scmp.eq.s32.totalorder %s29, 1
      %p173 = scmp.ne.s32.totalorder %s168, %s170
      %p174 = scmp.eq.s32.totalorder %s29, 0
      %p175 = por %p173, %p174
      %p176 = scmp.ne.s32.totalorder %s168, %s170
      %p177 = scmp.eq.s32.totalorder %s34, 1
      %p178 = por %p176, %p177
      %p179 = scmp.ne.s32.totalorder %s170, %s171
      %p180 = scmp.eq.s32.totalorder %s34, 0
      %p181 = por %p179, %p180
      %p182 = scmp.ne.s32.totalorder %s170, %s171
      %p183 = scmp.eq.s32.totalorder %s35, 1
      %p184 = por %p182, %p183
      %p186 = scmp.ne.s32.totalorder %s171, %s185
      %p187 = scmp.eq.s32.totalorder %s35, 0
      %p188 = por %p186, %p187
      %s190 = sadd.s32 %s189, 1
      %p193 = scmp.eq.s32.totalorder %s29, 1
      %p194 = scmp.ne.s32.totalorder %s189, %s191
      %p195 = scmp.eq.s32.totalorder %s29, 0
      %p196 = por %p194, %p195
      %p197 = scmp.ne.s32.totalorder %s189, %s191
      %p198 = scmp.eq.s32.totalorder %s34, 1
      %p199 = por %p197, %p198
      %p200 = scmp.ne.s32.totalorder %s191, %s192
      %p201 = scmp.eq.s32.totalorder %s34, 0
      %p202 = por %p200, %p201
      %p203 = scmp.ne.s32.totalorder %s191, %s192
      %p204 = scmp.eq.s32.totalorder %s35, 1
      %p205 = por %p203, %p204
      %p207 = scmp.ne.s32.totalorder %s192, %s206
      %p208 = scmp.eq.s32.totalorder %s35, 0
      %p209 = por %p207, %p208
      %s211 = sadd.s32 %s210, 1
      %p214 = scmp.eq.s32.totalorder %s29, 1
      %p215 = scmp.ne.s32.totalorder %s210, %s212
      %p216 = scmp.eq.s32.totalorder %s29, 0
      %p217 = por %p215, %p216
      %p218 = scmp.ne.s32.totalorder %s210, %s212
      %p219 = scmp.eq.s32.totalorder %s34, 1
      %p220 = por %p218, %p219
      %p221 = scmp.ne.s32.totalorder %s212, %s213
      %p222 = scmp.eq.s32.totalorder %s34, 0
      %p223 = por %p221, %p222
      %p224 = scmp.ne.s32.totalorder %s212, %s213
      %p225 = scmp.eq.s32.totalorder %s35, 1
      %p226 = por %p224, %p225
      %p228 = scmp.ne.s32.totalorder %s213, %s227
      %p229 = scmp.eq.s32.totalorder %s35, 0
      %p230 = por %p228, %p229
      %s232 = sadd.s32 %s231, 1
      %p235 = scmp.eq.s32.totalorder %s29, 1
      %p236 = scmp.ne.s32.totalorder %s231, %s233
      %p237 = scmp.eq.s32.totalorder %s29, 0
      %p238 = por %p236, %p237
      %p239 = scmp.ne.s32.totalorder %s231, %s233
      %p240 = scmp.eq.s32.totalorder %s34, 1
      %p241 = por %p239, %p240
      %p242 = scmp.ne.s32.totalorder %s233, %s234
      %p243 = scmp.eq.s32.totalorder %s34, 0
      %p244 = por %p242, %p243
      %p245 = scmp.ne.s32.totalorder %s233, %s234
      %p246 = scmp.eq.s32.totalorder %s35, 1
      %p247 = por %p245, %p246
      %p249 = scmp.ne.s32.totalorder %s234, %s248
      %p250 = scmp.eq.s32.totalorder %s35, 0
      %p251 = por %p249, %p250
      %s253 = sadd.s32 %s252, 1
      %p256 = scmp.eq.s32.totalorder %s29, 1
      %p257 = scmp.ne.s32.totalorder %s252, %s254
      %p258 = scmp.eq.s32.totalorder %s29, 0
      %p259 = por %p257, %p258
      %p260 = scmp.ne.s32.totalorder %s252, %s254
      %p261 = scmp.eq.s32.totalorder %s34, 1
      %p262 = por %p260, %p261
      %p263 = scmp.ne.s32.totalorder %s254, %s255
      %p264 = scmp.eq.s32.totalorder %s34, 0
      %p265 = por %p263, %p264
      %p266 = scmp.ne.s32.totalorder %s254, %s255
      %p267 = scmp.eq.s32.totalorder %s35, 1
      %p268 = por %p266, %p267
      %p270 = scmp.ne.s32.totalorder %s255, %s269
      %p271 = scmp.eq.s32.totalorder %s35, 0
      %p272 = por %p270, %p271
      %s274 = sadd.s32 %s273, 1
      %p277 = scmp.eq.s32.totalorder %s29, 1
      %p278 = scmp.ne.s32.totalorder %s273, %s275
      %p279 = scmp.eq.s32.totalorder %s29, 0
      %p280 = por %p278, %p279
      %p281 = scmp.ne.s32.totalorder %s273, %s275
      %p282 = scmp.eq.s32.totalorder %s34, 1
      %p283 = por %p281, %p282
      %p284 = scmp.ne.s32.totalorder %s275, %s276
      %p285 = scmp.eq.s32.totalorder %s34, 0
      %p286 = por %p284, %p285
      %p287 = scmp.ne.s32.totalorder %s275, %s276
      %p288 = scmp.eq.s32.totalorder %s35, 1
      %p289 = por %p287, %p288
      %p291 = scmp.ne.s32.totalorder %s276, %s290
      %p292 = scmp.eq.s32.totalorder %s35, 0
      %p293 = por %p291, %p292
      %s295 = sadd.s32 %s294, 1
      %p298 = scmp.eq.s32.totalorder %s29, 1
      %p299 = scmp.ne.s32.totalorder %s294, %s296
      %p300 = scmp.eq.s32.totalorder %s29, 0
      %p301 = por %p299, %p300
      %p302 = scmp.ne.s32.totalorder %s294, %s296
      %p303 = scmp.eq.s32.totalorder %s34, 1
      %p304 = por %p302, %p303
      %p305 = scmp.ne.s32.totalorder %s296, %s297
      %p306 = scmp.eq.s32.totalorder %s34, 0
      %p307 = por %p305, %p306
      %p308 = scmp.ne.s32.totalorder %s296, %s297
      %p309 = scmp.eq.s32.totalorder %s35, 1
      %p310 = por %p308, %p309
      %p312 = scmp.ne.s32.totalorder %s297, %s311
      %p313 = scmp.eq.s32.totalorder %s35, 0
      %p314 = por %p312, %p313
      %s316 = sadd.s32 %s315, 1
      %p319 = scmp.eq.s32.totalorder %s29, 1
      %p320 = scmp.ne.s32.totalorder %s315, %s317
      %p321 = scmp.eq.s32.totalorder %s29, 0
      %p322 = por %p320, %p321
      %p323 = scmp.ne.s32.totalorder %s315, %s317
      %p324 = scmp.eq.s32.totalorder %s34, 1
      %p325 = por %p323, %p324
      %p326 = scmp.ne.s32.totalorder %s317, %s318
      %p327 = scmp.eq.s32.totalorder %s34, 0
      %p328 = por %p326, %p327
      %p329 = scmp.ne.s32.totalorder %s317, %s318
      %p330 = scmp.eq.s32.totalorder %s35, 1
      %p331 = por %p329, %p330
      %p333 = scmp.ne.s32.totalorder %s318, %s332
      %p334 = scmp.eq.s32.totalorder %s35, 0
      %p335 = por %p333, %p334
      %s337 = sadd.s32 %s336, 1
      %p340 = scmp.eq.s32.totalorder %s29, 1
      %p341 = scmp.ne.s32.totalorder %s336, %s338
      %p342 = scmp.eq.s32.totalorder %s29, 0
      %p343 = por %p341, %p342
      %p344 = scmp.ne.s32.totalorder %s336, %s338
      %p345 = scmp.eq.s32.totalorder %s34, 1
      %p346 = por %p344, %p345
      %p347 = scmp.ne.s32.totalorder %s338, %s339
      %p348 = scmp.eq.s32.totalorder %s34, 0
      %p349 = por %p347, %p348
      %p350 = scmp.ne.s32.totalorder %s338, %s339
      %p351 = scmp.eq.s32.totalorder %s35, 1
      %p352 = por %p350, %p351
      %p354 = scmp.ne.s32.totalorder %s339, %s353
      %p355 = scmp.eq.s32.totalorder %s35, 0
      %p356 = por %p354, %p355
      %s357 = ssub.s32 %s29, %s36
      %p358 = scmp.eq.s32.totalorder %s357, 0
      %s360 = sadd.s32 %s359, 1
      %s361 = scalar_select %p358, %s359, %s360
      %p364 = pneg %p358
      %p365 = scmp.eq.s32.totalorder %s29, 1
      %p366 = por %p364, %p365
      %p367 = scmp.ne.s32.totalorder %s359, %s362
      %p368 = scmp.eq.s32.totalorder %s29, 0
      %p369 = por %p367, %p368
      %p370 = scmp.ne.s32.totalorder %s359, %s362
      %p371 = scmp.eq.s32.totalorder %s34, 1
      %p372 = por %p370, %p371
      %p373 = scmp.ne.s32.totalorder %s362, %s363
      %p374 = scmp.eq.s32.totalorder %s34, 0
      %p375 = por %p373, %p374
      %p376 = scmp.ne.s32.totalorder %s362, %s363
      %p377 = scmp.eq.s32.totalorder %s35, 1
      %p378 = por %p376, %p377
      %p380 = scmp.ne.s32.totalorder %s363, %s379
      %p381 = scmp.eq.s32.totalorder %s35, 0
      %p382 = por %p380, %p381
      %s383 = ssub.s32 %s29, %s36
      %p384 = scmp.eq.s32.totalorder %s383, 0
      %s386 = sadd.s32 %s385, 1
      %s387 = scalar_select %p384, %s385, %s386
      %p390 = pneg %p384
      %p391 = scmp.eq.s32.totalorder %s29, 1
      %p392 = por %p390, %p391
      %p393 = scmp.ne.s32.totalorder %s385, %s388
      %p394 = scmp.eq.s32.totalorder %s29, 0
      %p395 = por %p393, %p394
      %p396 = scmp.ne.s32.totalorder %s385, %s388
      %p397 = scmp.eq.s32.totalorder %s34, 1
      %p398 = por %p396, %p397
      %p399 = scmp.ne.s32.totalorder %s388, %s389
      %p400 = scmp.eq.s32.totalorder %s34, 0
      %p401 = por %p399, %p400
      %p402 = scmp.ne.s32.totalorder %s388, %s389
      %p403 = scmp.eq.s32.totalorder %s35, 1
      %p404 = por %p402, %p403
      %p406 = scmp.ne.s32.totalorder %s389, %s405
      %p407 = scmp.eq.s32.totalorder %s35, 0
      %p408 = por %p406, %p407
      %p409 = scmp.le.s32.totalorder 1, %s29
      %p410 = scmp.lt.s32.totalorder %s29, 3
      %p411 = pnand %p409, %p410
      %p412 = pneg %p411
      // Predicated region
      $region9: #{forward_prepared.1} parent=5 // pred_check
        _
      $region10: #{forward_prepared.1} parent=5 // pred_check_branch
        %414 = sbr.rel (%p411) target = $region12
      $region11: #{forward_prepared.1} parent=5 // pred_region
        %s415 = ssub.s32 %s29, 1
        // Predicated region
        $region13: #{forward_prepared.1} parent=11 // pred_check
          %p416 = pneg %p76
        $region14: #{forward_prepared.1} parent=11 // pred_check_branch
          %418 = sbr.rel (%p416) target = $region16
        $region15: #{forward_prepared.1} parent=11 // pred_region
          _
        $region16: #{forward_prepared.1} parent=11 // pred_fallthru
          _
        // Predicated region
        $region17: #{forward_prepared.1} parent=11 // pred_check
          %p419 = pneg %p97
        $region18: #{forward_prepared.1} parent=11 // pred_check_branch
          %421 = sbr.rel (%p419) target = $region20
        $region19: #{forward_prepared.1} parent=11 // pred_region
          _
        $region20: #{forward_prepared.1} parent=11 // pred_fallthru
          _
        // Predicated region
        $region21: #{forward_prepared.1} parent=11 // pred_check
          %p422 = pneg %p118
        $region22: #{forward_prepared.1} parent=11 // pred_check_branch
          %424 = sbr.rel (%p422) target = $region24
        $region23: #{forward_prepared.1} parent=11 // pred_region
          _
        $region24: #{forward_prepared.1} parent=11 // pred_fallthru
          _
        // Predicated region
        $region25: #{forward_prepared.1} parent=11 // pred_check
          %p425 = pneg %p139
        $region26: #{forward_prepared.1} parent=11 // pred_check_branch
          %427 = sbr.rel (%p425) target = $region28
        $region27: #{forward_prepared.1} parent=11 // pred_region
          _
        $region28: #{forward_prepared.1} parent=11 // pred_fallthru
          _
        // Predicated region
        $region29: #{forward_prepared.1} parent=11 // pred_check
          %p428 = pneg %p160
        $region30: #{forward_prepared.1} parent=11 // pred_check_branch
          %430 = sbr.rel (%p428) target = $region32
        $region31: #{forward_prepared.1} parent=11 // pred_region
          _
        $region32: #{forward_prepared.1} parent=11 // pred_fallthru
          _
        // Predicated region
        $region33: #{forward_prepared.1} parent=11 // pred_check
          %p431 = pneg %p181
        $region34: #{forward_prepared.1} parent=11 // pred_check_branch
          %433 = sbr.rel (%p431) target = $region36
        $region35: #{forward_prepared.1} parent=11 // pred_region
          _
        $region36: #{forward_prepared.1} parent=11 // pred_fallthru
          _
        // Predicated region
        $region37: #{forward_prepared.1} parent=11 // pred_check
          %p434 = pneg %p202
        $region38: #{forward_prepared.1} parent=11 // pred_check_branch
          %436 = sbr.rel (%p434) target = $region40
        $region39: #{forward_prepared.1} parent=11 // pred_region
          _
        $region40: #{forward_prepared.1} parent=11 // pred_fallthru
          _
        // Predicated region
        $region41: #{forward_prepared.1} parent=11 // pred_check
          %p437 = pneg %p223
        $region42: #{forward_prepared.1} parent=11 // pred_check_branch
          %439 = sbr.rel (%p437) target = $region44
        $region43: #{forward_prepared.1} parent=11 // pred_region
          _
        $region44: #{forward_prepared.1} parent=11 // pred_fallthru
          _
        // Predicated region
        $region45: #{forward_prepared.1} parent=11 // pred_check
          %p440 = pneg %p244
        $region46: #{forward_prepared.1} parent=11 // pred_check_branch
          %442 = sbr.rel (%p440) target = $region48
        $region47: #{forward_prepared.1} parent=11 // pred_region
          _
        $region48: #{forward_prepared.1} parent=11 // pred_fallthru
          _
        // Predicated region
        $region49: #{forward_prepared.1} parent=11 // pred_check
          %p443 = pneg %p265
        $region50: #{forward_prepared.1} parent=11 // pred_check_branch
          %445 = sbr.rel (%p443) target = $region52
        $region51: #{forward_prepared.1} parent=11 // pred_region
          _
        $region52: #{forward_prepared.1} parent=11 // pred_fallthru
          _
        // Predicated region
        $region53: #{forward_prepared.1} parent=11 // pred_check
          %p446 = pneg %p286
        $region54: #{forward_prepared.1} parent=11 // pred_check_branch
          %448 = sbr.rel (%p446) target = $region56
        $region55: #{forward_prepared.1} parent=11 // pred_region
          _
        $region56: #{forward_prepared.1} parent=11 // pred_fallthru
          _
        // Predicated region
        $region57: #{forward_prepared.1} parent=11 // pred_check
          %p449 = pneg %p307
        $region58: #{forward_prepared.1} parent=11 // pred_check_branch
          %451 = sbr.rel (%p449) target = $region60
        $region59: #{forward_prepared.1} parent=11 // pred_region
          _
        $region60: #{forward_prepared.1} parent=11 // pred_fallthru
          _
        // Predicated region
        $region61: #{forward_prepared.1} parent=11 // pred_check
          %p452 = pneg %p328
        $region62: #{forward_prepared.1} parent=11 // pred_check_branch
          %454 = sbr.rel (%p452) target = $region64
        $region63: #{forward_prepared.1} parent=11 // pred_region
          _
        $region64: #{forward_prepared.1} parent=11 // pred_fallthru
          _
        // Predicated region
        $region65: #{forward_prepared.1} parent=11 // pred_check
          %p455 = pneg %p349
        $region66: #{forward_prepared.1} parent=11 // pred_check_branch
          %457 = sbr.rel (%p455) target = $region68
        $region67: #{forward_prepared.1} parent=11 // pred_region
          _
        $region68: #{forward_prepared.1} parent=11 // pred_fallthru
          _
      $region12: #{forward_prepared.1} parent=5 // pred_fallthru
        _
      %p458 = scmp.lt.s32.totalorder %s29, 2
      // Predicated region
      $region69: #{forward_prepared.1} parent=5 // pred_check
        %p459 = pneg %p458
      $region70: #{forward_prepared.1} parent=5 // pred_check_branch
        %461 = sbr.rel (%p459) target = $region72
      $region71: #{forward_prepared.1} parent=5 // pred_region
        // Predicated region
        $region73: #{forward_prepared.1} parent=71 // pred_check
          %p462 = pneg %p49
        $region74: #{forward_prepared.1} parent=71 // pred_check_branch
          %464 = sbr.rel (%p462) target = $region76
        $region75: #{forward_prepared.1} parent=71 // pred_region
          %p465 = scmp.lt.s32.totalorder %s29, 1
          %s466 = scalar_select %p465, %s29, 1
          %s467 = smul.addr %s466, 128
          %s468 = smul.addr %s467, 4
          %s469 = scalar_lea.vmem %s0, %s468
        $region76: #{forward_prepared.1} parent=71 // pred_fallthru
          _
      $region72: #{forward_prepared.1} parent=5 // pred_fallthru
        _
      %p470 = scmp.le.s32.totalorder 1, %s29
      %p471 = scmp.lt.s32.totalorder %s29, 3
      %p472 = pnand %p470, %p471
      %p473 = pneg %p472
      // Predicated region
      $region77: #{forward_prepared.1} parent=5 // pred_check
        _
      $region78: #{forward_prepared.1} parent=5 // pred_check_branch
        %475 = sbr.rel (%p472) target = $region80
      $region79: #{forward_prepared.1} parent=5 // pred_region
        %s476 = ssub.s32 %s29, 1
        %p477 = scmp.lt.s32.totalorder %s34, 1
        %s478 = scalar_select %p477, %s34, 1
        %s479 = smul.addr %s478, 128
        %s480 = smul.addr %s479, 4
        %s481 = scalar_lea.vmem %s0, %s480
        %p482 = pneg %p55
        %p483 = pneg %p52
        %p484 = pneg %p76
        %p485 = pneg %p73
        %p486 = pneg %p97
        %p487 = pneg %p94
        %p488 = pneg %p118
        %p489 = pneg %p115
        %p490 = pneg %p139
        %p491 = pneg %p136
        %p492 = pneg %p160
        %p493 = pneg %p157
        %p494 = pneg %p181
        %p495 = pneg %p178
        %p496 = pneg %p202
        %p497 = pneg %p199
        %p498 = pneg %p223
        %p499 = pneg %p220
        %p500 = pneg %p244
        %p501 = pneg %p241
        %p502 = pneg %p265
        %p503 = pneg %p262
        %p504 = pneg %p286
        %p505 = pneg %p283
        %p506 = pneg %p307
        %p507 = pneg %p304
        %p508 = pneg %p328
        %p509 = pneg %p325
        %p510 = pneg %p349
        %p511 = pneg %p346
        %p512 = pneg %p375
        %p513 = pneg %p372
        %s514 = sand.u32 %s362, 1
        %s515 = scalar_lea.sflag [#allocation8], %s514
        %s516 = sand.u32 %s362, 1
        %s517 = scalar_lea.vmem [#allocation7], %s516
        %p518 = pneg %p401
        %p519 = pneg %p398
        %s520 = sand.u32 %s388, 1
        %s521 = scalar_lea.sflag [#allocation10], %s520
        %s522 = sand.u32 %s388, 1
        %s523 = scalar_lea.vmem [#allocation9], %s522
        %p524 = scmp.lt.s32.totalorder %s34, 1
        %s525 = scalar_select %p524, %s34, 1
        %s526 = smul.addr %s525, 128
        %s527 = smul.addr %s526, 4
        %s528 = scalar_lea.vmem %s0, %s527
        %v532 = vld [vmem:[%s528] sm:$0xf]
        %v533 = vld [vmem:[%s528 + $0x4] sm:$0xf]
        %v534 = vld [vmem:[%s528 + $0x8] sm:$0xf]
        %v535 = vld [vmem:[%s528 + $0xc] sm:$0xf]
        %v536 = vld [vmem:[%s528 + $0x10] sm:$0xf]
        %v537 = vld [vmem:[%s528 + $0x14] sm:$0xf]
        %v538 = vld [vmem:[%s528 + $0x18] sm:$0xf]
        %v539 = vld [vmem:[%s528 + $0x1c] sm:$0xf]
        %v540 = vld [vmem:[%s528 + $0x20] sm:$0xf]
        %v541 = vld [vmem:[%s528 + $0x24] sm:$0xf]
        %v542 = vld [vmem:[%s528 + $0x28] sm:$0xf]
        %v543 = vld [vmem:[%s528 + $0x2c] sm:$0xf]
        %v544 = vld [vmem:[%s528 + $0x30] sm:$0xf]
        %v545 = vld [vmem:[%s528 + $0x34] sm:$0xf]
        %v546 = vld [vmem:[%s528 + $0x38] sm:$0xf]
        %v547 = vld [vmem:[%s528 + $0x3c] sm:$0xf]
        %v548 = vld [vmem:[%s528 + $0x40] sm:$0xf]
        %v549 = vld [vmem:[%s528 + $0x44] sm:$0xf]
        %v550 = vld [vmem:[%s528 + $0x48] sm:$0xf]
        %v551 = vld [vmem:[%s528 + $0x4c] sm:$0xf]
        %v552 = vld [vmem:[%s528 + $0x50] sm:$0xf]
        %v553 = vld [vmem:[%s528 + $0x54] sm:$0xf]
        %v554 = vld [vmem:[%s528 + $0x58] sm:$0xf]
        %v555 = vld [vmem:[%s528 + $0x5c] sm:$0xf]
        %v556 = vld [vmem:[%s528 + $0x60] sm:$0xf]
        %v557 = vld [vmem:[%s528 + $0x64] sm:$0xf]
        %v558 = vld [vmem:[%s528 + $0x68] sm:$0xf]
        %v559 = vld [vmem:[%s528 + $0x6c] sm:$0xf]
        %v560 = vld [vmem:[%s528 + $0x70] sm:$0xf]
        %v561 = vld [vmem:[%s528 + $0x74] sm:$0xf]
        %v562 = vld [vmem:[%s528 + $0x78] sm:$0xf]
        %v563 = vld [vmem:[%s528 + $0x7c] sm:$0xf]
        %v564 = vld [vmem:[%s528 + $0x80] sm:$0xf]
        %v565 = vld [vmem:[%s528 + $0x84] sm:$0xf]
        %v566 = vld [vmem:[%s528 + $0x88] sm:$0xf]
        %v567 = vld [vmem:[%s528 + $0x8c] sm:$0xf]
        %v568 = vld [vmem:[%s528 + $0x90] sm:$0xf]
        %v569 = vld [vmem:[%s528 + $0x94] sm:$0xf]
        %v570 = vld [vmem:[%s528 + $0x98] sm:$0xf]
        %v571 = vld [vmem:[%s528 + $0x9c] sm:$0xf]
        %v572 = vld [vmem:[%s528 + $0xa0] sm:$0xf]
        %v573 = vld [vmem:[%s528 + $0xa4] sm:$0xf]
        %v574 = vld [vmem:[%s528 + $0xa8] sm:$0xf]
        %v575 = vld [vmem:[%s528 + $0xac] sm:$0xf]
        %v576 = vld [vmem:[%s528 + $0xb0] sm:$0xf]
        %v577 = vld [vmem:[%s528 + $0xb4] sm:$0xf]
        %v578 = vld [vmem:[%s528 + $0xb8] sm:$0xf]
        %v579 = vld [vmem:[%s528 + $0xbc] sm:$0xf]
        %v580 = vld [vmem:[%s528 + $0xc0] sm:$0xf]
        %v581 = vld [vmem:[%s528 + $0xc4] sm:$0xf]
        %v582 = vld [vmem:[%s528 + $0xc8] sm:$0xf]
        %v583 = vld [vmem:[%s528 + $0xcc] sm:$0xf]
        %v584 = vld [vmem:[%s528 + $0xd0] sm:$0xf]
        %v585 = vld [vmem:[%s528 + $0xd4] sm:$0xf]
        %v586 = vld [vmem:[%s528 + $0xd8] sm:$0xf]
        %v587 = vld [vmem:[%s528 + $0xdc] sm:$0xf]
        %v588 = vld [vmem:[%s528 + $0xe0] sm:$0xf]
        %v589 = vld [vmem:[%s528 + $0xe4] sm:$0xf]
        %v590 = vld [vmem:[%s528 + $0xe8] sm:$0xf]
        %v591 = vld [vmem:[%s528 + $0xec] sm:$0xf]
        %v592 = vld [vmem:[%s528 + $0xf0] sm:$0xf]
        %v593 = vld [vmem:[%s528 + $0xf4] sm:$0xf]
        %v594 = vld [vmem:[%s528 + $0xf8] sm:$0xf]
        %v595 = vld [vmem:[%s528 + $0xfc] sm:$0xf]
        %v596 = vld [vmem:[%s528 + $0x100] sm:$0xf]
        %v597 = vld [vmem:[%s528 + $0x104] sm:$0xf]
        %v598 = vld [vmem:[%s528 + $0x108] sm:$0xf]
        %v599 = vld [vmem:[%s528 + $0x10c] sm:$0xf]
        %v600 = vld [vmem:[%s528 + $0x110] sm:$0xf]
        %v601 = vld [vmem:[%s528 + $0x114] sm:$0xf]
        %v602 = vld [vmem:[%s528 + $0x118] sm:$0xf]
        %v603 = vld [vmem:[%s528 + $0x11c] sm:$0xf]
        %v604 = vld [vmem:[%s528 + $0x120] sm:$0xf]
        %v605 = vld [vmem:[%s528 + $0x124] sm:$0xf]
        %v606 = vld [vmem:[%s528 + $0x128] sm:$0xf]
        %v607 = vld [vmem:[%s528 + $0x12c] sm:$0xf]
        %v608 = vld [vmem:[%s528 + $0x130] sm:$0xf]
        %v609 = vld [vmem:[%s528 + $0x134] sm:$0xf]
        %v610 = vld [vmem:[%s528 + $0x138] sm:$0xf]
        %v611 = vld [vmem:[%s528 + $0x13c] sm:$0xf]
        %v612 = vld [vmem:[%s528 + $0x140] sm:$0xf]
        %v613 = vld [vmem:[%s528 + $0x144] sm:$0xf]
        %v614 = vld [vmem:[%s528 + $0x148] sm:$0xf]
        %v615 = vld [vmem:[%s528 + $0x14c] sm:$0xf]
        %v616 = vld [vmem:[%s528 + $0x150] sm:$0xf]
        %v617 = vld [vmem:[%s528 + $0x154] sm:$0xf]
        %v618 = vld [vmem:[%s528 + $0x158] sm:$0xf]
        %v619 = vld [vmem:[%s528 + $0x15c] sm:$0xf]
        %v620 = vld [vmem:[%s528 + $0x160] sm:$0xf]
        %v621 = vld [vmem:[%s528 + $0x164] sm:$0xf]
        %v622 = vld [vmem:[%s528 + $0x168] sm:$0xf]
        %v623 = vld [vmem:[%s528 + $0x16c] sm:$0xf]
        %v624 = vld [vmem:[%s528 + $0x170] sm:$0xf]
        %v625 = vld [vmem:[%s528 + $0x174] sm:$0xf]
        %v626 = vld [vmem:[%s528 + $0x178] sm:$0xf]
        %v627 = vld [vmem:[%s528 + $0x17c] sm:$0xf]
        %v628 = vld [vmem:[%s528 + $0x180] sm:$0xf]
        %v629 = vld [vmem:[%s528 + $0x184] sm:$0xf]
        %v630 = vld [vmem:[%s528 + $0x188] sm:$0xf]
        %v631 = vld [vmem:[%s528 + $0x18c] sm:$0xf]
        %v632 = vld [vmem:[%s528 + $0x190] sm:$0xf]
        %v633 = vld [vmem:[%s528 + $0x194] sm:$0xf]
        %v634 = vld [vmem:[%s528 + $0x198] sm:$0xf]
        %v635 = vld [vmem:[%s528 + $0x19c] sm:$0xf]
        %v636 = vld [vmem:[%s528 + $0x1a0] sm:$0xf]
        %v637 = vld [vmem:[%s528 + $0x1a4] sm:$0xf]
        %v638 = vld [vmem:[%s528 + $0x1a8] sm:$0xf]
        %v639 = vld [vmem:[%s528 + $0x1ac] sm:$0xf]
        %v640 = vld [vmem:[%s528 + $0x1b0] sm:$0xf]
        %v641 = vld [vmem:[%s528 + $0x1b4] sm:$0xf]
        %v642 = vld [vmem:[%s528 + $0x1b8] sm:$0xf]
        %v643 = vld [vmem:[%s528 + $0x1bc] sm:$0xf]
        %v644 = vld [vmem:[%s528 + $0x1c0] sm:$0xf]
        %v645 = vld [vmem:[%s528 + $0x1c4] sm:$0xf]
        %v646 = vld [vmem:[%s528 + $0x1c8] sm:$0xf]
        %v647 = vld [vmem:[%s528 + $0x1cc] sm:$0xf]
        %v648 = vld [vmem:[%s528 + $0x1d0] sm:$0xf]
        %v649 = vld [vmem:[%s528 + $0x1d4] sm:$0xf]
        %v650 = vld [vmem:[%s528 + $0x1d8] sm:$0xf]
        %v651 = vld [vmem:[%s528 + $0x1dc] sm:$0xf]
        %v652 = vld [vmem:[%s528 + $0x1e0] sm:$0xf]
        %v653 = vld [vmem:[%s528 + $0x1e4] sm:$0xf]
        %v654 = vld [vmem:[%s528 + $0x1e8] sm:$0xf]
        %v655 = vld [vmem:[%s528 + $0x1ec] sm:$0xf]
        %v656 = vld [vmem:[%s528 + $0x1f0] sm:$0xf]
        %v657 = vld [vmem:[%s528 + $0x1f4] sm:$0xf]
        %v658 = vld [vmem:[%s528 + $0x1f8] sm:$0xf]
        %v659 = vld [vmem:[%s528 + $0x1fc] sm:$0xf]
        %v660 = vld [vmem:[%s1] sm:$0xf]
        %v661 = vld [vmem:[%s1 + $0x4] sm:$0xf]
        %v662 = vld [vmem:[%s1 + $0x8] sm:$0xf]
        %v663 = vld [vmem:[%s1 + $0xc] sm:$0x3]
        %v664 = vld [vmem:[%s2] sm:$0x1]
        %v666 = vlaneseq
        %v667 = vshrl.u32 %v666, 7
        %v668 = vsub.s32 0, %v667
        %v669 = vrot.slane %v664, %v668
        %v799 = vunpack.c.l.b16 %v532
        %v800 = vunpack.c.l.b16 %v533
        %v801 = vunpack.c.l.b16 %v534
        %v802 = vunpack.c.l.b16 %v535
        %v803 = vunpack.c.l.b16 %v536
        %v804 = vunpack.c.l.b16 %v537
        %v805 = vunpack.c.l.b16 %v538
        %v806 = vunpack.c.l.b16 %v539
        %v807 = vunpack.c.l.b16 %v540
        %v808 = vunpack.c.l.b16 %v541
        %v809 = vunpack.c.l.b16 %v542
        %v810 = vunpack.c.l.b16 %v543
        %v811 = vunpack.c.l.b16 %v544
        %v812 = vunpack.c.l.b16 %v545
        %v813 = vunpack.c.l.b16 %v546
        %v814 = vunpack.c.l.b16 %v547
        %v815 = vunpack.c.l.b16 %v548
        %v816 = vunpack.c.l.b16 %v549
        %v817 = vunpack.c.l.b16 %v550
        %v818 = vunpack.c.l.b16 %v551
        %v819 = vunpack.c.l.b16 %v552
        %v820 = vunpack.c.l.b16 %v553
        %v821 = vunpack.c.l.b16 %v554
        %v822 = vunpack.c.l.b16 %v555
        %v823 = vunpack.c.l.b16 %v556
        %v824 = vunpack.c.l.b16 %v557
        %v825 = vunpack.c.l.b16 %v558
        %v826 = vunpack.c.l.b16 %v559
        %v827 = vunpack.c.l.b16 %v560
        %v828 = vunpack.c.l.b16 %v561
        %v829 = vunpack.c.l.b16 %v562
        %v830 = vunpack.c.l.b16 %v563
        %v831 = vunpack.c.l.b16 %v564
        %v832 = vunpack.c.l.b16 %v565
        %v833 = vunpack.c.l.b16 %v566
        %v834 = vunpack.c.l.b16 %v567
        %v835 = vunpack.c.l.b16 %v568
        %v836 = vunpack.c.l.b16 %v569
        %v837 = vunpack.c.l.b16 %v570
        %v838 = vunpack.c.l.b16 %v571
        %v839 = vunpack.c.l.b16 %v572
        %v840 = vunpack.c.l.b16 %v573
        %v841 = vunpack.c.l.b16 %v574
        %v842 = vunpack.c.l.b16 %v575
        %v843 = vunpack.c.l.b16 %v576
        %v844 = vunpack.c.l.b16 %v577
        %v845 = vunpack.c.l.b16 %v578
        %v846 = vunpack.c.l.b16 %v579
        %v847 = vunpack.c.l.b16 %v580
        %v848 = vunpack.c.l.b16 %v581
        %v849 = vunpack.c.l.b16 %v582
        %v850 = vunpack.c.l.b16 %v583
        %v851 = vunpack.c.l.b16 %v584
        %v852 = vunpack.c.l.b16 %v585
        %v853 = vunpack.c.l.b16 %v586
        %v854 = vunpack.c.l.b16 %v587
        %v855 = vunpack.c.l.b16 %v588
        %v856 = vunpack.c.l.b16 %v589
        %v857 = vunpack.c.l.b16 %v590
        %v858 = vunpack.c.l.b16 %v591
        %v859 = vunpack.c.l.b16 %v592
        %v860 = vunpack.c.l.b16 %v593
        %v861 = vunpack.c.l.b16 %v594
        %v862 = vunpack.c.l.b16 %v595
        %v863 = vunpack.c.l.b16 %v596
        %v864 = vunpack.c.l.b16 %v597
        %v865 = vunpack.c.l.b16 %v598
        %v866 = vunpack.c.l.b16 %v599
        %v867 = vunpack.c.l.b16 %v600
        %v868 = vunpack.c.l.b16 %v601
        %v869 = vunpack.c.l.b16 %v602
        %v870 = vunpack.c.l.b16 %v603
        %v871 = vunpack.c.l.b16 %v604
        %v872 = vunpack.c.l.b16 %v605
        %v873 = vunpack.c.l.b16 %v606
        %v874 = vunpack.c.l.b16 %v607
        %v875 = vunpack.c.l.b16 %v608
        %v876 = vunpack.c.l.b16 %v609
        %v877 = vunpack.c.l.b16 %v610
        %v878 = vunpack.c.l.b16 %v611
        %v879 = vunpack.c.l.b16 %v612
        %v880 = vunpack.c.l.b16 %v613
        %v881 = vunpack.c.l.b16 %v614
        %v882 = vunpack.c.l.b16 %v615
        %v883 = vunpack.c.l.b16 %v616
        %v884 = vunpack.c.l.b16 %v617
        %v885 = vunpack.c.l.b16 %v618
        %v886 = vunpack.c.l.b16 %v619
        %v887 = vunpack.c.l.b16 %v620
        %v888 = vunpack.c.l.b16 %v621
        %v889 = vunpack.c.l.b16 %v622
        %v890 = vunpack.c.l.b16 %v623
        %v891 = vunpack.c.l.b16 %v624
        %v892 = vunpack.c.l.b16 %v625
        %v893 = vunpack.c.l.b16 %v626
        %v894 = vunpack.c.l.b16 %v627
        %v895 = vunpack.c.l.b16 %v628
        %v896 = vunpack.c.l.b16 %v629
        %v897 = vunpack.c.l.b16 %v630
        %v898 = vunpack.c.l.b16 %v631
        %v899 = vunpack.c.l.b16 %v632
        %v900 = vunpack.c.l.b16 %v633
        %v901 = vunpack.c.l.b16 %v634
        %v902 = vunpack.c.l.b16 %v635
        %v903 = vunpack.c.l.b16 %v636
        %v904 = vunpack.c.l.b16 %v637
        %v905 = vunpack.c.l.b16 %v638
        %v906 = vunpack.c.l.b16 %v639
        %v907 = vunpack.c.l.b16 %v640
        %v908 = vunpack.c.l.b16 %v641
        %v909 = vunpack.c.l.b16 %v642
        %v910 = vunpack.c.l.b16 %v643
        %v911 = vunpack.c.l.b16 %v644
        %v912 = vunpack.c.l.b16 %v645
        %v913 = vunpack.c.l.b16 %v646
        %v914 = vunpack.c.l.b16 %v647
        %v915 = vunpack.c.l.b16 %v648
        %v916 = vunpack.c.l.b16 %v649
        %v917 = vunpack.c.l.b16 %v650
        %v918 = vunpack.c.l.b16 %v651
        %v919 = vunpack.c.l.b16 %v652
        %v920 = vunpack.c.l.b16 %v653
        %v921 = vunpack.c.l.b16 %v654
        %v922 = vunpack.c.l.b16 %v655
        %v923 = vunpack.c.l.b16 %v656
        %v924 = vunpack.c.l.b16 %v657
        %v925 = vunpack.c.l.b16 %v658
        %v926 = vunpack.c.l.b16 %v659
        %v927 = vpack.c.b16 %v800, %v799
        %v928 = vpack.c.b16 %v802, %v801
        %v929 = vpack.c.b16 %v804, %v803
        %v930 = vpack.c.b16 %v806, %v805
        %v931 = vpack.c.b16 %v808, %v807
        %v932 = vpack.c.b16 %v810, %v809
        %v933 = vpack.c.b16 %v812, %v811
        %v934 = vpack.c.b16 %v814, %v813
        %v935 = vpack.c.b16 %v816, %v815
        %v936 = vpack.c.b16 %v818, %v817
        %v937 = vpack.c.b16 %v820, %v819
        %v938 = vpack.c.b16 %v822, %v821
        %v939 = vpack.c.b16 %v824, %v823
        %v940 = vpack.c.b16 %v826, %v825
        %v941 = vpack.c.b16 %v828, %v827
        %v942 = vpack.c.b16 %v830, %v829
        %v943 = vpack.c.b16 %v832, %v831
        %v944 = vpack.c.b16 %v834, %v833
        %v945 = vpack.c.b16 %v836, %v835
        %v946 = vpack.c.b16 %v838, %v837
        %v947 = vpack.c.b16 %v840, %v839
        %v948 = vpack.c.b16 %v842, %v841
        %v949 = vpack.c.b16 %v844, %v843
        %v950 = vpack.c.b16 %v846, %v845
        %v951 = vpack.c.b16 %v848, %v847
        %v952 = vpack.c.b16 %v850, %v849
        %v953 = vpack.c.b16 %v852, %v851
        %v954 = vpack.c.b16 %v854, %v853
        %v955 = vpack.c.b16 %v856, %v855
        %v956 = vpack.c.b16 %v858, %v857
        %v957 = vpack.c.b16 %v860, %v859
        %v958 = vpack.c.b16 %v862, %v861
        %v959 = vpack.c.b16 %v864, %v863
        %v960 = vpack.c.b16 %v866, %v865
        %v961 = vpack.c.b16 %v868, %v867
        %v962 = vpack.c.b16 %v870, %v869
        %v963 = vpack.c.b16 %v872, %v871
        %v964 = vpack.c.b16 %v874, %v873
        %v965 = vpack.c.b16 %v876, %v875
        %v966 = vpack.c.b16 %v878, %v877
        %v967 = vpack.c.b16 %v880, %v879
        %v968 = vpack.c.b16 %v882, %v881
        %v969 = vpack.c.b16 %v884, %v883
        %v970 = vpack.c.b16 %v886, %v885
        %v971 = vpack.c.b16 %v888, %v887
        %v972 = vpack.c.b16 %v890, %v889
        %v973 = vpack.c.b16 %v892, %v891
        %v974 = vpack.c.b16 %v894, %v893
        %v975 = vpack.c.b16 %v896, %v895
        %v976 = vpack.c.b16 %v898, %v897
        %v977 = vpack.c.b16 %v900, %v899
        %v978 = vpack.c.b16 %v902, %v901
        %v979 = vpack.c.b16 %v904, %v903
        %v980 = vpack.c.b16 %v906, %v905
        %v981 = vpack.c.b16 %v908, %v907
        %v982 = vpack.c.b16 %v910, %v909
        %v983 = vpack.c.b16 %v912, %v911
        %v984 = vpack.c.b16 %v914, %v913
        %v985 = vpack.c.b16 %v916, %v915
        %v986 = vpack.c.b16 %v918, %v917
        %v987 = vpack.c.b16 %v920, %v919
        %v988 = vpack.c.b16 %v922, %v921
        %v989 = vpack.c.b16 %v924, %v923
        %v990 = vpack.c.b16 %v926, %v925
        %v995 = vunpack.c.l.b16 %v660
        %v996 = vunpack.c.l.b16 %v661
        %v997 = vunpack.c.l.b16 %v662
        %v998 = vunpack.c.l.b16 %v663
        %v999 = vpack.c.b16 %v996, %v995
        %v1000 = vpack.c.b16 %v998, %v997
        %vm1002 = vcmask 220160
        %v1004 = vsel %vm1002, %v927, 0
        %v1007 = vsel %vm1002, %v928, 0
        %v1010 = vsel %vm1002, %v929, 0
        %v1013 = vsel %vm1002, %v930, 0
        %v1016 = vsel %vm1002, %v931, 0
        %v1019 = vsel %vm1002, %v932, 0
        %v1022 = vsel %vm1002, %v933, 0
        %v1025 = vsel %vm1002, %v934, 0
        %v1028 = vsel %vm1002, %v935, 0
        %v1031 = vsel %vm1002, %v936, 0
        %v1034 = vsel %vm1002, %v937, 0
        %v1037 = vsel %vm1002, %v938, 0
        %v1040 = vsel %vm1002, %v939, 0
        %v1043 = vsel %vm1002, %v940, 0
        %v1046 = vsel %vm1002, %v941, 0
        %v1049 = vsel %vm1002, %v942, 0
        %v1052 = vsel %vm1002, %v943, 0
        %v1055 = vsel %vm1002, %v944, 0
        %v1058 = vsel %vm1002, %v945, 0
        %v1061 = vsel %vm1002, %v946, 0
        %v1064 = vsel %vm1002, %v947, 0
        %v1067 = vsel %vm1002, %v948, 0
        %v1070 = vsel %vm1002, %v949, 0
        %v1073 = vsel %vm1002, %v950, 0
        %v1076 = vsel %vm1002, %v951, 0
        %v1079 = vsel %vm1002, %v952, 0
        %v1082 = vsel %vm1002, %v953, 0
        %v1085 = vsel %vm1002, %v954, 0
        %v1088 = vsel %vm1002, %v955, 0
        %v1091 = vsel %vm1002, %v956, 0
        %v1094 = vsel %vm1002, %v957, 0
        %v1097 = vsel %vm1002, %v958, 0
        %v1100 = vsel %vm1002, %v959, 0
        %v1103 = vsel %vm1002, %v960, 0
        %v1106 = vsel %vm1002, %v961, 0
        %v1109 = vsel %vm1002, %v962, 0
        %v1112 = vsel %vm1002, %v963, 0
        %v1115 = vsel %vm1002, %v964, 0
        %v1118 = vsel %vm1002, %v965, 0
        %v1121 = vsel %vm1002, %v966, 0
        %v1124 = vsel %vm1002, %v967, 0
        %v1127 = vsel %vm1002, %v968, 0
        %v1130 = vsel %vm1002, %v969, 0
        %v1133 = vsel %vm1002, %v970, 0
        %v1136 = vsel %vm1002, %v971, 0
        %v1139 = vsel %vm1002, %v972, 0
        %v1142 = vsel %vm1002, %v973, 0
        %v1145 = vsel %vm1002, %v974, 0
        %v1148 = vsel %vm1002, %v975, 0
        %v1151 = vsel %vm1002, %v976, 0
        %v1154 = vsel %vm1002, %v977, 0
        %v1157 = vsel %vm1002, %v978, 0
        %v1160 = vsel %vm1002, %v979, 0
        %v1163 = vsel %vm1002, %v980, 0
        %v1166 = vsel %vm1002, %v981, 0
        %v1169 = vsel %vm1002, %v982, 0
        %v1172 = vsel %vm1002, %v983, 0
        %v1175 = vsel %vm1002, %v984, 0
        %v1178 = vsel %vm1002, %v985, 0
        %v1181 = vsel %vm1002, %v986, 0
        %v1184 = vsel %vm1002, %v987, 0
        %v1187 = vsel %vm1002, %v988, 0
        %v1190 = vsel %vm1002, %v989, 0
        %v1193 = vsel %vm1002, %v990, 0
        %vm1195 = vcmask 1044480
        %vm1196 = vcmask 1045504
        %v1197 = vsel %vm1195, 4294967295, 65535
        %v1198 = vsel %vm1196, %v1197, 0
        %v1200 = vand.u32 %v1000, %v1198
        %1202 = vmatprep.subr.bf16.mxu0 0
        %1203 = vmatpush1.bf16.msra.mxu0 %v999
        %1204 = vmatprep.subr.bf16.mxu0 0
        %1205 = vmatpush1.bf16.msra.mxu0 %v1200
        %1206 = vmatprep.subr.bf16.mxu0 0
        %1207 = vmatpush1.bf16.msra.mxu0 0
        %1208 = vmatprep.subr.bf16.mxu0 0
        %1209 = vmatpush1.bf16.msra.mxu0 0
        %1210 = vmatprep.subr.bf16.mxu0 0
        %1211 = vmatpush1.bf16.msra.mxu0 0
        %1212 = vmatprep.subr.bf16.mxu0 0
        %1213 = vmatpush1.bf16.msra.mxu0 0
        %1214 = vmatprep.subr.bf16.mxu0 0
        %1215 = vmatpush1.bf16.msra.mxu0 0
        %1216 = vmatprep.subr.bf16.mxu0 0
        %1217 = vmatpush1.bf16.msra.mxu0 0
        %1218 = vmatprep.subr.bf16.mxu0 0
        %1219 = vmatpush1.bf16.msra.mxu0 0
        %1220 = vmatprep.subr.bf16.mxu0 0
        %1221 = vmatpush1.bf16.msra.mxu0 0
        %1222 = vmatprep.subr.bf16.mxu0 0
        %1223 = vmatpush1.bf16.msra.mxu0 0
        %1224 = vmatprep.subr.bf16.mxu0 0
        %1225 = vmatpush1.bf16.msra.mxu0 0
        %1226 = vmatprep.subr.bf16.mxu0 0
        %1227 = vmatpush1.bf16.msra.mxu0 0
        %1228 = vmatprep.subr.bf16.mxu0 0
        %1229 = vmatpush1.bf16.msra.mxu0 0
        %1230 = vmatprep.subr.bf16.mxu0 0
        %1231 = vmatpush1.bf16.msra.mxu0 0
        %1232 = vmatprep.subr.bf16.mxu0 0
        %1233 = vmatpush1.bf16.msra.mxu0 0
        %1234 = vmatprep.mubr.bf16.mxu0 0
        %1235 = vmatmul.mubr.bf16.gmra.mrb[0].mxu0 %v1004
        %v1236 = vpop.f32.mrb[0].mxu0
        %v1237 = vadd.f32 %v669, %v1236
        %v1238 = vpop.f32.mrb[0].mxu0
        %v1239 = vpop.f32.mrb[0].mxu0
        %v1240 = vadd.f32 %v669, %v1239
        %v1241 = vpop.f32.mrb[0].mxu0
        %1242 = vmatprep.mubr.bf16.mxu0 0
        %1243 = vmatmul.mubr.bf16.gmra.mrb[0].mxu0 %v1007
        %v1244 = vpop.f32.mrb[0].mxu0
        %v1245 = vadd.f32 %v669, %v1244
        %v1246 = vpop.f32.mrb[0].mxu0
        %v1247 = vpop.f32.mrb[0].mxu0
        %v1248 = vadd.f32 %v669, %v1247
        %v1249 = vpop.f32.mrb[0].mxu0
        %1250 = vmatprep.mubr.bf16.mxu0 0
        %1251 = vmatmul.mubr.bf16.gmra.mrb[0].mxu0 %v1010
        %v1252 = vpop.f32.mrb[0].mxu0
        %v1253 = vadd.f32 %v669, %v1252
        %v1254 = vpop.f32.mrb[0].mxu0
        %v1255 = vpop.f32.mrb[0].mxu0
        %v1256 = vadd.f32 %v669, %v1255
        %v1257 = vpop.f32.mrb[0].mxu0
        %1258 = vmatprep.mubr.bf16.mxu0 0
        %1259 = vmatmul.mubr.bf16.gmra.mrb[0].mxu0 %v1013
        %v1260 = vpop.f32.mrb[0].mxu0
        %v1261 = vadd.f32 %v669, %v1260
        %v1262 = vpop.f32.mrb[0].mxu0
        %v1263 = vpop.f32.mrb[0].mxu0
        %v1264 = vadd.f32 %v669, %v1263
        %v1265 = vpop.f32.mrb[0].mxu0
        %1266 = vmatprep.mubr.bf16.mxu0 0
        %1267 = vmatmul.mubr.bf16.gmra.mrb[0].mxu0 %v1016
        %v1268 = vpop.f32.mrb[0].mxu0
        %v1269 = vadd.f32 %v669, %v1268
        %v1270 = vpop.f32.mrb[0].mxu0
        %v1271 = vpop.f32.mrb[0].mxu0
        %v1272 = vadd.f32 %v669, %v1271
        %v1273 = vpop.f32.mrb[0].mxu0
        %1274 = vmatprep.mubr.bf16.mxu0 0
        %1275 = vmatmul.mubr.bf16.gmra.mrb[0].mxu0 %v1019
        %v1276 = vpop.f32.mrb[0].mxu0
        %v1277 = vadd.f32 %v669, %v1276
        %v1278 = vpop.f32.mrb[0].mxu0
        %v1279 = vpop.f32.mrb[0].mxu0
        %v1280 = vadd.f32 %v669, %v1279
        %v1281 = vpop.f32.mrb[0].mxu0
        %1282 = vmatprep.mubr.bf16.mxu0 0
        %1283 = vmatmul.mubr.bf16.gmra.mrb[0].mxu0 %v1022
        %v1284 = vpop.f32.mrb[0].mxu0
        %v1285 = vadd.f32 %v669, %v1284
        %v1286 = vpop.f32.mrb[0].mxu0
        %v1287 = vpop.f32.mrb[0].mxu0
        %v1288 = vadd.f32 %v669, %v1287
        %v1289 = vpop.f32.mrb[0].mxu0
        %1290 = vmatprep.mubr.bf16.mxu0 0
        %1291 = vmatmul.mubr.bf16.gmra.mrb[0].mxu0 %v1025
        %v1292 = vpop.f32.mrb[0].mxu0
        %v1293 = vadd.f32 %v669, %v1292
        %v1294 = vpop.f32.mrb[0].mxu0
        %v1295 = vpop.f32.mrb[0].mxu0
        %v1296 = vadd.f32 %v669, %v1295
        %v1297 = vpop.f32.mrb[0].mxu0
        %1298 = vmatprep.mubr.bf16.mxu0 0
        %1299 = vmatmul.mubr.bf16.gmra.mrb[0].mxu0 %v1028
        %v1300 = vpop.f32.mrb[0].mxu0
        %v1301 = vadd.f32 %v669, %v1300
        %v1302 = vpop.f32.mrb[0].mxu0
        %v1303 = vpop.f32.mrb[0].mxu0
        %v1304 = vadd.f32 %v669, %v1303
        %v1305 = vpop.f32.mrb[0].mxu0
        %1306 = vmatprep.mubr.bf16.mxu0 0
        %1307 = vmatmul.mubr.bf16.gmra.mrb[0].mxu0 %v1031
        %v1308 = vpop.f32.mrb[0].mxu0
        %v1309 = vadd.f32 %v669, %v1308
        %v1310 = vpop.f32.mrb[0].mxu0
        %v1311 = vpop.f32.mrb[0].mxu0
        %v1312 = vadd.f32 %v669, %v1311
        %v1313 = vpop.f32.mrb[0].mxu0
        %1314 = vmatprep.mubr.bf16.mxu0 0
        %1315 = vmatmul.mubr.bf16.gmra.mrb[0].mxu0 %v1034
        %v1316 = vpop.f32.mrb[0].mxu0
        %v1317 = vadd.f32 %v669, %v1316
        %v1318 = vpop.f32.mrb[0].mxu0
        %v1319 = vpop.f32.mrb[0].mxu0
        %v1320 = vadd.f32 %v669, %v1319
        %v1321 = vpop.f32.mrb[0].mxu0
        %1322 = vmatprep.mubr.bf16.mxu0 0
        %1323 = vmatmul.mubr.bf16.gmra.mrb[0].mxu0 %v1037
        %v1324 = vpop.f32.mrb[0].mxu0
        %v1325 = vadd.f32 %v669, %v1324
        %v1326 = vpop.f32.mrb[0].mxu0
        %v1327 = vpop.f32.mrb[0].mxu0
        %v1328 = vadd.f32 %v669, %v1327
        %v1329 = vpop.f32.mrb[0].mxu0
        %1330 = vmatprep.mubr.bf16.mxu0 0
        %1331 = vmatmul.mubr.bf16.gmra.mrb[0].mxu0 %v1040
        %v1332 = vpop.f32.mrb[0].mxu0
        %v1333 = vadd.f32 %v669, %v1332
        %v1334 = vpop.f32.mrb[0].mxu0
        %v1335 = vpop.f32.mrb[0].mxu0
        %v1336 = vadd.f32 %v669, %v1335
        %v1337 = vpop.f32.mrb[0].mxu0
        %1338 = vmatprep.mubr.bf16.mxu0 0
        %1339 = vmatmul.mubr.bf16.gmra.mrb[0].mxu0 %v1043
        %v1340 = vpop.f32.mrb[0].mxu0
        %v1341 = vadd.f32 %v669, %v1340
        %v1342 = vpop.f32.mrb[0].mxu0
        %v1343 = vpop.f32.mrb[0].mxu0
        %v1344 = vadd.f32 %v669, %v1343
        %v1345 = vpop.f32.mrb[0].mxu0
        %1346 = vmatprep.mubr.bf16.mxu0 0
        %1347 = vmatmul.mubr.bf16.gmra.mrb[0].mxu0 %v1046
        %v1348 = vpop.f32.mrb[0].mxu0
        %v1349 = vadd.f32 %v669, %v1348
        %v1350 = vpop.f32.mrb[0].mxu0
        %v1351 = vpop.f32.mrb[0].mxu0
        %v1352 = vadd.f32 %v669, %v1351
        %v1353 = vpop.f32.mrb[0].mxu0
        %1354 = vmatprep.mubr.bf16.mxu0 0
        %1355 = vmatmul.mubr.bf16.gmra.mrb[0].mxu0 %v1049
        %v1356 = vpop.f32.mrb[0].mxu0
        %v1357 = vadd.f32 %v669, %v1356
        %v1358 = vpop.f32.mrb[0].mxu0
        %v1359 = vpop.f32.mrb[0].mxu0
        %v1360 = vadd.f32 %v669, %v1359
        %v1361 = vpop.f32.mrb[0].mxu0
        %1362 = vmatprep.mubr.bf16.mxu0 0
        %1363 = vmatmul.mubr.bf16.gmra.mrb[0].mxu0 %v1052
        %v1364 = vpop.f32.mrb[0].mxu0
        %v1365 = vadd.f32 %v669, %v1364
        %v1366 = vpop.f32.mrb[0].mxu0
        %v1367 = vpop.f32.mrb[0].mxu0
        %v1368 = vadd.f32 %v669, %v1367
        %v1369 = vpop.f32.mrb[0].mxu0
        %1370 = vmatprep.mubr.bf16.mxu0 0
        %1371 = vmatmul.mubr.bf16.gmra.mrb[0].mxu0 %v1055
        %v1372 = vpop.f32.mrb[0].mxu0
        %v1373 = vadd.f32 %v669, %v1372
        %v1374 = vpop.f32.mrb[0].mxu0
        %v1375 = vpop.f32.mrb[0].mxu0
        %v1376 = vadd.f32 %v669, %v1375
        %v1377 = vpop.f32.mrb[0].mxu0
        %1378 = vmatprep.mubr.bf16.mxu0 0
        %1379 = vmatmul.mubr.bf16.gmra.mrb[0].mxu0 %v1058
        %v1380 = vpop.f32.mrb[0].mxu0
        %v1381 = vadd.f32 %v669, %v1380
        %v1382 = vpop.f32.mrb[0].mxu0
        %v1383 = vpop.f32.mrb[0].mxu0
        %v1384 = vadd.f32 %v669, %v1383
        %v1385 = vpop.f32.mrb[0].mxu0
        %1386 = vmatprep.mubr.bf16.mxu0 0
        %1387 = vmatmul.mubr.bf16.gmra.mrb[0].mxu0 %v1061
        %v1388 = vpop.f32.mrb[0].mxu0
        %v1389 = vadd.f32 %v669, %v1388
        %v1390 = vpop.f32.mrb[0].mxu0
        %v1391 = vpop.f32.mrb[0].mxu0
        %v1392 = vadd.f32 %v669, %v1391
        %v1393 = vpop.f32.mrb[0].mxu0
        %1394 = vmatprep.mubr.bf16.mxu0 0
        %1395 = vmatmul.mubr.bf16.gmra.mrb[0].mxu0 %v1064
        %v1396 = vpop.f32.mrb[0].mxu0
        %v1397 = vadd.f32 %v669, %v1396
        %v1398 = vpop.f32.mrb[0].mxu0
        %v1399 = vpop.f32.mrb[0].mxu0
        %v1400 = vadd.f32 %v669, %v1399
        %v1401 = vpop.f32.mrb[0].mxu0
        %1402 = vmatprep.mubr.bf16.mxu0 0
        %1403 = vmatmul.mubr.bf16.gmra.mrb[0].mxu0 %v1067
        %v1404 = vpop.f32.mrb[0].mxu0
        %v1405 = vadd.f32 %v669, %v1404
        %v1406 = vpop.f32.mrb[0].mxu0
        %v1407 = vpop.f32.mrb[0].mxu0
        %v1408 = vadd.f32 %v669, %v1407
        %v1409 = vpop.f32.mrb[0].mxu0
        %1410 = vmatprep.mubr.bf16.mxu0 0
        %1411 = vmatmul.mubr.bf16.gmra.mrb[0].mxu0 %v1070
        %v1412 = vpop.f32.mrb[0].mxu0
        %v1413 = vadd.f32 %v669, %v1412
        %v1414 = vpop.f32.mrb[0].mxu0
        %v1415 = vpop.f32.mrb[0].mxu0
        %v1416 = vadd.f32 %v669, %v1415
        %v1417 = vpop.f32.mrb[0].mxu0
        %1418 = vmatprep.mubr.bf16.mxu0 0
        %1419 = vmatmul.mubr.bf16.gmra.mrb[0].mxu0 %v1073
        %v1420 = vpop.f32.mrb[0].mxu0
        %v1421 = vadd.f32 %v669, %v1420
        %v1422 = vpop.f32.mrb[0].mxu0
        %v1423 = vpop.f32.mrb[0].mxu0
        %v1424 = vadd.f32 %v669, %v1423
        %v1425 = vpop.f32.mrb[0].mxu0
        %1426 = vmatprep.mubr.bf16.mxu0 0
        %1427 = vmatmul.mubr.bf16.gmra.mrb[0].mxu0 %v1076
        %v1428 = vpop.f32.mrb[0].mxu0
        %v1429 = vadd.f32 %v669, %v1428
        %v1430 = vpop.f32.mrb[0].mxu0
        %v1431 = vpop.f32.mrb[0].mxu0
        %v1432 = vadd.f32 %v669, %v1431
        %v1433 = vpop.f32.mrb[0].mxu0
        %1434 = vmatprep.mubr.bf16.mxu0 0
        %1435 = vmatmul.mubr.bf16.gmra.mrb[0].mxu0 %v1079
        %v1436 = vpop.f32.mrb[0].mxu0
        %v1437 = vadd.f32 %v669, %v1436
        %v1438 = vpop.f32.mrb[0].mxu0
        %v1439 = vpop.f32.mrb[0].mxu0
        %v1440 = vadd.f32 %v669, %v1439
        %v1441 = vpop.f32.mrb[0].mxu0
        %1442 = vmatprep.mubr.bf16.mxu0 0
        %1443 = vmatmul.mubr.bf16.gmra.mrb[0].mxu0 %v1082
        %v1444 = vpop.f32.mrb[0].mxu0
        %v1445 = vadd.f32 %v669, %v1444
        %v1446 = vpop.f32.mrb[0].mxu0
        %v1447 = vpop.f32.mrb[0].mxu0
        %v1448 = vadd.f32 %v669, %v1447
        %v1449 = vpop.f32.mrb[0].mxu0
        %1450 = vmatprep.mubr.bf16.mxu0 0
        %1451 = vmatmul.mubr.bf16.gmra.mrb[0].mxu0 %v1085
        %v1452 = vpop.f32.mrb[0].mxu0
        %v1453 = vadd.f32 %v669, %v1452
        %v1454 = vpop.f32.mrb[0].mxu0
        %v1455 = vpop.f32.mrb[0].mxu0
        %v1456 = vadd.f32 %v669, %v1455
        %v1457 = vpop.f32.mrb[0].mxu0
        %1458 = vmatprep.mubr.bf16.mxu0 0
        %1459 = vmatmul.mubr.bf16.gmra.mrb[0].mxu0 %v1088
        %v1460 = vpop.f32.mrb[0].mxu0
        %v1461 = vadd.f32 %v669, %v1460
        %v1462 = vpop.f32.mrb[0].mxu0
        %v1463 = vpop.f32.mrb[0].mxu0
        %v1464 = vadd.f32 %v669, %v1463
        %v1465 = vpop.f32.mrb[0].mxu0
        %1466 = vmatprep.mubr.bf16.mxu0 0
        %1467 = vmatmul.mubr.bf16.gmra.mrb[0].mxu0 %v1091
        %v1468 = vpop.f32.mrb[0].mxu0
        %v1469 = vadd.f32 %v669, %v1468
        %v1470 = vpop.f32.mrb[0].mxu0
        %v1471 = vpop.f32.mrb[0].mxu0
        %v1472 = vadd.f32 %v669, %v1471
        %v1473 = vpop.f32.mrb[0].mxu0
        %1474 = vmatprep.mubr.bf16.mxu0 0
        %1475 = vmatmul.mubr.bf16.gmra.mrb[0].mxu0 %v1094
        %v1476 = vpop.f32.mrb[0].mxu0
        %v1477 = vadd.f32 %v669, %v1476
        %v1478 = vpop.f32.mrb[0].mxu0
        %v1479 = vpop.f32.mrb[0].mxu0
        %v1480 = vadd.f32 %v669, %v1479
        %v1481 = vpop.f32.mrb[0].mxu0
        %1482 = vmatprep.mubr.bf16.mxu0 0
        %1483 = vmatmul.mubr.bf16.gmra.mrb[0].mxu0 %v1097
        %v1484 = vpop.f32.mrb[0].mxu0
        %v1485 = vadd.f32 %v669, %v1484
        %v1486 = vpop.f32.mrb[0].mxu0
        %v1487 = vpop.f32.mrb[0].mxu0
        %v1488 = vadd.f32 %v669, %v1487
        %v1489 = vpop.f32.mrb[0].mxu0
        %1490 = vmatprep.mubr.bf16.mxu0 0
        %1491 = vmatmul.mubr.bf16.gmra.mrb[0].mxu0 %v1100
        %v1492 = vpop.f32.mrb[0].mxu0
        %v1493 = vadd.f32 %v669, %v1492
        %v1494 = vpop.f32.mrb[0].mxu0
        %v1495 = vpop.f32.mrb[0].mxu0
        %v1496 = vadd.f32 %v669, %v1495
        %v1497 = vpop.f32.mrb[0].mxu0
        %1498 = vmatprep.mubr.bf16.mxu0 0
        %1499 = vmatmul.mubr.bf16.gmra.mrb[0].mxu0 %v1103
        %v1500 = vpop.f32.mrb[0].mxu0
        %v1501 = vadd.f32 %v669, %v1500
        %v1502 = vpop.f32.mrb[0].mxu0
        %v1503 = vpop.f32.mrb[0].mxu0
        %v1504 = vadd.f32 %v669, %v1503
        %v1505 = vpop.f32.mrb[0].mxu0
        %1506 = vmatprep.mubr.bf16.mxu0 0
        %1507 = vmatmul.mubr.bf16.gmra.mrb[0].mxu0 %v1106
        %v1508 = vpop.f32.mrb[0].mxu0
        %v1509 = vadd.f32 %v669, %v1508
        %v1510 = vpop.f32.mrb[0].mxu0
        %v1511 = vpop.f32.mrb[0].mxu0
        %v1512 = vadd.f32 %v669, %v1511
        %v1513 = vpop.f32.mrb[0].mxu0
        %1514 = vmatprep.mubr.bf16.mxu0 0
        %1515 = vmatmul.mubr.bf16.gmra.mrb[0].mxu0 %v1109
        %v1516 = vpop.f32.mrb[0].mxu0
        %v1517 = vadd.f32 %v669, %v1516
        %v1518 = vpop.f32.mrb[0].mxu0
        %v1519 = vpop.f32.mrb[0].mxu0
        %v1520 = vadd.f32 %v669, %v1519
        %v1521 = vpop.f32.mrb[0].mxu0
        %1522 = vmatprep.mubr.bf16.mxu0 0
        %1523 = vmatmul.mubr.bf16.gmra.mrb[0].mxu0 %v1112
        %v1524 = vpop.f32.mrb[0].mxu0
        %v1525 = vadd.f32 %v669, %v1524
        %v1526 = vpop.f32.mrb[0].mxu0
        %v1527 = vpop.f32.mrb[0].mxu0
        %v1528 = vadd.f32 %v669, %v1527
        %v1529 = vpop.f32.mrb[0].mxu0
        %1530 = vmatprep.mubr.bf16.mxu0 0
        %1531 = vmatmul.mubr.bf16.gmra.mrb[0].mxu0 %v1115
        %v1532 = vpop.f32.mrb[0].mxu0
        %v1533 = vadd.f32 %v669, %v1532
        %v1534 = vpop.f32.mrb[0].mxu0
        %v1535 = vpop.f32.mrb[0].mxu0
        %v1536 = vadd.f32 %v669, %v1535
        %v1537 = vpop.f32.mrb[0].mxu0
        %1538 = vmatprep.mubr.bf16.mxu0 0
        %1539 = vmatmul.mubr.bf16.gmra.mrb[0].mxu0 %v1118
        %v1540 = vpop.f32.mrb[0].mxu0
        %v1541 = vadd.f32 %v669, %v1540
        %v1542 = vpop.f32.mrb[0].mxu0
        %v1543 = vpop.f32.mrb[0].mxu0
        %v1544 = vadd.f32 %v669, %v1543
        %v1545 = vpop.f32.mrb[0].mxu0
        %1546 = vmatprep.mubr.bf16.mxu0 0
        %1547 = vmatmul.mubr.bf16.gmra.mrb[0].mxu0 %v1121
        %v1548 = vpop.f32.mrb[0].mxu0
        %v1549 = vadd.f32 %v669, %v1548
        %v1550 = vpop.f32.mrb[0].mxu0
        %v1551 = vpop.f32.mrb[0].mxu0
        %v1552 = vadd.f32 %v669, %v1551
        %v1553 = vpop.f32.mrb[0].mxu0
        %1554 = vmatprep.mubr.bf16.mxu0 0
        %1555 = vmatmul.mubr.bf16.gmra.mrb[0].mxu0 %v1124
        %v1556 = vpop.f32.mrb[0].mxu0
        %v1557 = vadd.f32 %v669, %v1556
        %v1558 = vpop.f32.mrb[0].mxu0
        %v1559 = vpop.f32.mrb[0].mxu0
        %v1560 = vadd.f32 %v669, %v1559
        %v1561 = vpop.f32.mrb[0].mxu0
        %1562 = vmatprep.mubr.bf16.mxu0 0
        %1563 = vmatmul.mubr.bf16.gmra.mrb[0].mxu0 %v1127
        %v1564 = vpop.f32.mrb[0].mxu0
        %v1565 = vadd.f32 %v669, %v1564
        %v1566 = vpop.f32.mrb[0].mxu0
        %v1567 = vpop.f32.mrb[0].mxu0
        %v1568 = vadd.f32 %v669, %v1567
        %v1569 = vpop.f32.mrb[0].mxu0
        %1570 = vmatprep.mubr.bf16.mxu0 0
        %1571 = vmatmul.mubr.bf16.gmra.mrb[0].mxu0 %v1130
        %v1572 = vpop.f32.mrb[0].mxu0
        %v1573 = vadd.f32 %v669, %v1572
        %v1574 = vpop.f32.mrb[0].mxu0
        %v1575 = vpop.f32.mrb[0].mxu0
        %v1576 = vadd.f32 %v669, %v1575
        %v1577 = vpop.f32.mrb[0].mxu0
        %1578 = vmatprep.mubr.bf16.mxu0 0
        %1579 = vmatmul.mubr.bf16.gmra.mrb[0].mxu0 %v1133
        %v1580 = vpop.f32.mrb[0].mxu0
        %v1581 = vadd.f32 %v669, %v1580
        %v1582 = vpop.f32.mrb[0].mxu0
        %v1583 = vpop.f32.mrb[0].mxu0
        %v1584 = vadd.f32 %v669, %v1583
        %v1585 = vpop.f32.mrb[0].mxu0
        %1586 = vmatprep.mubr.bf16.mxu0 0
        %1587 = vmatmul.mubr.bf16.gmra.mrb[0].mxu0 %v1136
        %v1588 = vpop.f32.mrb[0].mxu0
        %v1589 = vadd.f32 %v669, %v1588
        %v1590 = vpop.f32.mrb[0].mxu0
        %v1591 = vpop.f32.mrb[0].mxu0
        %v1592 = vadd.f32 %v669, %v1591
        %v1593 = vpop.f32.mrb[0].mxu0
        %1594 = vmatprep.mubr.bf16.mxu0 0
        %1595 = vmatmul.mubr.bf16.gmra.mrb[0].mxu0 %v1139
        %v1596 = vpop.f32.mrb[0].mxu0
        %v1597 = vadd.f32 %v669, %v1596
        %v1598 = vpop.f32.mrb[0].mxu0
        %v1599 = vpop.f32.mrb[0].mxu0
        %v1600 = vadd.f32 %v669, %v1599
        %v1601 = vpop.f32.mrb[0].mxu0
        %1602 = vmatprep.mubr.bf16.mxu0 0
        %1603 = vmatmul.mubr.bf16.gmra.mrb[0].mxu0 %v1142
        %v1604 = vpop.f32.mrb[0].mxu0
        %v1605 = vadd.f32 %v669, %v1604
        %v1606 = vpop.f32.mrb[0].mxu0
        %v1607 = vpop.f32.mrb[0].mxu0
        %v1608 = vadd.f32 %v669, %v1607
        %v1609 = vpop.f32.mrb[0].mxu0
        %1610 = vmatprep.mubr.bf16.mxu0 0
        %1611 = vmatmul.mubr.bf16.gmra.mrb[0].mxu0 %v1145
        %v1612 = vpop.f32.mrb[0].mxu0
        %v1613 = vadd.f32 %v669, %v1612
        %v1614 = vpop.f32.mrb[0].mxu0
        %v1615 = vpop.f32.mrb[0].mxu0
        %v1616 = vadd.f32 %v669, %v1615
        %v1617 = vpop.f32.mrb[0].mxu0
        %1618 = vmatprep.mubr.bf16.mxu0 0
        %1619 = vmatmul.mubr.bf16.gmra.mrb[0].mxu0 %v1148
        %v1620 = vpop.f32.mrb[0].mxu0
        %v1621 = vadd.f32 %v669, %v1620
        %v1622 = vpop.f32.mrb[0].mxu0
        %v1623 = vpop.f32.mrb[0].mxu0
        %v1624 = vadd.f32 %v669, %v1623
        %v1625 = vpop.f32.mrb[0].mxu0
        %1626 = vmatprep.mubr.bf16.mxu0 0
        %1627 = vmatmul.mubr.bf16.gmra.mrb[0].mxu0 %v1151
        %v1628 = vpop.f32.mrb[0].mxu0
        %v1629 = vadd.f32 %v669, %v1628
        %v1630 = vpop.f32.mrb[0].mxu0
        %v1631 = vpop.f32.mrb[0].mxu0
        %v1632 = vadd.f32 %v669, %v1631
        %v1633 = vpop.f32.mrb[0].mxu0
        %1634 = vmatprep.mubr.bf16.mxu0 0
        %1635 = vmatmul.mubr.bf16.gmra.mrb[0].mxu0 %v1154
        %v1636 = vpop.f32.mrb[0].mxu0
        %v1637 = vadd.f32 %v669, %v1636
        %v1638 = vpop.f32.mrb[0].mxu0
        %v1639 = vpop.f32.mrb[0].mxu0
        %v1640 = vadd.f32 %v669, %v1639
        %v1641 = vpop.f32.mrb[0].mxu0
        %1642 = vmatprep.mubr.bf16.mxu0 0
        %1643 = vmatmul.mubr.bf16.gmra.mrb[0].mxu0 %v1157
        %v1644 = vpop.f32.mrb[0].mxu0
        %v1645 = vadd.f32 %v669, %v1644
        %v1646 = vpop.f32.mrb[0].mxu0
        %v1647 = vpop.f32.mrb[0].mxu0
        %v1648 = vadd.f32 %v669, %v1647
        %v1649 = vpop.f32.mrb[0].mxu0
        %1650 = vmatprep.mubr.bf16.mxu0 0
        %1651 = vmatmul.mubr.bf16.gmra.mrb[0].mxu0 %v1160
        %v1652 = vpop.f32.mrb[0].mxu0
        %v1653 = vadd.f32 %v669, %v1652
        %v1654 = vpop.f32.mrb[0].mxu0
        %v1655 = vpop.f32.mrb[0].mxu0
        %v1656 = vadd.f32 %v669, %v1655
        %v1657 = vpop.f32.mrb[0].mxu0
        %1658 = vmatprep.mubr.bf16.mxu0 0
        %1659 = vmatmul.mubr.bf16.gmra.mrb[0].mxu0 %v1163
        %v1660 = vpop.f32.mrb[0].mxu0
        %v1661 = vadd.f32 %v669, %v1660
        %v1662 = vpop.f32.mrb[0].mxu0
        %v1663 = vpop.f32.mrb[0].mxu0
        %v1664 = vadd.f32 %v669, %v1663
        %v1665 = vpop.f32.mrb[0].mxu0
        %1666 = vmatprep.mubr.bf16.mxu0 0
        %1667 = vmatmul.mubr.bf16.gmra.mrb[0].mxu0 %v1166
        %v1668 = vpop.f32.mrb[0].mxu0
        %v1669 = vadd.f32 %v669, %v1668
        %v1670 = vpop.f32.mrb[0].mxu0
        %v1671 = vpop.f32.mrb[0].mxu0
        %v1672 = vadd.f32 %v669, %v1671
        %v1673 = vpop.f32.mrb[0].mxu0
        %1674 = vmatprep.mubr.bf16.mxu0 0
        %1675 = vmatmul.mubr.bf16.gmra.mrb[0].mxu0 %v1169
        %v1676 = vpop.f32.mrb[0].mxu0
        %v1677 = vadd.f32 %v669, %v1676
        %v1678 = vpop.f32.mrb[0].mxu0
        %v1679 = vpop.f32.mrb[0].mxu0
        %v1680 = vadd.f32 %v669, %v1679
        %v1681 = vpop.f32.mrb[0].mxu0
        %1682 = vmatprep.mubr.bf16.mxu0 0
        %1683 = vmatmul.mubr.bf16.gmra.mrb[0].mxu0 %v1172
        %v1684 = vpop.f32.mrb[0].mxu0
        %v1685 = vadd.f32 %v669, %v1684
        %v1686 = vpop.f32.mrb[0].mxu0
        %v1687 = vpop.f32.mrb[0].mxu0
        %v1688 = vadd.f32 %v669, %v1687
        %v1689 = vpop.f32.mrb[0].mxu0
        %1690 = vmatprep.mubr.bf16.mxu0 0
        %1691 = vmatmul.mubr.bf16.gmra.mrb[0].mxu0 %v1175
        %v1692 = vpop.f32.mrb[0].mxu0
        %v1693 = vadd.f32 %v669, %v1692
        %v1694 = vpop.f32.mrb[0].mxu0
        %v1695 = vpop.f32.mrb[0].mxu0
        %v1696 = vadd.f32 %v669, %v1695
        %v1697 = vpop.f32.mrb[0].mxu0
        %1698 = vmatprep.mubr.bf16.mxu0 0
        %1699 = vmatmul.mubr.bf16.gmra.mrb[0].mxu0 %v1178
        %v1700 = vpop.f32.mrb[0].mxu0
        %v1701 = vadd.f32 %v669, %v1700
        %v1702 = vpop.f32.mrb[0].mxu0
        %v1703 = vpop.f32.mrb[0].mxu0
        %v1704 = vadd.f32 %v669, %v1703
        %v1705 = vpop.f32.mrb[0].mxu0
        %1706 = vmatprep.mubr.bf16.mxu0 0
        %1707 = vmatmul.mubr.bf16.gmra.mrb[0].mxu0 %v1181
        %v1708 = vpop.f32.mrb[0].mxu0
        %v1709 = vadd.f32 %v669, %v1708
        %v1710 = vpop.f32.mrb[0].mxu0
        %v1711 = vpop.f32.mrb[0].mxu0
        %v1712 = vadd.f32 %v669, %v1711
        %v1713 = vpop.f32.mrb[0].mxu0
        %1714 = vmatprep.mubr.bf16.mxu0 0
        %1715 = vmatmul.mubr.bf16.gmra.mrb[0].mxu0 %v1184
        %v1716 = vpop.f32.mrb[0].mxu0
        %v1717 = vadd.f32 %v669, %v1716
        %v1718 = vpop.f32.mrb[0].mxu0
        %v1719 = vpop.f32.mrb[0].mxu0
        %v1720 = vadd.f32 %v669, %v1719
        %v1721 = vpop.f32.mrb[0].mxu0
        %1722 = vmatprep.mubr.bf16.mxu0 0
        %1723 = vmatmul.mubr.bf16.gmra.mrb[0].mxu0 %v1187
        %v1724 = vpop.f32.mrb[0].mxu0
        %v1725 = vadd.f32 %v669, %v1724
        %v1726 = vpop.f32.mrb[0].mxu0
        %v1727 = vpop.f32.mrb[0].mxu0
        %v1728 = vadd.f32 %v669, %v1727
        %v1729 = vpop.f32.mrb[0].mxu0
        %1730 = vmatprep.mubr.bf16.mxu0 0
        %1731 = vmatmul.mubr.bf16.gmra.mrb[0].mxu0 %v1190
        %v1732 = vpop.f32.mrb[0].mxu0
        %v1733 = vadd.f32 %v669, %v1732
        %v1734 = vpop.f32.mrb[0].mxu0
        %v1735 = vpop.f32.mrb[0].mxu0
        %v1736 = vadd.f32 %v669, %v1735
        %v1737 = vpop.f32.mrb[0].mxu0
        %1738 = vmatprep.mubr.bf16.mxu0 0
        %1739 = vmatmul.mubr.bf16.gmra.mrb[0].mxu0 %v1193
        %v1740 = vpop.f32.mrb[0].mxu0
        %v1741 = vadd.f32 %v669, %v1740
        %v1742 = vpop.f32.mrb[0].mxu0
        %v1743 = vpop.f32.mrb[0].mxu0
        %v1744 = vadd.f32 %v669, %v1743
        %v1745 = vpop.f32.mrb[0].mxu0
        %1746 = vdwg.mxu0
        %v1747 = vmax.f32 %v1237, 0.0
        %v1748 = vmax.f32 %v1240, 0.0
        %v1749 = vmax.f32 %v1245, 0.0
        %v1750 = vmax.f32 %v1248, 0.0
        %v1751 = vmax.f32 %v1253, 0.0
        %v1752 = vmax.f32 %v1256, 0.0
        %v1753 = vmax.f32 %v1261, 0.0
        %v1754 = vmax.f32 %v1264, 0.0
        %v1755 = vmax.f32 %v1269, 0.0
        %v1756 = vmax.f32 %v1272, 0.0
        %v1757 = vmax.f32 %v1277, 0.0
        %v1758 = vmax.f32 %v1280, 0.0
        %v1759 = vmax.f32 %v1285, 0.0
        %v1760 = vmax.f32 %v1288, 0.0
        %v1761 = vmax.f32 %v1293, 0.0
        %v1762 = vmax.f32 %v1296, 0.0
        %v1763 = vmax.f32 %v1301, 0.0
        %v1764 = vmax.f32 %v1304, 0.0
        %v1765 = vmax.f32 %v1309, 0.0
        %v1766 = vmax.f32 %v1312, 0.0
        %v1767 = vmax.f32 %v1317, 0.0
        %v1768 = vmax.f32 %v1320, 0.0
        %v1769 = vmax.f32 %v1325, 0.0
        %v1770 = vmax.f32 %v1328, 0.0
        %v1771 = vmax.f32 %v1333, 0.0
        %v1772 = vmax.f32 %v1336, 0.0
        %v1773 = vmax.f32 %v1341, 0.0
        %v1774 = vmax.f32 %v1344, 0.0
        %v1775 = vmax.f32 %v1349, 0.0
        %v1776 = vmax.f32 %v1352, 0.0
        %v1777 = vmax.f32 %v1357, 0.0
        %v1778 = vmax.f32 %v1360, 0.0
        %v1779 = vmax.f32 %v1365, 0.0
        %v1780 = vmax.f32 %v1368, 0.0
        %v1781 = vmax.f32 %v1373, 0.0
        %v1782 = vmax.f32 %v1376, 0.0
        %v1783 = vmax.f32 %v1381, 0.0
        %v1784 = vmax.f32 %v1384, 0.0
        %v1785 = vmax.f32 %v1389, 0.0
        %v1786 = vmax.f32 %v1392, 0.0
        %v1787 = vmax.f32 %v1397, 0.0
        %v1788 = vmax.f32 %v1400, 0.0
        %v1789 = vmax.f32 %v1405, 0.0
        %v1790 = vmax.f32 %v1408, 0.0
        %v1791 = vmax.f32 %v1413, 0.0
        %v1792 = vmax.f32 %v1416, 0.0
        %v1793 = vmax.f32 %v1421, 0.0
        %v1794 = vmax.f32 %v1424, 0.0
        %v1795 = vmax.f32 %v1429, 0.0
        %v1796 = vmax.f32 %v1432, 0.0
        %v1797 = vmax.f32 %v1437, 0.0
        %v1798 = vmax.f32 %v1440, 0.0
        %v1799 = vmax.f32 %v1445, 0.0
        %v1800 = vmax.f32 %v1448, 0.0
        %v1801 = vmax.f32 %v1453, 0.0
        %v1802 = vmax.f32 %v1456, 0.0
        %v1803 = vmax.f32 %v1461, 0.0
        %v1804 = vmax.f32 %v1464, 0.0
        %v1805 = vmax.f32 %v1469, 0.0
        %v1806 = vmax.f32 %v1472, 0.0
        %v1807 = vmax.f32 %v1477, 0.0
        %v1808 = vmax.f32 %v1480, 0.0
        %v1809 = vmax.f32 %v1485, 0.0
        %v1810 = vmax.f32 %v1488, 0.0
        %v1811 = vmax.f32 %v1493, 0.0
        %v1812 = vmax.f32 %v1496, 0.0
        %v1813 = vmax.f32 %v1501, 0.0
        %v1814 = vmax.f32 %v1504, 0.0
        %v1815 = vmax.f32 %v1509, 0.0
        %v1816 = vmax.f32 %v1512, 0.0
        %v1817 = vmax.f32 %v1517, 0.0
        %v1818 = vmax.f32 %v1520, 0.0
        %v1819 = vmax.f32 %v1525, 0.0
        %v1820 = vmax.f32 %v1528, 0.0
        %v1821 = vmax.f32 %v1533, 0.0
        %v1822 = vmax.f32 %v1536, 0.0
        %v1823 = vmax.f32 %v1541, 0.0
        %v1824 = vmax.f32 %v1544, 0.0
        %v1825 = vmax.f32 %v1549, 0.0
        %v1826 = vmax.f32 %v1552, 0.0
        %v1827 = vmax.f32 %v1557, 0.0
        %v1828 = vmax.f32 %v1560, 0.0
        %v1829 = vmax.f32 %v1565, 0.0
        %v1830 = vmax.f32 %v1568, 0.0
        %v1831 = vmax.f32 %v1573, 0.0
        %v1832 = vmax.f32 %v1576, 0.0
        %v1833 = vmax.f32 %v1581, 0.0
        %v1834 = vmax.f32 %v1584, 0.0
        %v1835 = vmax.f32 %v1589, 0.0
        %v1836 = vmax.f32 %v1592, 0.0
        %v1837 = vmax.f32 %v1597, 0.0
        %v1838 = vmax.f32 %v1600, 0.0
        %v1839 = vmax.f32 %v1605, 0.0
        %v1840 = vmax.f32 %v1608, 0.0
        %v1841 = vmax.f32 %v1613, 0.0
        %v1842 = vmax.f32 %v1616, 0.0
        %v1843 = vmax.f32 %v1621, 0.0
        %v1844 = vmax.f32 %v1624, 0.0
        %v1845 = vmax.f32 %v1629, 0.0
        %v1846 = vmax.f32 %v1632, 0.0
        %v1847 = vmax.f32 %v1637, 0.0
        %v1848 = vmax.f32 %v1640, 0.0
        %v1849 = vmax.f32 %v1645, 0.0
        %v1850 = vmax.f32 %v1648, 0.0
        %v1851 = vmax.f32 %v1653, 0.0
        %v1852 = vmax.f32 %v1656, 0.0
        %v1853 = vmax.f32 %v1661, 0.0
        %v1854 = vmax.f32 %v1664, 0.0
        %v1855 = vmax.f32 %v1669, 0.0
        %v1856 = vmax.f32 %v1672, 0.0
        %v1857 = vmax.f32 %v1677, 0.0
        %v1858 = vmax.f32 %v1680, 0.0
        %v1859 = vmax.f32 %v1685, 0.0
        %v1860 = vmax.f32 %v1688, 0.0
        %v1861 = vmax.f32 %v1693, 0.0
        %v1862 = vmax.f32 %v1696, 0.0
        %v1863 = vmax.f32 %v1701, 0.0
        %v1864 = vmax.f32 %v1704, 0.0
        %v1865 = vmax.f32 %v1709, 0.0
        %v1866 = vmax.f32 %v1712, 0.0
        %v1867 = vmax.f32 %v1717, 0.0
        %v1868 = vmax.f32 %v1720, 0.0
        %v1869 = vmax.f32 %v1725, 0.0
        %v1870 = vmax.f32 %v1728, 0.0
        %v1871 = vmax.f32 %v1733, 0.0
        %v1872 = vmax.f32 %v1736, 0.0
        %v1873 = vmax.f32 %v1741, 0.0
        %v1874 = vmax.f32 %v1744, 0.0
        %vm1875 = vcmask 261120
        %1876 = vst.msk [vmem:[#allocation2] sm:$0xff] %vm1875, %v1747
        %1877 = vst.msk [vmem:[#allocation2 + $0x8] sm:$0xff] %vm1875, %v1748
        %1878 = vst.msk [vmem:[#allocation2 + $0x10] sm:$0xff] %vm1875, %v1749
        %1879 = vst.msk [vmem:[#allocation2 + $0x18] sm:$0xff] %vm1875, %v1750
        %1880 = vst.msk [vmem:[#allocation2 + $0x20] sm:$0xff] %vm1875, %v1751
        %1881 = vst.msk [vmem:[#allocation2 + $0x28] sm:$0xff] %vm1875, %v1752
        %1882 = vst.msk [vmem:[#allocation2 + $0x30] sm:$0xff] %vm1875, %v1753
        %1883 = vst.msk [vmem:[#allocation2 + $0x38] sm:$0xff] %vm1875, %v1754
        %1884 = vst.msk [vmem:[#allocation2 + $0x40] sm:$0xff] %vm1875, %v1755
        %1885 = vst.msk [vmem:[#allocation2 + $0x48] sm:$0xff] %vm1875, %v1756
        %1886 = vst.msk [vmem:[#allocation2 + $0x50] sm:$0xff] %vm1875, %v1757
        %1887 = vst.msk [vmem:[#allocation2 + $0x58] sm:$0xff] %vm1875, %v1758
        %1888 = vst.msk [vmem:[#allocation2 + $0x60] sm:$0xff] %vm1875, %v1759
        %1889 = vst.msk [vmem:[#allocation2 + $0x68] sm:$0xff] %vm1875, %v1760
        %1890 = vst.msk [vmem:[#allocation2 + $0x70] sm:$0xff] %vm1875, %v1761
        %1891 = vst.msk [vmem:[#allocation2 + $0x78] sm:$0xff] %vm1875, %v1762
        %1892 = vst.msk [vmem:[#allocation2 + $0x80] sm:$0xff] %vm1875, %v1763
        %1893 = vst.msk [vmem:[#allocation2 + $0x88] sm:$0xff] %vm1875, %v1764
        %1894 = vst.msk [vmem:[#allocation2 + $0x90] sm:$0xff] %vm1875, %v1765
        %1895 = vst.msk [vmem:[#allocation2 + $0x98] sm:$0xff] %vm1875, %v1766
        %1896 = vst.msk [vmem:[#allocation2 + $0xa0] sm:$0xff] %vm1875, %v1767
        %1897 = vst.msk [vmem:[#allocation2 + $0xa8] sm:$0xff] %vm1875, %v1768
        %1898 = vst.msk [vmem:[#allocation2 + $0xb0] sm:$0xff] %vm1875, %v1769
        %1899 = vst.msk [vmem:[#allocation2 + $0xb8] sm:$0xff] %vm1875, %v1770
        %1900 = vst.msk [vmem:[#allocation2 + $0xc0] sm:$0xff] %vm1875, %v1771
        %1901 = vst.msk [vmem:[#allocation2 + $0xc8] sm:$0xff] %vm1875, %v1772
        %1902 = vst.msk [vmem:[#allocation2 + $0xd0] sm:$0xff] %vm1875, %v1773
        %1903 = vst.msk [vmem:[#allocation2 + $0xd8] sm:$0xff] %vm1875, %v1774
        %1904 = vst.msk [vmem:[#allocation2 + $0xe0] sm:$0xff] %vm1875, %v1775
        %1905 = vst.msk [vmem:[#allocation2 + $0xe8] sm:$0xff] %vm1875, %v1776
        %1906 = vst.msk [vmem:[#allocation2 + $0xf0] sm:$0xff] %vm1875, %v1777
        %1907 = vst.msk [vmem:[#allocation2 + $0xf8] sm:$0xff] %vm1875, %v1778
        %1908 = vst.msk [vmem:[#allocation2 + $0x100] sm:$0xff] %vm1875, %v1779
        %1909 = vst.msk [vmem:[#allocation2 + $0x108] sm:$0xff] %vm1875, %v1780
        %1910 = vst.msk [vmem:[#allocation2 + $0x110] sm:$0xff] %vm1875, %v1781
        %1911 = vst.msk [vmem:[#allocation2 + $0x118] sm:$0xff] %vm1875, %v1782
        %1912 = vst.msk [vmem:[#allocation2 + $0x120] sm:$0xff] %vm1875, %v1783
        %1913 = vst.msk [vmem:[#allocation2 + $0x128] sm:$0xff] %vm1875, %v1784
        %1914 = vst.msk [vmem:[#allocation2 + $0x130] sm:$0xff] %vm1875, %v1785
        %1915 = vst.msk [vmem:[#allocation2 + $0x138] sm:$0xff] %vm1875, %v1786
        %1916 = vst.msk [vmem:[#allocation2 + $0x140] sm:$0xff] %vm1875, %v1787
        %1917 = vst.msk [vmem:[#allocation2 + $0x148] sm:$0xff] %vm1875, %v1788
        %1918 = vst.msk [vmem:[#allocation2 + $0x150] sm:$0xff] %vm1875, %v1789
        %1919 = vst.msk [vmem:[#allocation2 + $0x158] sm:$0xff] %vm1875, %v1790
        %1920 = vst.msk [vmem:[#allocation2 + $0x160] sm:$0xff] %vm1875, %v1791
        %1921 = vst.msk [vmem:[#allocation2 + $0x168] sm:$0xff] %vm1875, %v1792
        %1922 = vst.msk [vmem:[#allocation2 + $0x170] sm:$0xff] %vm1875, %v1793
        %1923 = vst.msk [vmem:[#allocation2 + $0x178] sm:$0xff] %vm1875, %v1794
        %1924 = vst.msk [vmem:[#allocation2 + $0x180] sm:$0xff] %vm1875, %v1795
        %1925 = vst.msk [vmem:[#allocation2 + $0x188] sm:$0xff] %vm1875, %v1796
        %1926 = vst.msk [vmem:[#allocation2 + $0x190] sm:$0xff] %vm1875, %v1797
        %1927 = vst.msk [vmem:[#allocation2 + $0x198] sm:$0xff] %vm1875, %v1798
        %1928 = vst.msk [vmem:[#allocation2 + $0x1a0] sm:$0xff] %vm1875, %v1799
        %1929 = vst.msk [vmem:[#allocation2 + $0x1a8] sm:$0xff] %vm1875, %v1800
        %1930 = vst.msk [vmem:[#allocation2 + $0x1b0] sm:$0xff] %vm1875, %v1801
        %1931 = vst.msk [vmem:[#allocation2 + $0x1b8] sm:$0xff] %vm1875, %v1802
        %1932 = vst.msk [vmem:[#allocation2 + $0x1c0] sm:$0xff] %vm1875, %v1803
        %1933 = vst.msk [vmem:[#allocation2 + $0x1c8] sm:$0xff] %vm1875, %v1804
        %1934 = vst.msk [vmem:[#allocation2 + $0x1d0] sm:$0xff] %vm1875, %v1805
        %1935 = vst.msk [vmem:[#allocation2 + $0x1d8] sm:$0xff] %vm1875, %v1806
        %1936 = vst.msk [vmem:[#allocation2 + $0x1e0] sm:$0xff] %vm1875, %v1807
        %1937 = vst.msk [vmem:[#allocation2 + $0x1e8] sm:$0xff] %vm1875, %v1808
        %1938 = vst.msk [vmem:[#allocation2 + $0x1f0] sm:$0xff] %vm1875, %v1809
        %1939 = vst.msk [vmem:[#allocation2 + $0x1f8] sm:$0xff] %vm1875, %v1810
        %1940 = vst.msk [vmem:[#allocation2 + $0x200] sm:$0xff] %vm1875, %v1811
        %1941 = vst.msk [vmem:[#allocation2 + $0x208] sm:$0xff] %vm1875, %v1812
        %1942 = vst.msk [vmem:[#allocation2 + $0x210] sm:$0xff] %vm1875, %v1813
        %1943 = vst.msk [vmem:[#allocation2 + $0x218] sm:$0xff] %vm1875, %v1814
        %1944 = vst.msk [vmem:[#allocation2 + $0x220] sm:$0xff] %vm1875, %v1815
        %1945 = vst.msk [vmem:[#allocation2 + $0x228] sm:$0xff] %vm1875, %v1816
        %1946 = vst.msk [vmem:[#allocation2 + $0x230] sm:$0xff] %vm1875, %v1817
        %1947 = vst.msk [vmem:[#allocation2 + $0x238] sm:$0xff] %vm1875, %v1818
        %1948 = vst.msk [vmem:[#allocation2 + $0x240] sm:$0xff] %vm1875, %v1819
        %1949 = vst.msk [vmem:[#allocation2 + $0x248] sm:$0xff] %vm1875, %v1820
        %1950 = vst.msk [vmem:[#allocation2 + $0x250] sm:$0xff] %vm1875, %v1821
        %1951 = vst.msk [vmem:[#allocation2 + $0x258] sm:$0xff] %vm1875, %v1822
        %1952 = vst.msk [vmem:[#allocation2 + $0x260] sm:$0xff] %vm1875, %v1823
        %1953 = vst.msk [vmem:[#allocation2 + $0x268] sm:$0xff] %vm1875, %v1824
        %1954 = vst.msk [vmem:[#allocation2 + $0x270] sm:$0xff] %vm1875, %v1825
        %1955 = vst.msk [vmem:[#allocation2 + $0x278] sm:$0xff] %vm1875, %v1826
        %1956 = vst.msk [vmem:[#allocation2 + $0x280] sm:$0xff] %vm1875, %v1827
        %1957 = vst.msk [vmem:[#allocation2 + $0x288] sm:$0xff] %vm1875, %v1828
        %1958 = vst.msk [vmem:[#allocation2 + $0x290] sm:$0xff] %vm1875, %v1829
        %1959 = vst.msk [vmem:[#allocation2 + $0x298] sm:$0xff] %vm1875, %v1830
        %1960 = vst.msk [vmem:[#allocation2 + $0x2a0] sm:$0xff] %vm1875, %v1831
        %1961 = vst.msk [vmem:[#allocation2 + $0x2a8] sm:$0xff] %vm1875, %v1832
        %1962 = vst.msk [vmem:[#allocation2 + $0x2b0] sm:$0xff] %vm1875, %v1833
        %1963 = vst.msk [vmem:[#allocation2 + $0x2b8] sm:$0xff] %vm1875, %v1834
        %1964 = vst.msk [vmem:[#allocation2 + $0x2c0] sm:$0xff] %vm1875, %v1835
        %1965 = vst.msk [vmem:[#allocation2 + $0x2c8] sm:$0xff] %vm1875, %v1836
        %1966 = vst.msk [vmem:[#allocation2 + $0x2d0] sm:$0xff] %vm1875, %v1837
        %1967 = vst.msk [vmem:[#allocation2 + $0x2d8] sm:$0xff] %vm1875, %v1838
        %1968 = vst.msk [vmem:[#allocation2 + $0x2e0] sm:$0xff] %vm1875, %v1839
        %1969 = vst.msk [vmem:[#allocation2 + $0x2e8] sm:$0xff] %vm1875, %v1840
        %1970 = vst.msk [vmem:[#allocation2 + $0x2f0] sm:$0xff] %vm1875, %v1841
        %1971 = vst.msk [vmem:[#allocation2 + $0x2f8] sm:$0xff] %vm1875, %v1842
        %1972 = vst.msk [vmem:[#allocation2 + $0x300] sm:$0xff] %vm1875, %v1843
        %1973 = vst.msk [vmem:[#allocation2 + $0x308] sm:$0xff] %vm1875, %v1844
        %1974 = vst.msk [vmem:[#allocation2 + $0x310] sm:$0xff] %vm1875, %v1845
        %1975 = vst.msk [vmem:[#allocation2 + $0x318] sm:$0xff] %vm1875, %v1846
        %1976 = vst.msk [vmem:[#allocation2 + $0x320] sm:$0xff] %vm1875, %v1847
        %1977 = vst.msk [vmem:[#allocation2 + $0x328] sm:$0xff] %vm1875, %v1848
        %1978 = vst.msk [vmem:[#allocation2 + $0x330] sm:$0xff] %vm1875, %v1849
        %1979 = vst.msk [vmem:[#allocation2 + $0x338] sm:$0xff] %vm1875, %v1850
        %1980 = vst.msk [vmem:[#allocation2 + $0x340] sm:$0xff] %vm1875, %v1851
        %1981 = vst.msk [vmem:[#allocation2 + $0x348] sm:$0xff] %vm1875, %v1852
        %1982 = vst.msk [vmem:[#allocation2 + $0x350] sm:$0xff] %vm1875, %v1853
        %1983 = vst.msk [vmem:[#allocation2 + $0x358] sm:$0xff] %vm1875, %v1854
        %1984 = vst.msk [vmem:[#allocation2 + $0x360] sm:$0xff] %vm1875, %v1855
        %1985 = vst.msk [vmem:[#allocation2 + $0x368] sm:$0xff] %vm1875, %v1856
        %1986 = vst.msk [vmem:[#allocation2 + $0x370] sm:$0xff] %vm1875, %v1857
        %1987 = vst.msk [vmem:[#allocation2 + $0x378] sm:$0xff] %vm1875, %v1858
        %1988 = vst.msk [vmem:[#allocation2 + $0x380] sm:$0xff] %vm1875, %v1859
        %1989 = vst.msk [vmem:[#allocation2 + $0x388] sm:$0xff] %vm1875, %v1860
        %1990 = vst.msk [vmem:[#allocation2 + $0x390] sm:$0xff] %vm1875, %v1861
        %1991 = vst.msk [vmem:[#allocation2 + $0x398] sm:$0xff] %vm1875, %v1862
        %1992 = vst.msk [vmem:[#allocation2 + $0x3a0] sm:$0xff] %vm1875, %v1863
        %1993 = vst.msk [vmem:[#allocation2 + $0x3a8] sm:$0xff] %vm1875, %v1864
        %1994 = vst.msk [vmem:[#allocation2 + $0x3b0] sm:$0xff] %vm1875, %v1865
        %1995 = vst.msk [vmem:[#allocation2 + $0x3b8] sm:$0xff] %vm1875, %v1866
        %1996 = vst.msk [vmem:[#allocation2 + $0x3c0] sm:$0xff] %vm1875, %v1867
        %1997 = vst.msk [vmem:[#allocation2 + $0x3c8] sm:$0xff] %vm1875, %v1868
        %1998 = vst.msk [vmem:[#allocation2 + $0x3d0] sm:$0xff] %vm1875, %v1869
        %1999 = vst.msk [vmem:[#allocation2 + $0x3d8] sm:$0xff] %vm1875, %v1870
        %2000 = vst.msk [vmem:[#allocation2 + $0x3e0] sm:$0xff] %vm1875, %v1871
        %2001 = vst.msk [vmem:[#allocation2 + $0x3e8] sm:$0xff] %vm1875, %v1872
        %2002 = vst.msk [vmem:[#allocation2 + $0x3f0] sm:$0xff] %vm1875, %v1873
        %2003 = vst.msk [vmem:[#allocation2 + $0x3f8] sm:$0xff] %vm1875, %v1874
        %2004 = vst.msk [vmem:[#allocation3] sm:$0xff] %vm1875, 0.0
        %2005 = vst.msk [vmem:[#allocation3 + $0x8] sm:$0xff] %vm1875, 0.0
        %2006 = vst.msk [vmem:[#allocation3 + $0x10] sm:$0xff] %vm1875, 0.0
        %2007 = vst.msk [vmem:[#allocation3 + $0x18] sm:$0xff] %vm1875, 0.0
        %2008 = vst.msk [vmem:[#allocation3 + $0x20] sm:$0xff] %vm1875, 0.0
        %2009 = vst.msk [vmem:[#allocation3 + $0x28] sm:$0xff] %vm1875, 0.0
        %2010 = vst.msk [vmem:[#allocation3 + $0x30] sm:$0xff] %vm1875, 0.0
        %2011 = vst.msk [vmem:[#allocation3 + $0x38] sm:$0xff] %vm1875, 0.0
        %2012 = vst.msk [vmem:[#allocation3 + $0x40] sm:$0xff] %vm1875, 0.0
        %2013 = vst.msk [vmem:[#allocation3 + $0x48] sm:$0xff] %vm1875, 0.0
        %2014 = vst.msk [vmem:[#allocation3 + $0x50] sm:$0xff] %vm1875, 0.0
        %2015 = vst.msk [vmem:[#allocation3 + $0x58] sm:$0xff] %vm1875, 0.0
        %2016 = vst.msk [vmem:[#allocation3 + $0x60] sm:$0xff] %vm1875, 0.0
        %2017 = vst.msk [vmem:[#allocation3 + $0x68] sm:$0xff] %vm1875, 0.0
        %2018 = vst.msk [vmem:[#allocation3 + $0x70] sm:$0xff] %vm1875, 0.0
        %2019 = vst.msk [vmem:[#allocation3 + $0x78] sm:$0xff] %vm1875, 0.0
        %2020 = vst.msk [vmem:[#allocation3 + $0x80] sm:$0xff] %vm1875, 0.0
        %2021 = vst.msk [vmem:[#allocation3 + $0x88] sm:$0xff] %vm1875, 0.0
        %2022 = vst.msk [vmem:[#allocation3 + $0x90] sm:$0xff] %vm1875, 0.0
        %2023 = vst.msk [vmem:[#allocation3 + $0x98] sm:$0xff] %vm1875, 0.0
        %2024 = vst.msk [vmem:[#allocation3 + $0xa0] sm:$0xff] %vm1875, 0.0
        %2025 = vst.msk [vmem:[#allocation3 + $0xa8] sm:$0xff] %vm1875, 0.0
        %2026 = vst.msk [vmem:[#allocation3 + $0xb0] sm:$0xff] %vm1875, 0.0
        %2027 = vst.msk [vmem:[#allocation3 + $0xb8] sm:$0xff] %vm1875, 0.0
        %2028 = vst.msk [vmem:[#allocation3 + $0xc0] sm:$0xff] %vm1875, 0.0
        %2029 = vst.msk [vmem:[#allocation3 + $0xc8] sm:$0xff] %vm1875, 0.0
        %2030 = vst.msk [vmem:[#allocation3 + $0xd0] sm:$0xff] %vm1875, 0.0
        %2031 = vst.msk [vmem:[#allocation3 + $0xd8] sm:$0xff] %vm1875, 0.0
        %2032 = vst.msk [vmem:[#allocation3 + $0xe0] sm:$0xff] %vm1875, 0.0
        %2033 = vst.msk [vmem:[#allocation3 + $0xe8] sm:$0xff] %vm1875, 0.0
        %2034 = vst.msk [vmem:[#allocation3 + $0xf0] sm:$0xff] %vm1875, 0.0
        %2035 = vst.msk [vmem:[#allocation3 + $0xf8] sm:$0xff] %vm1875, 0.0
        %2036 = vst.msk [vmem:[#allocation3 + $0x100] sm:$0xff] %vm1875, 0.0
        %2037 = vst.msk [vmem:[#allocation3 + $0x108] sm:$0xff] %vm1875, 0.0
        %2038 = vst.msk [vmem:[#allocation3 + $0x110] sm:$0xff] %vm1875, 0.0
        %2039 = vst.msk [vmem:[#allocation3 + $0x118] sm:$0xff] %vm1875, 0.0
        %vm2040 = vcmask 254976
        %2041 = vst.msk [vmem:[#allocation3 + $0x120] sm:$0x3] %vm2040, 0.0
        %v2042 = vld [vmem:[#allocation2] ss:$2 sm:$0xff]
        %s2043 = scalar_lea.vmem [#allocation2], 16
        %v2044 = vld [vmem:[%s2043] ss:$2 sm:$0xff]
        %s2045 = scalar_lea.vmem [#allocation2], 1
        %v2046 = vld [vmem:[%s2045] ss:$2 sm:$0xff]
        %s2047 = scalar_lea.vmem [#allocation2], 17
        %v2048 = vld [vmem:[%s2047] ss:$2 sm:$0xff]
        %v2049 = vmax.f32 %v2042, %v2046
        %v2050 = vmax.f32 %v2044, %v2048
        %s2051 = scalar_lea.vmem [#allocation2], 32
        %v2052 = vld [vmem:[%s2051] ss:$2 sm:$0xff]
        %s2053 = scalar_lea.vmem [#allocation2], 48
        %v2054 = vld [vmem:[%s2053] ss:$2 sm:$0xff]
        %s2055 = scalar_lea.vmem [#allocation2], 33
        %v2056 = vld [vmem:[%s2055] ss:$2 sm:$0xff]
        %s2057 = scalar_lea.vmem [#allocation2], 49
        %v2058 = vld [vmem:[%s2057] ss:$2 sm:$0xff]
        %v2059 = vmax.f32 %v2052, %v2056
        %v2060 = vmax.f32 %v2054, %v2058
        %v2061 = vmax.f32 %v2049, %v2059
        %v2062 = vmax.f32 %v2050, %v2060
        %2063 = vst.msk [vmem:[#allocation3 + $0x11] sm:$0xff] %vm1875, %v2061
        %2064 = vst.msk [vmem:[#allocation3 + $0x19] sm:$0xff] %vm1875, %v2062
        %s2065 = scalar_lea.vmem [#allocation2], 64
        %v2066 = vld [vmem:[%s2065] ss:$2 sm:$0xff]
        %s2067 = scalar_lea.vmem [#allocation2], 80
        %v2068 = vld [vmem:[%s2067] ss:$2 sm:$0xff]
        %s2069 = scalar_lea.vmem [#allocation2], 65
        %v2070 = vld [vmem:[%s2069] ss:$2 sm:$0xff]
        %s2071 = scalar_lea.vmem [#allocation2], 81
        %v2072 = vld [vmem:[%s2071] ss:$2 sm:$0xff]
        %v2073 = vmax.f32 %v2066, %v2070
        %v2074 = vmax.f32 %v2068, %v2072
        %s2075 = scalar_lea.vmem [#allocation2], 96
        %v2076 = vld [vmem:[%s2075] ss:$2 sm:$0xff]
        %s2077 = scalar_lea.vmem [#allocation2], 112
        %v2078 = vld [vmem:[%s2077] ss:$2 sm:$0xff]
        %s2079 = scalar_lea.vmem [#allocation2], 97
        %v2080 = vld [vmem:[%s2079] ss:$2 sm:$0xff]
        %s2081 = scalar_lea.vmem [#allocation2], 113
        %v2082 = vld [vmem:[%s2081] ss:$2 sm:$0xff]
        %v2083 = vmax.f32 %v2076, %v2080
        %v2084 = vmax.f32 %v2078, %v2082
        %v2085 = vmax.f32 %v2073, %v2083
        %v2086 = vmax.f32 %v2074, %v2084
        %2087 = vst.msk [vmem:[#allocation3 + $0x21] sm:$0xff] %vm1875, %v2085
        %2088 = vst.msk [vmem:[#allocation3 + $0x29] sm:$0xff] %vm1875, %v2086
        %s2089 = scalar_lea.vmem [#allocation2], 128
        %v2090 = vld [vmem:[%s2089] ss:$2 sm:$0xff]
        %s2091 = scalar_lea.vmem [#allocation2], 144
        %v2092 = vld [vmem:[%s2091] ss:$2 sm:$0xff]
        %s2093 = scalar_lea.vmem [#allocation2], 129
        %v2094 = vld [vmem:[%s2093] ss:$2 sm:$0xff]
        %s2095 = scalar_lea.vmem [#allocation2], 145
        %v2096 = vld [vmem:[%s2095] ss:$2 sm:$0xff]
        %v2097 = vmax.f32 %v2090, %v2094
        %v2098 = vmax.f32 %v2092, %v2096
        %s2099 = scalar_lea.vmem [#allocation2], 160
        %v2100 = vld [vmem:[%s2099] ss:$2 sm:$0xff]
        %s2101 = scalar_lea.vmem [#allocation2], 176
        %v2102 = vld [vmem:[%s2101] ss:$2 sm:$0xff]
        %s2103 = scalar_lea.vmem [#allocation2], 161
        %v2104 = vld [vmem:[%s2103] ss:$2 sm:$0xff]
        %s2105 = scalar_lea.vmem [#allocation2], 177
        %v2106 = vld [vmem:[%s2105] ss:$2 sm:$0xff]
        %v2107 = vmax.f32 %v2100, %v2104
        %v2108 = vmax.f32 %v2102, %v2106
        %v2109 = vmax.f32 %v2097, %v2107
        %v2110 = vmax.f32 %v2098, %v2108
        %2111 = vst.msk [vmem:[#allocation3 + $0x31] sm:$0xff] %vm1875, %v2109
        %2112 = vst.msk [vmem:[#allocation3 + $0x39] sm:$0xff] %vm1875, %v2110
        %s2113 = scalar_lea.vmem [#allocation2], 192
        %v2114 = vld [vmem:[%s2113] ss:$2 sm:$0xff]
        %s2115 = scalar_lea.vmem [#allocation2], 208
        %v2116 = vld [vmem:[%s2115] ss:$2 sm:$0xff]
        %s2117 = scalar_lea.vmem [#allocation2], 193
        %v2118 = vld [vmem:[%s2117] ss:$2 sm:$0xff]
        %s2119 = scalar_lea.vmem [#allocation2], 209
        %v2120 = vld [vmem:[%s2119] ss:$2 sm:$0xff]
        %v2121 = vmax.f32 %v2114, %v2118
        %v2122 = vmax.f32 %v2116, %v2120
        %s2123 = scalar_lea.vmem [#allocation2], 224
        %v2124 = vld [vmem:[%s2123] ss:$2 sm:$0xff]
        %s2125 = scalar_lea.vmem [#allocation2], 240
        %v2126 = vld [vmem:[%s2125] ss:$2 sm:$0xff]
        %s2127 = scalar_lea.vmem [#allocation2], 225
        %v2128 = vld [vmem:[%s2127] ss:$2 sm:$0xff]
        %s2129 = scalar_lea.vmem [#allocation2], 241
        %v2130 = vld [vmem:[%s2129] ss:$2 sm:$0xff]
        %v2131 = vmax.f32 %v2124, %v2128
        %v2132 = vmax.f32 %v2126, %v2130
        %v2133 = vmax.f32 %v2121, %v2131
        %v2134 = vmax.f32 %v2122, %v2132
        %2135 = vst.msk [vmem:[#allocation3 + $0x41] sm:$0xff] %vm1875, %v2133
        %2136 = vst.msk [vmem:[#allocation3 + $0x49] sm:$0xff] %vm1875, %v2134
        %s2137 = scalar_lea.vmem [#allocation2], 256
        %v2138 = vld [vmem:[%s2137] ss:$2 sm:$0xff]
        %s2139 = scalar_lea.vmem [#allocation2], 272
        %v2140 = vld [vmem:[%s2139] ss:$2 sm:$0xff]
        %s2141 = scalar_lea.vmem [#allocation2], 257
        %v2142 = vld [vmem:[%s2141] ss:$2 sm:$0xff]
        %s2143 = scalar_lea.vmem [#allocation2], 273
        %v2144 = vld [vmem:[%s2143] ss:$2 sm:$0xff]
        %v2145 = vmax.f32 %v2138, %v2142
        %v2146 = vmax.f32 %v2140, %v2144
        %s2147 = scalar_lea.vmem [#allocation2], 288
        %v2148 = vld [vmem:[%s2147] ss:$2 sm:$0xff]
        %s2149 = scalar_lea.vmem [#allocation2], 304
        %v2150 = vld [vmem:[%s2149] ss:$2 sm:$0xff]
        %s2151 = scalar_lea.vmem [#allocation2], 289
        %v2152 = vld [vmem:[%s2151] ss:$2 sm:$0xff]
        %s2153 = scalar_lea.vmem [#allocation2], 305
        %v2154 = vld [vmem:[%s2153] ss:$2 sm:$0xff]
        %v2155 = vmax.f32 %v2148, %v2152
        %v2156 = vmax.f32 %v2150, %v2154
        %v2157 = vmax.f32 %v2145, %v2155
        %v2158 = vmax.f32 %v2146, %v2156
        %2159 = vst.msk [vmem:[#allocation3 + $0x51] sm:$0xff] %vm1875, %v2157
        %2160 = vst.msk [vmem:[#allocation3 + $0x59] sm:$0xff] %vm1875, %v2158
        %s2161 = scalar_lea.vmem [#allocation2], 320
        %v2162 = vld [vmem:[%s2161] ss:$2 sm:$0xff]
        %s2163 = scalar_lea.vmem [#allocation2], 336
        %v2164 = vld [vmem:[%s2163] ss:$2 sm:$0xff]
        %s2165 = scalar_lea.vmem [#allocation2], 321
        %v2166 = vld [vmem:[%s2165] ss:$2 sm:$0xff]
        %s2167 = scalar_lea.vmem [#allocation2], 337
        %v2168 = vld [vmem:[%s2167] ss:$2 sm:$0xff]
        %v2169 = vmax.f32 %v2162, %v2166
        %v2170 = vmax.f32 %v2164, %v2168
        %s2171 = scalar_lea.vmem [#allocation2], 352
        %v2172 = vld [vmem:[%s2171] ss:$2 sm:$0xff]
        %s2173 = scalar_lea.vmem [#allocation2], 368
        %v2174 = vld [vmem:[%s2173] ss:$2 sm:$0xff]
        %s2175 = scalar_lea.vmem [#allocation2], 353
        %v2176 = vld [vmem:[%s2175] ss:$2 sm:$0xff]
        %s2177 = scalar_lea.vmem [#allocation2], 369
        %v2178 = vld [vmem:[%s2177] ss:$2 sm:$0xff]
        %v2179 = vmax.f32 %v2172, %v2176
        %v2180 = vmax.f32 %v2174, %v2178
        %v2181 = vmax.f32 %v2169, %v2179
        %v2182 = vmax.f32 %v2170, %v2180
        %2183 = vst.msk [vmem:[#allocation3 + $0x61] sm:$0xff] %vm1875, %v2181
        %2184 = vst.msk [vmem:[#allocation3 + $0x69] sm:$0xff] %vm1875, %v2182
        %s2185 = scalar_lea.vmem [#allocation2], 384
        %v2186 = vld [vmem:[%s2185] ss:$2 sm:$0xff]
        %s2187 = scalar_lea.vmem [#allocation2], 400
        %v2188 = vld [vmem:[%s2187] ss:$2 sm:$0xff]
        %s2189 = scalar_lea.vmem [#allocation2], 385
        %v2190 = vld [vmem:[%s2189] ss:$2 sm:$0xff]
        %s2191 = scalar_lea.vmem [#allocation2], 401
        %v2192 = vld [vmem:[%s2191] ss:$2 sm:$0xff]
        %v2193 = vmax.f32 %v2186, %v2190
        %v2194 = vmax.f32 %v2188, %v2192
        %s2195 = scalar_lea.vmem [#allocation2], 416
        %v2196 = vld [vmem:[%s2195] ss:$2 sm:$0xff]
        %s2197 = scalar_lea.vmem [#allocation2], 432
        %v2198 = vld [vmem:[%s2197] ss:$2 sm:$0xff]
        %s2199 = scalar_lea.vmem [#allocation2], 417
        %v2200 = vld [vmem:[%s2199] ss:$2 sm:$0xff]
        %s2201 = scalar_lea.vmem [#allocation2], 433
        %v2202 = vld [vmem:[%s2201] ss:$2 sm:$0xff]
        %v2203 = vmax.f32 %v2196, %v2200
        %v2204 = vmax.f32 %v2198, %v2202
        %v2205 = vmax.f32 %v2193, %v2203
        %v2206 = vmax.f32 %v2194, %v2204
        %2207 = vst.msk [vmem:[#allocation3 + $0x71] sm:$0xff] %vm1875, %v2205
        %2208 = vst.msk [vmem:[#allocation3 + $0x79] sm:$0xff] %vm1875, %v2206
        %s2209 = scalar_lea.vmem [#allocation2], 448
        %v2210 = vld [vmem:[%s2209] ss:$2 sm:$0xff]
        %s2211 = scalar_lea.vmem [#allocation2], 464
        %v2212 = vld [vmem:[%s2211] ss:$2 sm:$0xff]
        %s2213 = scalar_lea.vmem [#allocation2], 449
        %v2214 = vld [vmem:[%s2213] ss:$2 sm:$0xff]
        %s2215 = scalar_lea.vmem [#allocation2], 465
        %v2216 = vld [vmem:[%s2215] ss:$2 sm:$0xff]
        %v2217 = vmax.f32 %v2210, %v2214
        %v2218 = vmax.f32 %v2212, %v2216
        %s2219 = scalar_lea.vmem [#allocation2], 480
        %v2220 = vld [vmem:[%s2219] ss:$2 sm:$0xff]
        %s2221 = scalar_lea.vmem [#allocation2], 496
        %v2222 = vld [vmem:[%s2221] ss:$2 sm:$0xff]
        %s2223 = scalar_lea.vmem [#allocation2], 481
        %v2224 = vld [vmem:[%s2223] ss:$2 sm:$0xff]
        %s2225 = scalar_lea.vmem [#allocation2], 497
        %v2226 = vld [vmem:[%s2225] ss:$2 sm:$0xff]
        %v2227 = vmax.f32 %v2220, %v2224
        %v2228 = vmax.f32 %v2222, %v2226
        %v2229 = vmax.f32 %v2217, %v2227
        %v2230 = vmax.f32 %v2218, %v2228
        %2231 = vst.msk [vmem:[#allocation3 + $0x81] sm:$0xff] %vm1875, %v2229
        %2232 = vst.msk [vmem:[#allocation3 + $0x89] sm:$0xff] %vm1875, %v2230
        %s2233 = scalar_lea.vmem [#allocation2], 512
        %v2234 = vld [vmem:[%s2233] ss:$2 sm:$0xff]
        %s2235 = scalar_lea.vmem [#allocation2], 528
        %v2236 = vld [vmem:[%s2235] ss:$2 sm:$0xff]
        %s2237 = scalar_lea.vmem [#allocation2], 513
        %v2238 = vld [vmem:[%s2237] ss:$2 sm:$0xff]
        %s2239 = scalar_lea.vmem [#allocation2], 529
        %v2240 = vld [vmem:[%s2239] ss:$2 sm:$0xff]
        %v2241 = vmax.f32 %v2234, %v2238
        %v2242 = vmax.f32 %v2236, %v2240
        %s2243 = scalar_lea.vmem [#allocation2], 544
        %v2244 = vld [vmem:[%s2243] ss:$2 sm:$0xff]
        %s2245 = scalar_lea.vmem [#allocation2], 560
        %v2246 = vld [vmem:[%s2245] ss:$2 sm:$0xff]
        %s2247 = scalar_lea.vmem [#allocation2], 545
        %v2248 = vld [vmem:[%s2247] ss:$2 sm:$0xff]
        %s2249 = scalar_lea.vmem [#allocation2], 561
        %v2250 = vld [vmem:[%s2249] ss:$2 sm:$0xff]
        %v2251 = vmax.f32 %v2244, %v2248
        %v2252 = vmax.f32 %v2246, %v2250
        %v2253 = vmax.f32 %v2241, %v2251
        %v2254 = vmax.f32 %v2242, %v2252
        %2255 = vst.msk [vmem:[#allocation3 + $0x91] sm:$0xff] %vm1875, %v2253
        %2256 = vst.msk [vmem:[#allocation3 + $0x99] sm:$0xff] %vm1875, %v2254
        %s2257 = scalar_lea.vmem [#allocation2], 576
        %v2258 = vld [vmem:[%s2257] ss:$2 sm:$0xff]
        %s2259 = scalar_lea.vmem [#allocation2], 592
        %v2260 = vld [vmem:[%s2259] ss:$2 sm:$0xff]
        %s2261 = scalar_lea.vmem [#allocation2], 577
        %v2262 = vld [vmem:[%s2261] ss:$2 sm:$0xff]
        %s2263 = scalar_lea.vmem [#allocation2], 593
        %v2264 = vld [vmem:[%s2263] ss:$2 sm:$0xff]
        %v2265 = vmax.f32 %v2258, %v2262
        %v2266 = vmax.f32 %v2260, %v2264
        %s2267 = scalar_lea.vmem [#allocation2], 608
        %v2268 = vld [vmem:[%s2267] ss:$2 sm:$0xff]
        %s2269 = scalar_lea.vmem [#allocation2], 624
        %v2270 = vld [vmem:[%s2269] ss:$2 sm:$0xff]
        %s2271 = scalar_lea.vmem [#allocation2], 609
        %v2272 = vld [vmem:[%s2271] ss:$2 sm:$0xff]
        %s2273 = scalar_lea.vmem [#allocation2], 625
        %v2274 = vld [vmem:[%s2273] ss:$2 sm:$0xff]
        %v2275 = vmax.f32 %v2268, %v2272
        %v2276 = vmax.f32 %v2270, %v2274
        %v2277 = vmax.f32 %v2265, %v2275
        %v2278 = vmax.f32 %v2266, %v2276
        %2279 = vst.msk [vmem:[#allocation3 + $0xa1] sm:$0xff] %vm1875, %v2277
        %2280 = vst.msk [vmem:[#allocation3 + $0xa9] sm:$0xff] %vm1875, %v2278
        %s2281 = scalar_lea.vmem [#allocation2], 640
        %v2282 = vld [vmem:[%s2281] ss:$2 sm:$0xff]
        %s2283 = scalar_lea.vmem [#allocation2], 656
        %v2284 = vld [vmem:[%s2283] ss:$2 sm:$0xff]
        %s2285 = scalar_lea.vmem [#allocation2], 641
        %v2286 = vld [vmem:[%s2285] ss:$2 sm:$0xff]
        %s2287 = scalar_lea.vmem [#allocation2], 657
        %v2288 = vld [vmem:[%s2287] ss:$2 sm:$0xff]
        %v2289 = vmax.f32 %v2282, %v2286
        %v2290 = vmax.f32 %v2284, %v2288
        %s2291 = scalar_lea.vmem [#allocation2], 672
        %v2292 = vld [vmem:[%s2291] ss:$2 sm:$0xff]
        %s2293 = scalar_lea.vmem [#allocation2], 688
        %v2294 = vld [vmem:[%s2293] ss:$2 sm:$0xff]
        %s2295 = scalar_lea.vmem [#allocation2], 673
        %v2296 = vld [vmem:[%s2295] ss:$2 sm:$0xff]
        %s2297 = scalar_lea.vmem [#allocation2], 689
        %v2298 = vld [vmem:[%s2297] ss:$2 sm:$0xff]
        %v2299 = vmax.f32 %v2292, %v2296
        %v2300 = vmax.f32 %v2294, %v2298
        %v2301 = vmax.f32 %v2289, %v2299
        %v2302 = vmax.f32 %v2290, %v2300
        %2303 = vst.msk [vmem:[#allocation3 + $0xb1] sm:$0xff] %vm1875, %v2301
        %2304 = vst.msk [vmem:[#allocation3 + $0xb9] sm:$0xff] %vm1875, %v2302
        %s2305 = scalar_lea.vmem [#allocation2], 704
        %v2306 = vld [vmem:[%s2305] ss:$2 sm:$0xff]
        %s2307 = scalar_lea.vmem [#allocation2], 720
        %v2308 = vld [vmem:[%s2307] ss:$2 sm:$0xff]
        %s2309 = scalar_lea.vmem [#allocation2], 705
        %v2310 = vld [vmem:[%s2309] ss:$2 sm:$0xff]
        %s2311 = scalar_lea.vmem [#allocation2], 721
        %v2312 = vld [vmem:[%s2311] ss:$2 sm:$0xff]
        %v2313 = vmax.f32 %v2306, %v2310
        %v2314 = vmax.f32 %v2308, %v2312
        %s2315 = scalar_lea.vmem [#allocation2], 736
        %v2316 = vld [vmem:[%s2315] ss:$2 sm:$0xff]
        %s2317 = scalar_lea.vmem [#allocation2], 752
        %v2318 = vld [vmem:[%s2317] ss:$2 sm:$0xff]
        %s2319 = scalar_lea.vmem [#allocation2], 737
        %v2320 = vld [vmem:[%s2319] ss:$2 sm:$0xff]
        %s2321 = scalar_lea.vmem [#allocation2], 753
        %v2322 = vld [vmem:[%s2321] ss:$2 sm:$0xff]
        %v2323 = vmax.f32 %v2316, %v2320
        %v2324 = vmax.f32 %v2318, %v2322
        %v2325 = vmax.f32 %v2313, %v2323
        %v2326 = vmax.f32 %v2314, %v2324
        %2327 = vst.msk [vmem:[#allocation3 + $0xc1] sm:$0xff] %vm1875, %v2325
        %2328 = vst.msk [vmem:[#allocation3 + $0xc9] sm:$0xff] %vm1875, %v2326
        %s2329 = scalar_lea.vmem [#allocation2], 768
        %v2330 = vld [vmem:[%s2329] ss:$2 sm:$0xff]
        %s2331 = scalar_lea.vmem [#allocation2], 784
        %v2332 = vld [vmem:[%s2331] ss:$2 sm:$0xff]
        %s2333 = scalar_lea.vmem [#allocation2], 769
        %v2334 = vld [vmem:[%s2333] ss:$2 sm:$0xff]
        %s2335 = scalar_lea.vmem [#allocation2], 785
        %v2336 = vld [vmem:[%s2335] ss:$2 sm:$0xff]
        %v2337 = vmax.f32 %v2330, %v2334
        %v2338 = vmax.f32 %v2332, %v2336
        %s2339 = scalar_lea.vmem [#allocation2], 800
        %v2340 = vld [vmem:[%s2339] ss:$2 sm:$0xff]
        %s2341 = scalar_lea.vmem [#allocation2], 816
        %v2342 = vld [vmem:[%s2341] ss:$2 sm:$0xff]
        %s2343 = scalar_lea.vmem [#allocation2], 801
        %v2344 = vld [vmem:[%s2343] ss:$2 sm:$0xff]
        %s2345 = scalar_lea.vmem [#allocation2], 817
        %v2346 = vld [vmem:[%s2345] ss:$2 sm:$0xff]
        %v2347 = vmax.f32 %v2340, %v2344
        %v2348 = vmax.f32 %v2342, %v2346
        %v2349 = vmax.f32 %v2337, %v2347
        %v2350 = vmax.f32 %v2338, %v2348
        %2351 = vst.msk [vmem:[#allocation3 + $0xd1] sm:$0xff] %vm1875, %v2349
        %2352 = vst.msk [vmem:[#allocation3 + $0xd9] sm:$0xff] %vm1875, %v2350
        %s2353 = scalar_lea.vmem [#allocation2], 832
        %v2354 = vld [vmem:[%s2353] ss:$2 sm:$0xff]
        %s2355 = scalar_lea.vmem [#allocation2], 848
        %v2356 = vld [vmem:[%s2355] ss:$2 sm:$0xff]
        %s2357 = scalar_lea.vmem [#allocation2], 833
        %v2358 = vld [vmem:[%s2357] ss:$2 sm:$0xff]
        %s2359 = scalar_lea.vmem [#allocation2], 849
        %v2360 = vld [vmem:[%s2359] ss:$2 sm:$0xff]
        %v2361 = vmax.f32 %v2354, %v2358
        %v2362 = vmax.f32 %v2356, %v2360
        %s2363 = scalar_lea.vmem [#allocation2], 864
        %v2364 = vld [vmem:[%s2363] ss:$2 sm:$0xff]
        %s2365 = scalar_lea.vmem [#allocation2], 880
        %v2366 = vld [vmem:[%s2365] ss:$2 sm:$0xff]
        %s2367 = scalar_lea.vmem [#allocation2], 865
        %v2368 = vld [vmem:[%s2367] ss:$2 sm:$0xff]
        %s2369 = scalar_lea.vmem [#allocation2], 881
        %v2370 = vld [vmem:[%s2369] ss:$2 sm:$0xff]
        %v2371 = vmax.f32 %v2364, %v2368
        %v2372 = vmax.f32 %v2366, %v2370
        %v2373 = vmax.f32 %v2361, %v2371
        %v2374 = vmax.f32 %v2362, %v2372
        %2375 = vst.msk [vmem:[#allocation3 + $0xe1] sm:$0xff] %vm1875, %v2373
        %2376 = vst.msk [vmem:[#allocation3 + $0xe9] sm:$0xff] %vm1875, %v2374
        %s2377 = scalar_lea.vmem [#allocation2], 896
        %v2378 = vld [vmem:[%s2377] ss:$2 sm:$0xff]
        %s2379 = scalar_lea.vmem [#allocation2], 912
        %v2380 = vld [vmem:[%s2379] ss:$2 sm:$0xff]
        %s2381 = scalar_lea.vmem [#allocation2], 897
        %v2382 = vld [vmem:[%s2381] ss:$2 sm:$0xff]
        %s2383 = scalar_lea.vmem [#allocation2], 913
        %v2384 = vld [vmem:[%s2383] ss:$2 sm:$0xff]
        %v2385 = vmax.f32 %v2378, %v2382
        %v2386 = vmax.f32 %v2380, %v2384
        %s2387 = scalar_lea.vmem [#allocation2], 928
        %v2388 = vld [vmem:[%s2387] ss:$2 sm:$0xff]
        %s2389 = scalar_lea.vmem [#allocation2], 944
        %v2390 = vld [vmem:[%s2389] ss:$2 sm:$0xff]
        %s2391 = scalar_lea.vmem [#allocation2], 929
        %v2392 = vld [vmem:[%s2391] ss:$2 sm:$0xff]
        %s2393 = scalar_lea.vmem [#allocation2], 945
        %v2394 = vld [vmem:[%s2393] ss:$2 sm:$0xff]
        %v2395 = vmax.f32 %v2388, %v2392
        %v2396 = vmax.f32 %v2390, %v2394
        %v2397 = vmax.f32 %v2385, %v2395
        %v2398 = vmax.f32 %v2386, %v2396
        %2399 = vst.msk [vmem:[#allocation3 + $0xf1] sm:$0xff] %vm1875, %v2397
        %2400 = vst.msk [vmem:[#allocation3 + $0xf9] sm:$0xff] %vm1875, %v2398
        %s2401 = scalar_lea.vmem [#allocation2], 960
        %v2402 = vld [vmem:[%s2401] ss:$2 sm:$0xff]
        %s2403 = scalar_lea.vmem [#allocation2], 976
        %v2404 = vld [vmem:[%s2403] ss:$2 sm:$0xff]
        %s2405 = scalar_lea.vmem [#allocation2], 961
        %v2406 = vld [vmem:[%s2405] ss:$2 sm:$0xff]
        %s2407 = scalar_lea.vmem [#allocation2], 977
        %v2408 = vld [vmem:[%s2407] ss:$2 sm:$0xff]
        %v2409 = vmax.f32 %v2402, %v2406
        %v2410 = vmax.f32 %v2404, %v2408
        %s2411 = scalar_lea.vmem [#allocation2], 992
        %v2412 = vld [vmem:[%s2411] ss:$2 sm:$0xff]
        %s2413 = scalar_lea.vmem [#allocation2], 1008
        %v2414 = vld [vmem:[%s2413] ss:$2 sm:$0xff]
        %s2415 = scalar_lea.vmem [#allocation2], 993
        %v2416 = vld [vmem:[%s2415] ss:$2 sm:$0xff]
        %s2417 = scalar_lea.vmem [#allocation2], 1009
        %v2418 = vld [vmem:[%s2417] ss:$2 sm:$0xff]
        %v2419 = vmax.f32 %v2412, %v2416
        %v2420 = vmax.f32 %v2414, %v2418
        %v2421 = vmax.f32 %v2409, %v2419
        %v2422 = vmax.f32 %v2410, %v2420
        %2423 = vst.msk [vmem:[#allocation3 + $0x101] sm:$0xff] %vm1875, %v2421
        %2424 = vst.msk [vmem:[#allocation3 + $0x109] sm:$0xff] %vm1875, %v2422
        %v2425 = vlaneseq
        %v2426 = vshrl.u32 %v2425, 7
        %v2427 = vadd.s32 %v2426, 8
        %v2428 = vadd.s32 %v2426, 16
        %v2429 = vadd.s32 %v2426, 24
        %v2430 = vadd.s32 %v2426, 32
        %v2431 = vadd.s32 %v2426, 40
        %v2432 = vadd.s32 %v2426, 48
        %v2433 = vadd.s32 %v2426, 56
        %v2434 = vadd.s32 %v2426, 64
        %v2435 = vadd.s32 %v2426, 72
        %v2436 = vadd.s32 %v2426, 80
        %v2437 = vadd.s32 %v2426, 88
        %v2438 = vadd.s32 %v2426, 96
        %v2439 = vadd.s32 %v2426, 104
        %v2440 = vadd.s32 %v2426, 112
        %v2441 = vadd.s32 %v2426, 120
        %v2442 = vadd.s32 %v2426, 128
        %v2443 = vadd.s32 %v2426, 136
        %v2444 = vadd.s32 %v2426, 144
        %v2445 = vadd.s32 %v2426, 152
        %v2446 = vadd.s32 %v2426, 160
        %v2447 = vadd.s32 %v2426, 168
        %v2448 = vadd.s32 %v2426, 176
        %v2449 = vadd.s32 %v2426, 184
        %v2450 = vadd.s32 %v2426, 192
        %v2451 = vadd.s32 %v2426, 200
        %v2452 = vadd.s32 %v2426, 208
        %v2453 = vadd.s32 %v2426, 216
        %v2454 = vadd.s32 %v2426, 224
        %v2455 = vadd.s32 %v2426, 232
        %v2456 = vadd.s32 %v2426, 240
        %v2457 = vadd.s32 %v2426, 248
        %vm2458 = vcmp.lt.s32.totalorder %v2426, 0
        %v2459 = vsub.s32 0, %v2426
        %v2460 = vsel %vm2458, %v2459, %v2426
        %v2461 = vshrl.u32 %v2460, 4
        %v2462 = vand.u32 %v2460, 15
        %v2463 = vsub.s32 0, %v2462
        %v2464 = vsel %vm2458, %v2463, %v2462
        %vm2465 = vcmp.lt.s32.totalorder %v2427, 0
        %v2466 = vsub.s32 0, %v2427
        %v2467 = vsel %vm2465, %v2466, %v2427
        %v2468 = vshrl.u32 %v2467, 4
        %v2469 = vand.u32 %v2467, 15
        %v2470 = vsub.s32 0, %v2469
        %v2471 = vsel %vm2465, %v2470, %v2469
        %vm2472 = vcmp.lt.s32.totalorder %v2428, 0
        %v2473 = vsub.s32 0, %v2428
        %v2474 = vsel %vm2472, %v2473, %v2428
        %v2475 = vshrl.u32 %v2474, 4
        %v2476 = vand.u32 %v2474, 15
        %v2477 = vsub.s32 0, %v2476
        %v2478 = vsel %vm2472, %v2477, %v2476
        %vm2479 = vcmp.lt.s32.totalorder %v2429, 0
        %v2480 = vsub.s32 0, %v2429
        %v2481 = vsel %vm2479, %v2480, %v2429
        %v2482 = vshrl.u32 %v2481, 4
        %v2483 = vand.u32 %v2481, 15
        %v2484 = vsub.s32 0, %v2483
        %v2485 = vsel %vm2479, %v2484, %v2483
        %vm2486 = vcmp.lt.s32.totalorder %v2430, 0
        %v2487 = vsub.s32 0, %v2430
        %v2488 = vsel %vm2486, %v2487, %v2430
        %v2489 = vshrl.u32 %v2488, 4
        %v2490 = vand.u32 %v2488, 15
        %v2491 = vsub.s32 0, %v2490
        %v2492 = vsel %vm2486, %v2491, %v2490
        %vm2493 = vcmp.lt.s32.totalorder %v2431, 0
        %v2494 = vsub.s32 0, %v2431
        %v2495 = vsel %vm2493, %v2494, %v2431
        %v2496 = vshrl.u32 %v2495, 4
        %v2497 = vand.u32 %v2495, 15
        %v2498 = vsub.s32 0, %v2497
        %v2499 = vsel %vm2493, %v2498, %v2497
        %vm2500 = vcmp.lt.s32.totalorder %v2432, 0
        %v2501 = vsub.s32 0, %v2432
        %v2502 = vsel %vm2500, %v2501, %v2432
        %v2503 = vshrl.u32 %v2502, 4
        %v2504 = vand.u32 %v2502, 15
        %v2505 = vsub.s32 0, %v2504
        %v2506 = vsel %vm2500, %v2505, %v2504
        %vm2507 = vcmp.lt.s32.totalorder %v2433, 0
        %v2508 = vsub.s32 0, %v2433
        %v2509 = vsel %vm2507, %v2508, %v2433
        %v2510 = vshrl.u32 %v2509, 4
        %v2511 = vand.u32 %v2509, 15
        %v2512 = vsub.s32 0, %v2511
        %v2513 = vsel %vm2507, %v2512, %v2511
        %vm2514 = vcmp.lt.s32.totalorder %v2434, 0
        %v2515 = vsub.s32 0, %v2434
        %v2516 = vsel %vm2514, %v2515, %v2434
        %v2517 = vshrl.u32 %v2516, 4
        %v2518 = vand.u32 %v2516, 15
        %v2519 = vsub.s32 0, %v2518
        %v2520 = vsel %vm2514, %v2519, %v2518
        %vm2521 = vcmp.lt.s32.totalorder %v2435, 0
        %v2522 = vsub.s32 0, %v2435
        %v2523 = vsel %vm2521, %v2522, %v2435
        %v2524 = vshrl.u32 %v2523, 4
        %v2525 = vand.u32 %v2523, 15
        %v2526 = vsub.s32 0, %v2525
        %v2527 = vsel %vm2521, %v2526, %v2525
        %vm2528 = vcmp.lt.s32.totalorder %v2436, 0
        %v2529 = vsub.s32 0, %v2436
        %v2530 = vsel %vm2528, %v2529, %v2436
        %v2531 = vshrl.u32 %v2530, 4
        %v2532 = vand.u32 %v2530, 15
        %v2533 = vsub.s32 0, %v2532
        %v2534 = vsel %vm2528, %v2533, %v2532
        %vm2535 = vcmp.lt.s32.totalorder %v2437, 0
        %v2536 = vsub.s32 0, %v2437
        %v2537 = vsel %vm2535, %v2536, %v2437
        %v2538 = vshrl.u32 %v2537, 4
        %v2539 = vand.u32 %v2537, 15
        %v2540 = vsub.s32 0, %v2539
        %v2541 = vsel %vm2535, %v2540, %v2539
        %vm2542 = vcmp.lt.s32.totalorder %v2438, 0
        %v2543 = vsub.s32 0, %v2438
        %v2544 = vsel %vm2542, %v2543, %v2438
        %v2545 = vshrl.u32 %v2544, 4
        %v2546 = vand.u32 %v2544, 15
        %v2547 = vsub.s32 0, %v2546
        %v2548 = vsel %vm2542, %v2547, %v2546
        %vm2549 = vcmp.lt.s32.totalorder %v2439, 0
        %v2550 = vsub.s32 0, %v2439
        %v2551 = vsel %vm2549, %v2550, %v2439
        %v2552 = vshrl.u32 %v2551, 4
        %v2553 = vand.u32 %v2551, 15
        %v2554 = vsub.s32 0, %v2553
        %v2555 = vsel %vm2549, %v2554, %v2553
        %vm2556 = vcmp.lt.s32.totalorder %v2440, 0
        %v2557 = vsub.s32 0, %v2440
        %v2558 = vsel %vm2556, %v2557, %v2440
        %v2559 = vshrl.u32 %v2558, 4
        %v2560 = vand.u32 %v2558, 15
        %v2561 = vsub.s32 0, %v2560
        %v2562 = vsel %vm2556, %v2561, %v2560
        %vm2563 = vcmp.lt.s32.totalorder %v2441, 0
        %v2564 = vsub.s32 0, %v2441
        %v2565 = vsel %vm2563, %v2564, %v2441
        %v2566 = vshrl.u32 %v2565, 4
        %v2567 = vand.u32 %v2565, 15
        %v2568 = vsub.s32 0, %v2567
        %v2569 = vsel %vm2563, %v2568, %v2567
        %vm2570 = vcmp.lt.s32.totalorder %v2442, 0
        %v2571 = vsub.s32 0, %v2442
        %v2572 = vsel %vm2570, %v2571, %v2442
        %v2573 = vshrl.u32 %v2572, 4
        %v2574 = vand.u32 %v2572, 15
        %v2575 = vsub.s32 0, %v2574
        %v2576 = vsel %vm2570, %v2575, %v2574
        %vm2577 = vcmp.lt.s32.totalorder %v2443, 0
        %v2578 = vsub.s32 0, %v2443
        %v2579 = vsel %vm2577, %v2578, %v2443
        %v2580 = vshrl.u32 %v2579, 4
        %v2581 = vand.u32 %v2579, 15
        %v2582 = vsub.s32 0, %v2581
        %v2583 = vsel %vm2577, %v2582, %v2581
        %vm2584 = vcmp.lt.s32.totalorder %v2444, 0
        %v2585 = vsub.s32 0, %v2444
        %v2586 = vsel %vm2584, %v2585, %v2444
        %v2587 = vshrl.u32 %v2586, 4
        %v2588 = vand.u32 %v2586, 15
        %v2589 = vsub.s32 0, %v2588
        %v2590 = vsel %vm2584, %v2589, %v2588
        %vm2591 = vcmp.lt.s32.totalorder %v2445, 0
        %v2592 = vsub.s32 0, %v2445
        %v2593 = vsel %vm2591, %v2592, %v2445
        %v2594 = vshrl.u32 %v2593, 4
        %v2595 = vand.u32 %v2593, 15
        %v2596 = vsub.s32 0, %v2595
        %v2597 = vsel %vm2591, %v2596, %v2595
        %vm2598 = vcmp.lt.s32.totalorder %v2446, 0
        %v2599 = vsub.s32 0, %v2446
        %v2600 = vsel %vm2598, %v2599, %v2446
        %v2601 = vshrl.u32 %v2600, 4
        %v2602 = vand.u32 %v2600, 15
        %v2603 = vsub.s32 0, %v2602
        %v2604 = vsel %vm2598, %v2603, %v2602
        %vm2605 = vcmp.lt.s32.totalorder %v2447, 0
        %v2606 = vsub.s32 0, %v2447
        %v2607 = vsel %vm2605, %v2606, %v2447
        %v2608 = vshrl.u32 %v2607, 4
        %v2609 = vand.u32 %v2607, 15
        %v2610 = vsub.s32 0, %v2609
        %v2611 = vsel %vm2605, %v2610, %v2609
        %vm2612 = vcmp.lt.s32.totalorder %v2448, 0
        %v2613 = vsub.s32 0, %v2448
        %v2614 = vsel %vm2612, %v2613, %v2448
        %v2615 = vshrl.u32 %v2614, 4
        %v2616 = vand.u32 %v2614, 15
        %v2617 = vsub.s32 0, %v2616
        %v2618 = vsel %vm2612, %v2617, %v2616
        %vm2619 = vcmp.lt.s32.totalorder %v2449, 0
        %v2620 = vsub.s32 0, %v2449
        %v2621 = vsel %vm2619, %v2620, %v2449
        %v2622 = vshrl.u32 %v2621, 4
        %v2623 = vand.u32 %v2621, 15
        %v2624 = vsub.s32 0, %v2623
        %v2625 = vsel %vm2619, %v2624, %v2623
        %vm2626 = vcmp.lt.s32.totalorder %v2450, 0
        %v2627 = vsub.s32 0, %v2450
        %v2628 = vsel %vm2626, %v2627, %v2450
        %v2629 = vshrl.u32 %v2628, 4
        %v2630 = vand.u32 %v2628, 15
        %v2631 = vsub.s32 0, %v2630
        %v2632 = vsel %vm2626, %v2631, %v2630
        %vm2633 = vcmp.lt.s32.totalorder %v2451, 0
        %v2634 = vsub.s32 0, %v2451
        %v2635 = vsel %vm2633, %v2634, %v2451
        %v2636 = vshrl.u32 %v2635, 4
        %v2637 = vand.u32 %v2635, 15
        %v2638 = vsub.s32 0, %v2637
        %v2639 = vsel %vm2633, %v2638, %v2637
        %vm2640 = vcmp.lt.s32.totalorder %v2452, 0
        %v2641 = vsub.s32 0, %v2452
        %v2642 = vsel %vm2640, %v2641, %v2452
        %v2643 = vshrl.u32 %v2642, 4
        %v2644 = vand.u32 %v2642, 15
        %v2645 = vsub.s32 0, %v2644
        %v2646 = vsel %vm2640, %v2645, %v2644
        %vm2647 = vcmp.lt.s32.totalorder %v2453, 0
        %v2648 = vsub.s32 0, %v2453
        %v2649 = vsel %vm2647, %v2648, %v2453
        %v2650 = vshrl.u32 %v2649, 4
        %v2651 = vand.u32 %v2649, 15
        %v2652 = vsub.s32 0, %v2651
        %v2653 = vsel %vm2647, %v2652, %v2651
        %vm2654 = vcmp.lt.s32.totalorder %v2454, 0
        %v2655 = vsub.s32 0, %v2454
        %v2656 = vsel %vm2654, %v2655, %v2454
        %v2657 = vshrl.u32 %v2656, 4
        %v2658 = vand.u32 %v2656, 15
        %v2659 = vsub.s32 0, %v2658
        %v2660 = vsel %vm2654, %v2659, %v2658
        %vm2661 = vcmp.lt.s32.totalorder %v2455, 0
        %v2662 = vsub.s32 0, %v2455
        %v2663 = vsel %vm2661, %v2662, %v2455
        %v2664 = vshrl.u32 %v2663, 4
        %v2665 = vand.u32 %v2663, 15
        %v2666 = vsub.s32 0, %v2665
        %v2667 = vsel %vm2661, %v2666, %v2665
        %vm2668 = vcmp.lt.s32.totalorder %v2456, 0
        %v2669 = vsub.s32 0, %v2456
        %v2670 = vsel %vm2668, %v2669, %v2456
        %v2671 = vshrl.u32 %v2670, 4
        %v2672 = vand.u32 %v2670, 15
        %v2673 = vsub.s32 0, %v2672
        %v2674 = vsel %vm2668, %v2673, %v2672
        %vm2675 = vcmp.lt.s32.totalorder %v2457, 0
        %v2676 = vsub.s32 0, %v2457
        %v2677 = vsel %vm2675, %v2676, %v2457
        %v2678 = vshrl.u32 %v2677, 4
        %v2679 = vand.u32 %v2677, 15
        %v2680 = vsub.s32 0, %v2679
        %v2681 = vsel %vm2675, %v2680, %v2679
        %vm2682 = vcmp.ne.s32.totalorder %v2464, 0
        %vm2683 = vcmp.ne.s32.totalorder %v2471, 0
        %vm2684 = vcmp.ne.s32.totalorder %v2478, 0
        %vm2685 = vcmp.ne.s32.totalorder %v2485, 0
        %vm2686 = vcmp.ne.s32.totalorder %v2492, 0
        %vm2687 = vcmp.ne.s32.totalorder %v2499, 0
        %vm2688 = vcmp.ne.s32.totalorder %v2506, 0
        %vm2689 = vcmp.ne.s32.totalorder %v2513, 0
        %vm2690 = vcmp.ne.s32.totalorder %v2520, 0
        %vm2691 = vcmp.ne.s32.totalorder %v2527, 0
        %vm2692 = vcmp.ne.s32.totalorder %v2534, 0
        %vm2693 = vcmp.ne.s32.totalorder %v2541, 0
        %vm2694 = vcmp.ne.s32.totalorder %v2548, 0
        %vm2695 = vcmp.ne.s32.totalorder %v2555, 0
        %vm2696 = vcmp.ne.s32.totalorder %v2562, 0
        %vm2697 = vcmp.ne.s32.totalorder %v2569, 0
        %vm2698 = vcmp.ne.s32.totalorder %v2576, 0
        %vm2699 = vcmp.ne.s32.totalorder %v2583, 0
        %vm2700 = vcmp.ne.s32.totalorder %v2590, 0
        %vm2701 = vcmp.ne.s32.totalorder %v2597, 0
        %vm2702 = vcmp.ne.s32.totalorder %v2604, 0
        %vm2703 = vcmp.ne.s32.totalorder %v2611, 0
        %vm2704 = vcmp.ne.s32.totalorder %v2618, 0
        %vm2705 = vcmp.ne.s32.totalorder %v2625, 0
        %vm2706 = vcmp.ne.s32.totalorder %v2632, 0
        %vm2707 = vcmp.ne.s32.totalorder %v2639, 0
        %vm2708 = vcmp.ne.s32.totalorder %v2646, 0
        %vm2709 = vcmp.ne.s32.totalorder %v2653, 0
        %vm2710 = vcmp.ne.s32.totalorder %v2660, 0
        %vm2711 = vcmp.ne.s32.totalorder %v2667, 0
        %vm2712 = vcmp.ne.s32.totalorder %v2674, 0
        %vm2713 = vcmp.ne.s32.totalorder %v2681, 0
        %vm2714 = vcmp.lt.s32.totalorder %v2464, 0
        %vm2715 = vcmp.lt.s32.totalorder %v2471, 0
        %vm2716 = vcmp.lt.s32.totalorder %v2478, 0
        %vm2717 = vcmp.lt.s32.totalorder %v2485, 0
        %vm2718 = vcmp.lt.s32.totalorder %v2492, 0
        %vm2719 = vcmp.lt.s32.totalorder %v2499, 0
        %vm2720 = vcmp.lt.s32.totalorder %v2506, 0
        %vm2721 = vcmp.lt.s32.totalorder %v2513, 0
        %vm2722 = vcmp.lt.s32.totalorder %v2520, 0
        %vm2723 = vcmp.lt.s32.totalorder %v2527, 0
        %vm2724 = vcmp.lt.s32.totalorder %v2534, 0
        %vm2725 = vcmp.lt.s32.totalorder %v2541, 0
        %vm2726 = vcmp.lt.s32.totalorder %v2548, 0
        %vm2727 = vcmp.lt.s32.totalorder %v2555, 0
        %vm2728 = vcmp.lt.s32.totalorder %v2562, 0
        %vm2729 = vcmp.lt.s32.totalorder %v2569, 0
        %vm2730 = vcmp.lt.s32.totalorder %v2576, 0
        %vm2731 = vcmp.lt.s32.totalorder %v2583, 0
        %vm2732 = vcmp.lt.s32.totalorder %v2590, 0
        %vm2733 = vcmp.lt.s32.totalorder %v2597, 0
        %vm2734 = vcmp.lt.s32.totalorder %v2604, 0
        %vm2735 = vcmp.lt.s32.totalorder %v2611, 0
        %vm2736 = vcmp.lt.s32.totalorder %v2618, 0
        %vm2737 = vcmp.lt.s32.totalorder %v2625, 0
        %vm2738 = vcmp.lt.s32.totalorder %v2632, 0
        %vm2739 = vcmp.lt.s32.totalorder %v2639, 0
        %vm2740 = vcmp.lt.s32.totalorder %v2646, 0
        %vm2741 = vcmp.lt.s32.totalorder %v2653, 0
        %vm2742 = vcmp.lt.s32.totalorder %v2660, 0
        %vm2743 = vcmp.lt.s32.totalorder %v2667, 0
        %vm2744 = vcmp.lt.s32.totalorder %v2674, 0
        %vm2745 = vcmp.lt.s32.totalorder %v2681, 0
        %vm2746 = vmand %vm2714, %vm2682
        %vm2747 = vmand %vm2715, %vm2683
        %vm2748 = vmand %vm2716, %vm2684
        %vm2749 = vmand %vm2717, %vm2685
        %vm2750 = vmand %vm2718, %vm2686
        %vm2751 = vmand %vm2719, %vm2687
        %vm2752 = vmand %vm2720, %vm2688
        %vm2753 = vmand %vm2721, %vm2689
        %vm2754 = vmand %vm2722, %vm2690
        %vm2755 = vmand %vm2723, %vm2691
        %vm2756 = vmand %vm2724, %vm2692
        %vm2757 = vmand %vm2725, %vm2693
        %vm2758 = vmand %vm2726, %vm2694
        %vm2759 = vmand %vm2727, %vm2695
        %vm2760 = vmand %vm2728, %vm2696
        %vm2761 = vmand %vm2729, %vm2697
        %vm2762 = vmand %vm2730, %vm2698
        %vm2763 = vmand %vm2731, %vm2699
        %vm2764 = vmand %vm2732, %vm2700
        %vm2765 = vmand %vm2733, %vm2701
        %vm2766 = vmand %vm2734, %vm2702
        %vm2767 = vmand %vm2735, %vm2703
        %vm2768 = vmand %vm2736, %vm2704
        %vm2769 = vmand %vm2737, %vm2705
        %vm2770 = vmand %vm2738, %vm2706
        %vm2771 = vmand %vm2739, %vm2707
        %vm2772 = vmand %vm2740, %vm2708
        %vm2773 = vmand %vm2741, %vm2709
        %vm2774 = vmand %vm2742, %vm2710
        %vm2775 = vmand %vm2743, %vm2711
        %vm2776 = vmand %vm2744, %vm2712
        %vm2777 = vmand %vm2745, %vm2713
        %v2778 = vadd.s32 %v2464, 16
        %v2779 = vadd.s32 %v2471, 16
        %v2780 = vadd.s32 %v2478, 16
        %v2781 = vadd.s32 %v2485, 16
        %v2782 = vadd.s32 %v2492, 16
        %v2783 = vadd.s32 %v2499, 16
        %v2784 = vadd.s32 %v2506, 16
        %v2785 = vadd.s32 %v2513, 16
        %v2786 = vadd.s32 %v2520, 16
        %v2787 = vadd.s32 %v2527, 16
        %v2788 = vadd.s32 %v2534, 16
        %v2789 = vadd.s32 %v2541, 16
        %v2790 = vadd.s32 %v2548, 16
        %v2791 = vadd.s32 %v2555, 16
        %v2792 = vadd.s32 %v2562, 16
        %v2793 = vadd.s32 %v2569, 16
        %v2794 = vadd.s32 %v2576, 16
        %v2795 = vadd.s32 %v2583, 16
        %v2796 = vadd.s32 %v2590, 16
        %v2797 = vadd.s32 %v2597, 16
        %v2798 = vadd.s32 %v2604, 16
        %v2799 = vadd.s32 %v2611, 16
        %v2800 = vadd.s32 %v2618, 16
        %v2801 = vadd.s32 %v2625, 16
        %v2802 = vadd.s32 %v2632, 16
        %v2803 = vadd.s32 %v2639, 16
        %v2804 = vadd.s32 %v2646, 16
        %v2805 = vadd.s32 %v2653, 16
        %v2806 = vadd.s32 %v2660, 16
        %v2807 = vadd.s32 %v2667, 16
        %v2808 = vadd.s32 %v2674, 16
        %v2809 = vadd.s32 %v2681, 16
        %v2810 = vsel %vm2746, %v2778, %v2464
        %v2811 = vsel %vm2747, %v2779, %v2471
        %v2812 = vsel %vm2748, %v2780, %v2478
        %v2813 = vsel %vm2749, %v2781, %v2485
        %v2814 = vsel %vm2750, %v2782, %v2492
        %v2815 = vsel %vm2751, %v2783, %v2499
        %v2816 = vsel %vm2752, %v2784, %v2506
        %v2817 = vsel %vm2753, %v2785, %v2513
        %v2818 = vsel %vm2754, %v2786, %v2520
        %v2819 = vsel %vm2755, %v2787, %v2527
        %v2820 = vsel %vm2756, %v2788, %v2534
        %v2821 = vsel %vm2757, %v2789, %v2541
        %v2822 = vsel %vm2758, %v2790, %v2548
        %v2823 = vsel %vm2759, %v2791, %v2555
        %v2824 = vsel %vm2760, %v2792, %v2562
        %v2825 = vsel %vm2761, %v2793, %v2569
        %v2826 = vsel %vm2762, %v2794, %v2576
        %v2827 = vsel %vm2763, %v2795, %v2583
        %v2828 = vsel %vm2764, %v2796, %v2590
        %v2829 = vsel %vm2765, %v2797, %v2597
        %v2830 = vsel %vm2766, %v2798, %v2604
        %v2831 = vsel %vm2767, %v2799, %v2611
        %v2832 = vsel %vm2768, %v2800, %v2618
        %v2833 = vsel %vm2769, %v2801, %v2625
        %v2834 = vsel %vm2770, %v2802, %v2632
        %v2835 = vsel %vm2771, %v2803, %v2639
        %v2836 = vsel %vm2772, %v2804, %v2646
        %v2837 = vsel %vm2773, %v2805, %v2653
        %v2838 = vsel %vm2774, %v2806, %v2660
        %v2839 = vsel %vm2775, %v2807, %v2667
        %v2840 = vsel %vm2776, %v2808, %v2674
        %v2841 = vsel %vm2777, %v2809, %v2681
        %vm2842 = vcmp.gt.s32.totalorder %v2810, 0
        %vm2843 = vcmp.gt.s32.totalorder %v2811, 0
        %vm2844 = vcmp.gt.s32.totalorder %v2812, 0
        %vm2845 = vcmp.gt.s32.totalorder %v2813, 0
        %vm2846 = vcmp.gt.s32.totalorder %v2814, 0
        %vm2847 = vcmp.gt.s32.totalorder %v2815, 0
        %vm2848 = vcmp.gt.s32.totalorder %v2816, 0
        %vm2849 = vcmp.gt.s32.totalorder %v2817, 0
        %vm2850 = vcmp.gt.s32.totalorder %v2818, 0
        %vm2851 = vcmp.gt.s32.totalorder %v2819, 0
        %vm2852 = vcmp.gt.s32.totalorder %v2820, 0
        %vm2853 = vcmp.gt.s32.totalorder %v2821, 0
        %vm2854 = vcmp.gt.s32.totalorder %v2822, 0
        %vm2855 = vcmp.gt.s32.totalorder %v2823, 0
        %vm2856 = vcmp.gt.s32.totalorder %v2824, 0
        %vm2857 = vcmp.gt.s32.totalorder %v2825, 0
        %vm2858 = vcmp.gt.s32.totalorder %v2826, 0
        %vm2859 = vcmp.gt.s32.totalorder %v2827, 0
        %vm2860 = vcmp.gt.s32.totalorder %v2828, 0
        %vm2861 = vcmp.gt.s32.totalorder %v2829, 0
        %vm2862 = vcmp.gt.s32.totalorder %v2830, 0
        %vm2863 = vcmp.gt.s32.totalorder %v2831, 0
        %vm2864 = vcmp.gt.s32.totalorder %v2832, 0
        %vm2865 = vcmp.gt.s32.totalorder %v2833, 0
        %vm2866 = vcmp.gt.s32.totalorder %v2834, 0
        %vm2867 = vcmp.gt.s32.totalorder %v2835, 0
        %vm2868 = vcmp.gt.s32.totalorder %v2836, 0
        %vm2869 = vcmp.gt.s32.totalorder %v2837, 0
        %vm2870 = vcmp.gt.s32.totalorder %v2838, 0
        %vm2871 = vcmp.gt.s32.totalorder %v2839, 0
        %vm2872 = vcmp.gt.s32.totalorder %v2840, 0
        %vm2873 = vcmp.gt.s32.totalorder %v2841, 0
        %vm2874 = vcmp.lt.s32.totalorder %v2810, 15
        %vm2875 = vcmp.lt.s32.totalorder %v2811, 15
        %vm2876 = vcmp.lt.s32.totalorder %v2812, 15
        %vm2877 = vcmp.lt.s32.totalorder %v2813, 15
        %vm2878 = vcmp.lt.s32.totalorder %v2814, 15
        %vm2879 = vcmp.lt.s32.totalorder %v2815, 15
        %vm2880 = vcmp.lt.s32.totalorder %v2816, 15
        %vm2881 = vcmp.lt.s32.totalorder %v2817, 15
        %vm2882 = vcmp.lt.s32.totalorder %v2818, 15
        %vm2883 = vcmp.lt.s32.totalorder %v2819, 15
        %vm2884 = vcmp.lt.s32.totalorder %v2820, 15
        %vm2885 = vcmp.lt.s32.totalorder %v2821, 15
        %vm2886 = vcmp.lt.s32.totalorder %v2822, 15
        %vm2887 = vcmp.lt.s32.totalorder %v2823, 15
        %vm2888 = vcmp.lt.s32.totalorder %v2824, 15
        %vm2889 = vcmp.lt.s32.totalorder %v2825, 15
        %vm2890 = vcmp.lt.s32.totalorder %v2826, 15
        %vm2891 = vcmp.lt.s32.totalorder %v2827, 15
        %vm2892 = vcmp.lt.s32.totalorder %v2828, 15
        %vm2893 = vcmp.lt.s32.totalorder %v2829, 15
        %vm2894 = vcmp.lt.s32.totalorder %v2830, 15
        %vm2895 = vcmp.lt.s32.totalorder %v2831, 15
        %vm2896 = vcmp.lt.s32.totalorder %v2832, 15
        %vm2897 = vcmp.lt.s32.totalorder %v2833, 15
        %vm2898 = vcmp.lt.s32.totalorder %v2834, 15
        %vm2899 = vcmp.lt.s32.totalorder %v2835, 15
        %vm2900 = vcmp.lt.s32.totalorder %v2836, 15
        %vm2901 = vcmp.lt.s32.totalorder %v2837, 15
        %vm2902 = vcmp.lt.s32.totalorder %v2838, 15
        %vm2903 = vcmp.lt.s32.totalorder %v2839, 15
        %vm2904 = vcmp.lt.s32.totalorder %v2840, 15
        %vm2905 = vcmp.lt.s32.totalorder %v2841, 15
        %v2906 = vld [vmem:[#allocation3] sm:$0xff]
        %v2907 = vld [vmem:[#allocation3 + $0x8] sm:$0xff]
        %v2908 = vld [vmem:[#allocation3 + $0x10] sm:$0xff]
        %v2909 = vld [vmem:[#allocation3 + $0x18] sm:$0xff]
        %v2910 = vld [vmem:[#allocation3 + $0x20] sm:$0xff]
        %v2911 = vld [vmem:[#allocation3 + $0x28] sm:$0xff]
        %v2912 = vld [vmem:[#allocation3 + $0x30] sm:$0xff]
        %v2913 = vld [vmem:[#allocation3 + $0x38] sm:$0xff]
        %v2914 = vld [vmem:[#allocation3 + $0x40] sm:$0xff]
        %v2915 = vld [vmem:[#allocation3 + $0x48] sm:$0xff]
        %v2916 = vld [vmem:[#allocation3 + $0x50] sm:$0xff]
        %v2917 = vld [vmem:[#allocation3 + $0x58] sm:$0xff]
        %v2918 = vld [vmem:[#allocation3 + $0x60] sm:$0xff]
        %v2919 = vld [vmem:[#allocation3 + $0x68] sm:$0xff]
        %v2920 = vld [vmem:[#allocation3 + $0x70] sm:$0xff]
        %v2921 = vld [vmem:[#allocation3 + $0x78] sm:$0xff]
        %v2922 = vld [vmem:[#allocation3 + $0x80] sm:$0xff]
        %v2923 = vld [vmem:[#allocation3 + $0x88] sm:$0xff]
        %v2924 = vld [vmem:[#allocation3 + $0x90] sm:$0xff]
        %v2925 = vld [vmem:[#allocation3 + $0x98] sm:$0xff]
        %v2926 = vld [vmem:[#allocation3 + $0xa0] sm:$0xff]
        %v2927 = vld [vmem:[#allocation3 + $0xa8] sm:$0xff]
        %v2928 = vld [vmem:[#allocation3 + $0xb0] sm:$0xff]
        %v2929 = vld [vmem:[#allocation3 + $0xb8] sm:$0xff]
        %v2930 = vld [vmem:[#allocation3 + $0xc0] sm:$0xff]
        %v2931 = vld [vmem:[#allocation3 + $0xc8] sm:$0xff]
        %v2932 = vld [vmem:[#allocation3 + $0xd0] sm:$0xff]
        %v2933 = vld [vmem:[#allocation3 + $0xd8] sm:$0xff]
        %v2934 = vld [vmem:[#allocation3 + $0xe0] sm:$0xff]
        %v2935 = vld [vmem:[#allocation3 + $0xe8] sm:$0xff]
        %v2936 = vld [vmem:[#allocation3 + $0xf0] sm:$0xff]
        %v2937 = vld [vmem:[#allocation3 + $0xf8] sm:$0xff]
        %v2938 = vpack.c.bf16 %v2907, %v2906
        %v2939 = vpack.c.bf16 %v2909, %v2908
        %v2940 = vpack.c.bf16 %v2911, %v2910
        %v2941 = vpack.c.bf16 %v2913, %v2912
        %v2942 = vpack.c.bf16 %v2915, %v2914
        %v2943 = vpack.c.bf16 %v2917, %v2916
        %v2944 = vpack.c.bf16 %v2919, %v2918
        %v2945 = vpack.c.bf16 %v2921, %v2920
        %v2946 = vpack.c.bf16 %v2923, %v2922
        %v2947 = vpack.c.bf16 %v2925, %v2924
        %v2948 = vpack.c.bf16 %v2927, %v2926
        %v2949 = vpack.c.bf16 %v2929, %v2928
        %v2950 = vpack.c.bf16 %v2931, %v2930
        %v2951 = vpack.c.bf16 %v2933, %v2932
        %v2952 = vpack.c.bf16 %v2935, %v2934
        %v2953 = vpack.c.bf16 %v2937, %v2936
        %v2954 = vsel %vm2842, 1, 0
        %v2955 = vsel %vm2843, 1, 0
        %v2956 = vsel %vm2844, 1, 0
        %v2957 = vsel %vm2845, 1, 0
        %v2958 = vsel %vm2846, 1, 0
        %v2959 = vsel %vm2847, 1, 0
        %v2960 = vsel %vm2848, 1, 0
        %v2961 = vsel %vm2849, 1, 0
        %v2962 = vsel %vm2850, 1, 0
        %v2963 = vsel %vm2851, 1, 0
        %v2964 = vsel %vm2852, 1, 0
        %v2965 = vsel %vm2853, 1, 0
        %v2966 = vsel %vm2854, 1, 0
        %v2967 = vsel %vm2855, 1, 0
        %v2968 = vsel %vm2856, 1, 0
        %v2969 = vsel %vm2857, 1, 0
        %v2970 = vsel %vm2858, 1, 0
        %v2971 = vsel %vm2859, 1, 0
        %v2972 = vsel %vm2860, 1, 0
        %v2973 = vsel %vm2861, 1, 0
        %v2974 = vsel %vm2862, 1, 0
        %v2975 = vsel %vm2863, 1, 0
        %v2976 = vsel %vm2864, 1, 0
        %v2977 = vsel %vm2865, 1, 0
        %v2978 = vsel %vm2866, 1, 0
        %v2979 = vsel %vm2867, 1, 0
        %v2980 = vsel %vm2868, 1, 0
        %v2981 = vsel %vm2869, 1, 0
        %v2982 = vsel %vm2870, 1, 0
        %v2983 = vsel %vm2871, 1, 0
        %v2984 = vsel %vm2872, 1, 0
        %v2985 = vsel %vm2873, 1, 0
        %vm2986 = vcmp.eq.s32.totalorder %v2954, 1
        %vm2987 = vcmp.eq.s32.totalorder %v2955, 1
        %vm2988 = vcmp.eq.s32.totalorder %v2956, 1
        %vm2989 = vcmp.eq.s32.totalorder %v2957, 1
        %vm2990 = vcmp.eq.s32.totalorder %v2958, 1
        %vm2991 = vcmp.eq.s32.totalorder %v2959, 1
        %vm2992 = vcmp.eq.s32.totalorder %v2960, 1
        %vm2993 = vcmp.eq.s32.totalorder %v2961, 1
        %vm2994 = vcmp.eq.s32.totalorder %v2962, 1
        %vm2995 = vcmp.eq.s32.totalorder %v2963, 1
        %vm2996 = vcmp.eq.s32.totalorder %v2964, 1
        %vm2997 = vcmp.eq.s32.totalorder %v2965, 1
        %vm2998 = vcmp.eq.s32.totalorder %v2966, 1
        %vm2999 = vcmp.eq.s32.totalorder %v2967, 1
        %vm3000 = vcmp.eq.s32.totalorder %v2968, 1
        %vm3001 = vcmp.eq.s32.totalorder %v2969, 1
        %vm3002 = vcmp.eq.s32.totalorder %v2970, 1
        %vm3003 = vcmp.eq.s32.totalorder %v2971, 1
        %vm3004 = vcmp.eq.s32.totalorder %v2972, 1
        %vm3005 = vcmp.eq.s32.totalorder %v2973, 1
        %vm3006 = vcmp.eq.s32.totalorder %v2974, 1
        %vm3007 = vcmp.eq.s32.totalorder %v2975, 1
        %vm3008 = vcmp.eq.s32.totalorder %v2976, 1
        %vm3009 = vcmp.eq.s32.totalorder %v2977, 1
        %vm3010 = vcmp.eq.s32.totalorder %v2978, 1
        %vm3011 = vcmp.eq.s32.totalorder %v2979, 1
        %vm3012 = vcmp.eq.s32.totalorder %v2980, 1
        %vm3013 = vcmp.eq.s32.totalorder %v2981, 1
        %vm3014 = vcmp.eq.s32.totalorder %v2982, 1
        %vm3015 = vcmp.eq.s32.totalorder %v2983, 1
        %vm3016 = vcmp.eq.s32.totalorder %v2984, 1
        %vm3017 = vcmp.eq.s32.totalorder %v2985, 1
        %vm3018 = vmpackc.low %vm2986, %vm2986
        %vm3019 = vmpackc.low %vm2987, %vm2987
        %vm3020 = vmpackc.low %vm2988, %vm2988
        %vm3021 = vmpackc.low %vm2989, %vm2989
        %vm3022 = vmpackc.low %vm2990, %vm2990
        %vm3023 = vmpackc.low %vm2991, %vm2991
        %vm3024 = vmpackc.low %vm2992, %vm2992
        %vm3025 = vmpackc.low %vm2993, %vm2993
        %vm3026 = vmpackc.low %vm2994, %vm2994
        %vm3027 = vmpackc.low %vm2995, %vm2995
        %vm3028 = vmpackc.low %vm2996, %vm2996
        %vm3029 = vmpackc.low %vm2997, %vm2997
        %vm3030 = vmpackc.low %vm2998, %vm2998
        %vm3031 = vmpackc.low %vm2999, %vm2999
        %vm3032 = vmpackc.low %vm3000, %vm3000
        %vm3033 = vmpackc.low %vm3001, %vm3001
        %vm3034 = vmpackc.low %vm3002, %vm3002
        %vm3035 = vmpackc.low %vm3003, %vm3003
        %vm3036 = vmpackc.low %vm3004, %vm3004
        %vm3037 = vmpackc.low %vm3005, %vm3005
        %vm3038 = vmpackc.low %vm3006, %vm3006
        %vm3039 = vmpackc.low %vm3007, %vm3007
        %vm3040 = vmpackc.low %vm3008, %vm3008
        %vm3041 = vmpackc.low %vm3009, %vm3009
        %vm3042 = vmpackc.low %vm3010, %vm3010
        %vm3043 = vmpackc.low %vm3011, %vm3011
        %vm3044 = vmpackc.low %vm3012, %vm3012
        %vm3045 = vmpackc.low %vm3013, %vm3013
        %vm3046 = vmpackc.low %vm3014, %vm3014
        %vm3047 = vmpackc.low %vm3015, %vm3015
        %vm3048 = vmpackc.low %vm3016, %vm3016
        %vm3049 = vmpackc.low %vm3017, %vm3017
        %v3050 = vsel %vm3018, 65537, 0
        %v3051 = vsel %vm3019, 65537, 0
        %v3052 = vsel %vm3020, 65537, 0
        %v3053 = vsel %vm3021, 65537, 0
        %v3054 = vsel %vm3022, 65537, 0
        %v3055 = vsel %vm3023, 65537, 0
        %v3056 = vsel %vm3024, 65537, 0
        %v3057 = vsel %vm3025, 65537, 0
        %v3058 = vsel %vm3026, 65537, 0
        %v3059 = vsel %vm3027, 65537, 0
        %v3060 = vsel %vm3028, 65537, 0
        %v3061 = vsel %vm3029, 65537, 0
        %v3062 = vsel %vm3030, 65537, 0
        %v3063 = vsel %vm3031, 65537, 0
        %v3064 = vsel %vm3032, 65537, 0
        %v3065 = vsel %vm3033, 65537, 0
        %v3066 = vsel %vm3034, 65537, 0
        %v3067 = vsel %vm3035, 65537, 0
        %v3068 = vsel %vm3036, 65537, 0
        %v3069 = vsel %vm3037, 65537, 0
        %v3070 = vsel %vm3038, 65537, 0
        %v3071 = vsel %vm3039, 65537, 0
        %v3072 = vsel %vm3040, 65537, 0
        %v3073 = vsel %vm3041, 65537, 0
        %v3074 = vsel %vm3042, 65537, 0
        %v3075 = vsel %vm3043, 65537, 0
        %v3076 = vsel %vm3044, 65537, 0
        %v3077 = vsel %vm3045, 65537, 0
        %v3078 = vsel %vm3046, 65537, 0
        %v3079 = vsel %vm3047, 65537, 0
        %v3080 = vsel %vm3048, 65537, 0
        %v3081 = vsel %vm3049, 65537, 0
        %v3082 = vunpack.c.l.b16 %v3050
        %v3083 = vunpack.c.l.b16 %v3051
        %v3084 = vunpack.c.l.b16 %v3052
        %v3085 = vunpack.c.l.b16 %v3053
        %v3086 = vunpack.c.l.b16 %v3054
        %v3087 = vunpack.c.l.b16 %v3055
        %v3088 = vunpack.c.l.b16 %v3056
        %v3089 = vunpack.c.l.b16 %v3057
        %v3090 = vunpack.c.l.b16 %v3058
        %v3091 = vunpack.c.l.b16 %v3059
        %v3092 = vunpack.c.l.b16 %v3060
        %v3093 = vunpack.c.l.b16 %v3061
        %v3094 = vunpack.c.l.b16 %v3062
        %v3095 = vunpack.c.l.b16 %v3063
        %v3096 = vunpack.c.l.b16 %v3064
        %v3097 = vunpack.c.l.b16 %v3065
        %v3098 = vunpack.c.l.b16 %v3066
        %v3099 = vunpack.c.l.b16 %v3067
        %v3100 = vunpack.c.l.b16 %v3068
        %v3101 = vunpack.c.l.b16 %v3069
        %v3102 = vunpack.c.l.b16 %v3070
        %v3103 = vunpack.c.l.b16 %v3071
        %v3104 = vunpack.c.l.b16 %v3072
        %v3105 = vunpack.c.l.b16 %v3073
        %v3106 = vunpack.c.l.b16 %v3074
        %v3107 = vunpack.c.l.b16 %v3075
        %v3108 = vunpack.c.l.b16 %v3076
        %v3109 = vunpack.c.l.b16 %v3077
        %v3110 = vunpack.c.l.b16 %v3078
        %v3111 = vunpack.c.l.b16 %v3079
        %v3112 = vunpack.c.l.b16 %v3080
        %v3113 = vunpack.c.l.b16 %v3081
        %v3114 = vpack.c.b16 %v3083, %v3082
        %v3115 = vpack.c.b16 %v3085, %v3084
        %v3116 = vpack.c.b16 %v3087, %v3086
        %v3117 = vpack.c.b16 %v3089, %v3088
        %v3118 = vpack.c.b16 %v3091, %v3090
        %v3119 = vpack.c.b16 %v3093, %v3092
        %v3120 = vpack.c.b16 %v3095, %v3094
        %v3121 = vpack.c.b16 %v3097, %v3096
        %v3122 = vpack.c.b16 %v3099, %v3098
        %v3123 = vpack.c.b16 %v3101, %v3100
        %v3124 = vpack.c.b16 %v3103, %v3102
        %v3125 = vpack.c.b16 %v3105, %v3104
        %v3126 = vpack.c.b16 %v3107, %v3106
        %v3127 = vpack.c.b16 %v3109, %v3108
        %v3128 = vpack.c.b16 %v3111, %v3110
        %v3129 = vpack.c.b16 %v3113, %v3112
        %vm3130 = vcmp.ne.s16.totalorder %v3114, 0
        %vm3131 = vcmp.ne.s16.totalorder %v3115, 0
        %vm3132 = vcmp.ne.s16.totalorder %v3116, 0
        %vm3133 = vcmp.ne.s16.totalorder %v3117, 0
        %vm3134 = vcmp.ne.s16.totalorder %v3118, 0
        %vm3135 = vcmp.ne.s16.totalorder %v3119, 0
        %vm3136 = vcmp.ne.s16.totalorder %v3120, 0
        %vm3137 = vcmp.ne.s16.totalorder %v3121, 0
        %vm3138 = vcmp.ne.s16.totalorder %v3122, 0
        %vm3139 = vcmp.ne.s16.totalorder %v3123, 0
        %vm3140 = vcmp.ne.s16.totalorder %v3124, 0
        %vm3141 = vcmp.ne.s16.totalorder %v3125, 0
        %vm3142 = vcmp.ne.s16.totalorder %v3126, 0
        %vm3143 = vcmp.ne.s16.totalorder %v3127, 0
        %vm3144 = vcmp.ne.s16.totalorder %v3128, 0
        %vm3145 = vcmp.ne.s16.totalorder %v3129, 0
        %v3146 = vsel %vm3130, %v2938, 0
        %v3147 = vsel %vm3131, %v2939, 0
        %v3148 = vsel %vm3132, %v2940, 0
        %v3149 = vsel %vm3133, %v2941, 0
        %v3150 = vsel %vm3134, %v2942, 0
        %v3151 = vsel %vm3135, %v2943, 0
        %v3152 = vsel %vm3136, %v2944, 0
        %v3153 = vsel %vm3137, %v2945, 0
        %v3154 = vsel %vm3138, %v2946, 0
        %v3155 = vsel %vm3139, %v2947, 0
        %v3156 = vsel %vm3140, %v2948, 0
        %v3157 = vsel %vm3141, %v2949, 0
        %v3158 = vsel %vm3142, %v2950, 0
        %v3159 = vsel %vm3143, %v2951, 0
        %v3160 = vsel %vm3144, %v2952, 0
        %v3161 = vsel %vm3145, %v2953, 0
        %v3162 = vld [vmem:[#allocation3 + $0x1] sm:$0xff]
        %v3163 = vld [vmem:[#allocation3 + $0x9] sm:$0xff]
        %v3164 = vld [vmem:[#allocation3 + $0x11] sm:$0xff]
        %v3165 = vld [vmem:[#allocation3 + $0x19] sm:$0xff]
        %v3166 = vld [vmem:[#allocation3 + $0x21] sm:$0xff]
        %v3167 = vld [vmem:[#allocation3 + $0x29] sm:$0xff]
        %v3168 = vld [vmem:[#allocation3 + $0x31] sm:$0xff]
        %v3169 = vld [vmem:[#allocation3 + $0x39] sm:$0xff]
        %v3170 = vld [vmem:[#allocation3 + $0x41] sm:$0xff]
        %v3171 = vld [vmem:[#allocation3 + $0x49] sm:$0xff]
        %v3172 = vld [vmem:[#allocation3 + $0x51] sm:$0xff]
        %v3173 = vld [vmem:[#allocation3 + $0x59] sm:$0xff]
        %v3174 = vld [vmem:[#allocation3 + $0x61] sm:$0xff]
        %v3175 = vld [vmem:[#allocation3 + $0x69] sm:$0xff]
        %v3176 = vld [vmem:[#allocation3 + $0x71] sm:$0xff]
        %v3177 = vld [vmem:[#allocation3 + $0x79] sm:$0xff]
        %v3178 = vld [vmem:[#allocation3 + $0x81] sm:$0xff]
        %v3179 = vld [vmem:[#allocation3 + $0x89] sm:$0xff]
        %v3180 = vld [vmem:[#allocation3 + $0x91] sm:$0xff]
        %v3181 = vld [vmem:[#allocation3 + $0x99] sm:$0xff]
        %v3182 = vld [vmem:[#allocation3 + $0xa1] sm:$0xff]
        %v3183 = vld [vmem:[#allocation3 + $0xa9] sm:$0xff]
        %v3184 = vld [vmem:[#allocation3 + $0xb1] sm:$0xff]
        %v3185 = vld [vmem:[#allocation3 + $0xb9] sm:$0xff]
        %v3186 = vld [vmem:[#allocation3 + $0xc1] sm:$0xff]
        %v3187 = vld [vmem:[#allocation3 + $0xc9] sm:$0xff]
        %v3188 = vld [vmem:[#allocation3 + $0xd1] sm:$0xff]
        %v3189 = vld [vmem:[#allocation3 + $0xd9] sm:$0xff]
        %v3190 = vld [vmem:[#allocation3 + $0xe1] sm:$0xff]
        %v3191 = vld [vmem:[#allocation3 + $0xe9] sm:$0xff]
        %v3192 = vld [vmem:[#allocation3 + $0xf1] sm:$0xff]
        %v3193 = vld [vmem:[#allocation3 + $0xf9] sm:$0xff]
        %v3194 = vpack.c.bf16 %v3163, %v3162
        %v3195 = vpack.c.bf16 %v3165, %v3164
        %v3196 = vpack.c.bf16 %v3167, %v3166
        %v3197 = vpack.c.bf16 %v3169, %v3168
        %v3198 = vpack.c.bf16 %v3171, %v3170
        %v3199 = vpack.c.bf16 %v3173, %v3172
        %v3200 = vpack.c.bf16 %v3175, %v3174
        %v3201 = vpack.c.bf16 %v3177, %v3176
        %v3202 = vpack.c.bf16 %v3179, %v3178
        %v3203 = vpack.c.bf16 %v3181, %v3180
        %v3204 = vpack.c.bf16 %v3183, %v3182
        %v3205 = vpack.c.bf16 %v3185, %v3184
        %v3206 = vpack.c.bf16 %v3187, %v3186
        %v3207 = vpack.c.bf16 %v3189, %v3188
        %v3208 = vpack.c.bf16 %v3191, %v3190
        %v3209 = vpack.c.bf16 %v3193, %v3192
        %v3210 = vld [vmem:[#allocation3 + $0x2] sm:$0xff]
        %v3211 = vld [vmem:[#allocation3 + $0xa] sm:$0xff]
        %v3212 = vld [vmem:[#allocation3 + $0x12] sm:$0xff]
        %v3213 = vld [vmem:[#allocation3 + $0x1a] sm:$0xff]
        %v3214 = vld [vmem:[#allocation3 + $0x22] sm:$0xff]
        %v3215 = vld [vmem:[#allocation3 + $0x2a] sm:$0xff]
        %v3216 = vld [vmem:[#allocation3 + $0x32] sm:$0xff]
        %v3217 = vld [vmem:[#allocation3 + $0x3a] sm:$0xff]
        %v3218 = vld [vmem:[#allocation3 + $0x42] sm:$0xff]
        %v3219 = vld [vmem:[#allocation3 + $0x4a] sm:$0xff]
        %v3220 = vld [vmem:[#allocation3 + $0x52] sm:$0xff]
        %v3221 = vld [vmem:[#allocation3 + $0x5a] sm:$0xff]
        %v3222 = vld [vmem:[#allocation3 + $0x62] sm:$0xff]
        %v3223 = vld [vmem:[#allocation3 + $0x6a] sm:$0xff]
        %v3224 = vld [vmem:[#allocation3 + $0x72] sm:$0xff]
        %v3225 = vld [vmem:[#allocation3 + $0x7a] sm:$0xff]
        %v3226 = vld [vmem:[#allocation3 + $0x82] sm:$0xff]
        %v3227 = vld [vmem:[#allocation3 + $0x8a] sm:$0xff]
        %v3228 = vld [vmem:[#allocation3 + $0x92] sm:$0xff]
        %v3229 = vld [vmem:[#allocation3 + $0x9a] sm:$0xff]
        %v3230 = vld [vmem:[#allocation3 + $0xa2] sm:$0xff]
        %v3231 = vld [vmem:[#allocation3 + $0xaa] sm:$0xff]
        %v3232 = vld [vmem:[#allocation3 + $0xb2] sm:$0xff]
        %v3233 = vld [vmem:[#allocation3 + $0xba] sm:$0xff]
        %v3234 = vld [vmem:[#allocation3 + $0xc2] sm:$0xff]
        %v3235 = vld [vmem:[#allocation3 + $0xca] sm:$0xff]
        %v3236 = vld [vmem:[#allocation3 + $0xd2] sm:$0xff]
        %v3237 = vld [vmem:[#allocation3 + $0xda] sm:$0xff]
        %v3238 = vld [vmem:[#allocation3 + $0xe2] sm:$0xff]
        %v3239 = vld [vmem:[#allocation3 + $0xea] sm:$0xff]
        %v3240 = vld [vmem:[#allocation3 + $0xf2] sm:$0xff]
        %v3241 = vld [vmem:[#allocation3 + $0xfa] sm:$0xff]
        %v3242 = vpack.c.bf16 %v3211, %v3210
        %v3243 = vpack.c.bf16 %v3213, %v3212
        %v3244 = vpack.c.bf16 %v3215, %v3214
        %v3245 = vpack.c.bf16 %v3217, %v3216
        %v3246 = vpack.c.bf16 %v3219, %v3218
        %v3247 = vpack.c.bf16 %v3221, %v3220
        %v3248 = vpack.c.bf16 %v3223, %v3222
        %v3249 = vpack.c.bf16 %v3225, %v3224
        %v3250 = vpack.c.bf16 %v3227, %v3226
        %v3251 = vpack.c.bf16 %v3229, %v3228
        %v3252 = vpack.c.bf16 %v3231, %v3230
        %v3253 = vpack.c.bf16 %v3233, %v3232
        %v3254 = vpack.c.bf16 %v3235, %v3234
        %v3255 = vpack.c.bf16 %v3237, %v3236
        %v3256 = vpack.c.bf16 %v3239, %v3238
        %v3257 = vpack.c.bf16 %v3241, %v3240
        %v3258 = vsel %vm2874, 1, 0
        %v3259 = vsel %vm2875, 1, 0
        %v3260 = vsel %vm2876, 1, 0
        %v3261 = vsel %vm2877, 1, 0
        %v3262 = vsel %vm2878, 1, 0
        %v3263 = vsel %vm2879, 1, 0
        %v3264 = vsel %vm2880, 1, 0
        %v3265 = vsel %vm2881, 1, 0
        %v3266 = vsel %vm2882, 1, 0
        %v3267 = vsel %vm2883, 1, 0
        %v3268 = vsel %vm2884, 1, 0
        %v3269 = vsel %vm2885, 1, 0
        %v3270 = vsel %vm2886, 1, 0
        %v3271 = vsel %vm2887, 1, 0
        %v3272 = vsel %vm2888, 1, 0
        %v3273 = vsel %vm2889, 1, 0
        %v3274 = vsel %vm2890, 1, 0
        %v3275 = vsel %vm2891, 1, 0
        %v3276 = vsel %vm2892, 1, 0
        %v3277 = vsel %vm2893, 1, 0
        %v3278 = vsel %vm2894, 1, 0
        %v3279 = vsel %vm2895, 1, 0
        %v3280 = vsel %vm2896, 1, 0
        %v3281 = vsel %vm2897, 1, 0
        %v3282 = vsel %vm2898, 1, 0
        %v3283 = vsel %vm2899, 1, 0
        %v3284 = vsel %vm2900, 1, 0
        %v3285 = vsel %vm2901, 1, 0
        %v3286 = vsel %vm2902, 1, 0
        %v3287 = vsel %vm2903, 1, 0
        %v3288 = vsel %vm2904, 1, 0
        %v3289 = vsel %vm2905, 1, 0
        %vm3290 = vcmp.eq.s32.totalorder %v3258, 1
        %vm3291 = vcmp.eq.s32.totalorder %v3259, 1
        %vm3292 = vcmp.eq.s32.totalorder %v3260, 1
        %vm3293 = vcmp.eq.s32.totalorder %v3261, 1
        %vm3294 = vcmp.eq.s32.totalorder %v3262, 1
        %vm3295 = vcmp.eq.s32.totalorder %v3263, 1
        %vm3296 = vcmp.eq.s32.totalorder %v3264, 1
        %vm3297 = vcmp.eq.s32.totalorder %v3265, 1
        %vm3298 = vcmp.eq.s32.totalorder %v3266, 1
        %vm3299 = vcmp.eq.s32.totalorder %v3267, 1
        %vm3300 = vcmp.eq.s32.totalorder %v3268, 1
        %vm3301 = vcmp.eq.s32.totalorder %v3269, 1
        %vm3302 = vcmp.eq.s32.totalorder %v3270, 1
        %vm3303 = vcmp.eq.s32.totalorder %v3271, 1
        %vm3304 = vcmp.eq.s32.totalorder %v3272, 1
        %vm3305 = vcmp.eq.s32.totalorder %v3273, 1
        %vm3306 = vcmp.eq.s32.totalorder %v3274, 1
        %vm3307 = vcmp.eq.s32.totalorder %v3275, 1
        %vm3308 = vcmp.eq.s32.totalorder %v3276, 1
        %vm3309 = vcmp.eq.s32.totalorder %v3277, 1
        %vm3310 = vcmp.eq.s32.totalorder %v3278, 1
        %vm3311 = vcmp.eq.s32.totalorder %v3279, 1
        %vm3312 = vcmp.eq.s32.totalorder %v3280, 1
        %vm3313 = vcmp.eq.s32.totalorder %v3281, 1
        %vm3314 = vcmp.eq.s32.totalorder %v3282, 1
        %vm3315 = vcmp.eq.s32.totalorder %v3283, 1
        %vm3316 = vcmp.eq.s32.totalorder %v3284, 1
        %vm3317 = vcmp.eq.s32.totalorder %v3285, 1
        %vm3318 = vcmp.eq.s32.totalorder %v3286, 1
        %vm3319 = vcmp.eq.s32.totalorder %v3287, 1
        %vm3320 = vcmp.eq.s32.totalorder %v3288, 1
        %vm3321 = vcmp.eq.s32.totalorder %v3289, 1
        %vm3322 = vmpackc.low %vm3290, %vm3290
        %vm3323 = vmpackc.low %vm3291, %vm3291
        %vm3324 = vmpackc.low %vm3292, %vm3292
        %vm3325 = vmpackc.low %vm3293, %vm3293
        %vm3326 = vmpackc.low %vm3294, %vm3294
        %vm3327 = vmpackc.low %vm3295, %vm3295
        %vm3328 = vmpackc.low %vm3296, %vm3296
        %vm3329 = vmpackc.low %vm3297, %vm3297
        %vm3330 = vmpackc.low %vm3298, %vm3298
        %vm3331 = vmpackc.low %vm3299, %vm3299
        %vm3332 = vmpackc.low %vm3300, %vm3300
        %vm3333 = vmpackc.low %vm3301, %vm3301
        %vm3334 = vmpackc.low %vm3302, %vm3302
        %vm3335 = vmpackc.low %vm3303, %vm3303
        %vm3336 = vmpackc.low %vm3304, %vm3304
        %vm3337 = vmpackc.low %vm3305, %vm3305
        %vm3338 = vmpackc.low %vm3306, %vm3306
        %vm3339 = vmpackc.low %vm3307, %vm3307
        %vm3340 = vmpackc.low %vm3308, %vm3308
        %vm3341 = vmpackc.low %vm3309, %vm3309
        %vm3342 = vmpackc.low %vm3310, %vm3310
        %vm3343 = vmpackc.low %vm3311, %vm3311
        %vm3344 = vmpackc.low %vm3312, %vm3312
        %vm3345 = vmpackc.low %vm3313, %vm3313
        %vm3346 = vmpackc.low %vm3314, %vm3314
        %vm3347 = vmpackc.low %vm3315, %vm3315
        %vm3348 = vmpackc.low %vm3316, %vm3316
        %vm3349 = vmpackc.low %vm3317, %vm3317
        %vm3350 = vmpackc.low %vm3318, %vm3318
        %vm3351 = vmpackc.low %vm3319, %vm3319
        %vm3352 = vmpackc.low %vm3320, %vm3320
        %vm3353 = vmpackc.low %vm3321, %vm3321
        %v3354 = vsel %vm3322, 65537, 0
        %v3355 = vsel %vm3323, 65537, 0
        %v3356 = vsel %vm3324, 65537, 0
        %v3357 = vsel %vm3325, 65537, 0
        %v3358 = vsel %vm3326, 65537, 0
        %v3359 = vsel %vm3327, 65537, 0
        %v3360 = vsel %vm3328, 65537, 0
        %v3361 = vsel %vm3329, 65537, 0
        %v3362 = vsel %vm3330, 65537, 0
        %v3363 = vsel %vm3331, 65537, 0
        %v3364 = vsel %vm3332, 65537, 0
        %v3365 = vsel %vm3333, 65537, 0
        %v3366 = vsel %vm3334, 65537, 0
        %v3367 = vsel %vm3335, 65537, 0
        %v3368 = vsel %vm3336, 65537, 0
        %v3369 = vsel %vm3337, 65537, 0
        %v3370 = vsel %vm3338, 65537, 0
        %v3371 = vsel %vm3339, 65537, 0
        %v3372 = vsel %vm3340, 65537, 0
        %v3373 = vsel %vm3341, 65537, 0
        %v3374 = vsel %vm3342, 65537, 0
        %v3375 = vsel %vm3343, 65537, 0
        %v3376 = vsel %vm3344, 65537, 0
        %v3377 = vsel %vm3345, 65537, 0
        %v3378 = vsel %vm3346, 65537, 0
        %v3379 = vsel %vm3347, 65537, 0
        %v3380 = vsel %vm3348, 65537, 0
        %v3381 = vsel %vm3349, 65537, 0
        %v3382 = vsel %vm3350, 65537, 0
        %v3383 = vsel %vm3351, 65537, 0
        %v3384 = vsel %vm3352, 65537, 0
        %v3385 = vsel %vm3353, 65537, 0
        %v3386 = vunpack.c.l.b16 %v3354
        %v3387 = vunpack.c.l.b16 %v3355
        %v3388 = vunpack.c.l.b16 %v3356
        %v3389 = vunpack.c.l.b16 %v3357
        %v3390 = vunpack.c.l.b16 %v3358
        %v3391 = vunpack.c.l.b16 %v3359
        %v3392 = vunpack.c.l.b16 %v3360
        %v3393 = vunpack.c.l.b16 %v3361
        %v3394 = vunpack.c.l.b16 %v3362
        %v3395 = vunpack.c.l.b16 %v3363
        %v3396 = vunpack.c.l.b16 %v3364
        %v3397 = vunpack.c.l.b16 %v3365
        %v3398 = vunpack.c.l.b16 %v3366
        %v3399 = vunpack.c.l.b16 %v3367
        %v3400 = vunpack.c.l.b16 %v3368
        %v3401 = vunpack.c.l.b16 %v3369
        %v3402 = vunpack.c.l.b16 %v3370
        %v3403 = vunpack.c.l.b16 %v3371
        %v3404 = vunpack.c.l.b16 %v3372
        %v3405 = vunpack.c.l.b16 %v3373
        %v3406 = vunpack.c.l.b16 %v3374
        %v3407 = vunpack.c.l.b16 %v3375
        %v3408 = vunpack.c.l.b16 %v3376
        %v3409 = vunpack.c.l.b16 %v3377
        %v3410 = vunpack.c.l.b16 %v3378
        %v3411 = vunpack.c.l.b16 %v3379
        %v3412 = vunpack.c.l.b16 %v3380
        %v3413 = vunpack.c.l.b16 %v3381
        %v3414 = vunpack.c.l.b16 %v3382
        %v3415 = vunpack.c.l.b16 %v3383
        %v3416 = vunpack.c.l.b16 %v3384
        %v3417 = vunpack.c.l.b16 %v3385
        %v3418 = vpack.c.b16 %v3387, %v3386
        %v3419 = vpack.c.b16 %v3389, %v3388
        %v3420 = vpack.c.b16 %v3391, %v3390
        %v3421 = vpack.c.b16 %v3393, %v3392
        %v3422 = vpack.c.b16 %v3395, %v3394
        %v3423 = vpack.c.b16 %v3397, %v3396
        %v3424 = vpack.c.b16 %v3399, %v3398
        %v3425 = vpack.c.b16 %v3401, %v3400
        %v3426 = vpack.c.b16 %v3403, %v3402
        %v3427 = vpack.c.b16 %v3405, %v3404
        %v3428 = vpack.c.b16 %v3407, %v3406
        %v3429 = vpack.c.b16 %v3409, %v3408
        %v3430 = vpack.c.b16 %v3411, %v3410
        %v3431 = vpack.c.b16 %v3413, %v3412
        %v3432 = vpack.c.b16 %v3415, %v3414
        %v3433 = vpack.c.b16 %v3417, %v3416
        %vm3434 = vcmp.ne.s16.totalorder %v3418, 0
        %vm3435 = vcmp.ne.s16.totalorder %v3419, 0
        %vm3436 = vcmp.ne.s16.totalorder %v3420, 0
        %vm3437 = vcmp.ne.s16.totalorder %v3421, 0
        %vm3438 = vcmp.ne.s16.totalorder %v3422, 0
        %vm3439 = vcmp.ne.s16.totalorder %v3423, 0
        %vm3440 = vcmp.ne.s16.totalorder %v3424, 0
        %vm3441 = vcmp.ne.s16.totalorder %v3425, 0
        %vm3442 = vcmp.ne.s16.totalorder %v3426, 0
        %vm3443 = vcmp.ne.s16.totalorder %v3427, 0
        %vm3444 = vcmp.ne.s16.totalorder %v3428, 0
        %vm3445 = vcmp.ne.s16.totalorder %v3429, 0
        %vm3446 = vcmp.ne.s16.totalorder %v3430, 0
        %vm3447 = vcmp.ne.s16.totalorder %v3431, 0
        %vm3448 = vcmp.ne.s16.totalorder %v3432, 0
        %vm3449 = vcmp.ne.s16.totalorder %v3433, 0
        %v3450 = vsel %vm3434, %v3242, 0
        %v3451 = vsel %vm3435, %v3243, 0
        %v3452 = vsel %vm3436, %v3244, 0
        %v3453 = vsel %vm3437, %v3245, 0
        %v3454 = vsel %vm3438, %v3246, 0
        %v3455 = vsel %vm3439, %v3247, 0
        %v3456 = vsel %vm3440, %v3248, 0
        %v3457 = vsel %vm3441, %v3249, 0
        %v3458 = vsel %vm3442, %v3250, 0
        %v3459 = vsel %vm3443, %v3251, 0
        %v3460 = vsel %vm3444, %v3252, 0
        %v3461 = vsel %vm3445, %v3253, 0
        %v3462 = vsel %vm3446, %v3254, 0
        %v3463 = vsel %vm3447, %v3255, 0
        %v3464 = vsel %vm3448, %v3256, 0
        %v3465 = vsel %vm3449, %v3257, 0
        %v3466 = vld [vmem:[#allocation3 + $0x100] sm:$0xff]
        %v3467 = vld [vmem:[#allocation3 + $0x108] sm:$0xff]
        %v3468 = vpack.c.bf16 %v3467, %v3466
        %v3469 = vsel %vm3130, %v2939, 0
        %v3470 = vsel %vm3131, %v2940, 0
        %v3471 = vsel %vm3132, %v2941, 0
        %v3472 = vsel %vm3133, %v2942, 0
        %v3473 = vsel %vm3134, %v2943, 0
        %v3474 = vsel %vm3135, %v2944, 0
        %v3475 = vsel %vm3136, %v2945, 0
        %v3476 = vsel %vm3137, %v2946, 0
        %v3477 = vsel %vm3138, %v2947, 0
        %v3478 = vsel %vm3139, %v2948, 0
        %v3479 = vsel %vm3140, %v2949, 0
        %v3480 = vsel %vm3141, %v2950, 0
        %v3481 = vsel %vm3142, %v2951, 0
        %v3482 = vsel %vm3143, %v2952, 0
        %v3483 = vsel %vm3144, %v2953, 0
        %v3484 = vsel %vm3145, %v3468, 0
        %v3485 = vld [vmem:[#allocation3 + $0x101] sm:$0xff]
        %v3486 = vld [vmem:[#allocation3 + $0x109] sm:$0xff]
        %v3487 = vpack.c.bf16 %v3486, %v3485
        %v3488 = vld [vmem:[#allocation3 + $0x102] sm:$0xff]
        %v3489 = vld [vmem:[#allocation3 + $0x10a] sm:$0xff]
        %v3490 = vpack.c.bf16 %v3489, %v3488
        %v3491 = vsel %vm3434, %v3243, 0
        %v3492 = vsel %vm3435, %v3244, 0
        %v3493 = vsel %vm3436, %v3245, 0
        %v3494 = vsel %vm3437, %v3246, 0
        %v3495 = vsel %vm3438, %v3247, 0
        %v3496 = vsel %vm3439, %v3248, 0
        %v3497 = vsel %vm3440, %v3249, 0
        %v3498 = vsel %vm3441, %v3250, 0
        %v3499 = vsel %vm3442, %v3251, 0
        %v3500 = vsel %vm3443, %v3252, 0
        %v3501 = vsel %vm3444, %v3253, 0
        %v3502 = vsel %vm3445, %v3254, 0
        %v3503 = vsel %vm3446, %v3255, 0
        %v3504 = vsel %vm3447, %v3256, 0
        %v3505 = vsel %vm3448, %v3257, 0
        %v3506 = vsel %vm3449, %v3490, 0
        %v3507 = vld [vmem:[#allocation3 + $0x110] sm:$0xff]
        %v3508 = vld [vmem:[#allocation3 + $0x118] sm:$0xff]
        %v3509 = vpack.c.bf16 %v3508, %v3507
        %v3510 = vsel %vm3130, %v2940, 0
        %v3511 = vsel %vm3131, %v2941, 0
        %v3512 = vsel %vm3132, %v2942, 0
        %v3513 = vsel %vm3133, %v2943, 0
        %v3514 = vsel %vm3134, %v2944, 0
        %v3515 = vsel %vm3135, %v2945, 0
        %v3516 = vsel %vm3136, %v2946, 0
        %v3517 = vsel %vm3137, %v2947, 0
        %v3518 = vsel %vm3138, %v2948, 0
        %v3519 = vsel %vm3139, %v2949, 0
        %v3520 = vsel %vm3140, %v2950, 0
        %v3521 = vsel %vm3141, %v2951, 0
        %v3522 = vsel %vm3142, %v2952, 0
        %v3523 = vsel %vm3143, %v2953, 0
        %v3524 = vsel %vm3144, %v3468, 0
        %v3525 = vsel %vm3145, %v3509, 0
        %v3526 = vld [vmem:[#allocation3 + $0x111] sm:$0xff]
        %v3527 = vld [vmem:[#allocation3 + $0x119] sm:$0xff]
        %v3528 = vpack.c.bf16 %v3527, %v3526
        %v3529 = vld [vmem:[#allocation3 + $0x112] sm:$0xff]
        %v3530 = vld [vmem:[#allocation3 + $0x11a] sm:$0xff]
        %v3531 = vpack.c.bf16 %v3530, %v3529
        %v3532 = vsel %vm3434, %v3244, 0
        %v3533 = vsel %vm3435, %v3245, 0
        %v3534 = vsel %vm3436, %v3246, 0
        %v3535 = vsel %vm3437, %v3247, 0
        %v3536 = vsel %vm3438, %v3248, 0
        %v3537 = vsel %vm3439, %v3249, 0
        %v3538 = vsel %vm3440, %v3250, 0
        %v3539 = vsel %vm3441, %v3251, 0
        %v3540 = vsel %vm3442, %v3252, 0
        %v3541 = vsel %vm3443, %v3253, 0
        %v3542 = vsel %vm3444, %v3254, 0
        %v3543 = vsel %vm3445, %v3255, 0
        %v3544 = vsel %vm3446, %v3256, 0
        %v3545 = vsel %vm3447, %v3257, 0
        %v3546 = vsel %vm3448, %v3490, 0
        %v3547 = vsel %vm3449, %v3531, 0
        %3564 = vrot.lane.b32.xlu0 %v3194, 32
        %v3565 = vpop.permute.xlu0 %3564
        %3566 = vrot.lane.b32.xlu0 %v3195, 32
        %v3567 = vpop.permute.xlu0 %3566
        %3568 = vrot.lane.b32.xlu0 %v3196, 32
        %v3569 = vpop.permute.xlu0 %3568
        %3570 = vrot.lane.b32.xlu0 %v3197, 32
        %v3571 = vpop.permute.xlu0 %3570
        %3572 = vrot.lane.b32.xlu0 %v3198, 32
        %v3573 = vpop.permute.xlu0 %3572
        %3574 = vrot.lane.b32.xlu0 %v3199, 32
        %v3575 = vpop.permute.xlu0 %3574
        %3576 = vrot.lane.b32.xlu0 %v3200, 32
        %v3577 = vpop.permute.xlu0 %3576
        %3578 = vrot.lane.b32.xlu0 %v3201, 32
        %v3579 = vpop.permute.xlu0 %3578
        %3580 = vrot.lane.b32.xlu0 %v3202, 32
        %v3581 = vpop.permute.xlu0 %3580
        %3582 = vrot.lane.b32.xlu0 %v3203, 32
        %v3583 = vpop.permute.xlu0 %3582
        %3584 = vrot.lane.b32.xlu0 %v3204, 32
        %v3585 = vpop.permute.xlu0 %3584
        %3586 = vrot.lane.b32.xlu0 %v3205, 32
        %v3587 = vpop.permute.xlu0 %3586
        %3588 = vrot.lane.b32.xlu0 %v3206, 32
        %v3589 = vpop.permute.xlu0 %3588
        %3590 = vrot.lane.b32.xlu0 %v3207, 32
        %v3591 = vpop.permute.xlu0 %3590
        %3592 = vrot.lane.b32.xlu0 %v3208, 32
        %v3593 = vpop.permute.xlu0 %3592
        %3594 = vrot.lane.b32.xlu0 %v3209, 32
        %v3595 = vpop.permute.xlu0 %3594
        %3612 = vrot.lane.b32.xlu0 %v3450, 64
        %v3613 = vpop.permute.xlu0 %3612
        %3614 = vrot.lane.b32.xlu0 %v3451, 64
        %v3615 = vpop.permute.xlu0 %3614
        %3616 = vrot.lane.b32.xlu0 %v3452, 64
        %v3617 = vpop.permute.xlu0 %3616
        %3618 = vrot.lane.b32.xlu0 %v3453, 64
        %v3619 = vpop.permute.xlu0 %3618
        %3620 = vrot.lane.b32.xlu0 %v3454, 64
        %v3621 = vpop.permute.xlu0 %3620
        %3622 = vrot.lane.b32.xlu0 %v3455, 64
        %v3623 = vpop.permute.xlu0 %3622
        %3624 = vrot.lane.b32.xlu0 %v3456, 64
        %v3625 = vpop.permute.xlu0 %3624
        %3626 = vrot.lane.b32.xlu0 %v3457, 64
        %v3627 = vpop.permute.xlu0 %3626
        %3628 = vrot.lane.b32.xlu0 %v3458, 64
        %v3629 = vpop.permute.xlu0 %3628
        %3630 = vrot.lane.b32.xlu0 %v3459, 64
        %v3631 = vpop.permute.xlu0 %3630
        %3632 = vrot.lane.b32.xlu0 %v3460, 64
        %v3633 = vpop.permute.xlu0 %3632
        %3634 = vrot.lane.b32.xlu0 %v3461, 64
        %v3635 = vpop.permute.xlu0 %3634
        %3636 = vrot.lane.b32.xlu0 %v3462, 64
        %v3637 = vpop.permute.xlu0 %3636
        %3638 = vrot.lane.b32.xlu0 %v3463, 64
        %v3639 = vpop.permute.xlu0 %3638
        %3640 = vrot.lane.b32.xlu0 %v3464, 64
        %v3641 = vpop.permute.xlu0 %3640
        %3642 = vrot.lane.b32.xlu0 %v3465, 64
        %v3643 = vpop.permute.xlu0 %3642
        %3660 = vrot.lane.b32.xlu0 %v3469, 96
        %v3661 = vpop.permute.xlu0 %3660
        %3662 = vrot.lane.b32.xlu0 %v3470, 96
        %v3663 = vpop.permute.xlu0 %3662
        %3664 = vrot.lane.b32.xlu0 %v3471, 96
        %v3665 = vpop.permute.xlu0 %3664
        %3666 = vrot.lane.b32.xlu0 %v3472, 96
        %v3667 = vpop.permute.xlu0 %3666
        %3668 = vrot.lane.b32.xlu0 %v3473, 96
        %v3669 = vpop.permute.xlu0 %3668
        %3670 = vrot.lane.b32.xlu0 %v3474, 96
        %v3671 = vpop.permute.xlu0 %3670
        %3672 = vrot.lane.b32.xlu0 %v3475, 96
        %v3673 = vpop.permute.xlu0 %3672
        %3674 = vrot.lane.b32.xlu0 %v3476, 96
        %v3675 = vpop.permute.xlu0 %3674
        %3676 = vrot.lane.b32.xlu0 %v3477, 96
        %v3677 = vpop.permute.xlu0 %3676
        %3678 = vrot.lane.b32.xlu0 %v3478, 96
        %v3679 = vpop.permute.xlu0 %3678
        %3680 = vrot.lane.b32.xlu0 %v3479, 96
        %v3681 = vpop.permute.xlu0 %3680
        %3682 = vrot.lane.b32.xlu0 %v3480, 96
        %v3683 = vpop.permute.xlu0 %3682
        %3684 = vrot.lane.b32.xlu0 %v3481, 96
        %v3685 = vpop.permute.xlu0 %3684
        %3686 = vrot.lane.b32.xlu0 %v3482, 96
        %v3687 = vpop.permute.xlu0 %3686
        %3688 = vrot.lane.b32.xlu0 %v3483, 96
        %v3689 = vpop.permute.xlu0 %3688
        %3690 = vrot.lane.b32.xlu0 %v3484, 96
        %v3691 = vpop.permute.xlu0 %3690
        %3708 = vrot.lane.b32.xlu0 %v3491, 32
        %v3709 = vpop.permute.xlu0 %3708
        %3710 = vrot.lane.b32.xlu0 %v3492, 32
        %v3711 = vpop.permute.xlu0 %3710
        %3712 = vrot.lane.b32.xlu0 %v3493, 32
        %v3713 = vpop.permute.xlu0 %3712
        %3714 = vrot.lane.b32.xlu0 %v3494, 32
        %v3715 = vpop.permute.xlu0 %3714
        %3716 = vrot.lane.b32.xlu0 %v3495, 32
        %v3717 = vpop.permute.xlu0 %3716
        %3718 = vrot.lane.b32.xlu0 %v3496, 32
        %v3719 = vpop.permute.xlu0 %3718
        %3720 = vrot.lane.b32.xlu0 %v3497, 32
        %v3721 = vpop.permute.xlu0 %3720
        %3722 = vrot.lane.b32.xlu0 %v3498, 32
        %v3723 = vpop.permute.xlu0 %3722
        %3724 = vrot.lane.b32.xlu0 %v3499, 32
        %v3725 = vpop.permute.xlu0 %3724
        %3726 = vrot.lane.b32.xlu0 %v3500, 32
        %v3727 = vpop.permute.xlu0 %3726
        %3728 = vrot.lane.b32.xlu0 %v3501, 32
        %v3729 = vpop.permute.xlu0 %3728
        %3730 = vrot.lane.b32.xlu0 %v3502, 32
        %v3731 = vpop.permute.xlu0 %3730
        %3732 = vrot.lane.b32.xlu0 %v3503, 32
        %v3733 = vpop.permute.xlu0 %3732
        %3734 = vrot.lane.b32.xlu0 %v3504, 32
        %v3735 = vpop.permute.xlu0 %3734
        %3736 = vrot.lane.b32.xlu0 %v3505, 32
        %v3737 = vpop.permute.xlu0 %3736
        %3738 = vrot.lane.b32.xlu0 %v3506, 32
        %v3739 = vpop.permute.xlu0 %3738
        %3756 = vrot.lane.b32.xlu0 %v3510, 64
        %v3757 = vpop.permute.xlu0 %3756
        %3758 = vrot.lane.b32.xlu0 %v3511, 64
        %v3759 = vpop.permute.xlu0 %3758
        %3760 = vrot.lane.b32.xlu0 %v3512, 64
        %v3761 = vpop.permute.xlu0 %3760
        %3762 = vrot.lane.b32.xlu0 %v3513, 64
        %v3763 = vpop.permute.xlu0 %3762
        %3764 = vrot.lane.b32.xlu0 %v3514, 64
        %v3765 = vpop.permute.xlu0 %3764
        %3766 = vrot.lane.b32.xlu0 %v3515, 64
        %v3767 = vpop.permute.xlu0 %3766
        %3768 = vrot.lane.b32.xlu0 %v3516, 64
        %v3769 = vpop.permute.xlu0 %3768
        %3770 = vrot.lane.b32.xlu0 %v3517, 64
        %v3771 = vpop.permute.xlu0 %3770
        %3772 = vrot.lane.b32.xlu0 %v3518, 64
        %v3773 = vpop.permute.xlu0 %3772
        %3774 = vrot.lane.b32.xlu0 %v3519, 64
        %v3775 = vpop.permute.xlu0 %3774
        %3776 = vrot.lane.b32.xlu0 %v3520, 64
        %v3777 = vpop.permute.xlu0 %3776
        %3778 = vrot.lane.b32.xlu0 %v3521, 64
        %v3779 = vpop.permute.xlu0 %3778
        %3780 = vrot.lane.b32.xlu0 %v3522, 64
        %v3781 = vpop.permute.xlu0 %3780
        %3782 = vrot.lane.b32.xlu0 %v3523, 64
        %v3783 = vpop.permute.xlu0 %3782
        %3784 = vrot.lane.b32.xlu0 %v3524, 64
        %v3785 = vpop.permute.xlu0 %3784
        %3786 = vrot.lane.b32.xlu0 %v3525, 64
        %v3787 = vpop.permute.xlu0 %3786
        %3790 = vrot.lane.b32.xlu0 %v3196, 96
        %v3791 = vpop.permute.xlu0 %3790
        %3792 = vrot.lane.b32.xlu0 %v3197, 96
        %v3793 = vpop.permute.xlu0 %3792
        %3794 = vrot.lane.b32.xlu0 %v3198, 96
        %v3795 = vpop.permute.xlu0 %3794
        %3796 = vrot.lane.b32.xlu0 %v3199, 96
        %v3797 = vpop.permute.xlu0 %3796
        %3798 = vrot.lane.b32.xlu0 %v3200, 96
        %v3799 = vpop.permute.xlu0 %3798
        %3800 = vrot.lane.b32.xlu0 %v3201, 96
        %v3801 = vpop.permute.xlu0 %3800
        %3802 = vrot.lane.b32.xlu0 %v3202, 96
        %v3803 = vpop.permute.xlu0 %3802
        %3804 = vrot.lane.b32.xlu0 %v3203, 96
        %v3805 = vpop.permute.xlu0 %3804
        %3806 = vrot.lane.b32.xlu0 %v3204, 96
        %v3807 = vpop.permute.xlu0 %3806
        %3808 = vrot.lane.b32.xlu0 %v3205, 96
        %v3809 = vpop.permute.xlu0 %3808
        %3810 = vrot.lane.b32.xlu0 %v3206, 96
        %v3811 = vpop.permute.xlu0 %3810
        %3812 = vrot.lane.b32.xlu0 %v3207, 96
        %v3813 = vpop.permute.xlu0 %3812
        %3814 = vrot.lane.b32.xlu0 %v3208, 96
        %v3815 = vpop.permute.xlu0 %3814
        %3816 = vrot.lane.b32.xlu0 %v3209, 96
        %v3817 = vpop.permute.xlu0 %3816
        %3818 = vrot.lane.b32.xlu0 %v3487, 96
        %v3819 = vpop.permute.xlu0 %3818
        %3820 = vrot.lane.b32.xlu0 %v3528, 96
        %v3821 = vpop.permute.xlu0 %3820
        %v3824 = vsel %vm1875, %v3146, %v3565
        %v3827 = vsel %vm1875, %v3147, %v3567
        %v3830 = vsel %vm1875, %v3148, %v3569
        %v3833 = vsel %vm1875, %v3149, %v3571
        %v3836 = vsel %vm1875, %v3150, %v3573
        %v3839 = vsel %vm1875, %v3151, %v3575
        %v3842 = vsel %vm1875, %v3152, %v3577
        %v3845 = vsel %vm1875, %v3153, %v3579
        %v3848 = vsel %vm1875, %v3154, %v3581
        %v3851 = vsel %vm1875, %v3155, %v3583
        %v3854 = vsel %vm1875, %v3156, %v3585
        %v3857 = vsel %vm1875, %v3157, %v3587
        %v3860 = vsel %vm1875, %v3158, %v3589
        %v3863 = vsel %vm1875, %v3159, %v3591
        %v3866 = vsel %vm1875, %v3160, %v3593
        %v3869 = vsel %vm1875, %v3161, %v3595
        %vm3870 = vcmask 523264
        %v3872 = vsel %vm3870, %v3824, %v3613
        %v3874 = vsel %vm3870, %v3827, %v3615
        %v3876 = vsel %vm3870, %v3830, %v3617
        %v3878 = vsel %vm3870, %v3833, %v3619
        %v3880 = vsel %vm3870, %v3836, %v3621
        %v3882 = vsel %vm3870, %v3839, %v3623
        %v3884 = vsel %vm3870, %v3842, %v3625
        %v3886 = vsel %vm3870, %v3845, %v3627
        %v3888 = vsel %vm3870, %v3848, %v3629
        %v3890 = vsel %vm3870, %v3851, %v3631
        %v3892 = vsel %vm3870, %v3854, %v3633
        %v3894 = vsel %vm3870, %v3857, %v3635
        %v3896 = vsel %vm3870, %v3860, %v3637
        %v3898 = vsel %vm3870, %v3863, %v3639
        %v3900 = vsel %vm3870, %v3866, %v3641
        %v3902 = vsel %vm3870, %v3869, %v3643
        %vm3903 = vcmask 785408
        %v3905 = vsel %vm3903, %v3872, %v3661
        %v3908 = vsel %vm3903, %v3874, %v3663
        %v3911 = vsel %vm3903, %v3876, %v3665
        %v3914 = vsel %vm3903, %v3878, %v3667
        %v3917 = vsel %vm3903, %v3880, %v3669
        %v3920 = vsel %vm3903, %v3882, %v3671
        %v3923 = vsel %vm3903, %v3884, %v3673
        %v3926 = vsel %vm3903, %v3886, %v3675
        %v3929 = vsel %vm3903, %v3888, %v3677
        %v3932 = vsel %vm3903, %v3890, %v3679
        %v3935 = vsel %vm3903, %v3892, %v3681
        %v3938 = vsel %vm3903, %v3894, %v3683
        %v3941 = vsel %vm3903, %v3896, %v3685
        %v3944 = vsel %vm3903, %v3898, %v3687
        %v3947 = vsel %vm3903, %v3900, %v3689
        %v3950 = vsel %vm3903, %v3902, %v3691
        %v3954 = vsel %vm1875, %v3195, %v3709
        %v3957 = vsel %vm1875, %v3196, %v3711
        %v3960 = vsel %vm1875, %v3197, %v3713
        %v3963 = vsel %vm1875, %v3198, %v3715
        %v3966 = vsel %vm1875, %v3199, %v3717
        %v3969 = vsel %vm1875, %v3200, %v3719
        %v3972 = vsel %vm1875, %v3201, %v3721
        %v3975 = vsel %vm1875, %v3202, %v3723
        %v3978 = vsel %vm1875, %v3203, %v3725
        %v3981 = vsel %vm1875, %v3204, %v3727
        %v3984 = vsel %vm1875, %v3205, %v3729
        %v3987 = vsel %vm1875, %v3206, %v3731
        %v3990 = vsel %vm1875, %v3207, %v3733
        %v3993 = vsel %vm1875, %v3208, %v3735
        %v3996 = vsel %vm1875, %v3209, %v3737
        %v3999 = vsel %vm1875, %v3487, %v3739
        %v4001 = vsel %vm3870, %v3954, %v3757
        %v4003 = vsel %vm3870, %v3957, %v3759
        %v4005 = vsel %vm3870, %v3960, %v3761
        %v4007 = vsel %vm3870, %v3963, %v3763
        %v4009 = vsel %vm3870, %v3966, %v3765
        %v4011 = vsel %vm3870, %v3969, %v3767
        %v4013 = vsel %vm3870, %v3972, %v3769
        %v4015 = vsel %vm3870, %v3975, %v3771
        %v4017 = vsel %vm3870, %v3978, %v3773
        %v4019 = vsel %vm3870, %v3981, %v3775
        %v4021 = vsel %vm3870, %v3984, %v3777
        %v4023 = vsel %vm3870, %v3987, %v3779
        %v4025 = vsel %vm3870, %v3990, %v3781
        %v4027 = vsel %vm3870, %v3993, %v3783
        %v4029 = vsel %vm3870, %v3996, %v3785
        %v4031 = vsel %vm3870, %v3999, %v3787
        %v4033 = vsel %vm3903, %v4001, %v3791
        %v4036 = vsel %vm3903, %v4003, %v3793
        %v4039 = vsel %vm3903, %v4005, %v3795
        %v4042 = vsel %vm3903, %v4007, %v3797
        %v4045 = vsel %vm3903, %v4009, %v3799
        %v4048 = vsel %vm3903, %v4011, %v3801
        %v4051 = vsel %vm3903, %v4013, %v3803
        %v4054 = vsel %vm3903, %v4015, %v3805
        %v4057 = vsel %vm3903, %v4017, %v3807
        %v4060 = vsel %vm3903, %v4019, %v3809
        %v4063 = vsel %vm3903, %v4021, %v3811
        %v4066 = vsel %vm3903, %v4023, %v3813
        %v4069 = vsel %vm3903, %v4025, %v3815
        %v4072 = vsel %vm3903, %v4027, %v3817
        %v4075 = vsel %vm3903, %v4029, %v3819
        %v4078 = vsel %vm3903, %v4031, %v3821
        %v4080 = vld [vmem:[%s3] sm:$0xf]
        %v4081 = vld [vmem:[%s3 + $0x4] sm:$0xf]
        %v4082 = vld [vmem:[%s3 + $0x8] sm:$0xf]
        %v4083 = vld [vmem:[%s3 + $0xc] sm:$0xf]
        %v4084 = vld [vmem:[%s3 + $0x10] sm:$0xf]
        %v4085 = vld [vmem:[%s3 + $0x14] sm:$0xf]
        %v4086 = vld [vmem:[%s3 + $0x18] sm:$0xf]
        %v4087 = vld [vmem:[%s3 + $0x1c] sm:$0xf]
        %v4088 = vld [vmem:[%s3 + $0x20] sm:$0xf]
        %v4089 = vld [vmem:[%s3 + $0x24] sm:$0xf]
        %v4090 = vld [vmem:[%s3 + $0x28] sm:$0xf]
        %v4091 = vld [vmem:[%s3 + $0x2c] sm:$0xf]
        %v4092 = vld [vmem:[%s3 + $0x30] sm:$0xf]
        %v4093 = vld [vmem:[%s3 + $0x34] sm:$0xf]
        %v4094 = vld [vmem:[%s3 + $0x38] sm:$0xf]
        %v4095 = vld [vmem:[%s3 + $0x3c] sm:$0xf]
        %v4096 = vld [vmem:[%s3 + $0x40] sm:$0xf]
        %v4097 = vld [vmem:[%s3 + $0x44] sm:$0xf]
        %v4098 = vld [vmem:[%s3 + $0x48] sm:$0xf]
        %v4099 = vld [vmem:[%s3 + $0x4c] sm:$0xf]
        %v4100 = vld [vmem:[%s3 + $0x50] sm:$0xf]
        %v4101 = vld [vmem:[%s3 + $0x54] sm:$0xf]
        %v4102 = vld [vmem:[%s3 + $0x58] sm:$0xf]
        %v4103 = vld [vmem:[%s3 + $0x5c] sm:$0xf]
        %v4104 = vld [vmem:[%s3 + $0x60] sm:$0xf]
        %v4105 = vld [vmem:[%s3 + $0x64] sm:$0xf]
        %v4106 = vld [vmem:[%s3 + $0x68] sm:$0xf]
        %v4107 = vld [vmem:[%s3 + $0x6c] sm:$0xf]
        %v4108 = vld [vmem:[%s3 + $0x70] sm:$0xf]
        %v4109 = vld [vmem:[%s3 + $0x74] sm:$0xf]
        %v4110 = vld [vmem:[%s3 + $0x78] sm:$0xf]
        %v4111 = vld [vmem:[%s3 + $0x7c] sm:$0xf]
        %v4112 = vld [vmem:[%s3 + $0x80] sm:$0xf]
        %v4113 = vld [vmem:[%s3 + $0x84] sm:$0xf]
        %v4114 = vld [vmem:[%s3 + $0x88] sm:$0xf]
        %v4115 = vld [vmem:[%s3 + $0x8c] sm:$0xf]
        %v4116 = vld [vmem:[%s4] sm:$0x1]
        %v4118 = vlaneseq
        %v4119 = vshrl.u32 %v4118, 7
        %v4120 = vsub.s32 0, %v4119
        %v4121 = vrot.slane %v4116, %v4120
        %v4159 = vunpack.c.l.b16 %v4080
        %v4160 = vunpack.c.l.b16 %v4081
        %v4161 = vunpack.c.l.b16 %v4082
        %v4162 = vunpack.c.l.b16 %v4083
        %v4163 = vunpack.c.l.b16 %v4084
        %v4164 = vunpack.c.l.b16 %v4085
        %v4165 = vunpack.c.l.b16 %v4086
        %v4166 = vunpack.c.l.b16 %v4087
        %v4167 = vunpack.c.l.b16 %v4088
        %v4168 = vunpack.c.l.b16 %v4089
        %v4169 = vunpack.c.l.b16 %v4090
        %v4170 = vunpack.c.l.b16 %v4091
        %v4171 = vunpack.c.l.b16 %v4092
        %v4172 = vunpack.c.l.b16 %v4093
        %v4173 = vunpack.c.l.b16 %v4094
        %v4174 = vunpack.c.l.b16 %v4095
        %v4175 = vunpack.c.l.b16 %v4096
        %v4176 = vunpack.c.l.b16 %v4097
        %v4177 = vunpack.c.l.b16 %v4098
        %v4178 = vunpack.c.l.b16 %v4099
        %v4179 = vunpack.c.l.b16 %v4100
        %v4180 = vunpack.c.l.b16 %v4101
        %v4181 = vunpack.c.l.b16 %v4102
        %v4182 = vunpack.c.l.b16 %v4103
        %v4183 = vunpack.c.l.b16 %v4104
        %v4184 = vunpack.c.l.b16 %v4105
        %v4185 = vunpack.c.l.b16 %v4106
        %v4186 = vunpack.c.l.b16 %v4107
        %v4187 = vunpack.c.l.b16 %v4108
        %v4188 = vunpack.c.l.b16 %v4109
        %v4189 = vunpack.c.l.b16 %v4110
        %v4190 = vunpack.c.l.b16 %v4111
        %v4191 = vunpack.c.l.b16 %v4112
        %v4192 = vunpack.c.l.b16 %v4113
        %v4193 = vunpack.c.l.b16 %v4114
        %v4194 = vunpack.c.l.b16 %v4115
        %v4195 = vpack.c.b16 %v4160, %v4159
        %v4196 = vpack.c.b16 %v4162, %v4161
        %v4197 = vpack.c.b16 %v4164, %v4163
        %v4198 = vpack.c.b16 %v4166, %v4165
        %v4199 = vpack.c.b16 %v4168, %v4167
        %v4200 = vpack.c.b16 %v4170, %v4169
        %v4201 = vpack.c.b16 %v4172, %v4171
        %v4202 = vpack.c.b16 %v4174, %v4173
        %v4203 = vpack.c.b16 %v4176, %v4175
        %v4204 = vpack.c.b16 %v4178, %v4177
        %v4205 = vpack.c.b16 %v4180, %v4179
        %v4206 = vpack.c.b16 %v4182, %v4181
        %v4207 = vpack.c.b16 %v4184, %v4183
        %v4208 = vpack.c.b16 %v4186, %v4185
        %v4209 = vpack.c.b16 %v4188, %v4187
        %v4210 = vpack.c.b16 %v4190, %v4189
        %v4211 = vpack.c.b16 %v4192, %v4191
        %v4212 = vpack.c.b16 %v4194, %v4193
        %v4232 = vsel %vm1875, %v3532, 0
        %v4235 = vsel %vm1875, %v3533, 0
        %v4238 = vsel %vm1875, %v3534, 0
        %v4241 = vsel %vm1875, %v3535, 0
        %v4244 = vsel %vm1875, %v3536, 0
        %v4247 = vsel %vm1875, %v3537, 0
        %v4250 = vsel %vm1875, %v3538, 0
        %v4253 = vsel %vm1875, %v3539, 0
        %v4256 = vsel %vm1875, %v3540, 0
        %v4259 = vsel %vm1875, %v3541, 0
        %v4262 = vsel %vm1875, %v3542, 0
        %v4265 = vsel %vm1875, %v3543, 0
        %v4268 = vsel %vm1875, %v3544, 0
        %v4271 = vsel %vm1875, %v3545, 0
        %v4274 = vsel %vm1875, %v3546, 0
        %v4277 = vsel %vm1875, %v3547, 0
        %4279 = vmatprep.subr.bf16.mxu0 0
        %4280 = vmatpush1.bf16.msra.mxu0 %v4195
        %4281 = vmatprep.subr.bf16.mxu0 0
        %4282 = vmatpush1.bf16.msra.mxu0 %v4196
        %4283 = vmatprep.subr.bf16.mxu0 0
        %4284 = vmatpush1.bf16.msra.mxu0 %v4197
        %4285 = vmatprep.subr.bf16.mxu0 0
        %4286 = vmatpush1.bf16.msra.mxu0 %v4198
        %4287 = vmatprep.subr.bf16.mxu0 0
        %4288 = vmatpush1.bf16.msra.mxu0 %v4199
        %4289 = vmatprep.subr.bf16.mxu0 0
        %4290 = vmatpush1.bf16.msra.mxu0 %v4200
        %4291 = vmatprep.subr.bf16.mxu0 0
        %4292 = vmatpush1.bf16.msra.mxu0 %v4201
        %4293 = vmatprep.subr.bf16.mxu0 0
        %4294 = vmatpush1.bf16.msra.mxu0 %v4202
        %4295 = vmatprep.subr.bf16.mxu0 0
        %4296 = vmatpush1.bf16.msra.mxu0 %v4203
        %4297 = vmatprep.subr.bf16.mxu0 0
        %4298 = vmatpush1.bf16.msra.mxu0 %v4204
        %4299 = vmatprep.subr.bf16.mxu0 0
        %4300 = vmatpush1.bf16.msra.mxu0 %v4205
        %4301 = vmatprep.subr.bf16.mxu0 0
        %4302 = vmatpush1.bf16.msra.mxu0 %v4206
        %4303 = vmatprep.subr.bf16.mxu0 0
        %4304 = vmatpush1.bf16.msra.mxu0 %v4207
        %4305 = vmatprep.subr.bf16.mxu0 0
        %4306 = vmatpush1.bf16.msra.mxu0 %v4208
        %4307 = vmatprep.subr.bf16.mxu0 0
        %4308 = vmatpush1.bf16.msra.mxu0 %v4209
        %4309 = vmatprep.subr.bf16.mxu0 0
        %4310 = vmatpush1.bf16.msra.mxu0 %v4210
        %4311 = vmatprep.mubr.bf16.mxu0 %v4033
        %4312 = vmatmul.mubr.bf16.gmra.mrb[0].mxu0 %v3905
        %v4313 = vpop.f32.mrb[0].mxu0
        %v4314 = vadd.f32 %v4121, %v4313
        %v4315 = vpop.f32.mrb[0].mxu0
        %v4316 = vpop.f32.mrb[0].mxu0
        %v4317 = vadd.f32 %v4121, %v4316
        %v4318 = vpop.f32.mrb[0].mxu0
        %4319 = vmatprep.mubr.bf16.mxu0 %v4036
        %4320 = vmatmul.mubr.bf16.gmra.mrb[0].mxu0 %v3908
        %v4321 = vpop.f32.mrb[0].mxu0
        %v4322 = vadd.f32 %v4121, %v4321
        %v4323 = vpop.f32.mrb[0].mxu0
        %v4324 = vpop.f32.mrb[0].mxu0
        %v4325 = vadd.f32 %v4121, %v4324
        %v4326 = vpop.f32.mrb[0].mxu0
        %4327 = vmatprep.mubr.bf16.mxu0 %v4039
        %4328 = vmatmul.mubr.bf16.gmra.mrb[0].mxu0 %v3911
        %v4329 = vpop.f32.mrb[0].mxu0
        %v4330 = vadd.f32 %v4121, %v4329
        %v4331 = vpop.f32.mrb[0].mxu0
        %v4332 = vpop.f32.mrb[0].mxu0
        %v4333 = vadd.f32 %v4121, %v4332
        %v4334 = vpop.f32.mrb[0].mxu0
        %4335 = vmatprep.mubr.bf16.mxu0 %v4042
        %4336 = vmatmul.mubr.bf16.gmra.mrb[0].mxu0 %v3914
        %v4337 = vpop.f32.mrb[0].mxu0
        %v4338 = vadd.f32 %v4121, %v4337
        %v4339 = vpop.f32.mrb[0].mxu0
        %v4340 = vpop.f32.mrb[0].mxu0
        %v4341 = vadd.f32 %v4121, %v4340
        %v4342 = vpop.f32.mrb[0].mxu0
        %4343 = vmatprep.mubr.bf16.mxu0 %v4045
        %4344 = vmatmul.mubr.bf16.gmra.mrb[0].mxu0 %v3917
        %v4345 = vpop.f32.mrb[0].mxu0
        %v4346 = vadd.f32 %v4121, %v4345
        %v4347 = vpop.f32.mrb[0].mxu0
        %v4348 = vpop.f32.mrb[0].mxu0
        %v4349 = vadd.f32 %v4121, %v4348
        %v4350 = vpop.f32.mrb[0].mxu0
        %4351 = vmatprep.mubr.bf16.mxu0 %v4048
        %4352 = vmatmul.mubr.bf16.gmra.mrb[0].mxu0 %v3920
        %v4353 = vpop.f32.mrb[0].mxu0
        %v4354 = vadd.f32 %v4121, %v4353
        %v4355 = vpop.f32.mrb[0].mxu0
        %v4356 = vpop.f32.mrb[0].mxu0
        %v4357 = vadd.f32 %v4121, %v4356
        %v4358 = vpop.f32.mrb[0].mxu0
        %4359 = vmatprep.mubr.bf16.mxu0 %v4051
        %4360 = vmatmul.mubr.bf16.gmra.mrb[0].mxu0 %v3923
        %v4361 = vpop.f32.mrb[0].mxu0
        %v4362 = vadd.f32 %v4121, %v4361
        %v4363 = vpop.f32.mrb[0].mxu0
        %v4364 = vpop.f32.mrb[0].mxu0
        %v4365 = vadd.f32 %v4121, %v4364
        %v4366 = vpop.f32.mrb[0].mxu0
        %4367 = vmatprep.mubr.bf16.mxu0 %v4054
        %4368 = vmatmul.mubr.bf16.gmra.mrb[0].mxu0 %v3926
        %v4369 = vpop.f32.mrb[0].mxu0
        %v4370 = vadd.f32 %v4121, %v4369
        %v4371 = vpop.f32.mrb[0].mxu0
        %v4372 = vpop.f32.mrb[0].mxu0
        %v4373 = vadd.f32 %v4121, %v4372
        %v4374 = vpop.f32.mrb[0].mxu0
        %4375 = vmatprep.mubr.bf16.mxu0 %v4057
        %4376 = vmatmul.mubr.bf16.gmra.mrb[0].mxu0 %v3929
        %v4377 = vpop.f32.mrb[0].mxu0
        %v4378 = vadd.f32 %v4121, %v4377
        %v4379 = vpop.f32.mrb[0].mxu0
        %v4380 = vpop.f32.mrb[0].mxu0
        %v4381 = vadd.f32 %v4121, %v4380
        %v4382 = vpop.f32.mrb[0].mxu0
        %4383 = vmatprep.mubr.bf16.mxu0 %v4060
        %4384 = vmatmul.mubr.bf16.gmra.mrb[0].mxu0 %v3932
        %v4385 = vpop.f32.mrb[0].mxu0
        %v4386 = vadd.f32 %v4121, %v4385
        %v4387 = vpop.f32.mrb[0].mxu0
        %v4388 = vpop.f32.mrb[0].mxu0
        %v4389 = vadd.f32 %v4121, %v4388
        %v4390 = vpop.f32.mrb[0].mxu0
        %4391 = vmatprep.mubr.bf16.mxu0 %v4063
        %4392 = vmatmul.mubr.bf16.gmra.mrb[0].mxu0 %v3935
        %v4393 = vpop.f32.mrb[0].mxu0
        %v4394 = vadd.f32 %v4121, %v4393
        %v4395 = vpop.f32.mrb[0].mxu0
        %v4396 = vpop.f32.mrb[0].mxu0
        %v4397 = vadd.f32 %v4121, %v4396
        %v4398 = vpop.f32.mrb[0].mxu0
        %4399 = vmatprep.mubr.bf16.mxu0 %v4066
        %4400 = vmatmul.mubr.bf16.gmra.mrb[0].mxu0 %v3938
        %v4401 = vpop.f32.mrb[0].mxu0
        %v4402 = vadd.f32 %v4121, %v4401
        %v4403 = vpop.f32.mrb[0].mxu0
        %v4404 = vpop.f32.mrb[0].mxu0
        %v4405 = vadd.f32 %v4121, %v4404
        %v4406 = vpop.f32.mrb[0].mxu0
        %4407 = vmatprep.mubr.bf16.mxu0 %v4069
        %4408 = vmatmul.mubr.bf16.gmra.mrb[0].mxu0 %v3941
        %v4409 = vpop.f32.mrb[0].mxu0
        %v4410 = vadd.f32 %v4121, %v4409
        %v4411 = vpop.f32.mrb[0].mxu0
        %v4412 = vpop.f32.mrb[0].mxu0
        %v4413 = vadd.f32 %v4121, %v4412
        %v4414 = vpop.f32.mrb[0].mxu0
        %4415 = vmatprep.mubr.bf16.mxu0 %v4072
        %4416 = vmatmul.mubr.bf16.gmra.mrb[0].mxu0 %v3944
        %v4417 = vpop.f32.mrb[0].mxu0
        %v4418 = vadd.f32 %v4121, %v4417
        %v4419 = vpop.f32.mrb[0].mxu0
        %v4420 = vpop.f32.mrb[0].mxu0
        %v4421 = vadd.f32 %v4121, %v4420
        %v4422 = vpop.f32.mrb[0].mxu0
        %4423 = vmatprep.mubr.bf16.mxu0 %v4075
        %4424 = vmatmul.mubr.bf16.gmra.mrb[0].mxu0 %v3947
        %v4425 = vpop.f32.mrb[0].mxu0
        %v4426 = vadd.f32 %v4121, %v4425
        %v4427 = vpop.f32.mrb[0].mxu0
        %v4428 = vpop.f32.mrb[0].mxu0
        %v4429 = vadd.f32 %v4121, %v4428
        %v4430 = vpop.f32.mrb[0].mxu0
        %4431 = vmatprep.mubr.bf16.mxu0 %v4078
        %4432 = vmatmul.mubr.bf16.gmra.mrb[0].mxu0 %v3950
        %v4433 = vpop.f32.mrb[0].mxu0
        %v4434 = vadd.f32 %v4121, %v4433
        %v4435 = vpop.f32.mrb[0].mxu0
        %v4436 = vpop.f32.mrb[0].mxu0
        %v4437 = vadd.f32 %v4121, %v4436
        %v4438 = vpop.f32.mrb[0].mxu0
        %4439 = vdwg.mxu0
        %4440 = vmatprep.subr.bf16.mxu0 0
        %4441 = vmatpush1.bf16.msra.mxu0 %v4211
        %4442 = vmatprep.subr.bf16.mxu0 0
        %4443 = vmatpush1.bf16.msra.mxu0 %v4212
        %4444 = vmatprep.subr.bf16.mxu0 0
        %4445 = vmatpush1.bf16.msra.mxu0 0
        %4446 = vmatprep.subr.bf16.mxu0 0
        %4447 = vmatpush1.bf16.msra.mxu0 0
        %4448 = vmatprep.subr.bf16.mxu0 0
        %4449 = vmatpush1.bf16.msra.mxu0 0
        %4450 = vmatprep.subr.bf16.mxu0 0
        %4451 = vmatpush1.bf16.msra.mxu0 0
        %4452 = vmatprep.subr.bf16.mxu0 0
        %4453 = vmatpush1.bf16.msra.mxu0 0
        %4454 = vmatprep.subr.bf16.mxu0 0
        %4455 = vmatpush1.bf16.msra.mxu0 0
        %4456 = vmatprep.subr.bf16.mxu0 0
        %4457 = vmatpush1.bf16.msra.mxu0 0
        %4458 = vmatprep.subr.bf16.mxu0 0
        %4459 = vmatpush1.bf16.msra.mxu0 0
        %4460 = vmatprep.subr.bf16.mxu0 0
        %4461 = vmatpush1.bf16.msra.mxu0 0
        %4462 = vmatprep.subr.bf16.mxu0 0
        %4463 = vmatpush1.bf16.msra.mxu0 0
        %4464 = vmatprep.subr.bf16.mxu0 0
        %4465 = vmatpush1.bf16.msra.mxu0 0
        %4466 = vmatprep.subr.bf16.mxu0 0
        %4467 = vmatpush1.bf16.msra.mxu0 0
        %4468 = vmatprep.subr.bf16.mxu0 0
        %4469 = vmatpush1.bf16.msra.mxu0 0
        %4470 = vmatprep.subr.bf16.mxu0 0
        %4471 = vmatpush1.bf16.msra.mxu0 0
        %4472 = vmatprep.mubr.bf16.mxu0 0
        %4473 = vmatmul.mubr.bf16.gmra.mrb[0].mxu0 %v4232
        %v4474 = vpop.f32.mrb[0].mxu0
        %v4475 = vadd.f32 %v4314, %v4474
        %v4476 = vpop.f32.mrb[0].mxu0
        %v4477 = vpop.f32.mrb[0].mxu0
        %v4478 = vadd.f32 %v4317, %v4477
        %v4479 = vpop.f32.mrb[0].mxu0
        %4480 = vmatprep.mubr.bf16.mxu0 0
        %4481 = vmatmul.mubr.bf16.gmra.mrb[0].mxu0 %v4235
        %v4482 = vpop.f32.mrb[0].mxu0
        %v4483 = vadd.f32 %v4322, %v4482
        %v4484 = vpop.f32.mrb[0].mxu0
        %v4485 = vpop.f32.mrb[0].mxu0
        %v4486 = vadd.f32 %v4325, %v4485
        %v4487 = vpop.f32.mrb[0].mxu0
        %4488 = vmatprep.mubr.bf16.mxu0 0
        %4489 = vmatmul.mubr.bf16.gmra.mrb[0].mxu0 %v4238
        %v4490 = vpop.f32.mrb[0].mxu0
        %v4491 = vadd.f32 %v4330, %v4490
        %v4492 = vpop.f32.mrb[0].mxu0
        %v4493 = vpop.f32.mrb[0].mxu0
        %v4494 = vadd.f32 %v4333, %v4493
        %v4495 = vpop.f32.mrb[0].mxu0
        %4496 = vmatprep.mubr.bf16.mxu0 0
        %4497 = vmatmul.mubr.bf16.gmra.mrb[0].mxu0 %v4241
        %v4498 = vpop.f32.mrb[0].mxu0
        %v4499 = vadd.f32 %v4338, %v4498
        %v4500 = vpop.f32.mrb[0].mxu0
        %v4501 = vpop.f32.mrb[0].mxu0
        %v4502 = vadd.f32 %v4341, %v4501
        %v4503 = vpop.f32.mrb[0].mxu0
        %4504 = vmatprep.mubr.bf16.mxu0 0
        %4505 = vmatmul.mubr.bf16.gmra.mrb[0].mxu0 %v4244
        %v4506 = vpop.f32.mrb[0].mxu0
        %v4507 = vadd.f32 %v4346, %v4506
        %v4508 = vpop.f32.mrb[0].mxu0
        %v4509 = vpop.f32.mrb[0].mxu0
        %v4510 = vadd.f32 %v4349, %v4509
        %v4511 = vpop.f32.mrb[0].mxu0
        %4512 = vmatprep.mubr.bf16.mxu0 0
        %4513 = vmatmul.mubr.bf16.gmra.mrb[0].mxu0 %v4247
        %v4514 = vpop.f32.mrb[0].mxu0
        %v4515 = vadd.f32 %v4354, %v4514
        %v4516 = vpop.f32.mrb[0].mxu0
        %v4517 = vpop.f32.mrb[0].mxu0
        %v4518 = vadd.f32 %v4357, %v4517
        %v4519 = vpop.f32.mrb[0].mxu0
        %4520 = vmatprep.mubr.bf16.mxu0 0
        %4521 = vmatmul.mubr.bf16.gmra.mrb[0].mxu0 %v4250
        %v4522 = vpop.f32.mrb[0].mxu0
        %v4523 = vadd.f32 %v4362, %v4522
        %v4524 = vpop.f32.mrb[0].mxu0
        %v4525 = vpop.f32.mrb[0].mxu0
        %v4526 = vadd.f32 %v4365, %v4525
        %v4527 = vpop.f32.mrb[0].mxu0
        %4528 = vmatprep.mubr.bf16.mxu0 0
        %4529 = vmatmul.mubr.bf16.gmra.mrb[0].mxu0 %v4253
        %v4530 = vpop.f32.mrb[0].mxu0
        %v4531 = vadd.f32 %v4370, %v4530
        %v4532 = vpop.f32.mrb[0].mxu0
        %v4533 = vpop.f32.mrb[0].mxu0
        %v4534 = vadd.f32 %v4373, %v4533
        %v4535 = vpop.f32.mrb[0].mxu0
        %4536 = vmatprep.mubr.bf16.mxu0 0
        %4537 = vmatmul.mubr.bf16.gmra.mrb[0].mxu0 %v4256
        %v4538 = vpop.f32.mrb[0].mxu0
        %v4539 = vadd.f32 %v4378, %v4538
        %v4540 = vpop.f32.mrb[0].mxu0
        %v4541 = vpop.f32.mrb[0].mxu0
        %v4542 = vadd.f32 %v4381, %v4541
        %v4543 = vpop.f32.mrb[0].mxu0
        %4544 = vmatprep.mubr.bf16.mxu0 0
        %4545 = vmatmul.mubr.bf16.gmra.mrb[0].mxu0 %v4259
        %v4546 = vpop.f32.mrb[0].mxu0
        %v4547 = vadd.f32 %v4386, %v4546
        %v4548 = vpop.f32.mrb[0].mxu0
        %v4549 = vpop.f32.mrb[0].mxu0
        %v4550 = vadd.f32 %v4389, %v4549
        %v4551 = vpop.f32.mrb[0].mxu0
        %4552 = vmatprep.mubr.bf16.mxu0 0
        %4553 = vmatmul.mubr.bf16.gmra.mrb[0].mxu0 %v4262
        %v4554 = vpop.f32.mrb[0].mxu0
        %v4555 = vadd.f32 %v4394, %v4554
        %v4556 = vpop.f32.mrb[0].mxu0
        %v4557 = vpop.f32.mrb[0].mxu0
        %v4558 = vadd.f32 %v4397, %v4557
        %v4559 = vpop.f32.mrb[0].mxu0
        %4560 = vmatprep.mubr.bf16.mxu0 0
        %4561 = vmatmul.mubr.bf16.gmra.mrb[0].mxu0 %v4265
        %v4562 = vpop.f32.mrb[0].mxu0
        %v4563 = vadd.f32 %v4402, %v4562
        %v4564 = vpop.f32.mrb[0].mxu0
        %v4565 = vpop.f32.mrb[0].mxu0
        %v4566 = vadd.f32 %v4405, %v4565
        %v4567 = vpop.f32.mrb[0].mxu0
        %4568 = vmatprep.mubr.bf16.mxu0 0
        %4569 = vmatmul.mubr.bf16.gmra.mrb[0].mxu0 %v4268
        %v4570 = vpop.f32.mrb[0].mxu0
        %v4571 = vadd.f32 %v4410, %v4570
        %v4572 = vpop.f32.mrb[0].mxu0
        %v4573 = vpop.f32.mrb[0].mxu0
        %v4574 = vadd.f32 %v4413, %v4573
        %v4575 = vpop.f32.mrb[0].mxu0
        %4576 = vmatprep.mubr.bf16.mxu0 0
        %4577 = vmatmul.mubr.bf16.gmra.mrb[0].mxu0 %v4271
        %v4578 = vpop.f32.mrb[0].mxu0
        %v4579 = vadd.f32 %v4418, %v4578
        %v4580 = vpop.f32.mrb[0].mxu0
        %v4581 = vpop.f32.mrb[0].mxu0
        %v4582 = vadd.f32 %v4421, %v4581
        %v4583 = vpop.f32.mrb[0].mxu0
        %4584 = vmatprep.mubr.bf16.mxu0 0
        %4585 = vmatmul.mubr.bf16.gmra.mrb[0].mxu0 %v4274
        %v4586 = vpop.f32.mrb[0].mxu0
        %v4587 = vadd.f32 %v4426, %v4586
        %v4588 = vpop.f32.mrb[0].mxu0
        %v4589 = vpop.f32.mrb[0].mxu0
        %v4590 = vadd.f32 %v4429, %v4589
        %v4591 = vpop.f32.mrb[0].mxu0
        %4592 = vmatprep.mubr.bf16.mxu0 0
        %4593 = vmatmul.mubr.bf16.gmra.mrb[0].mxu0 %v4277
        %v4594 = vpop.f32.mrb[0].mxu0
        %v4595 = vadd.f32 %v4434, %v4594
        %v4596 = vpop.f32.mrb[0].mxu0
        %v4597 = vpop.f32.mrb[0].mxu0
        %v4598 = vadd.f32 %v4437, %v4597
        %v4599 = vpop.f32.mrb[0].mxu0
        %4600 = vdwg.mxu0
        %v4601 = vmax.f32 %v4475, 0.0
        %v4602 = vmax.f32 %v4478, 0.0
        %v4603 = vmax.f32 %v4483, 0.0
        %v4604 = vmax.f32 %v4486, 0.0
        %v4605 = vmax.f32 %v4491, 0.0
        %v4606 = vmax.f32 %v4494, 0.0
        %v4607 = vmax.f32 %v4499, 0.0
        %v4608 = vmax.f32 %v4502, 0.0
        %v4609 = vmax.f32 %v4507, 0.0
        %v4610 = vmax.f32 %v4510, 0.0
        %v4611 = vmax.f32 %v4515, 0.0
        %v4612 = vmax.f32 %v4518, 0.0
        %v4613 = vmax.f32 %v4523, 0.0
        %v4614 = vmax.f32 %v4526, 0.0
        %v4615 = vmax.f32 %v4531, 0.0
        %v4616 = vmax.f32 %v4534, 0.0
        %v4617 = vmax.f32 %v4539, 0.0
        %v4618 = vmax.f32 %v4542, 0.0
        %v4619 = vmax.f32 %v4547, 0.0
        %v4620 = vmax.f32 %v4550, 0.0
        %v4621 = vmax.f32 %v4555, 0.0
        %v4622 = vmax.f32 %v4558, 0.0
        %v4623 = vmax.f32 %v4563, 0.0
        %v4624 = vmax.f32 %v4566, 0.0
        %v4625 = vmax.f32 %v4571, 0.0
        %v4626 = vmax.f32 %v4574, 0.0
        %v4627 = vmax.f32 %v4579, 0.0
        %v4628 = vmax.f32 %v4582, 0.0
        %v4629 = vmax.f32 %v4587, 0.0
        %v4630 = vmax.f32 %v4590, 0.0
        %v4631 = vmax.f32 %v4595, 0.0
        %v4632 = vmax.f32 %v4598, 0.0
        %4633 = vst.msk [vmem:[#allocation2] sm:$0xff] %vm1875, %v4601
        %4634 = vst.msk [vmem:[#allocation2 + $0x8] sm:$0xff] %vm1875, %v4602
        %4635 = vst.msk [vmem:[#allocation2 + $0x10] sm:$0xff] %vm1875, %v4603
        %4636 = vst.msk [vmem:[#allocation2 + $0x18] sm:$0xff] %vm1875, %v4604
        %4637 = vst.msk [vmem:[#allocation2 + $0x20] sm:$0xff] %vm1875, %v4605
        %4638 = vst.msk [vmem:[#allocation2 + $0x28] sm:$0xff] %vm1875, %v4606
        %4639 = vst.msk [vmem:[#allocation2 + $0x30] sm:$0xff] %vm1875, %v4607
        %4640 = vst.msk [vmem:[#allocation2 + $0x38] sm:$0xff] %vm1875, %v4608
        %4641 = vst.msk [vmem:[#allocation2 + $0x40] sm:$0xff] %vm1875, %v4609
        %4642 = vst.msk [vmem:[#allocation2 + $0x48] sm:$0xff] %vm1875, %v4610
        %4643 = vst.msk [vmem:[#allocation2 + $0x50] sm:$0xff] %vm1875, %v4611
        %4644 = vst.msk [vmem:[#allocation2 + $0x58] sm:$0xff] %vm1875, %v4612
        %4645 = vst.msk [vmem:[#allocation2 + $0x60] sm:$0xff] %vm1875, %v4613
        %4646 = vst.msk [vmem:[#allocation2 + $0x68] sm:$0xff] %vm1875, %v4614
        %4647 = vst.msk [vmem:[#allocation2 + $0x70] sm:$0xff] %vm1875, %v4615
        %4648 = vst.msk [vmem:[#allocation2 + $0x78] sm:$0xff] %vm1875, %v4616
        %4649 = vst.msk [vmem:[#allocation2 + $0x80] sm:$0xff] %vm1875, %v4617
        %4650 = vst.msk [vmem:[#allocation2 + $0x88] sm:$0xff] %vm1875, %v4618
        %4651 = vst.msk [vmem:[#allocation2 + $0x90] sm:$0xff] %vm1875, %v4619
        %4652 = vst.msk [vmem:[#allocation2 + $0x98] sm:$0xff] %vm1875, %v4620
        %4653 = vst.msk [vmem:[#allocation2 + $0xa0] sm:$0xff] %vm1875, %v4621
        %4654 = vst.msk [vmem:[#allocation2 + $0xa8] sm:$0xff] %vm1875, %v4622
        %4655 = vst.msk [vmem:[#allocation2 + $0xb0] sm:$0xff] %vm1875, %v4623
        %4656 = vst.msk [vmem:[#allocation2 + $0xb8] sm:$0xff] %vm1875, %v4624
        %4657 = vst.msk [vmem:[#allocation2 + $0xc0] sm:$0xff] %vm1875, %v4625
        %4658 = vst.msk [vmem:[#allocation2 + $0xc8] sm:$0xff] %vm1875, %v4626
        %4659 = vst.msk [vmem:[#allocation2 + $0xd0] sm:$0xff] %vm1875, %v4627
        %4660 = vst.msk [vmem:[#allocation2 + $0xd8] sm:$0xff] %vm1875, %v4628
        %4661 = vst.msk [vmem:[#allocation2 + $0xe0] sm:$0xff] %vm1875, %v4629
        %4662 = vst.msk [vmem:[#allocation2 + $0xe8] sm:$0xff] %vm1875, %v4630
        %4663 = vst.msk [vmem:[#allocation2 + $0xf0] sm:$0xff] %vm1875, %v4631
        %4664 = vst.msk [vmem:[#allocation2 + $0xf8] sm:$0xff] %vm1875, %v4632
        %4665 = vst.msk [vmem:[#allocation4] sm:$0xff] %vm1875, 0.0
        %4666 = vst.msk [vmem:[#allocation4 + $0x8] sm:$0xff] %vm1875, 0.0
        %4667 = vst.msk [vmem:[#allocation4 + $0x10] sm:$0xff] %vm1875, 0.0
        %4668 = vst.msk [vmem:[#allocation4 + $0x18] sm:$0xff] %vm1875, 0.0
        %4669 = vst.msk [vmem:[#allocation4 + $0x20] sm:$0xff] %vm1875, 0.0
        %4670 = vst.msk [vmem:[#allocation4 + $0x28] sm:$0xff] %vm1875, 0.0
        %4671 = vst.msk [vmem:[#allocation4 + $0x30] sm:$0xff] %vm1875, 0.0
        %4672 = vst.msk [vmem:[#allocation4 + $0x38] sm:$0xff] %vm1875, 0.0
        %4673 = vst.msk [vmem:[#allocation4 + $0x40] sm:$0xff] %vm1875, 0.0
        %4674 = vst.msk [vmem:[#allocation4 + $0x48] sm:$0xff] %vm1875, 0.0
        %4675 = vst.msk [vmem:[#allocation4 + $0x50] sm:$0x3] %vm2040, 0.0
        %v4676 = vld [vmem:[#allocation2] ss:$2 sm:$0xff]
        %v4677 = vld [vmem:[%s2045] ss:$2 sm:$0xff]
        %v4678 = vmax.f32 %v4676, %v4677
        %v4679 = vld [vmem:[%s2043] ss:$2 sm:$0xff]
        %v4680 = vld [vmem:[%s2047] ss:$2 sm:$0xff]
        %v4681 = vmax.f32 %v4679, %v4680
        %v4682 = vmax.f32 %v4678, %v4681
        %4683 = vst.msk [vmem:[#allocation4 + $0x9] sm:$0xff] %vm1875, %v4682
        %v4684 = vld [vmem:[%s2051] ss:$2 sm:$0xff]
        %v4685 = vld [vmem:[%s2055] ss:$2 sm:$0xff]
        %v4686 = vmax.f32 %v4684, %v4685
        %v4687 = vld [vmem:[%s2053] ss:$2 sm:$0xff]
        %v4688 = vld [vmem:[%s2057] ss:$2 sm:$0xff]
        %v4689 = vmax.f32 %v4687, %v4688
        %v4690 = vmax.f32 %v4686, %v4689
        %4691 = vst.msk [vmem:[#allocation4 + $0x11] sm:$0xff] %vm1875, %v4690
        %v4692 = vld [vmem:[%s2065] ss:$2 sm:$0xff]
        %v4693 = vld [vmem:[%s2069] ss:$2 sm:$0xff]
        %v4694 = vmax.f32 %v4692, %v4693
        %v4695 = vld [vmem:[%s2067] ss:$2 sm:$0xff]
        %v4696 = vld [vmem:[%s2071] ss:$2 sm:$0xff]
        %v4697 = vmax.f32 %v4695, %v4696
        %v4698 = vmax.f32 %v4694, %v4697
        %4699 = vst.msk [vmem:[#allocation4 + $0x19] sm:$0xff] %vm1875, %v4698
        %v4700 = vld [vmem:[%s2075] ss:$2 sm:$0xff]
        %v4701 = vld [vmem:[%s2079] ss:$2 sm:$0xff]
        %v4702 = vmax.f32 %v4700, %v4701
        %v4703 = vld [vmem:[%s2077] ss:$2 sm:$0xff]
        %v4704 = vld [vmem:[%s2081] ss:$2 sm:$0xff]
        %v4705 = vmax.f32 %v4703, %v4704
        %v4706 = vmax.f32 %v4702, %v4705
        %4707 = vst.msk [vmem:[#allocation4 + $0x21] sm:$0xff] %vm1875, %v4706
        %v4708 = vld [vmem:[%s2089] ss:$2 sm:$0xff]
        %v4709 = vld [vmem:[%s2093] ss:$2 sm:$0xff]
        %v4710 = vmax.f32 %v4708, %v4709
        %v4711 = vld [vmem:[%s2091] ss:$2 sm:$0xff]
        %v4712 = vld [vmem:[%s2095] ss:$2 sm:$0xff]
        %v4713 = vmax.f32 %v4711, %v4712
        %v4714 = vmax.f32 %v4710, %v4713
        %4715 = vst.msk [vmem:[#allocation4 + $0x29] sm:$0xff] %vm1875, %v4714
        %v4716 = vld [vmem:[%s2099] ss:$2 sm:$0xff]
        %v4717 = vld [vmem:[%s2103] ss:$2 sm:$0xff]
        %v4718 = vmax.f32 %v4716, %v4717
        %v4719 = vld [vmem:[%s2101] ss:$2 sm:$0xff]
        %v4720 = vld [vmem:[%s2105] ss:$2 sm:$0xff]
        %v4721 = vmax.f32 %v4719, %v4720
        %v4722 = vmax.f32 %v4718, %v4721
        %4723 = vst.msk [vmem:[#allocation4 + $0x31] sm:$0xff] %vm1875, %v4722
        %v4724 = vld [vmem:[%s2113] ss:$2 sm:$0xff]
        %v4725 = vld [vmem:[%s2117] ss:$2 sm:$0xff]
        %v4726 = vmax.f32 %v4724, %v4725
        %v4727 = vld [vmem:[%s2115] ss:$2 sm:$0xff]
        %v4728 = vld [vmem:[%s2119] ss:$2 sm:$0xff]
        %v4729 = vmax.f32 %v4727, %v4728
        %v4730 = vmax.f32 %v4726, %v4729
        %4731 = vst.msk [vmem:[#allocation4 + $0x39] sm:$0xff] %vm1875, %v4730
        %v4732 = vld [vmem:[%s2123] ss:$2 sm:$0xff]
        %v4733 = vld [vmem:[%s2127] ss:$2 sm:$0xff]
        %v4734 = vmax.f32 %v4732, %v4733
        %v4735 = vld [vmem:[%s2125] ss:$2 sm:$0xff]
        %v4736 = vld [vmem:[%s2129] ss:$2 sm:$0xff]
        %v4737 = vmax.f32 %v4735, %v4736
        %v4738 = vmax.f32 %v4734, %v4737
        %4739 = vst.msk [vmem:[#allocation4 + $0x41] sm:$0xff] %vm1875, %v4738
        %vm4740 = vcmp.lt.s32.totalorder %v2426, 0
        %v4741 = vsub.s32 0, %v2426
        %v4742 = vsel %vm4740, %v4741, %v2426
        %v4743 = vshrl.u32 %v4742, 3
        %v4744 = vand.u32 %v4742, 7
        %v4745 = vsub.s32 0, %v4744
        %v4746 = vsel %vm4740, %v4745, %v4744
        %vm4747 = vcmp.lt.s32.totalorder %v2427, 0
        %v4748 = vsub.s32 0, %v2427
        %v4749 = vsel %vm4747, %v4748, %v2427
        %v4750 = vshrl.u32 %v4749, 3
        %v4751 = vand.u32 %v4749, 7
        %v4752 = vsub.s32 0, %v4751
        %v4753 = vsel %vm4747, %v4752, %v4751
        %vm4754 = vcmp.lt.s32.totalorder %v2428, 0
        %v4755 = vsub.s32 0, %v2428
        %v4756 = vsel %vm4754, %v4755, %v2428
        %v4757 = vshrl.u32 %v4756, 3
        %v4758 = vand.u32 %v4756, 7
        %v4759 = vsub.s32 0, %v4758
        %v4760 = vsel %vm4754, %v4759, %v4758
        %vm4761 = vcmp.lt.s32.totalorder %v2429, 0
        %v4762 = vsub.s32 0, %v2429
        %v4763 = vsel %vm4761, %v4762, %v2429
        %v4764 = vshrl.u32 %v4763, 3
        %v4765 = vand.u32 %v4763, 7
        %v4766 = vsub.s32 0, %v4765
        %v4767 = vsel %vm4761, %v4766, %v4765
        %vm4768 = vcmp.lt.s32.totalorder %v2430, 0
        %v4769 = vsub.s32 0, %v2430
        %v4770 = vsel %vm4768, %v4769, %v2430
        %v4771 = vshrl.u32 %v4770, 3
        %v4772 = vand.u32 %v4770, 7
        %v4773 = vsub.s32 0, %v4772
        %v4774 = vsel %vm4768, %v4773, %v4772
        %vm4775 = vcmp.lt.s32.totalorder %v2431, 0
        %v4776 = vsub.s32 0, %v2431
        %v4777 = vsel %vm4775, %v4776, %v2431
        %v4778 = vshrl.u32 %v4777, 3
        %v4779 = vand.u32 %v4777, 7
        %v4780 = vsub.s32 0, %v4779
        %v4781 = vsel %vm4775, %v4780, %v4779
        %vm4782 = vcmp.lt.s32.totalorder %v2432, 0
        %v4783 = vsub.s32 0, %v2432
        %v4784 = vsel %vm4782, %v4783, %v2432
        %v4785 = vshrl.u32 %v4784, 3
        %v4786 = vand.u32 %v4784, 7
        %v4787 = vsub.s32 0, %v4786
        %v4788 = vsel %vm4782, %v4787, %v4786
        %vm4789 = vcmp.lt.s32.totalorder %v2433, 0
        %v4790 = vsub.s32 0, %v2433
        %v4791 = vsel %vm4789, %v4790, %v2433
        %v4792 = vshrl.u32 %v4791, 3
        %v4793 = vand.u32 %v4791, 7
        %v4794 = vsub.s32 0, %v4793
        %v4795 = vsel %vm4789, %v4794, %v4793
        %vm4796 = vcmp.ne.s32.totalorder %v4746, 0
        %vm4797 = vcmp.ne.s32.totalorder %v4753, 0
        %vm4798 = vcmp.ne.s32.totalorder %v4760, 0
        %vm4799 = vcmp.ne.s32.totalorder %v4767, 0
        %vm4800 = vcmp.ne.s32.totalorder %v4774, 0
        %vm4801 = vcmp.ne.s32.totalorder %v4781, 0
        %vm4802 = vcmp.ne.s32.totalorder %v4788, 0
        %vm4803 = vcmp.ne.s32.totalorder %v4795, 0
        %vm4804 = vcmp.lt.s32.totalorder %v4746, 0
        %vm4805 = vcmp.lt.s32.totalorder %v4753, 0
        %vm4806 = vcmp.lt.s32.totalorder %v4760, 0
        %vm4807 = vcmp.lt.s32.totalorder %v4767, 0
        %vm4808 = vcmp.lt.s32.totalorder %v4774, 0
        %vm4809 = vcmp.lt.s32.totalorder %v4781, 0
        %vm4810 = vcmp.lt.s32.totalorder %v4788, 0
        %vm4811 = vcmp.lt.s32.totalorder %v4795, 0
        %vm4812 = vmand %vm4804, %vm4796
        %vm4813 = vmand %vm4805, %vm4797
        %vm4814 = vmand %vm4806, %vm4798
        %vm4815 = vmand %vm4807, %vm4799
        %vm4816 = vmand %vm4808, %vm4800
        %vm4817 = vmand %vm4809, %vm4801
        %vm4818 = vmand %vm4810, %vm4802
        %vm4819 = vmand %vm4811, %vm4803
        %v4820 = vadd.s32 %v4746, 8
        %v4821 = vadd.s32 %v4753, 8
        %v4822 = vadd.s32 %v4760, 8
        %v4823 = vadd.s32 %v4767, 8
        %v4824 = vadd.s32 %v4774, 8
        %v4825 = vadd.s32 %v4781, 8
        %v4826 = vadd.s32 %v4788, 8
        %v4827 = vadd.s32 %v4795, 8
        %v4828 = vsel %vm4812, %v4820, %v4746
        %v4829 = vsel %vm4813, %v4821, %v4753
        %v4830 = vsel %vm4814, %v4822, %v4760
        %v4831 = vsel %vm4815, %v4823, %v4767
        %v4832 = vsel %vm4816, %v4824, %v4774
        %v4833 = vsel %vm4817, %v4825, %v4781
        %v4834 = vsel %vm4818, %v4826, %v4788
        %v4835 = vsel %vm4819, %v4827, %v4795
        %vm4836 = vcmp.gt.s32.totalorder %v4828, 0
        %vm4837 = vcmp.gt.s32.totalorder %v4829, 0
        %vm4838 = vcmp.gt.s32.totalorder %v4830, 0
        %vm4839 = vcmp.gt.s32.totalorder %v4831, 0
        %vm4840 = vcmp.gt.s32.totalorder %v4832, 0
        %vm4841 = vcmp.gt.s32.totalorder %v4833, 0
        %vm4842 = vcmp.gt.s32.totalorder %v4834, 0
        %vm4843 = vcmp.gt.s32.totalorder %v4835, 0
        %vm4844 = vcmp.lt.s32.totalorder %v4828, 7
        %vm4845 = vcmp.lt.s32.totalorder %v4829, 7
        %vm4846 = vcmp.lt.s32.totalorder %v4830, 7
        %vm4847 = vcmp.lt.s32.totalorder %v4831, 7
        %vm4848 = vcmp.lt.s32.totalorder %v4832, 7
        %vm4849 = vcmp.lt.s32.totalorder %v4833, 7
        %vm4850 = vcmp.lt.s32.totalorder %v4834, 7
        %vm4851 = vcmp.lt.s32.totalorder %v4835, 7
        %v4852 = vld [vmem:[#allocation4] sm:$0xff]
        %v4853 = vld [vmem:[#allocation4 + $0x8] sm:$0xff]
        %v4854 = vld [vmem:[#allocation4 + $0x10] sm:$0xff]
        %v4855 = vld [vmem:[#allocation4 + $0x18] sm:$0xff]
        %v4856 = vld [vmem:[#allocation4 + $0x20] sm:$0xff]
        %v4857 = vld [vmem:[#allocation4 + $0x28] sm:$0xff]
        %v4858 = vld [vmem:[#allocation4 + $0x30] sm:$0xff]
        %v4859 = vld [vmem:[#allocation4 + $0x38] sm:$0xff]
        %v4860 = vpack.c.bf16 %v4853, %v4852
        %v4861 = vpack.c.bf16 %v4855, %v4854
        %v4862 = vpack.c.bf16 %v4857, %v4856
        %v4863 = vpack.c.bf16 %v4859, %v4858
        %v4864 = vsel %vm4836, 1, 0
        %v4865 = vsel %vm4837, 1, 0
        %v4866 = vsel %vm4838, 1, 0
        %v4867 = vsel %vm4839, 1, 0
        %v4868 = vsel %vm4840, 1, 0
        %v4869 = vsel %vm4841, 1, 0
        %v4870 = vsel %vm4842, 1, 0
        %v4871 = vsel %vm4843, 1, 0
        %vm4872 = vcmp.eq.s32.totalorder %v4864, 1
        %vm4873 = vcmp.eq.s32.totalorder %v4865, 1
        %vm4874 = vcmp.eq.s32.totalorder %v4866, 1
        %vm4875 = vcmp.eq.s32.totalorder %v4867, 1
        %vm4876 = vcmp.eq.s32.totalorder %v4868, 1
        %vm4877 = vcmp.eq.s32.totalorder %v4869, 1
        %vm4878 = vcmp.eq.s32.totalorder %v4870, 1
        %vm4879 = vcmp.eq.s32.totalorder %v4871, 1
        %vm4880 = vmpackc.low %vm4872, %vm4872
        %vm4881 = vmpackc.low %vm4873, %vm4873
        %vm4882 = vmpackc.low %vm4874, %vm4874
        %vm4883 = vmpackc.low %vm4875, %vm4875
        %vm4884 = vmpackc.low %vm4876, %vm4876
        %vm4885 = vmpackc.low %vm4877, %vm4877
        %vm4886 = vmpackc.low %vm4878, %vm4878
        %vm4887 = vmpackc.low %vm4879, %vm4879
        %v4888 = vsel %vm4880, 65537, 0
        %v4889 = vsel %vm4881, 65537, 0
        %v4890 = vsel %vm4882, 65537, 0
        %v4891 = vsel %vm4883, 65537, 0
        %v4892 = vsel %vm4884, 65537, 0
        %v4893 = vsel %vm4885, 65537, 0
        %v4894 = vsel %vm4886, 65537, 0
        %v4895 = vsel %vm4887, 65537, 0
        %v4896 = vunpack.c.l.b16 %v4888
        %v4897 = vunpack.c.l.b16 %v4889
        %v4898 = vunpack.c.l.b16 %v4890
        %v4899 = vunpack.c.l.b16 %v4891
        %v4900 = vunpack.c.l.b16 %v4892
        %v4901 = vunpack.c.l.b16 %v4893
        %v4902 = vunpack.c.l.b16 %v4894
        %v4903 = vunpack.c.l.b16 %v4895
        %v4904 = vpack.c.b16 %v4897, %v4896
        %v4905 = vpack.c.b16 %v4899, %v4898
        %v4906 = vpack.c.b16 %v4901, %v4900
        %v4907 = vpack.c.b16 %v4903, %v4902
        %vm4908 = vcmp.ne.s16.totalorder %v4904, 0
        %vm4909 = vcmp.ne.s16.totalorder %v4905, 0
        %vm4910 = vcmp.ne.s16.totalorder %v4906, 0
        %vm4911 = vcmp.ne.s16.totalorder %v4907, 0
        %v4912 = vsel %vm4908, %v4860, 0
        %v4913 = vsel %vm4909, %v4861, 0
        %v4914 = vsel %vm4910, %v4862, 0
        %v4915 = vsel %vm4911, %v4863, 0
        %v4916 = vld [vmem:[#allocation4 + $0x1] sm:$0xff]
        %v4917 = vld [vmem:[#allocation4 + $0x9] sm:$0xff]
        %v4918 = vld [vmem:[#allocation4 + $0x11] sm:$0xff]
        %v4919 = vld [vmem:[#allocation4 + $0x19] sm:$0xff]
        %v4920 = vld [vmem:[#allocation4 + $0x21] sm:$0xff]
        %v4921 = vld [vmem:[#allocation4 + $0x29] sm:$0xff]
        %v4922 = vld [vmem:[#allocation4 + $0x31] sm:$0xff]
        %v4923 = vld [vmem:[#allocation4 + $0x39] sm:$0xff]
        %v4924 = vpack.c.bf16 %v4917, %v4916
        %v4925 = vpack.c.bf16 %v4919, %v4918
        %v4926 = vpack.c.bf16 %v4921, %v4920
        %v4927 = vpack.c.bf16 %v4923, %v4922
        %v4928 = vld [vmem:[#allocation4 + $0x2] sm:$0xff]
        %v4929 = vld [vmem:[#allocation4 + $0xa] sm:$0xff]
        %v4930 = vld [vmem:[#allocation4 + $0x12] sm:$0xff]
        %v4931 = vld [vmem:[#allocation4 + $0x1a] sm:$0xff]
        %v4932 = vld [vmem:[#allocation4 + $0x22] sm:$0xff]
        %v4933 = vld [vmem:[#allocation4 + $0x2a] sm:$0xff]
        %v4934 = vld [vmem:[#allocation4 + $0x32] sm:$0xff]
        %v4935 = vld [vmem:[#allocation4 + $0x3a] sm:$0xff]
        %v4936 = vpack.c.bf16 %v4929, %v4928
        %v4937 = vpack.c.bf16 %v4931, %v4930
        %v4938 = vpack.c.bf16 %v4933, %v4932
        %v4939 = vpack.c.bf16 %v4935, %v4934
        %v4940 = vsel %vm4844, 1, 0
        %v4941 = vsel %vm4845, 1, 0
        %v4942 = vsel %vm4846, 1, 0
        %v4943 = vsel %vm4847, 1, 0
        %v4944 = vsel %vm4848, 1, 0
        %v4945 = vsel %vm4849, 1, 0
        %v4946 = vsel %vm4850, 1, 0
        %v4947 = vsel %vm4851, 1, 0
        %vm4948 = vcmp.eq.s32.totalorder %v4940, 1
        %vm4949 = vcmp.eq.s32.totalorder %v4941, 1
        %vm4950 = vcmp.eq.s32.totalorder %v4942, 1
        %vm4951 = vcmp.eq.s32.totalorder %v4943, 1
        %vm4952 = vcmp.eq.s32.totalorder %v4944, 1
        %vm4953 = vcmp.eq.s32.totalorder %v4945, 1
        %vm4954 = vcmp.eq.s32.totalorder %v4946, 1
        %vm4955 = vcmp.eq.s32.totalorder %v4947, 1
        %vm4956 = vmpackc.low %vm4948, %vm4948
        %vm4957 = vmpackc.low %vm4949, %vm4949
        %vm4958 = vmpackc.low %vm4950, %vm4950
        %vm4959 = vmpackc.low %vm4951, %vm4951
        %vm4960 = vmpackc.low %vm4952, %vm4952
        %vm4961 = vmpackc.low %vm4953, %vm4953
        %vm4962 = vmpackc.low %vm4954, %vm4954
        %vm4963 = vmpackc.low %vm4955, %vm4955
        %v4964 = vsel %vm4956, 65537, 0
        %v4965 = vsel %vm4957, 65537, 0
        %v4966 = vsel %vm4958, 65537, 0
        %v4967 = vsel %vm4959, 65537, 0
        %v4968 = vsel %vm4960, 65537, 0
        %v4969 = vsel %vm4961, 65537, 0
        %v4970 = vsel %vm4962, 65537, 0
        %v4971 = vsel %vm4963, 65537, 0
        %v4972 = vunpack.c.l.b16 %v4964
        %v4973 = vunpack.c.l.b16 %v4965
        %v4974 = vunpack.c.l.b16 %v4966
        %v4975 = vunpack.c.l.b16 %v4967
        %v4976 = vunpack.c.l.b16 %v4968
        %v4977 = vunpack.c.l.b16 %v4969
        %v4978 = vunpack.c.l.b16 %v4970
        %v4979 = vunpack.c.l.b16 %v4971
        %v4980 = vpack.c.b16 %v4973, %v4972
        %v4981 = vpack.c.b16 %v4975, %v4974
        %v4982 = vpack.c.b16 %v4977, %v4976
        %v4983 = vpack.c.b16 %v4979, %v4978
        %vm4984 = vcmp.ne.s16.totalorder %v4980, 0
        %vm4985 = vcmp.ne.s16.totalorder %v4981, 0
        %vm4986 = vcmp.ne.s16.totalorder %v4982, 0
        %vm4987 = vcmp.ne.s16.totalorder %v4983, 0
        %v4988 = vsel %vm4984, %v4936, 0
        %v4989 = vsel %vm4985, %v4937, 0
        %v4990 = vsel %vm4986, %v4938, 0
        %v4991 = vsel %vm4987, %v4939, 0
        %v4992 = vld [vmem:[#allocation4 + $0x40] sm:$0xff]
        %v4993 = vpack.c.bf16 %v4854, %v4853
        %v4994 = vpack.c.bf16 %v4856, %v4855
        %v4995 = vpack.c.bf16 %v4858, %v4857
        %v4996 = vpack.c.bf16 %v4992, %v4859
        %v4997 = vsel %vm4908, %v4993, 0
        %v4998 = vsel %vm4909, %v4994, 0
        %v4999 = vsel %vm4910, %v4995, 0
        %v5000 = vsel %vm4911, %v4996, 0
        %v5001 = vld [vmem:[#allocation4 + $0x41] sm:$0xff]
        %v5002 = vpack.c.bf16 %v4918, %v4917
        %v5003 = vpack.c.bf16 %v4920, %v4919
        %v5004 = vpack.c.bf16 %v4922, %v4921
        %v5005 = vpack.c.bf16 %v5001, %v4923
        %v5006 = vld [vmem:[#allocation4 + $0x42] sm:$0xff]
        %v5007 = vpack.c.bf16 %v4930, %v4929
        %v5008 = vpack.c.bf16 %v4932, %v4931
        %v5009 = vpack.c.bf16 %v4934, %v4933
        %v5010 = vpack.c.bf16 %v5006, %v4935
        %v5011 = vsel %vm4984, %v5007, 0
        %v5012 = vsel %vm4985, %v5008, 0
        %v5013 = vsel %vm4986, %v5009, 0
        %v5014 = vsel %vm4987, %v5010, 0
        %v5015 = vld [vmem:[#allocation4 + $0x48] sm:$0xff]
        %v5016 = vpack.c.bf16 %v5015, %v4992
        %v5017 = vsel %vm4908, %v4861, 0
        %v5018 = vsel %vm4909, %v4862, 0
        %v5019 = vsel %vm4910, %v4863, 0
        %v5020 = vsel %vm4911, %v5016, 0
        %v5021 = vld [vmem:[#allocation4 + $0x49] sm:$0xff]
        %v5022 = vpack.c.bf16 %v5021, %v5001
        %v5023 = vld [vmem:[#allocation4 + $0x4a] sm:$0xff]
        %v5024 = vpack.c.bf16 %v5023, %v5006
        %v5025 = vsel %vm4984, %v4937, 0
        %v5026 = vsel %vm4985, %v4938, 0
        %v5027 = vsel %vm4986, %v4939, 0
        %v5028 = vsel %vm4987, %v5024, 0
        %5033 = vrot.lane.b32.xlu0 %v4924, 32
        %v5034 = vpop.permute.xlu0 %5033
        %5035 = vrot.lane.b32.xlu0 %v4925, 32
        %v5036 = vpop.permute.xlu0 %5035
        %5037 = vrot.lane.b32.xlu0 %v4926, 32
        %v5038 = vpop.permute.xlu0 %5037
        %5039 = vrot.lane.b32.xlu0 %v4927, 32
        %v5040 = vpop.permute.xlu0 %5039
        %5045 = vrot.lane.b32.xlu0 %v4988, 64
        %v5046 = vpop.permute.xlu0 %5045
        %5047 = vrot.lane.b32.xlu0 %v4989, 64
        %v5048 = vpop.permute.xlu0 %5047
        %5049 = vrot.lane.b32.xlu0 %v4990, 64
        %v5050 = vpop.permute.xlu0 %5049
        %5051 = vrot.lane.b32.xlu0 %v4991, 64
        %v5052 = vpop.permute.xlu0 %5051
        %5057 = vrot.lane.b32.xlu0 %v4997, 96
        %v5058 = vpop.permute.xlu0 %5057
        %5059 = vrot.lane.b32.xlu0 %v4998, 96
        %v5060 = vpop.permute.xlu0 %5059
        %5061 = vrot.lane.b32.xlu0 %v4999, 96
        %v5062 = vpop.permute.xlu0 %5061
        %5063 = vrot.lane.b32.xlu0 %v5000, 96
        %v5064 = vpop.permute.xlu0 %5063
        %5069 = vrot.lane.b32.xlu0 %v5011, 32
        %v5070 = vpop.permute.xlu0 %5069
        %5071 = vrot.lane.b32.xlu0 %v5012, 32
        %v5072 = vpop.permute.xlu0 %5071
        %5073 = vrot.lane.b32.xlu0 %v5013, 32
        %v5074 = vpop.permute.xlu0 %5073
        %5075 = vrot.lane.b32.xlu0 %v5014, 32
        %v5076 = vpop.permute.xlu0 %5075
        %5081 = vrot.lane.b32.xlu0 %v5017, 64
        %v5082 = vpop.permute.xlu0 %5081
        %5083 = vrot.lane.b32.xlu0 %v5018, 64
        %v5084 = vpop.permute.xlu0 %5083
        %5085 = vrot.lane.b32.xlu0 %v5019, 64
        %v5086 = vpop.permute.xlu0 %5085
        %5087 = vrot.lane.b32.xlu0 %v5020, 64
        %v5088 = vpop.permute.xlu0 %5087
        %5090 = vrot.lane.b32.xlu0 %v4925, 96
        %v5091 = vpop.permute.xlu0 %5090
        %5092 = vrot.lane.b32.xlu0 %v4926, 96
        %v5093 = vpop.permute.xlu0 %5092
        %5094 = vrot.lane.b32.xlu0 %v4927, 96
        %v5095 = vpop.permute.xlu0 %5094
        %5096 = vrot.lane.b32.xlu0 %v5022, 96
        %v5097 = vpop.permute.xlu0 %5096
        %v5100 = vsel %vm1875, %v4912, %v5034
        %v5103 = vsel %vm1875, %v4913, %v5036
        %v5106 = vsel %vm1875, %v4914, %v5038
        %v5109 = vsel %vm1875, %v4915, %v5040
        %v5111 = vsel %vm3870, %v5100, %v5046
        %v5113 = vsel %vm3870, %v5103, %v5048
        %v5115 = vsel %vm3870, %v5106, %v5050
        %v5117 = vsel %vm3870, %v5109, %v5052
        %v5119 = vsel %vm3903, %v5111, %v5058
        %v5122 = vsel %vm3903, %v5113, %v5060
        %v5125 = vsel %vm3903, %v5115, %v5062
        %v5128 = vsel %vm3903, %v5117, %v5064
        %v5132 = vsel %vm1875, %v5002, %v5070
        %v5135 = vsel %vm1875, %v5003, %v5072
        %v5138 = vsel %vm1875, %v5004, %v5074
        %v5141 = vsel %vm1875, %v5005, %v5076
        %v5143 = vsel %vm3870, %v5132, %v5082
        %v5145 = vsel %vm3870, %v5135, %v5084
        %v5147 = vsel %vm3870, %v5138, %v5086
        %v5149 = vsel %vm3870, %v5141, %v5088
        %v5151 = vsel %vm3903, %v5143, %v5091
        %v5154 = vsel %vm3903, %v5145, %v5093
        %v5157 = vsel %vm3903, %v5147, %v5095
        %v5160 = vsel %vm3903, %v5149, %v5097
        %v5162 = vld [vmem:[%s5] sm:$0xf]
        %v5163 = vld [vmem:[%s5 + $0x4] sm:$0xf]
        %v5164 = vld [vmem:[%s5 + $0x8] sm:$0xf]
        %v5165 = vld [vmem:[%s5 + $0xc] sm:$0xf]
        %v5166 = vld [vmem:[%s5 + $0x10] sm:$0xf]
        %v5167 = vld [vmem:[%s5 + $0x14] sm:$0xf]
        %v5168 = vld [vmem:[%s5 + $0x18] sm:$0xf]
        %v5169 = vld [vmem:[%s5 + $0x1c] sm:$0xf]
        %v5170 = vld [vmem:[%s5 + $0x20] sm:$0xf]
        %v5171 = vld [vmem:[%s5 + $0x24] sm:$0xf]
        %v5172 = vld [vmem:[%s5 + $0x28] sm:$0xf]
        %v5173 = vld [vmem:[%s5 + $0x2c] sm:$0xf]
        %v5174 = vld [vmem:[%s5 + $0x30] sm:$0xf]
        %v5175 = vld [vmem:[%s5 + $0x34] sm:$0xf]
        %v5176 = vld [vmem:[%s5 + $0x38] sm:$0xf]
        %v5177 = vld [vmem:[%s5 + $0x3c] sm:$0xf]
        %v5178 = vld [vmem:[%s5 + $0x40] sm:$0xf]
        %v5179 = vld [vmem:[%s5 + $0x44] sm:$0xf]
        %v5180 = vld [vmem:[%s5 + $0x48] sm:$0xf]
        %v5181 = vld [vmem:[%s5 + $0x4c] sm:$0xf]
        %v5182 = vld [vmem:[%s5 + $0x50] sm:$0xf]
        %v5183 = vld [vmem:[%s5 + $0x54] sm:$0xf]
        %v5184 = vld [vmem:[%s5 + $0x58] sm:$0xf]
        %v5185 = vld [vmem:[%s5 + $0x5c] sm:$0xf]
        %v5186 = vld [vmem:[%s5 + $0x60] sm:$0xf]
        %v5187 = vld [vmem:[%s5 + $0x64] sm:$0xf]
        %v5188 = vld [vmem:[%s5 + $0x68] sm:$0xf]
        %v5189 = vld [vmem:[%s5 + $0x6c] sm:$0xf]
        %v5190 = vld [vmem:[%s5 + $0x70] sm:$0xf]
        %v5191 = vld [vmem:[%s5 + $0x74] sm:$0xf]
        %v5192 = vld [vmem:[%s5 + $0x78] sm:$0xf]
        %v5193 = vld [vmem:[%s5 + $0x7c] sm:$0xf]
        %v5194 = vld [vmem:[%s5 + $0x80] sm:$0xf]
        %v5195 = vld [vmem:[%s5 + $0x84] sm:$0xf]
        %v5196 = vld [vmem:[%s5 + $0x88] sm:$0xf]
        %v5197 = vld [vmem:[%s5 + $0x8c] sm:$0xf]
        %v5198 = vld [vmem:[%s6] sm:$0x1]
        %v5200 = vlaneseq
        %v5201 = vshrl.u32 %v5200, 7
        %v5202 = vsub.s32 0, %v5201
        %v5203 = vrot.slane %v5198, %v5202
        %v5241 = vunpack.c.l.b16 %v5162
        %v5242 = vunpack.c.l.b16 %v5163
        %v5243 = vunpack.c.l.b16 %v5164
        %v5244 = vunpack.c.l.b16 %v5165
        %v5245 = vunpack.c.l.b16 %v5166
        %v5246 = vunpack.c.l.b16 %v5167
        %v5247 = vunpack.c.l.b16 %v5168
        %v5248 = vunpack.c.l.b16 %v5169
        %v5249 = vunpack.c.l.b16 %v5170
        %v5250 = vunpack.c.l.b16 %v5171
        %v5251 = vunpack.c.l.b16 %v5172
        %v5252 = vunpack.c.l.b16 %v5173
        %v5253 = vunpack.c.l.b16 %v5174
        %v5254 = vunpack.c.l.b16 %v5175
        %v5255 = vunpack.c.l.b16 %v5176
        %v5256 = vunpack.c.l.b16 %v5177
        %v5257 = vunpack.c.l.b16 %v5178
        %v5258 = vunpack.c.l.b16 %v5179
        %v5259 = vunpack.c.l.b16 %v5180
        %v5260 = vunpack.c.l.b16 %v5181
        %v5261 = vunpack.c.l.b16 %v5182
        %v5262 = vunpack.c.l.b16 %v5183
        %v5263 = vunpack.c.l.b16 %v5184
        %v5264 = vunpack.c.l.b16 %v5185
        %v5265 = vunpack.c.l.b16 %v5186
        %v5266 = vunpack.c.l.b16 %v5187
        %v5267 = vunpack.c.l.b16 %v5188
        %v5268 = vunpack.c.l.b16 %v5189
        %v5269 = vunpack.c.l.b16 %v5190
        %v5270 = vunpack.c.l.b16 %v5191
        %v5271 = vunpack.c.l.b16 %v5192
        %v5272 = vunpack.c.l.b16 %v5193
        %v5273 = vunpack.c.l.b16 %v5194
        %v5274 = vunpack.c.l.b16 %v5195
        %v5275 = vunpack.c.l.b16 %v5196
        %v5276 = vunpack.c.l.b16 %v5197
        %v5277 = vpack.c.b16 %v5242, %v5241
        %v5278 = vpack.c.b16 %v5244, %v5243
        %v5279 = vpack.c.b16 %v5246, %v5245
        %v5280 = vpack.c.b16 %v5248, %v5247
        %v5281 = vpack.c.b16 %v5250, %v5249
        %v5282 = vpack.c.b16 %v5252, %v5251
        %v5283 = vpack.c.b16 %v5254, %v5253
        %v5284 = vpack.c.b16 %v5256, %v5255
        %v5285 = vpack.c.b16 %v5258, %v5257
        %v5286 = vpack.c.b16 %v5260, %v5259
        %v5287 = vpack.c.b16 %v5262, %v5261
        %v5288 = vpack.c.b16 %v5264, %v5263
        %v5289 = vpack.c.b16 %v5266, %v5265
        %v5290 = vpack.c.b16 %v5268, %v5267
        %v5291 = vpack.c.b16 %v5270, %v5269
        %v5292 = vpack.c.b16 %v5272, %v5271
        %v5293 = vpack.c.b16 %v5274, %v5273
        %v5294 = vpack.c.b16 %v5276, %v5275
        %v5314 = vsel %vm1875, %v5025, 0
        %v5317 = vsel %vm1875, %v5026, 0
        %v5320 = vsel %vm1875, %v5027, 0
        %v5323 = vsel %vm1875, %v5028, 0
        %5325 = vmatprep.subr.bf16.mxu0 0
        %5326 = vmatpush1.bf16.msra.mxu0 %v5277
        %5327 = vmatprep.subr.bf16.mxu0 0
        %5328 = vmatpush1.bf16.msra.mxu0 %v5278
        %5329 = vmatprep.subr.bf16.mxu0 0
        %5330 = vmatpush1.bf16.msra.mxu0 %v5279
        %5331 = vmatprep.subr.bf16.mxu0 0
        %5332 = vmatpush1.bf16.msra.mxu0 %v5280
        %5333 = vmatprep.subr.bf16.mxu0 0
        %5334 = vmatpush1.bf16.msra.mxu0 %v5281
        %5335 = vmatprep.subr.bf16.mxu0 0
        %5336 = vmatpush1.bf16.msra.mxu0 %v5282
        %5337 = vmatprep.subr.bf16.mxu0 0
        %5338 = vmatpush1.bf16.msra.mxu0 %v5283
        %5339 = vmatprep.subr.bf16.mxu0 0
        %5340 = vmatpush1.bf16.msra.mxu0 %v5284
        %5341 = vmatprep.subr.bf16.mxu0 0
        %5342 = vmatpush1.bf16.msra.mxu0 %v5285
        %5343 = vmatprep.subr.bf16.mxu0 0
        %5344 = vmatpush1.bf16.msra.mxu0 %v5286
        %5345 = vmatprep.subr.bf16.mxu0 0
        %5346 = vmatpush1.bf16.msra.mxu0 %v5287
        %5347 = vmatprep.subr.bf16.mxu0 0
        %5348 = vmatpush1.bf16.msra.mxu0 %v5288
        %5349 = vmatprep.subr.bf16.mxu0 0
        %5350 = vmatpush1.bf16.msra.mxu0 %v5289
        %5351 = vmatprep.subr.bf16.mxu0 0
        %5352 = vmatpush1.bf16.msra.mxu0 %v5290
        %5353 = vmatprep.subr.bf16.mxu0 0
        %5354 = vmatpush1.bf16.msra.mxu0 %v5291
        %5355 = vmatprep.subr.bf16.mxu0 0
        %5356 = vmatpush1.bf16.msra.mxu0 %v5292
        %5357 = vmatprep.mubr.bf16.mxu0 %v5151
        %5358 = vmatmul.mubr.bf16.gmra.mrb[0].mxu0 %v5119
        %v5359 = vpop.f32.mrb[0].mxu0
        %v5360 = vadd.f32 %v5203, %v5359
        %v5361 = vpop.f32.mrb[0].mxu0
        %v5362 = vpop.f32.mrb[0].mxu0
        %v5363 = vadd.f32 %v5203, %v5362
        %v5364 = vpop.f32.mrb[0].mxu0
        %5365 = vmatprep.mubr.bf16.mxu0 %v5154
        %5366 = vmatmul.mubr.bf16.gmra.mrb[0].mxu0 %v5122
        %v5367 = vpop.f32.mrb[0].mxu0
        %v5368 = vadd.f32 %v5203, %v5367
        %v5369 = vpop.f32.mrb[0].mxu0
        %v5370 = vpop.f32.mrb[0].mxu0
        %v5371 = vadd.f32 %v5203, %v5370
        %v5372 = vpop.f32.mrb[0].mxu0
        %5373 = vmatprep.mubr.bf16.mxu0 %v5157
        %5374 = vmatmul.mubr.bf16.gmra.mrb[0].mxu0 %v5125
        %v5375 = vpop.f32.mrb[0].mxu0
        %v5376 = vadd.f32 %v5203, %v5375
        %v5377 = vpop.f32.mrb[0].mxu0
        %v5378 = vpop.f32.mrb[0].mxu0
        %v5379 = vadd.f32 %v5203, %v5378
        %v5380 = vpop.f32.mrb[0].mxu0
        %5381 = vmatprep.mubr.bf16.mxu0 %v5160
        %5382 = vmatmul.mubr.bf16.gmra.mrb[0].mxu0 %v5128
        %v5383 = vpop.f32.mrb[0].mxu0
        %v5384 = vadd.f32 %v5203, %v5383
        %v5385 = vpop.f32.mrb[0].mxu0
        %v5386 = vpop.f32.mrb[0].mxu0
        %v5387 = vadd.f32 %v5203, %v5386
        %v5388 = vpop.f32.mrb[0].mxu0
        %5389 = vdwg.mxu0
        %5390 = vmatprep.subr.bf16.mxu0 0
        %5391 = vmatpush1.bf16.msra.mxu0 %v5293
        %5392 = vmatprep.subr.bf16.mxu0 0
        %5393 = vmatpush1.bf16.msra.mxu0 %v5294
        %5394 = vmatprep.subr.bf16.mxu0 0
        %5395 = vmatpush1.bf16.msra.mxu0 0
        %5396 = vmatprep.subr.bf16.mxu0 0
        %5397 = vmatpush1.bf16.msra.mxu0 0
        %5398 = vmatprep.subr.bf16.mxu0 0
        %5399 = vmatpush1.bf16.msra.mxu0 0
        %5400 = vmatprep.subr.bf16.mxu0 0
        %5401 = vmatpush1.bf16.msra.mxu0 0
        %5402 = vmatprep.subr.bf16.mxu0 0
        %5403 = vmatpush1.bf16.msra.mxu0 0
        %5404 = vmatprep.subr.bf16.mxu0 0
        %5405 = vmatpush1.bf16.msra.mxu0 0
        %5406 = vmatprep.subr.bf16.mxu0 0
        %5407 = vmatpush1.bf16.msra.mxu0 0
        %5408 = vmatprep.subr.bf16.mxu0 0
        %5409 = vmatpush1.bf16.msra.mxu0 0
        %5410 = vmatprep.subr.bf16.mxu0 0
        %5411 = vmatpush1.bf16.msra.mxu0 0
        %5412 = vmatprep.subr.bf16.mxu0 0
        %5413 = vmatpush1.bf16.msra.mxu0 0
        %5414 = vmatprep.subr.bf16.mxu0 0
        %5415 = vmatpush1.bf16.msra.mxu0 0
        %5416 = vmatprep.subr.bf16.mxu0 0
        %5417 = vmatpush1.bf16.msra.mxu0 0
        %5418 = vmatprep.subr.bf16.mxu0 0
        %5419 = vmatpush1.bf16.msra.mxu0 0
        %5420 = vmatprep.subr.bf16.mxu0 0
        %5421 = vmatpush1.bf16.msra.mxu0 0
        %5422 = vmatprep.mubr.bf16.mxu0 0
        %5423 = vmatmul.mubr.bf16.gmra.mrb[0].mxu0 %v5314
        %v5424 = vpop.f32.mrb[0].mxu0
        %v5425 = vadd.f32 %v5360, %v5424
        %v5426 = vpop.f32.mrb[0].mxu0
        %v5427 = vpop.f32.mrb[0].mxu0
        %v5428 = vadd.f32 %v5363, %v5427
        %v5429 = vpop.f32.mrb[0].mxu0
        %5430 = vmatprep.mubr.bf16.mxu0 0
        %5431 = vmatmul.mubr.bf16.gmra.mrb[0].mxu0 %v5317
        %v5432 = vpop.f32.mrb[0].mxu0
        %v5433 = vadd.f32 %v5368, %v5432
        %v5434 = vpop.f32.mrb[0].mxu0
        %v5435 = vpop.f32.mrb[0].mxu0
        %v5436 = vadd.f32 %v5371, %v5435
        %v5437 = vpop.f32.mrb[0].mxu0
        %5438 = vmatprep.mubr.bf16.mxu0 0
        %5439 = vmatmul.mubr.bf16.gmra.mrb[0].mxu0 %v5320
        %v5440 = vpop.f32.mrb[0].mxu0
        %v5441 = vadd.f32 %v5376, %v5440
        %v5442 = vpop.f32.mrb[0].mxu0
        %v5443 = vpop.f32.mrb[0].mxu0
        %v5444 = vadd.f32 %v5379, %v5443
        %v5445 = vpop.f32.mrb[0].mxu0
        %5446 = vmatprep.mubr.bf16.mxu0 0
        %5447 = vmatmul.mubr.bf16.gmra.mrb[0].mxu0 %v5323
        %v5448 = vpop.f32.mrb[0].mxu0
        %v5449 = vadd.f32 %v5384, %v5448
        %v5450 = vpop.f32.mrb[0].mxu0
        %v5451 = vpop.f32.mrb[0].mxu0
        %v5452 = vadd.f32 %v5387, %v5451
        %v5453 = vpop.f32.mrb[0].mxu0
        %5454 = vdwg.mxu0
        %v5455 = vmax.f32 %v5425, 0.0
        %v5456 = vmax.f32 %v5428, 0.0
        %v5457 = vmax.f32 %v5433, 0.0
        %v5458 = vmax.f32 %v5436, 0.0
        %v5459 = vmax.f32 %v5441, 0.0
        %v5460 = vmax.f32 %v5444, 0.0
        %v5461 = vmax.f32 %v5449, 0.0
        %v5462 = vmax.f32 %v5452, 0.0
        %5463 = vst.msk [vmem:[#allocation2] sm:$0xff] %vm1875, %v5455
        %5464 = vst.msk [vmem:[#allocation2 + $0x8] sm:$0xff] %vm1875, %v5456
        %5465 = vst.msk [vmem:[#allocation2 + $0x10] sm:$0xff] %vm1875, %v5457
        %5466 = vst.msk [vmem:[#allocation2 + $0x18] sm:$0xff] %vm1875, %v5458
        %5467 = vst.msk [vmem:[#allocation2 + $0x20] sm:$0xff] %vm1875, %v5459
        %5468 = vst.msk [vmem:[#allocation2 + $0x28] sm:$0xff] %vm1875, %v5460
        %5469 = vst.msk [vmem:[#allocation2 + $0x30] sm:$0xff] %vm1875, %v5461
        %5470 = vst.msk [vmem:[#allocation2 + $0x38] sm:$0xff] %vm1875, %v5462
        %5471 = vst.msk [vmem:[#allocation5] sm:$0xff] %vm1875, 0.0
        %5472 = vst.msk [vmem:[#allocation5 + $0x8] sm:$0xff] %vm1875, 0.0
        %5473 = vst.msk [vmem:[#allocation5 + $0x10] sm:$0xff] %vm1875, 0.0
        %5474 = vst.msk [vmem:[#allocation5 + $0x18] sm:$0x3] %vm2040, 0.0
        %v5475 = vld [vmem:[#allocation2] ss:$2 sm:$0xf]
        %v5476 = vld [vmem:[%s2045] ss:$2 sm:$0xf]
        %v5477 = vmax.f32 %v5475, %v5476
        %s5478 = scalar_lea.vmem [#allocation2], 8
        %v5479 = vld [vmem:[%s5478] ss:$2 sm:$0xf]
        %s5480 = scalar_lea.vmem [#allocation2], 9
        %v5481 = vld [vmem:[%s5480] ss:$2 sm:$0xf]
        %v5482 = vmax.f32 %v5479, %v5481
        %v5483 = vmax.f32 %v5477, %v5482
        %vm5484 = vcmask 257024
        %5485 = vst.msk [vmem:[#allocation5 + $0x5] sm:$0xf] %vm5484, %v5483
        %v5486 = vld [vmem:[%s2043] ss:$2 sm:$0xf]
        %v5487 = vld [vmem:[%s2047] ss:$2 sm:$0xf]
        %v5488 = vmax.f32 %v5486, %v5487
        %s5489 = scalar_lea.vmem [#allocation2], 24
        %v5490 = vld [vmem:[%s5489] ss:$2 sm:$0xf]
        %s5491 = scalar_lea.vmem [#allocation2], 25
        %v5492 = vld [vmem:[%s5491] ss:$2 sm:$0xf]
        %v5493 = vmax.f32 %v5490, %v5492
        %v5494 = vmax.f32 %v5488, %v5493
        %5495 = vst.msk [vmem:[#allocation5 + $0x9] sm:$0xf] %vm5484, %v5494
        %v5496 = vld [vmem:[%s2051] ss:$2 sm:$0xf]
        %v5497 = vld [vmem:[%s2055] ss:$2 sm:$0xf]
        %v5498 = vmax.f32 %v5496, %v5497
        %s5499 = scalar_lea.vmem [#allocation2], 40
        %v5500 = vld [vmem:[%s5499] ss:$2 sm:$0xf]
        %s5501 = scalar_lea.vmem [#allocation2], 41
        %v5502 = vld [vmem:[%s5501] ss:$2 sm:$0xf]
        %v5503 = vmax.f32 %v5500, %v5502
        %v5504 = vmax.f32 %v5498, %v5503
        %5505 = vst.msk [vmem:[#allocation5 + $0xd] sm:$0xf] %vm5484, %v5504
        %v5506 = vld [vmem:[%s2053] ss:$2 sm:$0xf]
        %v5507 = vld [vmem:[%s2057] ss:$2 sm:$0xf]
        %v5508 = vmax.f32 %v5506, %v5507
        %s5509 = scalar_lea.vmem [#allocation2], 56
        %v5510 = vld [vmem:[%s5509] ss:$2 sm:$0xf]
        %s5511 = scalar_lea.vmem [#allocation2], 57
        %v5512 = vld [vmem:[%s5511] ss:$2 sm:$0xf]
        %v5513 = vmax.f32 %v5510, %v5512
        %v5514 = vmax.f32 %v5508, %v5513
        %5515 = vst.msk [vmem:[#allocation5 + $0x11] sm:$0xf] %vm5484, %v5514
        %vm5516 = vcmp.lt.s32.totalorder %v2426, 0
        %v5517 = vsub.s32 0, %v2426
        %v5518 = vsel %vm5516, %v5517, %v2426
        %v5519 = vshrl.u32 %v5518, 2
        %v5520 = vand.u32 %v5518, 3
        %v5521 = vsub.s32 0, %v5520
        %v5522 = vsel %vm5516, %v5521, %v5520
        %vm5523 = vcmp.lt.s32.totalorder %v2427, 0
        %v5524 = vsub.s32 0, %v2427
        %v5525 = vsel %vm5523, %v5524, %v2427
        %v5526 = vshrl.u32 %v5525, 2
        %v5527 = vand.u32 %v5525, 3
        %v5528 = vsub.s32 0, %v5527
        %v5529 = vsel %vm5523, %v5528, %v5527
        %vm5530 = vcmp.ne.s32.totalorder %v5522, 0
        %vm5531 = vcmp.ne.s32.totalorder %v5529, 0
        %vm5532 = vcmp.lt.s32.totalorder %v5522, 0
        %vm5533 = vcmp.lt.s32.totalorder %v5529, 0
        %vm5534 = vmand %vm5532, %vm5530
        %vm5535 = vmand %vm5533, %vm5531
        %v5536 = vadd.s32 %v5522, 4
        %v5537 = vadd.s32 %v5529, 4
        %v5538 = vsel %vm5534, %v5536, %v5522
        %v5539 = vsel %vm5535, %v5537, %v5529
        %vm5540 = vcmp.gt.s32.totalorder %v5538, 0
        %vm5541 = vcmp.gt.s32.totalorder %v5539, 0
        %vm5542 = vcmp.lt.s32.totalorder %v5538, 3
        %vm5543 = vcmp.lt.s32.totalorder %v5539, 3
        %v5544 = vld [vmem:[#allocation5] sm:$0xff]
        %v5545 = vld [vmem:[#allocation5 + $0x8] sm:$0xff]
        %v5546 = vpack.c.bf16 %v5545, %v5544
        %v5547 = vsel %vm5540, 1, 0
        %v5548 = vsel %vm5541, 1, 0
        %vm5549 = vcmp.eq.s32.totalorder %v5547, 1
        %vm5550 = vcmp.eq.s32.totalorder %v5548, 1
        %vm5551 = vmpackc.low %vm5549, %vm5549
        %vm5552 = vmpackc.low %vm5550, %vm5550
        %v5553 = vsel %vm5551, 65537, 0
        %v5554 = vsel %vm5552, 65537, 0
        %v5555 = vunpack.c.l.b16 %v5553
        %v5556 = vunpack.c.l.b16 %v5554
        %v5557 = vpack.c.b16 %v5556, %v5555
        %vm5558 = vcmp.ne.s16.totalorder %v5557, 0
        %v5559 = vsel %vm5558, %v5546, 0
        %v5560 = vld [vmem:[#allocation5 + $0x1] sm:$0xff]
        %v5561 = vld [vmem:[#allocation5 + $0x9] sm:$0xff]
        %v5562 = vpack.c.bf16 %v5561, %v5560
        %v5563 = vld [vmem:[#allocation5 + $0x2] sm:$0xff]
        %v5564 = vld [vmem:[#allocation5 + $0xa] sm:$0xff]
        %v5565 = vpack.c.bf16 %v5564, %v5563
        %v5566 = vsel %vm5542, 1, 0
        %v5567 = vsel %vm5543, 1, 0
        %vm5568 = vcmp.eq.s32.totalorder %v5566, 1
        %vm5569 = vcmp.eq.s32.totalorder %v5567, 1
        %vm5570 = vmpackc.low %vm5568, %vm5568
        %vm5571 = vmpackc.low %vm5569, %vm5569
        %v5572 = vsel %vm5570, 65537, 0
        %v5573 = vsel %vm5571, 65537, 0
        %v5574 = vunpack.c.l.b16 %v5572
        %v5575 = vunpack.c.l.b16 %v5573
        %v5576 = vpack.c.b16 %v5575, %v5574
        %vm5577 = vcmp.ne.s16.totalorder %v5576, 0
        %v5578 = vsel %vm5577, %v5565, 0
        %v5579 = vld [vmem:[#allocation5 + $0x4] sm:$0xff]
        %v5580 = vld [vmem:[#allocation5 + $0xc] sm:$0xff]
        %v5581 = vpack.c.bf16 %v5580, %v5579
        %v5582 = vsel %vm5558, %v5581, 0
        %v5583 = vld [vmem:[#allocation5 + $0x5] sm:$0xff]
        %v5584 = vld [vmem:[#allocation5 + $0xd] sm:$0xff]
        %v5585 = vpack.c.bf16 %v5584, %v5583
        %v5586 = vld [vmem:[#allocation5 + $0x6] sm:$0xff]
        %v5587 = vld [vmem:[#allocation5 + $0xe] sm:$0xff]
        %v5588 = vpack.c.bf16 %v5587, %v5586
        %v5589 = vsel %vm5577, %v5588, 0
        %v5590 = vld [vmem:[#allocation5 + $0x10] sm:$0xff]
        %v5591 = vpack.c.bf16 %v5590, %v5545
        %v5592 = vsel %vm5558, %v5591, 0
        %v5593 = vld [vmem:[#allocation5 + $0x11] sm:$0xff]
        %v5594 = vpack.c.bf16 %v5593, %v5561
        %v5595 = vld [vmem:[#allocation5 + $0x12] sm:$0xff]
        %v5596 = vpack.c.bf16 %v5595, %v5564
        %v5597 = vsel %vm5577, %v5596, 0
        %5599 = vrot.lane.b32.xlu0 %v5562, 32
        %v5600 = vpop.permute.xlu0 %5599
        %5602 = vrot.lane.b32.xlu0 %v5578, 64
        %v5603 = vpop.permute.xlu0 %5602
        %5605 = vrot.lane.b32.xlu0 %v5582, 96
        %v5606 = vpop.permute.xlu0 %5605
        %5608 = vrot.lane.b32.xlu0 %v5589, 32
        %v5609 = vpop.permute.xlu0 %5608
        %5611 = vrot.lane.b32.xlu0 %v5592, 64
        %v5612 = vpop.permute.xlu0 %5611
        %5614 = vrot.lane.b32.xlu0 %v5594, 96
        %v5615 = vpop.permute.xlu0 %5614
        %v5618 = vsel %vm1875, %v5559, %v5600
        %v5620 = vsel %vm3870, %v5618, %v5603
        %v5622 = vsel %vm3903, %v5620, %v5606
        %v5626 = vsel %vm1875, %v5585, %v5609
        %v5628 = vsel %vm3870, %v5626, %v5612
        %v5630 = vsel %vm3903, %v5628, %v5615
        %v5632 = vld [vmem:[%s7] sm:$0xf]
        %v5633 = vld [vmem:[%s7 + $0x4] sm:$0xf]
        %v5634 = vld [vmem:[%s7 + $0x8] sm:$0xf]
        %v5635 = vld [vmem:[%s7 + $0xc] sm:$0xf]
        %v5636 = vld [vmem:[%s7 + $0x10] sm:$0xf]
        %v5637 = vld [vmem:[%s7 + $0x14] sm:$0xf]
        %v5638 = vld [vmem:[%s7 + $0x18] sm:$0xf]
        %v5639 = vld [vmem:[%s7 + $0x1c] sm:$0xf]
        %v5640 = vld [vmem:[%s7 + $0x20] sm:$0xf]
        %v5641 = vld [vmem:[%s7 + $0x24] sm:$0xf]
        %v5642 = vld [vmem:[%s7 + $0x28] sm:$0xf]
        %v5643 = vld [vmem:[%s7 + $0x2c] sm:$0xf]
        %v5644 = vld [vmem:[%s7 + $0x30] sm:$0xf]
        %v5645 = vld [vmem:[%s7 + $0x34] sm:$0xf]
        %v5646 = vld [vmem:[%s7 + $0x38] sm:$0xf]
        %v5647 = vld [vmem:[%s7 + $0x3c] sm:$0xf]
        %v5648 = vld [vmem:[%s7 + $0x40] sm:$0xf]
        %v5649 = vld [vmem:[%s7 + $0x44] sm:$0xf]
        %v5650 = vld [vmem:[%s7 + $0x48] sm:$0xf]
        %v5651 = vld [vmem:[%s7 + $0x4c] sm:$0xf]
        %v5652 = vld [vmem:[%s7 + $0x50] sm:$0xf]
        %v5653 = vld [vmem:[%s7 + $0x54] sm:$0xf]
        %v5654 = vld [vmem:[%s7 + $0x58] sm:$0xf]
        %v5655 = vld [vmem:[%s7 + $0x5c] sm:$0xf]
        %v5656 = vld [vmem:[%s7 + $0x60] sm:$0xf]
        %v5657 = vld [vmem:[%s7 + $0x64] sm:$0xf]
        %v5658 = vld [vmem:[%s7 + $0x68] sm:$0xf]
        %v5659 = vld [vmem:[%s7 + $0x6c] sm:$0xf]
        %v5660 = vld [vmem:[%s7 + $0x70] sm:$0xf]
        %v5661 = vld [vmem:[%s7 + $0x74] sm:$0xf]
        %v5662 = vld [vmem:[%s7 + $0x78] sm:$0xf]
        %v5663 = vld [vmem:[%s7 + $0x7c] sm:$0xf]
        %v5664 = vld [vmem:[%s7 + $0x80] sm:$0xf]
        %v5665 = vld [vmem:[%s7 + $0x84] sm:$0xf]
        %v5666 = vld [vmem:[%s7 + $0x88] sm:$0xf]
        %v5667 = vld [vmem:[%s7 + $0x8c] sm:$0xf]
        %v5668 = vld [vmem:[%s8] sm:$0x1]
        %v5670 = vlaneseq
        %v5671 = vshrl.u32 %v5670, 7
        %v5672 = vsub.s32 0, %v5671
        %v5673 = vrot.slane %v5668, %v5672
        %v5711 = vunpack.c.l.b16 %v5632
        %v5712 = vunpack.c.l.b16 %v5633
        %v5713 = vunpack.c.l.b16 %v5634
        %v5714 = vunpack.c.l.b16 %v5635
        %v5715 = vunpack.c.l.b16 %v5636
        %v5716 = vunpack.c.l.b16 %v5637
        %v5717 = vunpack.c.l.b16 %v5638
        %v5718 = vunpack.c.l.b16 %v5639
        %v5719 = vunpack.c.l.b16 %v5640
        %v5720 = vunpack.c.l.b16 %v5641
        %v5721 = vunpack.c.l.b16 %v5642
        %v5722 = vunpack.c.l.b16 %v5643
        %v5723 = vunpack.c.l.b16 %v5644
        %v5724 = vunpack.c.l.b16 %v5645
        %v5725 = vunpack.c.l.b16 %v5646
        %v5726 = vunpack.c.l.b16 %v5647
        %v5727 = vunpack.c.l.b16 %v5648
        %v5728 = vunpack.c.l.b16 %v5649
        %v5729 = vunpack.c.l.b16 %v5650
        %v5730 = vunpack.c.l.b16 %v5651
        %v5731 = vunpack.c.l.b16 %v5652
        %v5732 = vunpack.c.l.b16 %v5653
        %v5733 = vunpack.c.l.b16 %v5654
        %v5734 = vunpack.c.l.b16 %v5655
        %v5735 = vunpack.c.l.b16 %v5656
        %v5736 = vunpack.c.l.b16 %v5657
        %v5737 = vunpack.c.l.b16 %v5658
        %v5738 = vunpack.c.l.b16 %v5659
        %v5739 = vunpack.c.l.b16 %v5660
        %v5740 = vunpack.c.l.b16 %v5661
        %v5741 = vunpack.c.l.b16 %v5662
        %v5742 = vunpack.c.l.b16 %v5663
        %v5743 = vunpack.c.l.b16 %v5664
        %v5744 = vunpack.c.l.b16 %v5665
        %v5745 = vunpack.c.l.b16 %v5666
        %v5746 = vunpack.c.l.b16 %v5667
        %v5747 = vpack.c.b16 %v5712, %v5711
        %v5748 = vpack.c.b16 %v5714, %v5713
        %v5749 = vpack.c.b16 %v5716, %v5715
        %v5750 = vpack.c.b16 %v5718, %v5717
        %v5751 = vpack.c.b16 %v5720, %v5719
        %v5752 = vpack.c.b16 %v5722, %v5721
        %v5753 = vpack.c.b16 %v5724, %v5723
        %v5754 = vpack.c.b16 %v5726, %v5725
        %v5755 = vpack.c.b16 %v5728, %v5727
        %v5756 = vpack.c.b16 %v5730, %v5729
        %v5757 = vpack.c.b16 %v5732, %v5731
        %v5758 = vpack.c.b16 %v5734, %v5733
        %v5759 = vpack.c.b16 %v5736, %v5735
        %v5760 = vpack.c.b16 %v5738, %v5737
        %v5761 = vpack.c.b16 %v5740, %v5739
        %v5762 = vpack.c.b16 %v5742, %v5741
        %v5763 = vpack.c.b16 %v5744, %v5743
        %v5764 = vpack.c.b16 %v5746, %v5745
        %v5784 = vsel %vm1875, %v5597, 0
        %5786 = vmatprep.subr.bf16.mxu0 0
        %5787 = vmatpush1.bf16.msra.mxu0 %v5747
        %5788 = vmatprep.subr.bf16.mxu0 0
        %5789 = vmatpush1.bf16.msra.mxu0 %v5748
        %5790 = vmatprep.subr.bf16.mxu0 0
        %5791 = vmatpush1.bf16.msra.mxu0 %v5749
        %5792 = vmatprep.subr.bf16.mxu0 0
        %5793 = vmatpush1.bf16.msra.mxu0 %v5750
        %5794 = vmatprep.subr.bf16.mxu0 0
        %5795 = vmatpush1.bf16.msra.mxu0 %v5751
        %5796 = vmatprep.subr.bf16.mxu0 0
        %5797 = vmatpush1.bf16.msra.mxu0 %v5752
        %5798 = vmatprep.subr.bf16.mxu0 0
        %5799 = vmatpush1.bf16.msra.mxu0 %v5753
        %5800 = vmatprep.subr.bf16.mxu0 0
        %5801 = vmatpush1.bf16.msra.mxu0 %v5754
        %5802 = vmatprep.subr.bf16.mxu0 0
        %5803 = vmatpush1.bf16.msra.mxu0 %v5755
        %5804 = vmatprep.subr.bf16.mxu0 0
        %5805 = vmatpush1.bf16.msra.mxu0 %v5756
        %5806 = vmatprep.subr.bf16.mxu0 0
        %5807 = vmatpush1.bf16.msra.mxu0 %v5757
        %5808 = vmatprep.subr.bf16.mxu0 0
        %5809 = vmatpush1.bf16.msra.mxu0 %v5758
        %5810 = vmatprep.subr.bf16.mxu0 0
        %5811 = vmatpush1.bf16.msra.mxu0 %v5759
        %5812 = vmatprep.subr.bf16.mxu0 0
        %5813 = vmatpush1.bf16.msra.mxu0 %v5760
        %5814 = vmatprep.subr.bf16.mxu0 0
        %5815 = vmatpush1.bf16.msra.mxu0 %v5761
        %5816 = vmatprep.subr.bf16.mxu0 0
        %5817 = vmatpush1.bf16.msra.mxu0 %v5762
        %5818 = vmatprep.mubr.bf16.mxu0 %v5630
        %5819 = vmatmul.mubr.bf16.gmra.mrb[0].mxu0 %v5622
        %v5820 = vpop.f32.mrb[0].mxu0
        %v5821 = vadd.f32 %v5673, %v5820
        %v5822 = vpop.f32.mrb[0].mxu0
        %v5823 = vpop.f32.mrb[0].mxu0
        %v5824 = vadd.f32 %v5673, %v5823
        %v5825 = vpop.f32.mrb[0].mxu0
        %5826 = vdwg.mxu0
        %5827 = vmatprep.subr.bf16.mxu0 0
        %5828 = vmatpush1.bf16.msra.mxu0 %v5763
        %5829 = vmatprep.subr.bf16.mxu0 0
        %5830 = vmatpush1.bf16.msra.mxu0 %v5764
        %5831 = vmatprep.subr.bf16.mxu0 0
        %5832 = vmatpush1.bf16.msra.mxu0 0
        %5833 = vmatprep.subr.bf16.mxu0 0
        %5834 = vmatpush1.bf16.msra.mxu0 0
        %5835 = vmatprep.subr.bf16.mxu0 0
        %5836 = vmatpush1.bf16.msra.mxu0 0
        %5837 = vmatprep.subr.bf16.mxu0 0
        %5838 = vmatpush1.bf16.msra.mxu0 0
        %5839 = vmatprep.subr.bf16.mxu0 0
        %5840 = vmatpush1.bf16.msra.mxu0 0
        %5841 = vmatprep.subr.bf16.mxu0 0
        %5842 = vmatpush1.bf16.msra.mxu0 0
        %5843 = vmatprep.subr.bf16.mxu0 0
        %5844 = vmatpush1.bf16.msra.mxu0 0
        %5845 = vmatprep.subr.bf16.mxu0 0
        %5846 = vmatpush1.bf16.msra.mxu0 0
        %5847 = vmatprep.subr.bf16.mxu0 0
        %5848 = vmatpush1.bf16.msra.mxu0 0
        %5849 = vmatprep.subr.bf16.mxu0 0
        %5850 = vmatpush1.bf16.msra.mxu0 0
        %5851 = vmatprep.subr.bf16.mxu0 0
        %5852 = vmatpush1.bf16.msra.mxu0 0
        %5853 = vmatprep.subr.bf16.mxu0 0
        %5854 = vmatpush1.bf16.msra.mxu0 0
        %5855 = vmatprep.subr.bf16.mxu0 0
        %5856 = vmatpush1.bf16.msra.mxu0 0
        %5857 = vmatprep.subr.bf16.mxu0 0
        %5858 = vmatpush1.bf16.msra.mxu0 0
        %5859 = vmatprep.mubr.bf16.mxu0 0
        %5860 = vmatmul.mubr.bf16.gmra.mrb[0].mxu0 %v5784
        %v5861 = vpop.f32.mrb[0].mxu0
        %v5862 = vadd.f32 %v5821, %v5861
        %v5863 = vpop.f32.mrb[0].mxu0
        %v5864 = vpop.f32.mrb[0].mxu0
        %v5865 = vadd.f32 %v5824, %v5864
        %v5866 = vpop.f32.mrb[0].mxu0
        %5867 = vdwg.mxu0
        %v5868 = vmax.f32 %v5862, 0.0
        %v5869 = vmax.f32 %v5865, 0.0
        %5870 = vst.msk [vmem:[#allocation2] sm:$0xff] %vm1875, %v5868
        %5871 = vst.msk [vmem:[#allocation2 + $0x8] sm:$0xff] %vm1875, %v5869
        %v5872 = vld [vmem:[#allocation2] ss:$2 sm:$0x3]
        %v5873 = vld [vmem:[%s2045] ss:$2 sm:$0x3]
        %v5874 = vmax.f32 %v5872, %v5873
        %s5875 = scalar_lea.vmem [#allocation2], 4
        %v5876 = vld [vmem:[%s5875] ss:$2 sm:$0x3]
        %s5877 = scalar_lea.vmem [#allocation2], 5
        %v5878 = vld [vmem:[%s5877] ss:$2 sm:$0x3]
        %v5879 = vmax.f32 %v5876, %v5878
        %v5880 = vmax.f32 %v5874, %v5879
        %5881 = vst.msk [vmem:[#allocation6] sm:$0x3] %vm2040, %v5880
        %v5882 = vld [vmem:[%s5478] ss:$2 sm:$0x3]
        %v5883 = vld [vmem:[%s5480] ss:$2 sm:$0x3]
        %v5884 = vmax.f32 %v5882, %v5883
        %s5885 = scalar_lea.vmem [#allocation2], 12
        %v5886 = vld [vmem:[%s5885] ss:$2 sm:$0x3]
        %s5887 = scalar_lea.vmem [#allocation2], 13
        %v5888 = vld [vmem:[%s5887] ss:$2 sm:$0x3]
        %v5889 = vmax.f32 %v5886, %v5888
        %v5890 = vmax.f32 %v5884, %v5889
        %5891 = vst.msk [vmem:[#allocation6 + $0x2] sm:$0x3] %vm2040, %v5890
        %v5892 = vld [vmem:[#allocation6] sm:$0x1]
        %v5893 = vld [vmem:[#allocation6 + $0x1] sm:$0x1]
        %v5894 = vld [vmem:[#allocation6 + $0x2] sm:$0x1]
        %v5895 = vld [vmem:[#allocation6 + $0x3] sm:$0x1]
        %5897 = vrot.lane.b32.xlu0 %v5893, 32
        %v5898 = vpop.permute.xlu0 %5897
        %5901 = vrot.lane.b32.xlu0 %v5894, 64
        %v5902 = vpop.permute.xlu0 %5901
        %5905 = vrot.lane.b32.xlu0 %v5895, 96
        %v5906 = vpop.permute.xlu0 %5905
        %v5908 = vsel %vm1875, %v5892, %v5898
        %v5909 = vsel %vm3870, %v5908, %v5902
        %v5910 = vsel %vm3903, %v5909, %v5906
        %v5911 = vld [vmem:[%s9] sm:$0xff]
        %v5912 = vld [vmem:[%s9 + $0x8] sm:$0xff]
        %v5913 = vld [vmem:[%s9 + $0x10] sm:$0xff]
        %v5914 = vld [vmem:[%s9 + $0x18] sm:$0xff]
        %v5915 = vld [vmem:[%s9 + $0x20] sm:$0xff]
        %v5916 = vld [vmem:[%s9 + $0x28] sm:$0xff]
        %v5917 = vld [vmem:[%s9 + $0x30] sm:$0xff]
        %v5918 = vld [vmem:[%s9 + $0x38] sm:$0xff]
        %v5919 = vld [vmem:[%s9 + $0x40] sm:$0xff]
        %v5920 = vld [vmem:[%s9 + $0x48] sm:$0xff]
        %v5921 = vld [vmem:[%s9 + $0x50] sm:$0xff]
        %v5922 = vld [vmem:[%s9 + $0x58] sm:$0xff]
        %v5923 = vld [vmem:[%s9 + $0x60] sm:$0xff]
        %v5924 = vld [vmem:[%s9 + $0x68] sm:$0xff]
        %v5925 = vld [vmem:[%s9 + $0x70] sm:$0xff]
        %v5926 = vld [vmem:[%s9 + $0x78] sm:$0xff]
        %v5927 = vld [vmem:[%s10] sm:$0x1]
        %5928 = vmatprep.subr.mxu0 0.0
        %5929 = vmatpush1.msra.mxu0 %v5911
        %5930 = vmatprep.subr.mxu0 0.0
        %5931 = vmatpush1.msra.mxu0 %v5912
        %5932 = vmatprep.subr.mxu0 0.0
        %5933 = vmatpush1.msra.mxu0 %v5913
        %5934 = vmatprep.subr.mxu0 0.0
        %5935 = vmatpush1.msra.mxu0 %v5914
        %5936 = vmatprep.subr.mxu0 0.0
        %5937 = vmatpush1.msra.mxu0 %v5915
        %5938 = vmatprep.subr.mxu0 0.0
        %5939 = vmatpush1.msra.mxu0 %v5916
        %5940 = vmatprep.subr.mxu0 0.0
        %5941 = vmatpush1.msra.mxu0 %v5917
        %5942 = vmatprep.subr.mxu0 0.0
        %5943 = vmatpush1.msra.mxu0 %v5918
        %5944 = vmatprep.subr.mxu0 0.0
        %5945 = vmatpush1.msra.mxu0 %v5919
        %5946 = vmatprep.subr.mxu0 0.0
        %5947 = vmatpush1.msra.mxu0 %v5920
        %5948 = vmatprep.subr.mxu0 0.0
        %5949 = vmatpush1.msra.mxu0 %v5921
        %5950 = vmatprep.subr.mxu0 0.0
        %5951 = vmatpush1.msra.mxu0 %v5922
        %5952 = vmatprep.subr.mxu0 0.0
        %5953 = vmatpush1.msra.mxu0 %v5923
        %5954 = vmatprep.subr.mxu0 0.0
        %5955 = vmatpush1.msra.mxu0 %v5924
        %5956 = vmatprep.subr.mxu0 0.0
        %5957 = vmatpush1.msra.mxu0 %v5925
        %5958 = vmatprep.subr.mxu0 0.0
        %5959 = vmatpush1.msra.mxu0 %v5926
        %5960 = vmatprep.subr.mxu0 0.0
        %5961 = vmatpush1.msra.mxu0 0.0
        %5962 = vmatprep.subr.mxu0 0.0
        %5963 = vmatpush1.msra.mxu0 0.0
        %5964 = vmatprep.subr.mxu0 0.0
        %5965 = vmatpush1.msra.mxu0 0.0
        %5966 = vmatprep.subr.mxu0 0.0
        %5967 = vmatpush1.msra.mxu0 0.0
        %5968 = vmatprep.subr.mxu0 0.0
        %5969 = vmatpush1.msra.mxu0 0.0
        %5970 = vmatprep.subr.mxu0 0.0
        %5971 = vmatpush1.msra.mxu0 0.0
        %5972 = vmatprep.subr.mxu0 0.0
        %5973 = vmatpush1.msra.mxu0 0.0
        %5974 = vmatprep.subr.mxu0 0.0
        %5975 = vmatpush1.msra.mxu0 0.0
        %5976 = vmatprep.subr.mxu0 0.0
        %5977 = vmatpush1.msra.mxu0 0.0
        %5978 = vmatprep.subr.mxu0 0.0
        %5979 = vmatpush1.msra.mxu0 0.0
        %5980 = vmatprep.subr.mxu0 0.0
        %5981 = vmatpush1.msra.mxu0 0.0
        %5982 = vmatprep.subr.mxu0 0.0
        %5983 = vmatpush1.msra.mxu0 0.0
        %5984 = vmatprep.subr.mxu0 0.0
        %5985 = vmatpush1.msra.mxu0 0.0
        %5986 = vmatprep.subr.mxu0 0.0
        %5987 = vmatpush1.msra.mxu0 0.0
        %5988 = vmatprep.subr.mxu0 0.0
        %5989 = vmatpush1.msra.mxu0 0.0
        %5990 = vmatprep.subr.mxu0 0.0
        %5991 = vmatpush1.msra.mxu0 0.0
        %5992 = vmatprep.mubr.f32.mxu0 0.0
        %5993 = vmatmul.mubr.f32.gmra.mrb[0].mxu0 %v5910
        %v5994 = vpop.f32.mrb[0].mxu0
        %v5995 = vadd.f32 %v5927, %v5994
        %v5996 = vpop.f32.mrb[0].mxu0
        %5997 = vdwg.mxu0
        %v5998 = vld [vmem:[%s11] sm:$0xff]
        %v5999 = vld [vmem:[%s11 + $0x8] sm:$0xff]
        %v6000 = vld [vmem:[%s11 + $0x10] sm:$0xff]
        %v6001 = vld [vmem:[%s11 + $0x18] sm:$0xff]
        %v6002 = vld [vmem:[%s11 + $0x20] sm:$0xff]
        %v6003 = vld [vmem:[%s11 + $0x28] sm:$0xff]
        %v6004 = vld [vmem:[%s11 + $0x30] sm:$0xff]
        %v6005 = vld [vmem:[%s11 + $0x38] sm:$0xff]
        %v6006 = vld [vmem:[%s11 + $0x40] sm:$0xff]
        %v6007 = vld [vmem:[%s11 + $0x48] sm:$0xff]
        %v6008 = vld [vmem:[%s11 + $0x50] sm:$0xff]
        %v6009 = vld [vmem:[%s11 + $0x58] sm:$0xff]
        %v6010 = vld [vmem:[%s11 + $0x60] sm:$0xff]
        %v6011 = vld [vmem:[%s11 + $0x68] sm:$0xff]
        %v6012 = vld [vmem:[%s11 + $0x70] sm:$0xff]
        %v6013 = vld [vmem:[%s11 + $0x78] sm:$0xff]
        %v6014 = vld [vmem:[%s12] sm:$0x1]
        %6015 = vmatprep.subr.mxu0 0.0
        %6016 = vmatpush1.msra.mxu0 %v5998
        %6017 = vmatprep.subr.mxu0 0.0
        %6018 = vmatpush1.msra.mxu0 %v5999
        %6019 = vmatprep.subr.mxu0 0.0
        %6020 = vmatpush1.msra.mxu0 %v6000
        %6021 = vmatprep.subr.mxu0 0.0
        %6022 = vmatpush1.msra.mxu0 %v6001
        %6023 = vmatprep.subr.mxu0 0.0
        %6024 = vmatpush1.msra.mxu0 %v6002
        %6025 = vmatprep.subr.mxu0 0.0
        %6026 = vmatpush1.msra.mxu0 %v6003
        %6027 = vmatprep.subr.mxu0 0.0
        %6028 = vmatpush1.msra.mxu0 %v6004
        %6029 = vmatprep.subr.mxu0 0.0
        %6030 = vmatpush1.msra.mxu0 %v6005
        %6031 = vmatprep.subr.mxu0 0.0
        %6032 = vmatpush1.msra.mxu0 %v6006
        %6033 = vmatprep.subr.mxu0 0.0
        %6034 = vmatpush1.msra.mxu0 %v6007
        %6035 = vmatprep.subr.mxu0 0.0
        %6036 = vmatpush1.msra.mxu0 %v6008
        %6037 = vmatprep.subr.mxu0 0.0
        %6038 = vmatpush1.msra.mxu0 %v6009
        %6039 = vmatprep.subr.mxu0 0.0
        %6040 = vmatpush1.msra.mxu0 %v6010
        %6041 = vmatprep.subr.mxu0 0.0
        %6042 = vmatpush1.msra.mxu0 %v6011
        %6043 = vmatprep.subr.mxu0 0.0
        %6044 = vmatpush1.msra.mxu0 %v6012
        %6045 = vmatprep.subr.mxu0 0.0
        %6046 = vmatpush1.msra.mxu0 %v6013
        %6047 = vmatprep.subr.mxu0 0.0
        %6048 = vmatpush1.msra.mxu0 0.0
        %6049 = vmatprep.subr.mxu0 0.0
        %6050 = vmatpush1.msra.mxu0 0.0
        %6051 = vmatprep.subr.mxu0 0.0
        %6052 = vmatpush1.msra.mxu0 0.0
        %6053 = vmatprep.subr.mxu0 0.0
        %6054 = vmatpush1.msra.mxu0 0.0
        %6055 = vmatprep.subr.mxu0 0.0
        %6056 = vmatpush1.msra.mxu0 0.0
        %6057 = vmatprep.subr.mxu0 0.0
        %6058 = vmatpush1.msra.mxu0 0.0
        %6059 = vmatprep.subr.mxu0 0.0
        %6060 = vmatpush1.msra.mxu0 0.0
        %6061 = vmatprep.subr.mxu0 0.0
        %6062 = vmatpush1.msra.mxu0 0.0
        %6063 = vmatprep.subr.mxu0 0.0
        %6064 = vmatpush1.msra.mxu0 0.0
        %6065 = vmatprep.subr.mxu0 0.0
        %6066 = vmatpush1.msra.mxu0 0.0
        %6067 = vmatprep.subr.mxu0 0.0
        %6068 = vmatpush1.msra.mxu0 0.0
        %6069 = vmatprep.subr.mxu0 0.0
        %6070 = vmatpush1.msra.mxu0 0.0
        %6071 = vmatprep.subr.mxu0 0.0
        %6072 = vmatpush1.msra.mxu0 0.0
        %6073 = vmatprep.subr.mxu0 0.0
        %6074 = vmatpush1.msra.mxu0 0.0
        %6075 = vmatprep.subr.mxu0 0.0
        %6076 = vmatpush1.msra.mxu0 0.0
        %6077 = vmatprep.subr.mxu0 0.0
        %6078 = vmatpush1.msra.mxu0 0.0
        %6079 = vmatprep.mubr.f32.mxu0 0.0
        %6080 = vmatmul.mubr.f32.gmra.mrb[0].mxu0 %v5995
        %v6081 = vpop.f32.mrb[0].mxu0
        %v6082 = vadd.f32 %v6014, %v6081
        %v6083 = vpop.f32.mrb[0].mxu0
        %6084 = vdwg.mxu0
        %v6085 = vld [vmem:[%s13] sm:$0xff]
        %v6086 = vld [vmem:[%s13 + $0x8] sm:$0xff]
        %v6087 = vld [vmem:[%s13 + $0x10] sm:$0xff]
        %v6088 = vld [vmem:[%s13 + $0x18] sm:$0xff]
        %v6089 = vld [vmem:[%s13 + $0x20] sm:$0xff]
        %v6090 = vld [vmem:[%s13 + $0x28] sm:$0xff]
        %v6091 = vld [vmem:[%s13 + $0x30] sm:$0xff]
        %v6092 = vld [vmem:[%s13 + $0x38] sm:$0xff]
        %v6093 = vld [vmem:[%s13 + $0x40] sm:$0xff]
        %v6094 = vld [vmem:[%s13 + $0x48] sm:$0xff]
        %v6095 = vld [vmem:[%s13 + $0x50] sm:$0xff]
        %v6096 = vld [vmem:[%s13 + $0x58] sm:$0xff]
        %v6097 = vld [vmem:[%s13 + $0x60] sm:$0xff]
        %v6098 = vld [vmem:[%s13 + $0x68] sm:$0xff]
        %v6099 = vld [vmem:[%s13 + $0x70] sm:$0xff]
        %v6100 = vld [vmem:[%s13 + $0x78] sm:$0xff]
        %v6101 = vld [vmem:[%s14] sm:$0x1]
        %6102 = vmatprep.subr.mxu0 0.0
        %6103 = vmatpush1.msra.mxu0 %v6085
        %6104 = vmatprep.subr.mxu0 0.0
        %6105 = vmatpush1.msra.mxu0 %v6086
        %6106 = vmatprep.subr.mxu0 0.0
        %6107 = vmatpush1.msra.mxu0 %v6087
        %6108 = vmatprep.subr.mxu0 0.0
        %6109 = vmatpush1.msra.mxu0 %v6088
        %6110 = vmatprep.subr.mxu0 0.0
        %6111 = vmatpush1.msra.mxu0 %v6089
        %6112 = vmatprep.subr.mxu0 0.0
        %6113 = vmatpush1.msra.mxu0 %v6090
        %6114 = vmatprep.subr.mxu0 0.0
        %6115 = vmatpush1.msra.mxu0 %v6091
        %6116 = vmatprep.subr.mxu0 0.0
        %6117 = vmatpush1.msra.mxu0 %v6092
        %6118 = vmatprep.subr.mxu0 0.0
        %6119 = vmatpush1.msra.mxu0 %v6093
        %6120 = vmatprep.subr.mxu0 0.0
        %6121 = vmatpush1.msra.mxu0 %v6094
        %6122 = vmatprep.subr.mxu0 0.0
        %6123 = vmatpush1.msra.mxu0 %v6095
        %6124 = vmatprep.subr.mxu0 0.0
        %6125 = vmatpush1.msra.mxu0 %v6096
        %6126 = vmatprep.subr.mxu0 0.0
        %6127 = vmatpush1.msra.mxu0 %v6097
        %6128 = vmatprep.subr.mxu0 0.0
        %6129 = vmatpush1.msra.mxu0 %v6098
        %6130 = vmatprep.subr.mxu0 0.0
        %6131 = vmatpush1.msra.mxu0 %v6099
        %6132 = vmatprep.subr.mxu0 0.0
        %6133 = vmatpush1.msra.mxu0 %v6100
        %6134 = vmatprep.subr.mxu0 0.0
        %6135 = vmatpush1.msra.mxu0 0.0
        %6136 = vmatprep.subr.mxu0 0.0
        %6137 = vmatpush1.msra.mxu0 0.0
        %6138 = vmatprep.subr.mxu0 0.0
        %6139 = vmatpush1.msra.mxu0 0.0
        %6140 = vmatprep.subr.mxu0 0.0
        %6141 = vmatpush1.msra.mxu0 0.0
        %6142 = vmatprep.subr.mxu0 0.0
        %6143 = vmatpush1.msra.mxu0 0.0
        %6144 = vmatprep.subr.mxu0 0.0
        %6145 = vmatpush1.msra.mxu0 0.0
        %6146 = vmatprep.subr.mxu0 0.0
        %6147 = vmatpush1.msra.mxu0 0.0
        %6148 = vmatprep.subr.mxu0 0.0
        %6149 = vmatpush1.msra.mxu0 0.0
        %6150 = vmatprep.subr.mxu0 0.0
        %6151 = vmatpush1.msra.mxu0 0.0
        %6152 = vmatprep.subr.mxu0 0.0
        %6153 = vmatpush1.msra.mxu0 0.0
        %6154 = vmatprep.subr.mxu0 0.0
        %6155 = vmatpush1.msra.mxu0 0.0
        %6156 = vmatprep.subr.mxu0 0.0
        %6157 = vmatpush1.msra.mxu0 0.0
        %6158 = vmatprep.subr.mxu0 0.0
        %6159 = vmatpush1.msra.mxu0 0.0
        %6160 = vmatprep.subr.mxu0 0.0
        %6161 = vmatpush1.msra.mxu0 0.0
        %6162 = vmatprep.subr.mxu0 0.0
        %6163 = vmatpush1.msra.mxu0 0.0
        %6164 = vmatprep.subr.mxu0 0.0
        %6165 = vmatpush1.msra.mxu0 0.0
        %6166 = vmatprep.mubr.f32.mxu0 0.0
        %6167 = vmatmul.mubr.f32.gmra.mrb[0].mxu0 %v6082
        %v6168 = vpop.f32.mrb[0].mxu0
        %v6169 = vadd.f32 %v6101, %v6168
        %v6170 = vpop.f32.mrb[0].mxu0
        %6171 = vdwg.mxu0
        %vm6172 = vcmask 32768
        %v6173 = vsel %vm6172, %v6169, -inf
        %6174 = vmax.xlane.f32.xlu0 %v6173
        %v6175 = vpop.xlane.xlu0 %6174
        %v6176 = vsub.f32 %v6169, %v6175
        %v6177 = vmul.f32 %v6176, 1.442695
        %v6178 = vpow.pop %v6177
        %v6179 = vsel %vm6172, %v6178, 0.0
        %6180 = vadd.xlane.f32.xlu0 %v6179
        %v6181 = vpop.xlane.xlu0 %6180
        %v6182 = vrcp.pop %v6181
        %v6183 = vmul.f32 %v6178, %v6182
        %6184 = vst.msk [vmem:[%s517] sm:$0x1] %vm6172, %v6183
        %6185 = vst.msk [vmem:[%s523] sm:$0x1] %vm6172, %v6169
        %s6186 = sand.u32 %s362, 1
        %s6187 = scalar_lea.sflag [#allocation8], %s6186
        %s6188 = sand.u32 %s362, 1
        %s6189 = scalar_lea.vmem [#allocation7], %s6188
        %s6190 = sand.u32 %s388, 1
        %s6191 = scalar_lea.sflag [#allocation10], %s6190
        %s6192 = sand.u32 %s388, 1
        %s6193 = scalar_lea.vmem [#allocation9], %s6192
        // Predicated region
        $region81: #{forward_prepared.1} parent=79 // pred_check
          %p6194 = pneg %p372
        $region82: #{forward_prepared.1} parent=79 // pred_check_branch
          %6196 = sbr.rel (%p6194) target = $region84
        $region83: #{forward_prepared.1} parent=79 // pred_region
          %s6198 = ssub.s32 16, 16
          %6199 = vsyncadd %s6187, %s6198
          %s6200 = smul.addr %s34, 16
          %s6201 = scalar_lea.hbm %s15, %s6200
          %s6203 = sshll.u32 %s6189, 4
          %s6204 = int_to_ptr.vmem [resolvable:$true] %s6203
          %6206 = dma.vmem_to_hbm [thread:$0]  %s6204, 16, %s6201, %s6187
        $region84: #{forward_prepared.1} parent=79 // pred_fallthru
          _
        // Predicated region
        $region85: #{forward_prepared.1} parent=79 // pred_check
          %p6207 = pneg %p398
        $region86: #{forward_prepared.1} parent=79 // pred_check_branch
          %6209 = sbr.rel (%p6207) target = $region88
        $region87: #{forward_prepared.1} parent=79 // pred_region
          %s6211 = ssub.s32 16, 16
          %6212 = vsyncadd %s6191, %s6211
          %s6213 = smul.addr %s34, 16
          %s6214 = scalar_lea.hbm %s16, %s6213
          %s6216 = sshll.u32 %s6193, 4
          %s6217 = int_to_ptr.vmem [resolvable:$true] %s6216
          %6219 = dma.vmem_to_hbm [thread:$0]  %s6217, 16, %s6214, %s6191
        $region88: #{forward_prepared.1} parent=79 // pred_fallthru
          _
      $region80: #{forward_prepared.1} parent=5 // pred_fallthru
        _
      %p6220 = scmp.le.s32.totalorder 2, %s29
      // Predicated region
      $region89: #{forward_prepared.1} parent=5 // pred_check
        %p6221 = pneg %p6220
      $region90: #{forward_prepared.1} parent=5 // pred_check_branch
        %6223 = sbr.rel (%p6221) target = $region92
      $region91: #{forward_prepared.1} parent=5 // pred_region
        %s6224 = ssub.s32 %s29, 2
        // Predicated region
        $region93: #{forward_prepared.1} parent=91 // pred_check
          %p6225 = pneg %p378
        $region94: #{forward_prepared.1} parent=91 // pred_check_branch
          %6227 = sbr.rel (%p6225) target = $region96
        $region95: #{forward_prepared.1} parent=91 // pred_region
          %s6228 = sand.u32 %s363, 1
          %s6229 = scalar_lea.sflag [#allocation8], %s6228
          %s6230 = sand.u32 %s363, 1
          %s6231 = scalar_lea.vmem [#allocation7], %s6230
          %6232 = dma.done %s6229, 16
        $region96: #{forward_prepared.1} parent=91 // pred_fallthru
          _
        // Predicated region
        $region97: #{forward_prepared.1} parent=91 // pred_check
          %p6233 = pneg %p404
        $region98: #{forward_prepared.1} parent=91 // pred_check_branch
          %6235 = sbr.rel (%p6233) target = $region100
        $region99: #{forward_prepared.1} parent=91 // pred_region
          %s6236 = sand.u32 %s389, 1
          %s6237 = scalar_lea.sflag [#allocation10], %s6236
          %s6238 = sand.u32 %s389, 1
          %s6239 = scalar_lea.vmem [#allocation9], %s6238
          %6240 = dma.done %s6237, 16
        $region100: #{forward_prepared.1} parent=91 // pred_fallthru
          _
      $region92: #{forward_prepared.1} parent=5 // pred_fallthru
        _
    $region6: #{forward_prepared.1} parent=1 // loop_footer
      %s33 = sadd.s32 1, %s29
    $region7: #{forward_prepared.1} parent=1 // loop_footer_branch
      %28 = sbr.rel target = $region3
    $region8: #{forward_prepared.1} parent=1 // loop_exit
      _
    %6241 = vsyncpa [#allocation8], 1
    %s6242 = scalar_lea.sflag [#allocation8], 1
    %6243 = vsyncpa %s6242, 1
    %6244 = vsyncpa [#allocation10], 1
    %s6245 = scalar_lea.sflag [#allocation10], 1
    %6246 = vsyncpa %s6245, 1

</llo_original>
